<compile_context>
chip_gen: v6e
topology: v6e:2x2x1
jax: 0.10.0
libtpu: 0.0.40
codegen_flags: <defaults>
</compile_context>

<pallas_src>
import math
from functools import partial

import numpy as np
import jax
import jax.numpy as jnp
from jax.experimental import pallas as pl
from jax.experimental.pallas import tpu as pltpu

D_MODEL = 130
N_HEADS = 2
HEAD_DIM = D_MODEL // N_HEADS      # 65
HEAD_PAD = 128                     # lane-aligned per-head width inside the kernel
D_FF = 512
N_LAYERS = 3
LN_EPS = 1e-5


# ----------------------------------------------------------------------------
# Fused Pallas kernel: 3 encoder layers + classifier, one grid step per batch element.
# ----------------------------------------------------------------------------
def _layernorm(x, g, b, eps=LN_EPS):
    mu = jnp.mean(x, axis=-1, keepdims=True)
    var = jnp.mean(jnp.square(x - mu), axis=-1, keepdims=True)
    return (x - mu) * jax.lax.rsqrt(var + eps) * g + b


def encoder_kernel(x_ref, bias_ref,
                   wqkv_ref, bqkv_ref, wo_ref, bo_ref,
                   ln1g_ref, ln1b_ref,
                   w1_ref, b1_ref, w2_ref, b2_ref,
                   ln2g_ref, ln2b_ref,
                   clfw_ref, clfb_ref,
                   seq_ref, logit_ref, *, use_cls=True):
    S = x_ref.shape[1]
    n_layers = wqkv_ref.shape[0]

    x = x_ref[0]                                          # (S, D) for this batch element
    # additive key bias (0 or -1e9 on padded keys), broadcast hoisted out of all loops
    key_bias = jnp.broadcast_to(bias_ref[0], (S, S))      # (S_q, S_k)

    for li in range(n_layers):                            # static unroll, weights resident
        # fused QKV projection, padded per-head layout (D, 3*H*128); q pre-scaled
        qkv = jnp.dot(x, wqkv_ref[li], preferred_element_type=jnp.float32) + bqkv_ref[li]

        heads = []
        for h in range(N_HEADS):                          # all slices 128-aligned, width 128
            q = qkv[:, (0 * N_HEADS + h) * HEAD_PAD:(0 * N_HEADS + h + 1) * HEAD_PAD]
            k = qkv[:, (1 * N_HEADS + h) * HEAD_PAD:(1 * N_HEADS + h + 1) * HEAD_PAD]
            v = qkv[:, (2 * N_HEADS + h) * HEAD_PAD:(2 * N_HEADS + h + 1) * HEAD_PAD]

            s = jax.lax.dot_general(q, k, (((1,), (1,)), ((), ())),
                                    preferred_element_type=jnp.float32) + key_bias
            s = s - jnp.max(s, axis=-1, keepdims=True)
            p = jnp.exp(s)
            p = p * pl.reciprocal(jnp.sum(p, axis=-1, keepdims=True), approx=True)
            heads.append(jnp.dot(p, v, preferred_element_type=jnp.float32))   # (S, 128)

        attn = jnp.concatenate(heads, axis=-1)            # (S, 2*128), zero in padded cols
        attn = jnp.dot(attn, wo_ref[li], preferred_element_type=jnp.float32) + bo_ref[li]
        y = _layernorm(x + attn, ln1g_ref[li], ln1b_ref[li])                  # post-norm

        # FFN 130 -> 512 -> 130
        h1 = jnp.maximum(
            jnp.dot(y, w1_ref[li], preferred_element_type=jnp.float32) + b1_ref[li], 0.0)
        h2 = jnp.dot(h1, w2_ref[li], preferred_element_type=jnp.float32) + b2_ref[li]
        x = _layernorm(y + h2, ln2g_ref[li], ln2b_ref[li])

    seq_ref[0] = x                                         # (S, D)

    # classifier head (fused; avoids a second launch)
    if use_cls:
        hidden = x[0:1, :]                                 # cls row
    else:
        hidden = jnp.mean(x, axis=0, keepdims=True)
    logit_ref[0] = (jnp.dot(hidden, clfw_ref[...], preferred_element_type=jnp.float32)
                    + clfb_ref[...])


def fused_forward(x, key_bias, kp, use_cls=True):
    B, S, D = x.shape

    def full_spec(a):
        nd = a.ndim
        return pl.BlockSpec(a.shape, lambda b: (0,) * nd)   # resident across grid steps

    weight_names = ["wqkv", "bqkv", "wo", "bo", "ln1_g", "ln1_b",
                    "w1", "b1", "w2", "b2", "ln2_g", "ln2_b", "clf_w", "clf_b"]
    weights = [kp[n] for n in weight_names]

    seq, logits = pl.pallas_call(
        partial(encoder_kernel, use_cls=use_cls),
        grid=(B,),
        in_specs=[pl.BlockSpec((1, S, D), lambda b: (b, 0, 0)),
                  pl.BlockSpec((1, 1, S), lambda b: (b, 0, 0))]
                 + [full_spec(w) for w in weights],
        out_specs=(pl.BlockSpec((1, S, D), lambda b: (b, 0, 0)),
                   pl.BlockSpec((1, 1, 1), lambda b: (b, 0, 0))),
        out_shape=(jax.ShapeDtypeStruct((B, S, D), jnp.float32),
                   jax.ShapeDtypeStruct((B, 1, 1), jnp.float32)),
        compiler_params=pltpu.CompilerParams(
            dimension_semantics=("parallel",),
            vmem_limit_bytes=32 * 1024 * 1024),
    )(x, key_bias.reshape(B, 1, S), *weights)
    return seq, logits.reshape(B, 1)


# ----------------------------------------------------------------------------
# Positional encoding (Summer(PositionalEncodingPermute1D(seq_len))) -- plain NumPy glue.
# Library quirk: the "channel" axis of the 1D PE is the *sequence* axis (because of the
# permute), and positions run over the embedding dimension.
# ----------------------------------------------------------------------------
def positional_encoding_permute1d(seq_len, d_model):
    channels = int(np.ceil(seq_len / 2) * 2)
    inv_freq = 1.0 / (10000.0 ** (np.arange(0, channels, 2, dtype=np.float32) / channels))
    pos = np.arange(d_model, dtype=np.float32)
    sin_inp = np.einsum("i,j->ij", pos, inv_freq)          # (d_model, channels//2)
    emb = np.zeros((d_model, channels), dtype=np.float32)
    emb[:, 0::2] = np.sin(sin_inp)
    emb[:, 1::2] = np.cos(sin_inp)
    return jnp.asarray(emb[:, :seq_len].T)                 # (seq_len, d_model)


# ----------------------------------------------------------------------------
# Parameter init (deterministic, synthetic) in natural stacked layout:
#   wqkv: (L, D, 3D) columns [q(h0,h1) | k(h0,h1) | v(h0,h1)]
#   wo:   (L, D, D)  rows are concatenated head outputs
# ----------------------------------------------------------------------------
def init_params(key, d_model=D_MODEL, n_layers=N_LAYERS, d_ff=D_FF):
    s = 0.05
    keys = jax.random.split(key, 3)
    params = {"cls_emb": jax.random.normal(keys[0], (1, d_model), jnp.float32)}
    kw, kb = jax.random.split(keys[1])
    params["clf_w"] = jax.random.normal(kw, (d_model, 1), jnp.float32) * s
    params["clf_b"] = jax.random.normal(kb, (1, 1), jnp.float32) * s

    lk = jax.random.split(keys[2], 8)
    params["wqkv"] = jax.random.normal(lk[0], (n_layers, d_model, 3 * d_model), jnp.float32) * s
    params["bqkv"] = jax.random.normal(lk[1], (n_layers, 1, 3 * d_model), jnp.float32) * s
    params["wo"] = jax.random.normal(lk[2], (n_layers, d_model, d_model), jnp.float32) * s
    params["bo"] = jax.random.normal(lk[3], (n_layers, 1, d_model), jnp.float32) * s
    params["ln1_g"] = jnp.ones((n_layers, 1, d_model), jnp.float32)
    params["ln1_b"] = jnp.zeros((n_layers, 1, d_model), jnp.float32)
    params["w1"] = jax.random.normal(lk[4], (n_layers, d_model, d_ff), jnp.float32) * s
    params["b1"] = jax.random.normal(lk[5], (n_layers, 1, d_ff), jnp.float32) * s
    params["w2"] = jax.random.normal(lk[6], (n_layers, d_ff, d_model), jnp.float32) * s
    params["b2"] = jax.random.normal(lk[7], (n_layers, 1, d_model), jnp.float32) * s
    params["ln2_g"] = jnp.ones((n_layers, 1, d_model), jnp.float32)
    params["ln2_b"] = jnp.zeros((n_layers, 1, d_model), jnp.float32)
    return params


# One-time repack into the lane-aligned kernel layout:
#   wqkv -> (L, D, 3*H*128) with each head's 65 cols zero-padded to a 128-lane slot,
#           q columns pre-scaled by 1/sqrt(head_dim);
#   wo   -> (L, H*128, D) with the padded rows zeroed.
def pack_params(params):
    L, D, _ = params["wqkv"].shape
    hd = D // N_HEADS
    scale = 1.0 / math.sqrt(hd)

    def pad_last(a):
        return jnp.pad(a, [(0, 0)] * (a.ndim - 1) + [(0, HEAD_PAD - hd)])

    w_blocks, b_blocks = [], []
    for which, sc in ((0, scale), (1, 1.0), (2, 1.0)):     # fold scale into q
        w = params["wqkv"][..., which * D:(which + 1) * D] * sc
        b = params["bqkv"][..., which * D:(which + 1) * D] * sc
        for h in range(N_HEADS):
            w_blocks.append(pad_last(w[..., h * hd:(h + 1) * hd]))
            b_blocks.append(pad_last(b[..., h * hd:(h + 1) * hd]))

    kp = dict(params)
    kp["wqkv"] = jnp.concatenate(w_blocks, axis=-1)        # (L, D, 3*H*128)
    kp["bqkv"] = jnp.concatenate(b_blocks, axis=-1)        # (L, 1, 3*H*128)
    wo_rows = [jnp.pad(params["wo"][:, h * hd:(h + 1) * hd, :],
                       ((0, 0), (0, HEAD_PAD - hd), (0, 0))) for h in range(N_HEADS)]
    kp["wo"] = jnp.concatenate(wo_rows, axis=1)            # (L, H*128, D)
    return kp


# ----------------------------------------------------------------------------
# Full forward (matches AudioTransformers.forward, use_cls=True by default)
# ----------------------------------------------------------------------------
@partial(jax.jit, static_argnames=("use_cls",))
def audio_transformers_forward(inputs, attention_mask, kparams, use_cls=True):
    B, S0, D = inputs.shape
    if use_cls:
        cls = jnp.broadcast_to(kparams["cls_emb"][None], (B, 1, D))
        x = jnp.concatenate([cls, inputs], axis=1)
        mask = jnp.concatenate([jnp.zeros((B, 1), jnp.float32),
                                attention_mask.astype(jnp.float32)], axis=1)
    else:
        x = inputs
        mask = attention_mask.astype(jnp.float32)

    S = x.shape[1]
    x = x + positional_encoding_permute1d(S, D)[None]      # Summer(PositionalEncodingPermute1D)
    key_bias = mask * jnp.float32(-1e9)                    # additive key-padding bias

    seq, logits = fused_forward(x, key_bias, kparams, use_cls=use_cls)
    return logits, seq[:, 1:, :]


if __name__ == "__main__":
    key = jax.random.PRNGKey(0)
    k_in, k_params = jax.random.split(key)

    B, S0 = 2, 8                                  # small shapes; d_model fixed at 130 by module
    inputs = jax.random.normal(k_in, (B, S0, D_MODEL), jnp.float32)
    attention_mask = jnp.zeros((B, S0), jnp.float32).at[1, 6:].set(1.0)   # batch 1: last 2 padded

    params = init_params(k_params)
    kparams = pack_params(params)                 # one-time lane-aligned weight repack

    logits, seq_out = audio_transformers_forward(inputs, attention_mask, kparams, use_cls=True)
    jax.block_until_ready((logits, seq_out))

    assert logits.shape == (B, 1)
    assert seq_out.shape == (B, S0, D_MODEL)
    assert bool(jnp.all(jnp.isfinite(logits))) and bool(jnp.all(jnp.isfinite(seq_out)))
    print("KERNEL_OK")
</pallas_src>

<mosaic_0001>
module attributes {stable_mosaic.version = 11 : i64} {
  func.func @encoder_kernel(%arg0: i32, %arg1: memref<1x9x130xf32, #tpu.memory_space<vmem>>, %arg2: memref<1x1x9xf32, #tpu.memory_space<vmem>>, %arg3: memref<3x130x768xf32, #tpu.memory_space<vmem>>, %arg4: memref<3x1x768xf32, #tpu.memory_space<vmem>>, %arg5: memref<3x256x130xf32, #tpu.memory_space<vmem>>, %arg6: memref<3x1x130xf32, #tpu.memory_space<vmem>>, %arg7: memref<3x1x130xf32, #tpu.memory_space<vmem>>, %arg8: memref<3x1x130xf32, #tpu.memory_space<vmem>>, %arg9: memref<3x130x512xf32, #tpu.memory_space<vmem>>, %arg10: memref<3x1x512xf32, #tpu.memory_space<vmem>>, %arg11: memref<3x512x130xf32, #tpu.memory_space<vmem>>, %arg12: memref<3x1x130xf32, #tpu.memory_space<vmem>>, %arg13: memref<3x1x130xf32, #tpu.memory_space<vmem>>, %arg14: memref<3x1x130xf32, #tpu.memory_space<vmem>>, %arg15: memref<130x1xf32, #tpu.memory_space<vmem>>, %arg16: memref<1x1xf32, #tpu.memory_space<vmem>>, %arg17: memref<1x9x130xf32, #tpu.memory_space<vmem>>, %arg18: memref<1x1x1xf32, #tpu.memory_space<vmem>>) attributes {dimension_semantics = [#tpu.dimension_semantics<parallel>], iteration_bounds = array<i64: 2>, scalar_prefetch = 0 : i64, scratch_operands = 0 : i64, tpu.core_type = #tpu.core_type<tc>, window_params = [{transform_indices = @transform_0, window_bounds = array<i64: 1, 9, 130>}, {transform_indices = @transform_1, window_bounds = array<i64: 1, 1, 9>}, {pipeline_mode = #tpu.pipeline_mode<synchronous>, transform_indices = @transform_2, window_bounds = array<i64: 3, 130, 768>}, {pipeline_mode = #tpu.pipeline_mode<synchronous>, transform_indices = @transform_3, window_bounds = array<i64: 3, 1, 768>}, {pipeline_mode = #tpu.pipeline_mode<synchronous>, transform_indices = @transform_4, window_bounds = array<i64: 3, 256, 130>}, {pipeline_mode = #tpu.pipeline_mode<synchronous>, transform_indices = @transform_5, window_bounds = array<i64: 3, 1, 130>}, {pipeline_mode = #tpu.pipeline_mode<synchronous>, transform_indices = @transform_6, window_bounds = array<i64: 3, 1, 130>}, {pipeline_mode = #tpu.pipeline_mode<synchronous>, transform_indices = @transform_7, window_bounds = array<i64: 3, 1, 130>}, {pipeline_mode = #tpu.pipeline_mode<synchronous>, transform_indices = @transform_8, window_bounds = array<i64: 3, 130, 512>}, {pipeline_mode = #tpu.pipeline_mode<synchronous>, transform_indices = @transform_9, window_bounds = array<i64: 3, 1, 512>}, {pipeline_mode = #tpu.pipeline_mode<synchronous>, transform_indices = @transform_10, window_bounds = array<i64: 3, 512, 130>}, {pipeline_mode = #tpu.pipeline_mode<synchronous>, transform_indices = @transform_11, window_bounds = array<i64: 3, 1, 130>}, {pipeline_mode = #tpu.pipeline_mode<synchronous>, transform_indices = @transform_12, window_bounds = array<i64: 3, 1, 130>}, {pipeline_mode = #tpu.pipeline_mode<synchronous>, transform_indices = @transform_13, window_bounds = array<i64: 3, 1, 130>}, {pipeline_mode = #tpu.pipeline_mode<synchronous>, transform_indices = @transform_14, window_bounds = array<i64: 130, 1>}, {pipeline_mode = #tpu.pipeline_mode<synchronous>, transform_indices = @transform_15, window_bounds = array<i64: 1, 1>}, {transform_indices = @transform_16, window_bounds = array<i64: 1, 9, 130>}, {transform_indices = @transform_17, window_bounds = array<i64: 1, 1, 1>}]} {
    %c0 = arith.constant 0 : index
    %c0_0 = arith.constant 0 : index
    %c0_1 = arith.constant 0 : index
    %0 = vector.load %arg1[%c0, %c0_0, %c0_1] : memref<1x9x130xf32, #tpu.memory_space<vmem>>, vector<1x9x130xf32>
    %1 = vector.shape_cast %0 : vector<1x9x130xf32> to vector<9x130xf32>
    %c0_2 = arith.constant 0 : index
    %c0_3 = arith.constant 0 : index
    %c0_4 = arith.constant 0 : index
    %2 = vector.load %arg2[%c0_2, %c0_3, %c0_4] : memref<1x1x9xf32, #tpu.memory_space<vmem>>, vector<1x1x9xf32>
    %3 = vector.shape_cast %2 : vector<1x1x9xf32> to vector<1x9xf32>
    %4 = vector.shape_cast %3 : vector<1x9xf32> to vector<1x9xf32>
    %5 = vector.broadcast %4 : vector<1x9xf32> to vector<9x9xf32>
    %c0_5 = arith.constant 0 : index
    %c0_6 = arith.constant 0 : index
    %c0_7 = arith.constant 0 : index
    %6 = vector.load %arg3[%c0_5, %c0_6, %c0_7] : memref<3x130x768xf32, #tpu.memory_space<vmem>>, vector<1x130x768xf32>
    %7 = vector.shape_cast %6 : vector<1x130x768xf32> to vector<130x768xf32>
    %cst = arith.constant dense<0.000000e+00> : vector<9x768xf32>
    %8 = tpu.matmul %1, %7, %cst {dimension_numbers = #tpu.dot_dimension_numbers<[1], [0], [0], [1], [0, 0, 1, 1], [], []>} : vector<9x130xf32>, vector<130x768xf32>, vector<9x768xf32> -> vector<9x768xf32>
    %c0_8 = arith.constant 0 : index
    %c0_9 = arith.constant 0 : index
    %c0_10 = arith.constant 0 : index
    %9 = vector.load %arg4[%c0_8, %c0_9, %c0_10] : memref<3x1x768xf32, #tpu.memory_space<vmem>>, vector<1x1x768xf32>
    %10 = vector.shape_cast %9 : vector<1x1x768xf32> to vector<1x768xf32>
    %11 = vector.broadcast %10 : vector<1x768xf32> to vector<9x768xf32>
    %12 = arith.addf %8, %11 : vector<9x768xf32>
    %13 = vector.extract_strided_slice %12 {offsets = [0, 0], sizes = [9, 128], strides = [1, 1]} : vector<9x768xf32> to vector<9x128xf32>
    %14 = vector.extract_strided_slice %12 {offsets = [0, 256], sizes = [9, 128], strides = [1, 1]} : vector<9x768xf32> to vector<9x128xf32>
    %15 = vector.extract_strided_slice %12 {offsets = [0, 512], sizes = [9, 128], strides = [1, 1]} : vector<9x768xf32> to vector<9x128xf32>
    %cst_11 = arith.constant dense<0.000000e+00> : vector<9x9xf32>
    %16 = tpu.matmul %13, %14, %cst_11 {dimension_numbers = #tpu.dot_dimension_numbers<[1], [1], [0], [0], [0, 0, 1, 0], [], []>} : vector<9x128xf32>, vector<9x128xf32>, vector<9x9xf32> -> vector<9x9xf32>
    %17 = arith.addf %16, %5 : vector<9x9xf32>
    %cst_12 = arith.constant dense<0xFF800000> : vector<9xf32>
    %18 = vector.multi_reduction <maximumf>, %17, %cst_12 [1] : vector<9x9xf32> to vector<9xf32>
    %19 = vector.shape_cast %18 : vector<9xf32> to vector<9x1xf32>
    %20 = vector.broadcast %19 : vector<9x1xf32> to vector<9x9xf32>
    %21 = arith.subf %17, %20 : vector<9x9xf32>
    %22 = math.exp %21 : vector<9x9xf32>
    %cst_13 = arith.constant dense<0.000000e+00> : vector<9xf32>
    %23 = vector.multi_reduction <add>, %22, %cst_13 [1] : vector<9x9xf32> to vector<9xf32>
    %24 = vector.shape_cast %23 : vector<9xf32> to vector<9x1xf32>
    %25 = tpu.reciprocal %24 {approx = true} : vector<9x1xf32> -> vector<9x1xf32>
    %26 = vector.broadcast %25 : vector<9x1xf32> to vector<9x9xf32>
    %27 = arith.mulf %22, %26 : vector<9x9xf32>
    %cst_14 = arith.constant dense<0.000000e+00> : vector<9x128xf32>
    %28 = tpu.matmul %27, %15, %cst_14 {dimension_numbers = #tpu.dot_dimension_numbers<[1], [0], [0], [1], [0, 0, 1, 1], [], []>} : vector<9x9xf32>, vector<9x128xf32>, vector<9x128xf32> -> vector<9x128xf32>
    %29 = vector.extract_strided_slice %12 {offsets = [0, 128], sizes = [9, 128], strides = [1, 1]} : vector<9x768xf32> to vector<9x128xf32>
    %30 = vector.extract_strided_slice %12 {offsets = [0, 384], sizes = [9, 128], strides = [1, 1]} : vector<9x768xf32> to vector<9x128xf32>
    %31 = vector.extract_strided_slice %12 {offsets = [0, 640], sizes = [9, 128], strides = [1, 1]} : vector<9x768xf32> to vector<9x128xf32>
    %cst_15 = arith.constant dense<0.000000e+00> : vector<9x9xf32>
    %32 = tpu.matmul %29, %30, %cst_15 {dimension_numbers = #tpu.dot_dimension_numbers<[1], [1], [0], [0], [0, 0, 1, 0], [], []>} : vector<9x128xf32>, vector<9x128xf32>, vector<9x9xf32> -> vector<9x9xf32>
    %33 = arith.addf %32, %5 : vector<9x9xf32>
    %cst_16 = arith.constant dense<0xFF800000> : vector<9xf32>
    %34 = vector.multi_reduction <maximumf>, %33, %cst_16 [1] : vector<9x9xf32> to vector<9xf32>
    %35 = vector.shape_cast %34 : vector<9xf32> to vector<9x1xf32>
    %36 = vector.broadcast %35 : vector<9x1xf32> to vector<9x9xf32>
    %37 = arith.subf %33, %36 : vector<9x9xf32>
    %38 = math.exp %37 : vector<9x9xf32>
    %cst_17 = arith.constant dense<0.000000e+00> : vector<9xf32>
    %39 = vector.multi_reduction <add>, %38, %cst_17 [1] : vector<9x9xf32> to vector<9xf32>
    %40 = vector.shape_cast %39 : vector<9xf32> to vector<9x1xf32>
    %41 = tpu.reciprocal %40 {approx = true} : vector<9x1xf32> -> vector<9x1xf32>
    %42 = vector.broadcast %41 : vector<9x1xf32> to vector<9x9xf32>
    %43 = arith.mulf %38, %42 : vector<9x9xf32>
    %cst_18 = arith.constant dense<0.000000e+00> : vector<9x128xf32>
    %44 = tpu.matmul %43, %31, %cst_18 {dimension_numbers = #tpu.dot_dimension_numbers<[1], [0], [0], [1], [0, 0, 1, 1], [], []>} : vector<9x9xf32>, vector<9x128xf32>, vector<9x128xf32> -> vector<9x128xf32>
    %45 = tpu.concatenate %28, %44 in 1 : vector<9x128xf32>, vector<9x128xf32> -> vector<9x256xf32>
    %c0_19 = arith.constant 0 : index
    %c0_20 = arith.constant 0 : index
    %c0_21 = arith.constant 0 : index
    %46 = vector.load %arg5[%c0_19, %c0_20, %c0_21] : memref<3x256x130xf32, #tpu.memory_space<vmem>>, vector<1x256x130xf32>
    %47 = vector.shape_cast %46 : vector<1x256x130xf32> to vector<256x130xf32>
    %cst_22 = arith.constant dense<0.000000e+00> : vector<9x130xf32>
    %48 = tpu.matmul %45, %47, %cst_22 {dimension_numbers = #tpu.dot_dimension_numbers<[1], [0], [0], [1], [0, 0, 1, 1], [], []>} : vector<9x256xf32>, vector<256x130xf32>, vector<9x130xf32> -> vector<9x130xf32>
    %c0_23 = arith.constant 0 : index
    %c0_24 = arith.constant 0 : index
    %c0_25 = arith.constant 0 : index
    %49 = vector.load %arg6[%c0_23, %c0_24, %c0_25] : memref<3x1x130xf32, #tpu.memory_space<vmem>>, vector<1x1x130xf32>
    %50 = vector.shape_cast %49 : vector<1x1x130xf32> to vector<1x130xf32>
    %51 = vector.broadcast %50 : vector<1x130xf32> to vector<9x130xf32>
    %52 = arith.addf %48, %51 : vector<9x130xf32>
    %53 = arith.addf %1, %52 : vector<9x130xf32>
    %c0_26 = arith.constant 0 : index
    %c0_27 = arith.constant 0 : index
    %c0_28 = arith.constant 0 : index
    %54 = vector.load %arg7[%c0_26, %c0_27, %c0_28] : memref<3x1x130xf32, #tpu.memory_space<vmem>>, vector<1x1x130xf32>
    %55 = vector.shape_cast %54 : vector<1x1x130xf32> to vector<1x130xf32>
    %c0_29 = arith.constant 0 : index
    %c0_30 = arith.constant 0 : index
    %c0_31 = arith.constant 0 : index
    %56 = vector.load %arg8[%c0_29, %c0_30, %c0_31] : memref<3x1x130xf32, #tpu.memory_space<vmem>>, vector<1x1x130xf32>
    %57 = vector.shape_cast %56 : vector<1x1x130xf32> to vector<1x130xf32>
    %cst_32 = arith.constant dense<0.000000e+00> : vector<9xf32>
    %58 = vector.multi_reduction <add>, %53, %cst_32 [1] : vector<9x130xf32> to vector<9xf32>
    %59 = vector.shape_cast %58 : vector<9xf32> to vector<9x1xf32>
    %cst_33 = arith.constant 1.300000e+02 : f32
    %60 = vector.broadcast %cst_33 : f32 to vector<9x1xf32>
    %61 = arith.divf %59, %60 : vector<9x1xf32>
    %62 = vector.broadcast %61 : vector<9x1xf32> to vector<9x130xf32>
    %63 = arith.subf %53, %62 : vector<9x130xf32>
    %64 = arith.mulf %63, %63 : vector<9x130xf32>
    %cst_34 = arith.constant dense<0.000000e+00> : vector<9xf32>
    %65 = vector.multi_reduction <add>, %64, %cst_34 [1] : vector<9x130xf32> to vector<9xf32>
    %66 = vector.shape_cast %65 : vector<9xf32> to vector<9x1xf32>
    %cst_35 = arith.constant 1.300000e+02 : f32
    %67 = vector.broadcast %cst_35 : f32 to vector<9x1xf32>
    %68 = arith.divf %66, %67 : vector<9x1xf32>
    %69 = vector.broadcast %61 : vector<9x1xf32> to vector<9x130xf32>
    %70 = arith.subf %53, %69 : vector<9x130xf32>
    %cst_36 = arith.constant 9.99999974E-6 : f32
    %71 = vector.broadcast %cst_36 : f32 to vector<9x1xf32>
    %72 = arith.addf %68, %71 : vector<9x1xf32>
    %73 = math.rsqrt %72 : vector<9x1xf32>
    %74 = vector.broadcast %73 : vector<9x1xf32> to vector<9x130xf32>
    %75 = arith.mulf %70, %74 : vector<9x130xf32>
    %76 = vector.broadcast %55 : vector<1x130xf32> to vector<9x130xf32>
    %77 = arith.mulf %75, %76 : vector<9x130xf32>
    %78 = vector.broadcast %57 : vector<1x130xf32> to vector<9x130xf32>
    %79 = arith.addf %77, %78 : vector<9x130xf32>
    %c0_37 = arith.constant 0 : index
    %c0_38 = arith.constant 0 : index
    %c0_39 = arith.constant 0 : index
    %80 = vector.load %arg9[%c0_37, %c0_38, %c0_39] : memref<3x130x512xf32, #tpu.memory_space<vmem>>, vector<1x130x512xf32>
    %81 = vector.shape_cast %80 : vector<1x130x512xf32> to vector<130x512xf32>
    %cst_40 = arith.constant dense<0.000000e+00> : vector<9x512xf32>
    %82 = tpu.matmul %79, %81, %cst_40 {dimension_numbers = #tpu.dot_dimension_numbers<[1], [0], [0], [1], [0, 0, 1, 1], [], []>} : vector<9x130xf32>, vector<130x512xf32>, vector<9x512xf32> -> vector<9x512xf32>
    %c0_41 = arith.constant 0 : index
    %c0_42 = arith.constant 0 : index
    %c0_43 = arith.constant 0 : index
    %83 = vector.load %arg10[%c0_41, %c0_42, %c0_43] : memref<3x1x512xf32, #tpu.memory_space<vmem>>, vector<1x1x512xf32>
    %84 = vector.shape_cast %83 : vector<1x1x512xf32> to vector<1x512xf32>
    %85 = vector.broadcast %84 : vector<1x512xf32> to vector<9x512xf32>
    %86 = arith.addf %82, %85 : vector<9x512xf32>
    %cst_44 = arith.constant 0.000000e+00 : f32
    %87 = vector.broadcast %cst_44 : f32 to vector<9x512xf32>
    %88 = arith.maximumf %86, %87 : vector<9x512xf32>
    %c0_45 = arith.constant 0 : index
    %c0_46 = arith.constant 0 : index
    %c0_47 = arith.constant 0 : index
    %89 = vector.load %arg11[%c0_45, %c0_46, %c0_47] : memref<3x512x130xf32, #tpu.memory_space<vmem>>, vector<1x512x130xf32>
    %90 = vector.shape_cast %89 : vector<1x512x130xf32> to vector<512x130xf32>
    %cst_48 = arith.constant dense<0.000000e+00> : vector<9x130xf32>
    %91 = tpu.matmul %88, %90, %cst_48 {dimension_numbers = #tpu.dot_dimension_numbers<[1], [0], [0], [1], [0, 0, 1, 1], [], []>} : vector<9x512xf32>, vector<512x130xf32>, vector<9x130xf32> -> vector<9x130xf32>
    %c0_49 = arith.constant 0 : index
    %c0_50 = arith.constant 0 : index
    %c0_51 = arith.constant 0 : index
    %92 = vector.load %arg12[%c0_49, %c0_50, %c0_51] : memref<3x1x130xf32, #tpu.memory_space<vmem>>, vector<1x1x130xf32>
    %93 = vector.shape_cast %92 : vector<1x1x130xf32> to vector<1x130xf32>
    %94 = vector.broadcast %93 : vector<1x130xf32> to vector<9x130xf32>
    %95 = arith.addf %91, %94 : vector<9x130xf32>
    %96 = arith.addf %79, %95 : vector<9x130xf32>
    %c0_52 = arith.constant 0 : index
    %c0_53 = arith.constant 0 : index
    %c0_54 = arith.constant 0 : index
    %97 = vector.load %arg13[%c0_52, %c0_53, %c0_54] : memref<3x1x130xf32, #tpu.memory_space<vmem>>, vector<1x1x130xf32>
    %98 = vector.shape_cast %97 : vector<1x1x130xf32> to vector<1x130xf32>
    %c0_55 = arith.constant 0 : index
    %c0_56 = arith.constant 0 : index
    %c0_57 = arith.constant 0 : index
    %99 = vector.load %arg14[%c0_55, %c0_56, %c0_57] : memref<3x1x130xf32, #tpu.memory_space<vmem>>, vector<1x1x130xf32>
    %100 = vector.shape_cast %99 : vector<1x1x130xf32> to vector<1x130xf32>
    %cst_58 = arith.constant dense<0.000000e+00> : vector<9xf32>
    %101 = vector.multi_reduction <add>, %96, %cst_58 [1] : vector<9x130xf32> to vector<9xf32>
    %102 = vector.shape_cast %101 : vector<9xf32> to vector<9x1xf32>
    %cst_59 = arith.constant 1.300000e+02 : f32
    %103 = vector.broadcast %cst_59 : f32 to vector<9x1xf32>
    %104 = arith.divf %102, %103 : vector<9x1xf32>
    %105 = vector.broadcast %104 : vector<9x1xf32> to vector<9x130xf32>
    %106 = arith.subf %96, %105 : vector<9x130xf32>
    %107 = arith.mulf %106, %106 : vector<9x130xf32>
    %cst_60 = arith.constant dense<0.000000e+00> : vector<9xf32>
    %108 = vector.multi_reduction <add>, %107, %cst_60 [1] : vector<9x130xf32> to vector<9xf32>
    %109 = vector.shape_cast %108 : vector<9xf32> to vector<9x1xf32>
    %cst_61 = arith.constant 1.300000e+02 : f32
    %110 = vector.broadcast %cst_61 : f32 to vector<9x1xf32>
    %111 = arith.divf %109, %110 : vector<9x1xf32>
    %112 = vector.broadcast %104 : vector<9x1xf32> to vector<9x130xf32>
    %113 = arith.subf %96, %112 : vector<9x130xf32>
    %cst_62 = arith.constant 9.99999974E-6 : f32
    %114 = vector.broadcast %cst_62 : f32 to vector<9x1xf32>
    %115 = arith.addf %111, %114 : vector<9x1xf32>
    %116 = math.rsqrt %115 : vector<9x1xf32>
    %117 = vector.broadcast %116 : vector<9x1xf32> to vector<9x130xf32>
    %118 = arith.mulf %113, %117 : vector<9x130xf32>
    %119 = vector.broadcast %98 : vector<1x130xf32> to vector<9x130xf32>
    %120 = arith.mulf %118, %119 : vector<9x130xf32>
    %121 = vector.broadcast %100 : vector<1x130xf32> to vector<9x130xf32>
    %122 = arith.addf %120, %121 : vector<9x130xf32>
    %c1 = arith.constant 1 : index
    %c0_63 = arith.constant 0 : index
    %c0_64 = arith.constant 0 : index
    %123 = vector.load %arg3[%c1, %c0_63, %c0_64] : memref<3x130x768xf32, #tpu.memory_space<vmem>>, vector<1x130x768xf32>
    %124 = vector.shape_cast %123 : vector<1x130x768xf32> to vector<130x768xf32>
    %cst_65 = arith.constant dense<0.000000e+00> : vector<9x768xf32>
    %125 = tpu.matmul %122, %124, %cst_65 {dimension_numbers = #tpu.dot_dimension_numbers<[1], [0], [0], [1], [0, 0, 1, 1], [], []>} : vector<9x130xf32>, vector<130x768xf32>, vector<9x768xf32> -> vector<9x768xf32>
    %c1_66 = arith.constant 1 : index
    %c0_67 = arith.constant 0 : index
    %c0_68 = arith.constant 0 : index
    %126 = vector.load %arg4[%c1_66, %c0_67, %c0_68] : memref<3x1x768xf32, #tpu.memory_space<vmem>>, vector<1x1x768xf32>
    %127 = vector.shape_cast %126 : vector<1x1x768xf32> to vector<1x768xf32>
    %128 = vector.broadcast %127 : vector<1x768xf32> to vector<9x768xf32>
    %129 = arith.addf %125, %128 : vector<9x768xf32>
    %130 = vector.extract_strided_slice %129 {offsets = [0, 0], sizes = [9, 128], strides = [1, 1]} : vector<9x768xf32> to vector<9x128xf32>
    %131 = vector.extract_strided_slice %129 {offsets = [0, 256], sizes = [9, 128], strides = [1, 1]} : vector<9x768xf32> to vector<9x128xf32>
    %132 = vector.extract_strided_slice %129 {offsets = [0, 512], sizes = [9, 128], strides = [1, 1]} : vector<9x768xf32> to vector<9x128xf32>
    %cst_69 = arith.constant dense<0.000000e+00> : vector<9x9xf32>
    %133 = tpu.matmul %130, %131, %cst_69 {dimension_numbers = #tpu.dot_dimension_numbers<[1], [1], [0], [0], [0, 0, 1, 0], [], []>} : vector<9x128xf32>, vector<9x128xf32>, vector<9x9xf32> -> vector<9x9xf32>
    %134 = arith.addf %133, %5 : vector<9x9xf32>
    %cst_70 = arith.constant dense<0xFF800000> : vector<9xf32>
    %135 = vector.multi_reduction <maximumf>, %134, %cst_70 [1] : vector<9x9xf32> to vector<9xf32>
    %136 = vector.shape_cast %135 : vector<9xf32> to vector<9x1xf32>
    %137 = vector.broadcast %136 : vector<9x1xf32> to vector<9x9xf32>
    %138 = arith.subf %134, %137 : vector<9x9xf32>
    %139 = math.exp %138 : vector<9x9xf32>
    %cst_71 = arith.constant dense<0.000000e+00> : vector<9xf32>
    %140 = vector.multi_reduction <add>, %139, %cst_71 [1] : vector<9x9xf32> to vector<9xf32>
    %141 = vector.shape_cast %140 : vector<9xf32> to vector<9x1xf32>
    %142 = tpu.reciprocal %141 {approx = true} : vector<9x1xf32> -> vector<9x1xf32>
    %143 = vector.broadcast %142 : vector<9x1xf32> to vector<9x9xf32>
    %144 = arith.mulf %139, %143 : vector<9x9xf32>
    %cst_72 = arith.constant dense<0.000000e+00> : vector<9x128xf32>
    %145 = tpu.matmul %144, %132, %cst_72 {dimension_numbers = #tpu.dot_dimension_numbers<[1], [0], [0], [1], [0, 0, 1, 1], [], []>} : vector<9x9xf32>, vector<9x128xf32>, vector<9x128xf32> -> vector<9x128xf32>
    %146 = vector.extract_strided_slice %129 {offsets = [0, 128], sizes = [9, 128], strides = [1, 1]} : vector<9x768xf32> to vector<9x128xf32>
    %147 = vector.extract_strided_slice %129 {offsets = [0, 384], sizes = [9, 128], strides = [1, 1]} : vector<9x768xf32> to vector<9x128xf32>
    %148 = vector.extract_strided_slice %129 {offsets = [0, 640], sizes = [9, 128], strides = [1, 1]} : vector<9x768xf32> to vector<9x128xf32>
    %cst_73 = arith.constant dense<0.000000e+00> : vector<9x9xf32>
    %149 = tpu.matmul %146, %147, %cst_73 {dimension_numbers = #tpu.dot_dimension_numbers<[1], [1], [0], [0], [0, 0, 1, 0], [], []>} : vector<9x128xf32>, vector<9x128xf32>, vector<9x9xf32> -> vector<9x9xf32>
    %150 = arith.addf %149, %5 : vector<9x9xf32>
    %cst_74 = arith.constant dense<0xFF800000> : vector<9xf32>
    %151 = vector.multi_reduction <maximumf>, %150, %cst_74 [1] : vector<9x9xf32> to vector<9xf32>
    %152 = vector.shape_cast %151 : vector<9xf32> to vector<9x1xf32>
    %153 = vector.broadcast %152 : vector<9x1xf32> to vector<9x9xf32>
    %154 = arith.subf %150, %153 : vector<9x9xf32>
    %155 = math.exp %154 : vector<9x9xf32>
    %cst_75 = arith.constant dense<0.000000e+00> : vector<9xf32>
    %156 = vector.multi_reduction <add>, %155, %cst_75 [1] : vector<9x9xf32> to vector<9xf32>
    %157 = vector.shape_cast %156 : vector<9xf32> to vector<9x1xf32>
    %158 = tpu.reciprocal %157 {approx = true} : vector<9x1xf32> -> vector<9x1xf32>
    %159 = vector.broadcast %158 : vector<9x1xf32> to vector<9x9xf32>
    %160 = arith.mulf %155, %159 : vector<9x9xf32>
    %cst_76 = arith.constant dense<0.000000e+00> : vector<9x128xf32>
    %161 = tpu.matmul %160, %148, %cst_76 {dimension_numbers = #tpu.dot_dimension_numbers<[1], [0], [0], [1], [0, 0, 1, 1], [], []>} : vector<9x9xf32>, vector<9x128xf32>, vector<9x128xf32> -> vector<9x128xf32>
    %162 = tpu.concatenate %145, %161 in 1 : vector<9x128xf32>, vector<9x128xf32> -> vector<9x256xf32>
    %c1_77 = arith.constant 1 : index
    %c0_78 = arith.constant 0 : index
    %c0_79 = arith.constant 0 : index
    %163 = vector.load %arg5[%c1_77, %c0_78, %c0_79] : memref<3x256x130xf32, #tpu.memory_space<vmem>>, vector<1x256x130xf32>
    %164 = vector.shape_cast %163 : vector<1x256x130xf32> to vector<256x130xf32>
    %cst_80 = arith.constant dense<0.000000e+00> : vector<9x130xf32>
    %165 = tpu.matmul %162, %164, %cst_80 {dimension_numbers = #tpu.dot_dimension_numbers<[1], [0], [0], [1], [0, 0, 1, 1], [], []>} : vector<9x256xf32>, vector<256x130xf32>, vector<9x130xf32> -> vector<9x130xf32>
    %c1_81 = arith.constant 1 : index
    %c0_82 = arith.constant 0 : index
    %c0_83 = arith.constant 0 : index
    %166 = vector.load %arg6[%c1_81, %c0_82, %c0_83] : memref<3x1x130xf32, #tpu.memory_space<vmem>>, vector<1x1x130xf32>
    %167 = vector.shape_cast %166 : vector<1x1x130xf32> to vector<1x130xf32>
    %168 = vector.broadcast %167 : vector<1x130xf32> to vector<9x130xf32>
    %169 = arith.addf %165, %168 : vector<9x130xf32>
    %170 = arith.addf %122, %169 : vector<9x130xf32>
    %c1_84 = arith.constant 1 : index
    %c0_85 = arith.constant 0 : index
    %c0_86 = arith.constant 0 : index
    %171 = vector.load %arg7[%c1_84, %c0_85, %c0_86] : memref<3x1x130xf32, #tpu.memory_space<vmem>>, vector<1x1x130xf32>
    %172 = vector.shape_cast %171 : vector<1x1x130xf32> to vector<1x130xf32>
    %c1_87 = arith.constant 1 : index
    %c0_88 = arith.constant 0 : index
    %c0_89 = arith.constant 0 : index
    %173 = vector.load %arg8[%c1_87, %c0_88, %c0_89] : memref<3x1x130xf32, #tpu.memory_space<vmem>>, vector<1x1x130xf32>
    %174 = vector.shape_cast %173 : vector<1x1x130xf32> to vector<1x130xf32>
    %cst_90 = arith.constant dense<0.000000e+00> : vector<9xf32>
    %175 = vector.multi_reduction <add>, %170, %cst_90 [1] : vector<9x130xf32> to vector<9xf32>
    %176 = vector.shape_cast %175 : vector<9xf32> to vector<9x1xf32>
    %cst_91 = arith.constant 1.300000e+02 : f32
    %177 = vector.broadcast %cst_91 : f32 to vector<9x1xf32>
    %178 = arith.divf %176, %177 : vector<9x1xf32>
    %179 = vector.broadcast %178 : vector<9x1xf32> to vector<9x130xf32>
    %180 = arith.subf %170, %179 : vector<9x130xf32>
    %181 = arith.mulf %180, %180 : vector<9x130xf32>
    %cst_92 = arith.constant dense<0.000000e+00> : vector<9xf32>
    %182 = vector.multi_reduction <add>, %181, %cst_92 [1] : vector<9x130xf32> to vector<9xf32>
    %183 = vector.shape_cast %182 : vector<9xf32> to vector<9x1xf32>
    %cst_93 = arith.constant 1.300000e+02 : f32
    %184 = vector.broadcast %cst_93 : f32 to vector<9x1xf32>
    %185 = arith.divf %183, %184 : vector<9x1xf32>
    %186 = vector.broadcast %178 : vector<9x1xf32> to vector<9x130xf32>
    %187 = arith.subf %170, %186 : vector<9x130xf32>
    %cst_94 = arith.constant 9.99999974E-6 : f32
    %188 = vector.broadcast %cst_94 : f32 to vector<9x1xf32>
    %189 = arith.addf %185, %188 : vector<9x1xf32>
    %190 = math.rsqrt %189 : vector<9x1xf32>
    %191 = vector.broadcast %190 : vector<9x1xf32> to vector<9x130xf32>
    %192 = arith.mulf %187, %191 : vector<9x130xf32>
    %193 = vector.broadcast %172 : vector<1x130xf32> to vector<9x130xf32>
    %194 = arith.mulf %192, %193 : vector<9x130xf32>
    %195 = vector.broadcast %174 : vector<1x130xf32> to vector<9x130xf32>
    %196 = arith.addf %194, %195 : vector<9x130xf32>
    %c1_95 = arith.constant 1 : index
    %c0_96 = arith.constant 0 : index
    %c0_97 = arith.constant 0 : index
    %197 = vector.load %arg9[%c1_95, %c0_96, %c0_97] : memref<3x130x512xf32, #tpu.memory_space<vmem>>, vector<1x130x512xf32>
    %198 = vector.shape_cast %197 : vector<1x130x512xf32> to vector<130x512xf32>
    %cst_98 = arith.constant dense<0.000000e+00> : vector<9x512xf32>
    %199 = tpu.matmul %196, %198, %cst_98 {dimension_numbers = #tpu.dot_dimension_numbers<[1], [0], [0], [1], [0, 0, 1, 1], [], []>} : vector<9x130xf32>, vector<130x512xf32>, vector<9x512xf32> -> vector<9x512xf32>
    %c1_99 = arith.constant 1 : index
    %c0_100 = arith.constant 0 : index
    %c0_101 = arith.constant 0 : index
    %200 = vector.load %arg10[%c1_99, %c0_100, %c0_101] : memref<3x1x512xf32, #tpu.memory_space<vmem>>, vector<1x1x512xf32>
    %201 = vector.shape_cast %200 : vector<1x1x512xf32> to vector<1x512xf32>
    %202 = vector.broadcast %201 : vector<1x512xf32> to vector<9x512xf32>
    %203 = arith.addf %199, %202 : vector<9x512xf32>
    %cst_102 = arith.constant 0.000000e+00 : f32
    %204 = vector.broadcast %cst_102 : f32 to vector<9x512xf32>
    %205 = arith.maximumf %203, %204 : vector<9x512xf32>
    %c1_103 = arith.constant 1 : index
    %c0_104 = arith.constant 0 : index
    %c0_105 = arith.constant 0 : index
    %206 = vector.load %arg11[%c1_103, %c0_104, %c0_105] : memref<3x512x130xf32, #tpu.memory_space<vmem>>, vector<1x512x130xf32>
    %207 = vector.shape_cast %206 : vector<1x512x130xf32> to vector<512x130xf32>
    %cst_106 = arith.constant dense<0.000000e+00> : vector<9x130xf32>
    %208 = tpu.matmul %205, %207, %cst_106 {dimension_numbers = #tpu.dot_dimension_numbers<[1], [0], [0], [1], [0, 0, 1, 1], [], []>} : vector<9x512xf32>, vector<512x130xf32>, vector<9x130xf32> -> vector<9x130xf32>
    %c1_107 = arith.constant 1 : index
    %c0_108 = arith.constant 0 : index
    %c0_109 = arith.constant 0 : index
    %209 = vector.load %arg12[%c1_107, %c0_108, %c0_109] : memref<3x1x130xf32, #tpu.memory_space<vmem>>, vector<1x1x130xf32>
    %210 = vector.shape_cast %209 : vector<1x1x130xf32> to vector<1x130xf32>
    %211 = vector.broadcast %210 : vector<1x130xf32> to vector<9x130xf32>
    %212 = arith.addf %208, %211 : vector<9x130xf32>
    %213 = arith.addf %196, %212 : vector<9x130xf32>
    %c1_110 = arith.constant 1 : index
    %c0_111 = arith.constant 0 : index
    %c0_112 = arith.constant 0 : index
    %214 = vector.load %arg13[%c1_110, %c0_111, %c0_112] : memref<3x1x130xf32, #tpu.memory_space<vmem>>, vector<1x1x130xf32>
    %215 = vector.shape_cast %214 : vector<1x1x130xf32> to vector<1x130xf32>
    %c1_113 = arith.constant 1 : index
    %c0_114 = arith.constant 0 : index
    %c0_115 = arith.constant 0 : index
    %216 = vector.load %arg14[%c1_113, %c0_114, %c0_115] : memref<3x1x130xf32, #tpu.memory_space<vmem>>, vector<1x1x130xf32>
    %217 = vector.shape_cast %216 : vector<1x1x130xf32> to vector<1x130xf32>
    %cst_116 = arith.constant dense<0.000000e+00> : vector<9xf32>
    %218 = vector.multi_reduction <add>, %213, %cst_116 [1] : vector<9x130xf32> to vector<9xf32>
    %219 = vector.shape_cast %218 : vector<9xf32> to vector<9x1xf32>
    %cst_117 = arith.constant 1.300000e+02 : f32
    %220 = vector.broadcast %cst_117 : f32 to vector<9x1xf32>
    %221 = arith.divf %219, %220 : vector<9x1xf32>
    %222 = vector.broadcast %221 : vector<9x1xf32> to vector<9x130xf32>
    %223 = arith.subf %213, %222 : vector<9x130xf32>
    %224 = arith.mulf %223, %223 : vector<9x130xf32>
    %cst_118 = arith.constant dense<0.000000e+00> : vector<9xf32>
    %225 = vector.multi_reduction <add>, %224, %cst_118 [1] : vector<9x130xf32> to vector<9xf32>
    %226 = vector.shape_cast %225 : vector<9xf32> to vector<9x1xf32>
    %cst_119 = arith.constant 1.300000e+02 : f32
    %227 = vector.broadcast %cst_119 : f32 to vector<9x1xf32>
    %228 = arith.divf %226, %227 : vector<9x1xf32>
    %229 = vector.broadcast %221 : vector<9x1xf32> to vector<9x130xf32>
    %230 = arith.subf %213, %229 : vector<9x130xf32>
    %cst_120 = arith.constant 9.99999974E-6 : f32
    %231 = vector.broadcast %cst_120 : f32 to vector<9x1xf32>
    %232 = arith.addf %228, %231 : vector<9x1xf32>
    %233 = math.rsqrt %232 : vector<9x1xf32>
    %234 = vector.broadcast %233 : vector<9x1xf32> to vector<9x130xf32>
    %235 = arith.mulf %230, %234 : vector<9x130xf32>
    %236 = vector.broadcast %215 : vector<1x130xf32> to vector<9x130xf32>
    %237 = arith.mulf %235, %236 : vector<9x130xf32>
    %238 = vector.broadcast %217 : vector<1x130xf32> to vector<9x130xf32>
    %239 = arith.addf %237, %238 : vector<9x130xf32>
    %c2 = arith.constant 2 : index
    %c0_121 = arith.constant 0 : index
    %c0_122 = arith.constant 0 : index
    %240 = vector.load %arg3[%c2, %c0_121, %c0_122] : memref<3x130x768xf32, #tpu.memory_space<vmem>>, vector<1x130x768xf32>
    %241 = vector.shape_cast %240 : vector<1x130x768xf32> to vector<130x768xf32>
    %cst_123 = arith.constant dense<0.000000e+00> : vector<9x768xf32>
    %242 = tpu.matmul %239, %241, %cst_123 {dimension_numbers = #tpu.dot_dimension_numbers<[1], [0], [0], [1], [0, 0, 1, 1], [], []>} : vector<9x130xf32>, vector<130x768xf32>, vector<9x768xf32> -> vector<9x768xf32>
    %c2_124 = arith.constant 2 : index
    %c0_125 = arith.constant 0 : index
    %c0_126 = arith.constant 0 : index
    %243 = vector.load %arg4[%c2_124, %c0_125, %c0_126] : memref<3x1x768xf32, #tpu.memory_space<vmem>>, vector<1x1x768xf32>
    %244 = vector.shape_cast %243 : vector<1x1x768xf32> to vector<1x768xf32>
    %245 = vector.broadcast %244 : vector<1x768xf32> to vector<9x768xf32>
    %246 = arith.addf %242, %245 : vector<9x768xf32>
    %247 = vector.extract_strided_slice %246 {offsets = [0, 0], sizes = [9, 128], strides = [1, 1]} : vector<9x768xf32> to vector<9x128xf32>
    %248 = vector.extract_strided_slice %246 {offsets = [0, 256], sizes = [9, 128], strides = [1, 1]} : vector<9x768xf32> to vector<9x128xf32>
    %249 = vector.extract_strided_slice %246 {offsets = [0, 512], sizes = [9, 128], strides = [1, 1]} : vector<9x768xf32> to vector<9x128xf32>
    %cst_127 = arith.constant dense<0.000000e+00> : vector<9x9xf32>
    %250 = tpu.matmul %247, %248, %cst_127 {dimension_numbers = #tpu.dot_dimension_numbers<[1], [1], [0], [0], [0, 0, 1, 0], [], []>} : vector<9x128xf32>, vector<9x128xf32>, vector<9x9xf32> -> vector<9x9xf32>
    %251 = arith.addf %250, %5 : vector<9x9xf32>
    %cst_128 = arith.constant dense<0xFF800000> : vector<9xf32>
    %252 = vector.multi_reduction <maximumf>, %251, %cst_128 [1] : vector<9x9xf32> to vector<9xf32>
    %253 = vector.shape_cast %252 : vector<9xf32> to vector<9x1xf32>
    %254 = vector.broadcast %253 : vector<9x1xf32> to vector<9x9xf32>
    %255 = arith.subf %251, %254 : vector<9x9xf32>
    %256 = math.exp %255 : vector<9x9xf32>
    %cst_129 = arith.constant dense<0.000000e+00> : vector<9xf32>
    %257 = vector.multi_reduction <add>, %256, %cst_129 [1] : vector<9x9xf32> to vector<9xf32>
    %258 = vector.shape_cast %257 : vector<9xf32> to vector<9x1xf32>
    %259 = tpu.reciprocal %258 {approx = true} : vector<9x1xf32> -> vector<9x1xf32>
    %260 = vector.broadcast %259 : vector<9x1xf32> to vector<9x9xf32>
    %261 = arith.mulf %256, %260 : vector<9x9xf32>
    %cst_130 = arith.constant dense<0.000000e+00> : vector<9x128xf32>
    %262 = tpu.matmul %261, %249, %cst_130 {dimension_numbers = #tpu.dot_dimension_numbers<[1], [0], [0], [1], [0, 0, 1, 1], [], []>} : vector<9x9xf32>, vector<9x128xf32>, vector<9x128xf32> -> vector<9x128xf32>
    %263 = vector.extract_strided_slice %246 {offsets = [0, 128], sizes = [9, 128], strides = [1, 1]} : vector<9x768xf32> to vector<9x128xf32>
    %264 = vector.extract_strided_slice %246 {offsets = [0, 384], sizes = [9, 128], strides = [1, 1]} : vector<9x768xf32> to vector<9x128xf32>
    %265 = vector.extract_strided_slice %246 {offsets = [0, 640], sizes = [9, 128], strides = [1, 1]} : vector<9x768xf32> to vector<9x128xf32>
    %cst_131 = arith.constant dense<0.000000e+00> : vector<9x9xf32>
    %266 = tpu.matmul %263, %264, %cst_131 {dimension_numbers = #tpu.dot_dimension_numbers<[1], [1], [0], [0], [0, 0, 1, 0], [], []>} : vector<9x128xf32>, vector<9x128xf32>, vector<9x9xf32> -> vector<9x9xf32>
    %267 = arith.addf %266, %5 : vector<9x9xf32>
    %cst_132 = arith.constant dense<0xFF800000> : vector<9xf32>
    %268 = vector.multi_reduction <maximumf>, %267, %cst_132 [1] : vector<9x9xf32> to vector<9xf32>
    %269 = vector.shape_cast %268 : vector<9xf32> to vector<9x1xf32>
    %270 = vector.broadcast %269 : vector<9x1xf32> to vector<9x9xf32>
    %271 = arith.subf %267, %270 : vector<9x9xf32>
    %272 = math.exp %271 : vector<9x9xf32>
    %cst_133 = arith.constant dense<0.000000e+00> : vector<9xf32>
    %273 = vector.multi_reduction <add>, %272, %cst_133 [1] : vector<9x9xf32> to vector<9xf32>
    %274 = vector.shape_cast %273 : vector<9xf32> to vector<9x1xf32>
    %275 = tpu.reciprocal %274 {approx = true} : vector<9x1xf32> -> vector<9x1xf32>
    %276 = vector.broadcast %275 : vector<9x1xf32> to vector<9x9xf32>
    %277 = arith.mulf %272, %276 : vector<9x9xf32>
    %cst_134 = arith.constant dense<0.000000e+00> : vector<9x128xf32>
    %278 = tpu.matmul %277, %265, %cst_134 {dimension_numbers = #tpu.dot_dimension_numbers<[1], [0], [0], [1], [0, 0, 1, 1], [], []>} : vector<9x9xf32>, vector<9x128xf32>, vector<9x128xf32> -> vector<9x128xf32>
    %279 = tpu.concatenate %262, %278 in 1 : vector<9x128xf32>, vector<9x128xf32> -> vector<9x256xf32>
    %c2_135 = arith.constant 2 : index
    %c0_136 = arith.constant 0 : index
    %c0_137 = arith.constant 0 : index
    %280 = vector.load %arg5[%c2_135, %c0_136, %c0_137] : memref<3x256x130xf32, #tpu.memory_space<vmem>>, vector<1x256x130xf32>
    %281 = vector.shape_cast %280 : vector<1x256x130xf32> to vector<256x130xf32>
    %cst_138 = arith.constant dense<0.000000e+00> : vector<9x130xf32>
    %282 = tpu.matmul %279, %281, %cst_138 {dimension_numbers = #tpu.dot_dimension_numbers<[1], [0], [0], [1], [0, 0, 1, 1], [], []>} : vector<9x256xf32>, vector<256x130xf32>, vector<9x130xf32> -> vector<9x130xf32>
    %c2_139 = arith.constant 2 : index
    %c0_140 = arith.constant 0 : index
    %c0_141 = arith.constant 0 : index
    %283 = vector.load %arg6[%c2_139, %c0_140, %c0_141] : memref<3x1x130xf32, #tpu.memory_space<vmem>>, vector<1x1x130xf32>
    %284 = vector.shape_cast %283 : vector<1x1x130xf32> to vector<1x130xf32>
    %285 = vector.broadcast %284 : vector<1x130xf32> to vector<9x130xf32>
    %286 = arith.addf %282, %285 : vector<9x130xf32>
    %287 = arith.addf %239, %286 : vector<9x130xf32>
    %c2_142 = arith.constant 2 : index
    %c0_143 = arith.constant 0 : index
    %c0_144 = arith.constant 0 : index
    %288 = vector.load %arg7[%c2_142, %c0_143, %c0_144] : memref<3x1x130xf32, #tpu.memory_space<vmem>>, vector<1x1x130xf32>
    %289 = vector.shape_cast %288 : vector<1x1x130xf32> to vector<1x130xf32>
    %c2_145 = arith.constant 2 : index
    %c0_146 = arith.constant 0 : index
    %c0_147 = arith.constant 0 : index
    %290 = vector.load %arg8[%c2_145, %c0_146, %c0_147] : memref<3x1x130xf32, #tpu.memory_space<vmem>>, vector<1x1x130xf32>
    %291 = vector.shape_cast %290 : vector<1x1x130xf32> to vector<1x130xf32>
    %cst_148 = arith.constant dense<0.000000e+00> : vector<9xf32>
    %292 = vector.multi_reduction <add>, %287, %cst_148 [1] : vector<9x130xf32> to vector<9xf32>
    %293 = vector.shape_cast %292 : vector<9xf32> to vector<9x1xf32>
    %cst_149 = arith.constant 1.300000e+02 : f32
    %294 = vector.broadcast %cst_149 : f32 to vector<9x1xf32>
    %295 = arith.divf %293, %294 : vector<9x1xf32>
    %296 = vector.broadcast %295 : vector<9x1xf32> to vector<9x130xf32>
    %297 = arith.subf %287, %296 : vector<9x130xf32>
    %298 = arith.mulf %297, %297 : vector<9x130xf32>
    %cst_150 = arith.constant dense<0.000000e+00> : vector<9xf32>
    %299 = vector.multi_reduction <add>, %298, %cst_150 [1] : vector<9x130xf32> to vector<9xf32>
    %300 = vector.shape_cast %299 : vector<9xf32> to vector<9x1xf32>
    %cst_151 = arith.constant 1.300000e+02 : f32
    %301 = vector.broadcast %cst_151 : f32 to vector<9x1xf32>
    %302 = arith.divf %300, %301 : vector<9x1xf32>
    %303 = vector.broadcast %295 : vector<9x1xf32> to vector<9x130xf32>
    %304 = arith.subf %287, %303 : vector<9x130xf32>
    %cst_152 = arith.constant 9.99999974E-6 : f32
    %305 = vector.broadcast %cst_152 : f32 to vector<9x1xf32>
    %306 = arith.addf %302, %305 : vector<9x1xf32>
    %307 = math.rsqrt %306 : vector<9x1xf32>
    %308 = vector.broadcast %307 : vector<9x1xf32> to vector<9x130xf32>
    %309 = arith.mulf %304, %308 : vector<9x130xf32>
    %310 = vector.broadcast %289 : vector<1x130xf32> to vector<9x130xf32>
    %311 = arith.mulf %309, %310 : vector<9x130xf32>
    %312 = vector.broadcast %291 : vector<1x130xf32> to vector<9x130xf32>
    %313 = arith.addf %311, %312 : vector<9x130xf32>
    %c2_153 = arith.constant 2 : index
    %c0_154 = arith.constant 0 : index
    %c0_155 = arith.constant 0 : index
    %314 = vector.load %arg9[%c2_153, %c0_154, %c0_155] : memref<3x130x512xf32, #tpu.memory_space<vmem>>, vector<1x130x512xf32>
    %315 = vector.shape_cast %314 : vector<1x130x512xf32> to vector<130x512xf32>
    %cst_156 = arith.constant dense<0.000000e+00> : vector<9x512xf32>
    %316 = tpu.matmul %313, %315, %cst_156 {dimension_numbers = #tpu.dot_dimension_numbers<[1], [0], [0], [1], [0, 0, 1, 1], [], []>} : vector<9x130xf32>, vector<130x512xf32>, vector<9x512xf32> -> vector<9x512xf32>
    %c2_157 = arith.constant 2 : index
    %c0_158 = arith.constant 0 : index
    %c0_159 = arith.constant 0 : index
    %317 = vector.load %arg10[%c2_157, %c0_158, %c0_159] : memref<3x1x512xf32, #tpu.memory_space<vmem>>, vector<1x1x512xf32>
    %318 = vector.shape_cast %317 : vector<1x1x512xf32> to vector<1x512xf32>
    %319 = vector.broadcast %318 : vector<1x512xf32> to vector<9x512xf32>
    %320 = arith.addf %316, %319 : vector<9x512xf32>
    %cst_160 = arith.constant 0.000000e+00 : f32
    %321 = vector.broadcast %cst_160 : f32 to vector<9x512xf32>
    %322 = arith.maximumf %320, %321 : vector<9x512xf32>
    %c2_161 = arith.constant 2 : index
    %c0_162 = arith.constant 0 : index
    %c0_163 = arith.constant 0 : index
    %323 = vector.load %arg11[%c2_161, %c0_162, %c0_163] : memref<3x512x130xf32, #tpu.memory_space<vmem>>, vector<1x512x130xf32>
    %324 = vector.shape_cast %323 : vector<1x512x130xf32> to vector<512x130xf32>
    %cst_164 = arith.constant dense<0.000000e+00> : vector<9x130xf32>
    %325 = tpu.matmul %322, %324, %cst_164 {dimension_numbers = #tpu.dot_dimension_numbers<[1], [0], [0], [1], [0, 0, 1, 1], [], []>} : vector<9x512xf32>, vector<512x130xf32>, vector<9x130xf32> -> vector<9x130xf32>
    %c2_165 = arith.constant 2 : index
    %c0_166 = arith.constant 0 : index
    %c0_167 = arith.constant 0 : index
    %326 = vector.load %arg12[%c2_165, %c0_166, %c0_167] : memref<3x1x130xf32, #tpu.memory_space<vmem>>, vector<1x1x130xf32>
    %327 = vector.shape_cast %326 : vector<1x1x130xf32> to vector<1x130xf32>
    %328 = vector.broadcast %327 : vector<1x130xf32> to vector<9x130xf32>
    %329 = arith.addf %325, %328 : vector<9x130xf32>
    %330 = arith.addf %313, %329 : vector<9x130xf32>
    %c2_168 = arith.constant 2 : index
    %c0_169 = arith.constant 0 : index
    %c0_170 = arith.constant 0 : index
    %331 = vector.load %arg13[%c2_168, %c0_169, %c0_170] : memref<3x1x130xf32, #tpu.memory_space<vmem>>, vector<1x1x130xf32>
    %332 = vector.shape_cast %331 : vector<1x1x130xf32> to vector<1x130xf32>
    %c2_171 = arith.constant 2 : index
    %c0_172 = arith.constant 0 : index
    %c0_173 = arith.constant 0 : index
    %333 = vector.load %arg14[%c2_171, %c0_172, %c0_173] : memref<3x1x130xf32, #tpu.memory_space<vmem>>, vector<1x1x130xf32>
    %334 = vector.shape_cast %333 : vector<1x1x130xf32> to vector<1x130xf32>
    %cst_174 = arith.constant dense<0.000000e+00> : vector<9xf32>
    %335 = vector.multi_reduction <add>, %330, %cst_174 [1] : vector<9x130xf32> to vector<9xf32>
    %336 = vector.shape_cast %335 : vector<9xf32> to vector<9x1xf32>
    %cst_175 = arith.constant 1.300000e+02 : f32
    %337 = vector.broadcast %cst_175 : f32 to vector<9x1xf32>
    %338 = arith.divf %336, %337 : vector<9x1xf32>
    %339 = vector.broadcast %338 : vector<9x1xf32> to vector<9x130xf32>
    %340 = arith.subf %330, %339 : vector<9x130xf32>
    %341 = arith.mulf %340, %340 : vector<9x130xf32>
    %cst_176 = arith.constant dense<0.000000e+00> : vector<9xf32>
    %342 = vector.multi_reduction <add>, %341, %cst_176 [1] : vector<9x130xf32> to vector<9xf32>
    %343 = vector.shape_cast %342 : vector<9xf32> to vector<9x1xf32>
    %cst_177 = arith.constant 1.300000e+02 : f32
    %344 = vector.broadcast %cst_177 : f32 to vector<9x1xf32>
    %345 = arith.divf %343, %344 : vector<9x1xf32>
    %346 = vector.broadcast %338 : vector<9x1xf32> to vector<9x130xf32>
    %347 = arith.subf %330, %346 : vector<9x130xf32>
    %cst_178 = arith.constant 9.99999974E-6 : f32
    %348 = vector.broadcast %cst_178 : f32 to vector<9x1xf32>
    %349 = arith.addf %345, %348 : vector<9x1xf32>
    %350 = math.rsqrt %349 : vector<9x1xf32>
    %351 = vector.broadcast %350 : vector<9x1xf32> to vector<9x130xf32>
    %352 = arith.mulf %347, %351 : vector<9x130xf32>
    %353 = vector.broadcast %332 : vector<1x130xf32> to vector<9x130xf32>
    %354 = arith.mulf %352, %353 : vector<9x130xf32>
    %355 = vector.broadcast %334 : vector<1x130xf32> to vector<9x130xf32>
    %356 = arith.addf %354, %355 : vector<9x130xf32>
    %c0_179 = arith.constant 0 : index
    %c0_180 = arith.constant 0 : index
    %c0_181 = arith.constant 0 : index
    %357 = vector.load %arg17[%c0_179, %c0_180, %c0_181] : memref<1x9x130xf32, #tpu.memory_space<vmem>>, vector<1x9x130xf32>
    %358 = vector.shape_cast %357 : vector<1x9x130xf32> to vector<9x130xf32>
    %359 = vector.shape_cast %356 : vector<9x130xf32> to vector<1x9x130xf32>
    tpu.vector_store %arg17[%c0_179, %c0_180, %c0_181], %359 {strides = array<i32>} : memref<1x9x130xf32, #tpu.memory_space<vmem>>, vector<1x9x130xf32>,
    %360 = vector.extract_strided_slice %356 {offsets = [0, 0], sizes = [1, 130], strides = [1, 1]} : vector<9x130xf32> to vector<1x130xf32>
    %c0_182 = arith.constant 0 : index
    %c0_183 = arith.constant 0 : index
    %361 = vector.load %arg15[%c0_182, %c0_183] : memref<130x1xf32, #tpu.memory_space<vmem>>, vector<130x1xf32>
    %cst_184 = arith.constant dense<0.000000e+00> : vector<1x1xf32>
    %362 = tpu.matmul %360, %361, %cst_184 {dimension_numbers = #tpu.dot_dimension_numbers<[1], [0], [0], [1], [0, 0, 1, 1], [], []>} : vector<1x130xf32>, vector<130x1xf32>, vector<1x1xf32> -> vector<1x1xf32>
    %c0_185 = arith.constant 0 : index
    %c0_186 = arith.constant 0 : index
    %363 = vector.load %arg16[%c0_185, %c0_186] : memref<1x1xf32, #tpu.memory_space<vmem>>, vector<1x1xf32>
    %364 = arith.addf %362, %363 : vector<1x1xf32>
    %c0_187 = arith.constant 0 : index
    %c0_188 = arith.constant 0 : index
    %c0_189 = arith.constant 0 : index
    %365 = vector.load %arg18[%c0_187, %c0_188, %c0_189] : memref<1x1x1xf32, #tpu.memory_space<vmem>>, vector<1x1x1xf32>
    %366 = vector.shape_cast %365 : vector<1x1x1xf32> to vector<1x1xf32>
    %367 = vector.shape_cast %364 : vector<1x1xf32> to vector<1x1x1xf32>
    tpu.vector_store %arg18[%c0_187, %c0_188, %c0_189], %367 {strides = array<i32>} : memref<1x1x1xf32, #tpu.memory_space<vmem>>, vector<1x1x1xf32>,
    return
  }
  func.func @transform_0(%arg0: i32) -> (i32, i32, i32) {
    %c0_i32 = arith.constant 0 : i32
    %c0_i32_0 = arith.constant 0 : i32
    %c0_i32_1 = arith.constant 0 : i32
    return %arg0, %c0_i32, %c0_i32_0 : i32, i32, i32
  }
  func.func @transform_1(%arg0: i32) -> (i32, i32, i32) {
    %c0_i32 = arith.constant 0 : i32
    %c0_i32_0 = arith.constant 0 : i32
    %c0_i32_1 = arith.constant 0 : i32
    return %arg0, %c0_i32, %c0_i32_0 : i32, i32, i32
  }
  func.func @transform_2(%arg0: i32) -> (i32, i32, i32) {
    %c0_i32 = arith.constant 0 : i32
    %c0_i32_0 = arith.constant 0 : i32
    %c0_i32_1 = arith.constant 0 : i32
    %c0_i32_2 = arith.constant 0 : i32
    return %c0_i32, %c0_i32_0, %c0_i32_1 : i32, i32, i32
  }
  func.func @transform_3(%arg0: i32) -> (i32, i32, i32) {
    %c0_i32 = arith.constant 0 : i32
    %c0_i32_0 = arith.constant 0 : i32
    %c0_i32_1 = arith.constant 0 : i32
    %c0_i32_2 = arith.constant 0 : i32
    return %c0_i32, %c0_i32_0, %c0_i32_1 : i32, i32, i32
  }
  func.func @transform_4(%arg0: i32) -> (i32, i32, i32) {
    %c0_i32 = arith.constant 0 : i32
    %c0_i32_0 = arith.constant 0 : i32
    %c0_i32_1 = arith.constant 0 : i32
    %c0_i32_2 = arith.constant 0 : i32
    return %c0_i32, %c0_i32_0, %c0_i32_1 : i32, i32, i32
  }
  func.func @transform_5(%arg0: i32) -> (i32, i32, i32) {
    %c0_i32 = arith.constant 0 : i32
    %c0_i32_0 = arith.constant 0 : i32
    %c0_i32_1 = arith.constant 0 : i32
    %c0_i32_2 = arith.constant 0 : i32
    return %c0_i32, %c0_i32_0, %c0_i32_1 : i32, i32, i32
  }
  func.func @transform_6(%arg0: i32) -> (i32, i32, i32) {
    %c0_i32 = arith.constant 0 : i32
    %c0_i32_0 = arith.constant 0 : i32
    %c0_i32_1 = arith.constant 0 : i32
    %c0_i32_2 = arith.constant 0 : i32
    return %c0_i32, %c0_i32_0, %c0_i32_1 : i32, i32, i32
  }
  func.func @transform_7(%arg0: i32) -> (i32, i32, i32) {
    %c0_i32 = arith.constant 0 : i32
    %c0_i32_0 = arith.constant 0 : i32
    %c0_i32_1 = arith.constant 0 : i32
    %c0_i32_2 = arith.constant 0 : i32
    return %c0_i32, %c0_i32_0, %c0_i32_1 : i32, i32, i32
  }
  func.func @transform_8(%arg0: i32) -> (i32, i32, i32) {
    %c0_i32 = arith.constant 0 : i32
    %c0_i32_0 = arith.constant 0 : i32
    %c0_i32_1 = arith.constant 0 : i32
    %c0_i32_2 = arith.constant 0 : i32
    return %c0_i32, %c0_i32_0, %c0_i32_1 : i32, i32, i32
  }
  func.func @transform_9(%arg0: i32) -> (i32, i32, i32) {
    %c0_i32 = arith.constant 0 : i32
    %c0_i32_0 = arith.constant 0 : i32
    %c0_i32_1 = arith.constant 0 : i32
    %c0_i32_2 = arith.constant 0 : i32
    return %c0_i32, %c0_i32_0, %c0_i32_1 : i32, i32, i32
  }
  func.func @transform_10(%arg0: i32) -> (i32, i32, i32) {
    %c0_i32 = arith.constant 0 : i32
    %c0_i32_0 = arith.constant 0 : i32
    %c0_i32_1 = arith.constant 0 : i32
    %c0_i32_2 = arith.constant 0 : i32
    return %c0_i32, %c0_i32_0, %c0_i32_1 : i32, i32, i32
  }
  func.func @transform_11(%arg0: i32) -> (i32, i32, i32) {
    %c0_i32 = arith.constant 0 : i32
    %c0_i32_0 = arith.constant 0 : i32
    %c0_i32_1 = arith.constant 0 : i32
    %c0_i32_2 = arith.constant 0 : i32
    return %c0_i32, %c0_i32_0, %c0_i32_1 : i32, i32, i32
  }
  func.func @transform_12(%arg0: i32) -> (i32, i32, i32) {
    %c0_i32 = arith.constant 0 : i32
    %c0_i32_0 = arith.constant 0 : i32
    %c0_i32_1 = arith.constant 0 : i32
    %c0_i32_2 = arith.constant 0 : i32
    return %c0_i32, %c0_i32_0, %c0_i32_1 : i32, i32, i32
  }
  func.func @transform_13(%arg0: i32) -> (i32, i32, i32) {
    %c0_i32 = arith.constant 0 : i32
    %c0_i32_0 = arith.constant 0 : i32
    %c0_i32_1 = arith.constant 0 : i32
    %c0_i32_2 = arith.constant 0 : i32
    return %c0_i32, %c0_i32_0, %c0_i32_1 : i32, i32, i32
  }
  func.func @transform_14(%arg0: i32) -> (i32, i32) {
    %c0_i32 = arith.constant 0 : i32
    %c0_i32_0 = arith.constant 0 : i32
    %c0_i32_1 = arith.constant 0 : i32
    return %c0_i32, %c0_i32_0 : i32, i32
  }
  func.func @transform_15(%arg0: i32) -> (i32, i32) {
    %c0_i32 = arith.constant 0 : i32
    %c0_i32_0 = arith.constant 0 : i32
    %c0_i32_1 = arith.constant 0 : i32
    return %c0_i32, %c0_i32_0 : i32, i32
  }
  func.func @transform_16(%arg0: i32) -> (i32, i32, i32) {
    %c0_i32 = arith.constant 0 : i32
    %c0_i32_0 = arith.constant 0 : i32
    %c0_i32_1 = arith.constant 0 : i32
    return %arg0, %c0_i32, %c0_i32_0 : i32, i32, i32
  }
  func.func @transform_17(%arg0: i32) -> (i32, i32, i32) {
    %c0_i32 = arith.constant 0 : i32
    %c0_i32_0 = arith.constant 0 : i32
    %c0_i32_1 = arith.constant 0 : i32
    return %arg0, %c0_i32, %c0_i32_0 : i32, i32, i32
  }
}

</mosaic_0001>

<llo_original>
// kernel: audio_transformers_forward.1
$region0: #{audio_transformers_forward.1}
  #allocation0 [shape = 'u32[]', space=smem, size = 0x4, offset = 0x4, fixed_abs, tag = 'smem constant byte address 0x4 - core index']
  #allocation1 [shape = 'u32[144,128]{1,0:T(1,128)}', space=vmem, size = 0x12000, scoped, tag = 'internal scratch']
  #allocation2 [shape = 'f32[1,1]{1,0:T(1,128)S(1)}', space=vmem, size = 0x200, scoped, tag = 'scoped memory for audio_transformers_forward.1']
  %s0 = inlined_call_operand.vmem [shape: f32[2,9,130], index: 0, kind: input, shape index: {}]
  %s1 = inlined_call_operand.vmem [shape: f32[2,1,9], index: 1, kind: input, shape index: {}]
  %s2 = inlined_call_operand.vmem [shape: f32[3,130,768], index: 2, kind: input, shape index: {}]
  %s3 = inlined_call_operand.vmem [shape: f32[3,1,768], index: 3, kind: input, shape index: {}]
  %s4 = inlined_call_operand.vmem [shape: f32[3,256,130], index: 4, kind: input, shape index: {}]
  %s5 = inlined_call_operand.vmem [shape: f32[3,1,130], index: 5, kind: input, shape index: {}]
  %s6 = inlined_call_operand.vmem [shape: f32[3,1,130], index: 6, kind: input, shape index: {}]
  %s7 = inlined_call_operand.vmem [shape: f32[3,1,130], index: 7, kind: input, shape index: {}]
  %s8 = inlined_call_operand.vmem [shape: f32[3,130,512], index: 8, kind: input, shape index: {}]
  %s9 = inlined_call_operand.vmem [shape: f32[3,1,512], index: 9, kind: input, shape index: {}]
  %s10 = inlined_call_operand.vmem [shape: f32[3,512,130], index: 10, kind: input, shape index: {}]
  %s11 = inlined_call_operand.vmem [shape: f32[3,1,130], index: 11, kind: input, shape index: {}]
  %s12 = inlined_call_operand.vmem [shape: f32[3,1,130], index: 12, kind: input, shape index: {}]
  %s13 = inlined_call_operand.vmem [shape: f32[3,1,130], index: 13, kind: input, shape index: {}]
  %s14 = inlined_call_operand.vmem [shape: f32[130,1], index: 14, kind: input, shape index: {}]
  %s15 = inlined_call_operand.<no memory space> [shape: f32[1,1], index: 15, kind: input, shape index: {}]
  %s16 = inlined_call_operand.vmem [shape: f32[2,9,130], index: 16, kind: output, shape index: {0}]
  %s17 = inlined_call_operand.vmem [shape: f32[2,1,1], index: 17, kind: output, shape index: {1}]
  %18 = xla_tuple %s16, %s17
  %s19 = sld [smem:[#allocation0]]
  $region105: #{audio_transformers_forward.1} parent=0
    _
  %s21 = ssub.s32 1, %s19
  %s22 = scalar_select 0, %s21, %s19
  %v23 = vstv %s15
  %24 = vst [vmem:[#allocation2] sm:$0x1] %v23
  loop: start=0, step=1, limit=4
  $region2: #{audio_transformers_forward.1} parent=0 // loop_pre_header
    _
  $region3: #{audio_transformers_forward.1} parent=0 // loop_header
    %s26 = sphi 0, %s30
    %p27 = scmp.ge.s32.totalorder %s26, 4
    %s36 = sphi 0, %s38
    %s39 = sphi 0, %s36
    %s40 = sphi 0, %s39
    %s56 = sphi 0, %s40
    %s62 = sphi 0, %s64
    %s65 = sphi 0, %s62
    %s66 = sphi 0, %s65
    %s82 = sphi 0, %s66
    %s86 = sphi 0, %s86
    %s88 = sphi 0, %s86
    %s89 = sphi 0, %s88
    %s103 = sphi 0, %s89
    %s107 = sphi 0, %s107
    %s109 = sphi 0, %s107
    %s110 = sphi 0, %s109
    %s124 = sphi 0, %s110
    %s128 = sphi 0, %s128
    %s130 = sphi 0, %s128
    %s131 = sphi 0, %s130
    %s145 = sphi 0, %s131
    %s149 = sphi 0, %s149
    %s151 = sphi 0, %s149
    %s152 = sphi 0, %s151
    %s166 = sphi 0, %s152
    %s170 = sphi 0, %s170
    %s172 = sphi 0, %s170
    %s173 = sphi 0, %s172
    %s187 = sphi 0, %s173
    %s191 = sphi 0, %s191
    %s193 = sphi 0, %s191
    %s194 = sphi 0, %s193
    %s208 = sphi 0, %s194
    %s212 = sphi 0, %s212
    %s214 = sphi 0, %s212
    %s215 = sphi 0, %s214
    %s229 = sphi 0, %s215
    %s233 = sphi 0, %s233
    %s235 = sphi 0, %s233
    %s236 = sphi 0, %s235
    %s250 = sphi 0, %s236
    %s254 = sphi 0, %s254
    %s256 = sphi 0, %s254
    %s257 = sphi 0, %s256
    %s271 = sphi 0, %s257
    %s275 = sphi 0, %s275
    %s277 = sphi 0, %s275
    %s278 = sphi 0, %s277
    %s292 = sphi 0, %s278
    %s296 = sphi 0, %s296
    %s298 = sphi 0, %s296
    %s299 = sphi 0, %s298
    %s313 = sphi 0, %s299
    %s317 = sphi 0, %s317
    %s319 = sphi 0, %s317
    %s320 = sphi 0, %s319
    %s334 = sphi 0, %s320
    %s338 = sphi 0, %s338
    %s340 = sphi 0, %s338
    %s341 = sphi 0, %s340
    %s355 = sphi 0, %s341
    %s359 = sphi 0, %s359
    %s361 = sphi 0, %s359
    %s362 = sphi 0, %s361
    %s376 = sphi 0, %s362
    %s382 = sphi 0, %s384
    %s385 = sphi 0, %s382
    %s386 = sphi 0, %s385
    %s402 = sphi 0, %s386
    %s408 = sphi 0, %s410
    %s411 = sphi 0, %s408
    %s412 = sphi 0, %s411
    %s428 = sphi 0, %s412
  $region4: #{audio_transformers_forward.1} parent=0 // loop_header_branch
    %29 = sbr.rel (%p27) target = $region8
  $region5: #{audio_transformers_forward.1} parent=0 // loop_body
    %s31 = ssub.s32 %s26, 1
    %s32 = ssub.s32 %s26, 2
    %s33 = sadd.s32 %s26, 1
    %s34 = ssub.s32 %s26, %s33
    %p35 = scmp.eq.s32.totalorder %s34, 0
    %s37 = sadd.s32 %s36, 1
    %s38 = scalar_select %p35, %s36, %s37
    %p41 = pneg %p35
    %p42 = scmp.eq.s32.totalorder %s26, 1
    %p43 = por %p41, %p42
    %p44 = scmp.ne.s32.totalorder %s36, %s39
    %p45 = scmp.eq.s32.totalorder %s26, 0
    %p46 = por %p44, %p45
    %p47 = scmp.ne.s32.totalorder %s36, %s39
    %p48 = scmp.eq.s32.totalorder %s31, 1
    %p49 = por %p47, %p48
    %p50 = scmp.ne.s32.totalorder %s39, %s40
    %p51 = scmp.eq.s32.totalorder %s31, 0
    %p52 = por %p50, %p51
    %p53 = scmp.ne.s32.totalorder %s39, %s40
    %p54 = scmp.eq.s32.totalorder %s32, 1
    %p55 = por %p53, %p54
    %p57 = scmp.ne.s32.totalorder %s40, %s56
    %p58 = scmp.eq.s32.totalorder %s32, 0
    %p59 = por %p57, %p58
    %s60 = ssub.s32 %s26, %s33
    %p61 = scmp.eq.s32.totalorder %s60, 0
    %s63 = sadd.s32 %s62, 1
    %s64 = scalar_select %p61, %s62, %s63
    %p67 = pneg %p61
    %p68 = scmp.eq.s32.totalorder %s26, 1
    %p69 = por %p67, %p68
    %p70 = scmp.ne.s32.totalorder %s62, %s65
    %p71 = scmp.eq.s32.totalorder %s26, 0
    %p72 = por %p70, %p71
    %p73 = scmp.ne.s32.totalorder %s62, %s65
    %p74 = scmp.eq.s32.totalorder %s31, 1
    %p75 = por %p73, %p74
    %p76 = scmp.ne.s32.totalorder %s65, %s66
    %p77 = scmp.eq.s32.totalorder %s31, 0
    %p78 = por %p76, %p77
    %p79 = scmp.ne.s32.totalorder %s65, %s66
    %p80 = scmp.eq.s32.totalorder %s32, 1
    %p81 = por %p79, %p80
    %p83 = scmp.ne.s32.totalorder %s66, %s82
    %p84 = scmp.eq.s32.totalorder %s32, 0
    %p85 = por %p83, %p84
    %s87 = sadd.s32 %s86, 1
    %p90 = scmp.eq.s32.totalorder %s26, 1
    %p91 = scmp.ne.s32.totalorder %s86, %s88
    %p92 = scmp.eq.s32.totalorder %s26, 0
    %p93 = por %p91, %p92
    %p94 = scmp.ne.s32.totalorder %s86, %s88
    %p95 = scmp.eq.s32.totalorder %s31, 1
    %p96 = por %p94, %p95
    %p97 = scmp.ne.s32.totalorder %s88, %s89
    %p98 = scmp.eq.s32.totalorder %s31, 0
    %p99 = por %p97, %p98
    %p100 = scmp.ne.s32.totalorder %s88, %s89
    %p101 = scmp.eq.s32.totalorder %s32, 1
    %p102 = por %p100, %p101
    %p104 = scmp.ne.s32.totalorder %s89, %s103
    %p105 = scmp.eq.s32.totalorder %s32, 0
    %p106 = por %p104, %p105
    %s108 = sadd.s32 %s107, 1
    %p111 = scmp.eq.s32.totalorder %s26, 1
    %p112 = scmp.ne.s32.totalorder %s107, %s109
    %p113 = scmp.eq.s32.totalorder %s26, 0
    %p114 = por %p112, %p113
    %p115 = scmp.ne.s32.totalorder %s107, %s109
    %p116 = scmp.eq.s32.totalorder %s31, 1
    %p117 = por %p115, %p116
    %p118 = scmp.ne.s32.totalorder %s109, %s110
    %p119 = scmp.eq.s32.totalorder %s31, 0
    %p120 = por %p118, %p119
    %p121 = scmp.ne.s32.totalorder %s109, %s110
    %p122 = scmp.eq.s32.totalorder %s32, 1
    %p123 = por %p121, %p122
    %p125 = scmp.ne.s32.totalorder %s110, %s124
    %p126 = scmp.eq.s32.totalorder %s32, 0
    %p127 = por %p125, %p126
    %s129 = sadd.s32 %s128, 1
    %p132 = scmp.eq.s32.totalorder %s26, 1
    %p133 = scmp.ne.s32.totalorder %s128, %s130
    %p134 = scmp.eq.s32.totalorder %s26, 0
    %p135 = por %p133, %p134
    %p136 = scmp.ne.s32.totalorder %s128, %s130
    %p137 = scmp.eq.s32.totalorder %s31, 1
    %p138 = por %p136, %p137
    %p139 = scmp.ne.s32.totalorder %s130, %s131
    %p140 = scmp.eq.s32.totalorder %s31, 0
    %p141 = por %p139, %p140
    %p142 = scmp.ne.s32.totalorder %s130, %s131
    %p143 = scmp.eq.s32.totalorder %s32, 1
    %p144 = por %p142, %p143
    %p146 = scmp.ne.s32.totalorder %s131, %s145
    %p147 = scmp.eq.s32.totalorder %s32, 0
    %p148 = por %p146, %p147
    %s150 = sadd.s32 %s149, 1
    %p153 = scmp.eq.s32.totalorder %s26, 1
    %p154 = scmp.ne.s32.totalorder %s149, %s151
    %p155 = scmp.eq.s32.totalorder %s26, 0
    %p156 = por %p154, %p155
    %p157 = scmp.ne.s32.totalorder %s149, %s151
    %p158 = scmp.eq.s32.totalorder %s31, 1
    %p159 = por %p157, %p158
    %p160 = scmp.ne.s32.totalorder %s151, %s152
    %p161 = scmp.eq.s32.totalorder %s31, 0
    %p162 = por %p160, %p161
    %p163 = scmp.ne.s32.totalorder %s151, %s152
    %p164 = scmp.eq.s32.totalorder %s32, 1
    %p165 = por %p163, %p164
    %p167 = scmp.ne.s32.totalorder %s152, %s166
    %p168 = scmp.eq.s32.totalorder %s32, 0
    %p169 = por %p167, %p168
    %s171 = sadd.s32 %s170, 1
    %p174 = scmp.eq.s32.totalorder %s26, 1
    %p175 = scmp.ne.s32.totalorder %s170, %s172
    %p176 = scmp.eq.s32.totalorder %s26, 0
    %p177 = por %p175, %p176
    %p178 = scmp.ne.s32.totalorder %s170, %s172
    %p179 = scmp.eq.s32.totalorder %s31, 1
    %p180 = por %p178, %p179
    %p181 = scmp.ne.s32.totalorder %s172, %s173
    %p182 = scmp.eq.s32.totalorder %s31, 0
    %p183 = por %p181, %p182
    %p184 = scmp.ne.s32.totalorder %s172, %s173
    %p185 = scmp.eq.s32.totalorder %s32, 1
    %p186 = por %p184, %p185
    %p188 = scmp.ne.s32.totalorder %s173, %s187
    %p189 = scmp.eq.s32.totalorder %s32, 0
    %p190 = por %p188, %p189
    %s192 = sadd.s32 %s191, 1
    %p195 = scmp.eq.s32.totalorder %s26, 1
    %p196 = scmp.ne.s32.totalorder %s191, %s193
    %p197 = scmp.eq.s32.totalorder %s26, 0
    %p198 = por %p196, %p197
    %p199 = scmp.ne.s32.totalorder %s191, %s193
    %p200 = scmp.eq.s32.totalorder %s31, 1
    %p201 = por %p199, %p200
    %p202 = scmp.ne.s32.totalorder %s193, %s194
    %p203 = scmp.eq.s32.totalorder %s31, 0
    %p204 = por %p202, %p203
    %p205 = scmp.ne.s32.totalorder %s193, %s194
    %p206 = scmp.eq.s32.totalorder %s32, 1
    %p207 = por %p205, %p206
    %p209 = scmp.ne.s32.totalorder %s194, %s208
    %p210 = scmp.eq.s32.totalorder %s32, 0
    %p211 = por %p209, %p210
    %s213 = sadd.s32 %s212, 1
    %p216 = scmp.eq.s32.totalorder %s26, 1
    %p217 = scmp.ne.s32.totalorder %s212, %s214
    %p218 = scmp.eq.s32.totalorder %s26, 0
    %p219 = por %p217, %p218
    %p220 = scmp.ne.s32.totalorder %s212, %s214
    %p221 = scmp.eq.s32.totalorder %s31, 1
    %p222 = por %p220, %p221
    %p223 = scmp.ne.s32.totalorder %s214, %s215
    %p224 = scmp.eq.s32.totalorder %s31, 0
    %p225 = por %p223, %p224
    %p226 = scmp.ne.s32.totalorder %s214, %s215
    %p227 = scmp.eq.s32.totalorder %s32, 1
    %p228 = por %p226, %p227
    %p230 = scmp.ne.s32.totalorder %s215, %s229
    %p231 = scmp.eq.s32.totalorder %s32, 0
    %p232 = por %p230, %p231
    %s234 = sadd.s32 %s233, 1
    %p237 = scmp.eq.s32.totalorder %s26, 1
    %p238 = scmp.ne.s32.totalorder %s233, %s235
    %p239 = scmp.eq.s32.totalorder %s26, 0
    %p240 = por %p238, %p239
    %p241 = scmp.ne.s32.totalorder %s233, %s235
    %p242 = scmp.eq.s32.totalorder %s31, 1
    %p243 = por %p241, %p242
    %p244 = scmp.ne.s32.totalorder %s235, %s236
    %p245 = scmp.eq.s32.totalorder %s31, 0
    %p246 = por %p244, %p245
    %p247 = scmp.ne.s32.totalorder %s235, %s236
    %p248 = scmp.eq.s32.totalorder %s32, 1
    %p249 = por %p247, %p248
    %p251 = scmp.ne.s32.totalorder %s236, %s250
    %p252 = scmp.eq.s32.totalorder %s32, 0
    %p253 = por %p251, %p252
    %s255 = sadd.s32 %s254, 1
    %p258 = scmp.eq.s32.totalorder %s26, 1
    %p259 = scmp.ne.s32.totalorder %s254, %s256
    %p260 = scmp.eq.s32.totalorder %s26, 0
    %p261 = por %p259, %p260
    %p262 = scmp.ne.s32.totalorder %s254, %s256
    %p263 = scmp.eq.s32.totalorder %s31, 1
    %p264 = por %p262, %p263
    %p265 = scmp.ne.s32.totalorder %s256, %s257
    %p266 = scmp.eq.s32.totalorder %s31, 0
    %p267 = por %p265, %p266
    %p268 = scmp.ne.s32.totalorder %s256, %s257
    %p269 = scmp.eq.s32.totalorder %s32, 1
    %p270 = por %p268, %p269
    %p272 = scmp.ne.s32.totalorder %s257, %s271
    %p273 = scmp.eq.s32.totalorder %s32, 0
    %p274 = por %p272, %p273
    %s276 = sadd.s32 %s275, 1
    %p279 = scmp.eq.s32.totalorder %s26, 1
    %p280 = scmp.ne.s32.totalorder %s275, %s277
    %p281 = scmp.eq.s32.totalorder %s26, 0
    %p282 = por %p280, %p281
    %p283 = scmp.ne.s32.totalorder %s275, %s277
    %p284 = scmp.eq.s32.totalorder %s31, 1
    %p285 = por %p283, %p284
    %p286 = scmp.ne.s32.totalorder %s277, %s278
    %p287 = scmp.eq.s32.totalorder %s31, 0
    %p288 = por %p286, %p287
    %p289 = scmp.ne.s32.totalorder %s277, %s278
    %p290 = scmp.eq.s32.totalorder %s32, 1
    %p291 = por %p289, %p290
    %p293 = scmp.ne.s32.totalorder %s278, %s292
    %p294 = scmp.eq.s32.totalorder %s32, 0
    %p295 = por %p293, %p294
    %s297 = sadd.s32 %s296, 1
    %p300 = scmp.eq.s32.totalorder %s26, 1
    %p301 = scmp.ne.s32.totalorder %s296, %s298
    %p302 = scmp.eq.s32.totalorder %s26, 0
    %p303 = por %p301, %p302
    %p304 = scmp.ne.s32.totalorder %s296, %s298
    %p305 = scmp.eq.s32.totalorder %s31, 1
    %p306 = por %p304, %p305
    %p307 = scmp.ne.s32.totalorder %s298, %s299
    %p308 = scmp.eq.s32.totalorder %s31, 0
    %p309 = por %p307, %p308
    %p310 = scmp.ne.s32.totalorder %s298, %s299
    %p311 = scmp.eq.s32.totalorder %s32, 1
    %p312 = por %p310, %p311
    %p314 = scmp.ne.s32.totalorder %s299, %s313
    %p315 = scmp.eq.s32.totalorder %s32, 0
    %p316 = por %p314, %p315
    %s318 = sadd.s32 %s317, 1
    %p321 = scmp.eq.s32.totalorder %s26, 1
    %p322 = scmp.ne.s32.totalorder %s317, %s319
    %p323 = scmp.eq.s32.totalorder %s26, 0
    %p324 = por %p322, %p323
    %p325 = scmp.ne.s32.totalorder %s317, %s319
    %p326 = scmp.eq.s32.totalorder %s31, 1
    %p327 = por %p325, %p326
    %p328 = scmp.ne.s32.totalorder %s319, %s320
    %p329 = scmp.eq.s32.totalorder %s31, 0
    %p330 = por %p328, %p329
    %p331 = scmp.ne.s32.totalorder %s319, %s320
    %p332 = scmp.eq.s32.totalorder %s32, 1
    %p333 = por %p331, %p332
    %p335 = scmp.ne.s32.totalorder %s320, %s334
    %p336 = scmp.eq.s32.totalorder %s32, 0
    %p337 = por %p335, %p336
    %s339 = sadd.s32 %s338, 1
    %p342 = scmp.eq.s32.totalorder %s26, 1
    %p343 = scmp.ne.s32.totalorder %s338, %s340
    %p344 = scmp.eq.s32.totalorder %s26, 0
    %p345 = por %p343, %p344
    %p346 = scmp.ne.s32.totalorder %s338, %s340
    %p347 = scmp.eq.s32.totalorder %s31, 1
    %p348 = por %p346, %p347
    %p349 = scmp.ne.s32.totalorder %s340, %s341
    %p350 = scmp.eq.s32.totalorder %s31, 0
    %p351 = por %p349, %p350
    %p352 = scmp.ne.s32.totalorder %s340, %s341
    %p353 = scmp.eq.s32.totalorder %s32, 1
    %p354 = por %p352, %p353
    %p356 = scmp.ne.s32.totalorder %s341, %s355
    %p357 = scmp.eq.s32.totalorder %s32, 0
    %p358 = por %p356, %p357
    %s360 = sadd.s32 %s359, 1
    %p363 = scmp.eq.s32.totalorder %s26, 1
    %p364 = scmp.ne.s32.totalorder %s359, %s361
    %p365 = scmp.eq.s32.totalorder %s26, 0
    %p366 = por %p364, %p365
    %p367 = scmp.ne.s32.totalorder %s359, %s361
    %p368 = scmp.eq.s32.totalorder %s31, 1
    %p369 = por %p367, %p368
    %p370 = scmp.ne.s32.totalorder %s361, %s362
    %p371 = scmp.eq.s32.totalorder %s31, 0
    %p372 = por %p370, %p371
    %p373 = scmp.ne.s32.totalorder %s361, %s362
    %p374 = scmp.eq.s32.totalorder %s32, 1
    %p375 = por %p373, %p374
    %p377 = scmp.ne.s32.totalorder %s362, %s376
    %p378 = scmp.eq.s32.totalorder %s32, 0
    %p379 = por %p377, %p378
    %s380 = ssub.s32 %s26, %s33
    %p381 = scmp.eq.s32.totalorder %s380, 0
    %s383 = sadd.s32 %s382, 1
    %s384 = scalar_select %p381, %s382, %s383
    %p387 = pneg %p381
    %p388 = scmp.eq.s32.totalorder %s26, 1
    %p389 = por %p387, %p388
    %p390 = scmp.ne.s32.totalorder %s382, %s385
    %p391 = scmp.eq.s32.totalorder %s26, 0
    %p392 = por %p390, %p391
    %p393 = scmp.ne.s32.totalorder %s382, %s385
    %p394 = scmp.eq.s32.totalorder %s31, 1
    %p395 = por %p393, %p394
    %p396 = scmp.ne.s32.totalorder %s385, %s386
    %p397 = scmp.eq.s32.totalorder %s31, 0
    %p398 = por %p396, %p397
    %p399 = scmp.ne.s32.totalorder %s385, %s386
    %p400 = scmp.eq.s32.totalorder %s32, 1
    %p401 = por %p399, %p400
    %p403 = scmp.ne.s32.totalorder %s386, %s402
    %p404 = scmp.eq.s32.totalorder %s32, 0
    %p405 = por %p403, %p404
    %s406 = ssub.s32 %s26, %s33
    %p407 = scmp.eq.s32.totalorder %s406, 0
    %s409 = sadd.s32 %s408, 1
    %s410 = scalar_select %p407, %s408, %s409
    %p413 = pneg %p407
    %p414 = scmp.eq.s32.totalorder %s26, 1
    %p415 = por %p413, %p414
    %p416 = scmp.ne.s32.totalorder %s408, %s411
    %p417 = scmp.eq.s32.totalorder %s26, 0
    %p418 = por %p416, %p417
    %p419 = scmp.ne.s32.totalorder %s408, %s411
    %p420 = scmp.eq.s32.totalorder %s31, 1
    %p421 = por %p419, %p420
    %p422 = scmp.ne.s32.totalorder %s411, %s412
    %p423 = scmp.eq.s32.totalorder %s31, 0
    %p424 = por %p422, %p423
    %p425 = scmp.ne.s32.totalorder %s411, %s412
    %p426 = scmp.eq.s32.totalorder %s32, 1
    %p427 = por %p425, %p426
    %p429 = scmp.ne.s32.totalorder %s412, %s428
    %p430 = scmp.eq.s32.totalorder %s32, 0
    %p431 = por %p429, %p430
    %p432 = scmp.le.s32.totalorder 1, %s26
    %p433 = scmp.lt.s32.totalorder %s26, 3
    %p434 = pnand %p432, %p433
    %p435 = pneg %p434
    // Predicated region
    $region9: #{audio_transformers_forward.1} parent=5 // pred_check
      _
    $region10: #{audio_transformers_forward.1} parent=5 // pred_check_branch
      %437 = sbr.rel (%p434) target = $region12
    $region11: #{audio_transformers_forward.1} parent=5 // pred_region
      %s438 = ssub.s32 %s26, 1
      // Predicated region
      $region13: #{audio_transformers_forward.1} parent=11 // pred_check
        %p439 = pneg %p99
      $region14: #{audio_transformers_forward.1} parent=11 // pred_check_branch
        %441 = sbr.rel (%p439) target = $region16
      $region15: #{audio_transformers_forward.1} parent=11 // pred_region
        _
      $region16: #{audio_transformers_forward.1} parent=11 // pred_fallthru
        _
      // Predicated region
      $region17: #{audio_transformers_forward.1} parent=11 // pred_check
        %p442 = pneg %p120
      $region18: #{audio_transformers_forward.1} parent=11 // pred_check_branch
        %444 = sbr.rel (%p442) target = $region20
      $region19: #{audio_transformers_forward.1} parent=11 // pred_region
        _
      $region20: #{audio_transformers_forward.1} parent=11 // pred_fallthru
        _
      // Predicated region
      $region21: #{audio_transformers_forward.1} parent=11 // pred_check
        %p445 = pneg %p141
      $region22: #{audio_transformers_forward.1} parent=11 // pred_check_branch
        %447 = sbr.rel (%p445) target = $region24
      $region23: #{audio_transformers_forward.1} parent=11 // pred_region
        _
      $region24: #{audio_transformers_forward.1} parent=11 // pred_fallthru
        _
      // Predicated region
      $region25: #{audio_transformers_forward.1} parent=11 // pred_check
        %p448 = pneg %p162
      $region26: #{audio_transformers_forward.1} parent=11 // pred_check_branch
        %450 = sbr.rel (%p448) target = $region28
      $region27: #{audio_transformers_forward.1} parent=11 // pred_region
        _
      $region28: #{audio_transformers_forward.1} parent=11 // pred_fallthru
        _
      // Predicated region
      $region29: #{audio_transformers_forward.1} parent=11 // pred_check
        %p451 = pneg %p183
      $region30: #{audio_transformers_forward.1} parent=11 // pred_check_branch
        %453 = sbr.rel (%p451) target = $region32
      $region31: #{audio_transformers_forward.1} parent=11 // pred_region
        _
      $region32: #{audio_transformers_forward.1} parent=11 // pred_fallthru
        _
      // Predicated region
      $region33: #{audio_transformers_forward.1} parent=11 // pred_check
        %p454 = pneg %p204
      $region34: #{audio_transformers_forward.1} parent=11 // pred_check_branch
        %456 = sbr.rel (%p454) target = $region36
      $region35: #{audio_transformers_forward.1} parent=11 // pred_region
        _
      $region36: #{audio_transformers_forward.1} parent=11 // pred_fallthru
        _
      // Predicated region
      $region37: #{audio_transformers_forward.1} parent=11 // pred_check
        %p457 = pneg %p225
      $region38: #{audio_transformers_forward.1} parent=11 // pred_check_branch
        %459 = sbr.rel (%p457) target = $region40
      $region39: #{audio_transformers_forward.1} parent=11 // pred_region
        _
      $region40: #{audio_transformers_forward.1} parent=11 // pred_fallthru
        _
      // Predicated region
      $region41: #{audio_transformers_forward.1} parent=11 // pred_check
        %p460 = pneg %p246
      $region42: #{audio_transformers_forward.1} parent=11 // pred_check_branch
        %462 = sbr.rel (%p460) target = $region44
      $region43: #{audio_transformers_forward.1} parent=11 // pred_region
        _
      $region44: #{audio_transformers_forward.1} parent=11 // pred_fallthru
        _
      // Predicated region
      $region45: #{audio_transformers_forward.1} parent=11 // pred_check
        %p463 = pneg %p267
      $region46: #{audio_transformers_forward.1} parent=11 // pred_check_branch
        %465 = sbr.rel (%p463) target = $region48
      $region47: #{audio_transformers_forward.1} parent=11 // pred_region
        _
      $region48: #{audio_transformers_forward.1} parent=11 // pred_fallthru
        _
      // Predicated region
      $region49: #{audio_transformers_forward.1} parent=11 // pred_check
        %p466 = pneg %p288
      $region50: #{audio_transformers_forward.1} parent=11 // pred_check_branch
        %468 = sbr.rel (%p466) target = $region52
      $region51: #{audio_transformers_forward.1} parent=11 // pred_region
        _
      $region52: #{audio_transformers_forward.1} parent=11 // pred_fallthru
        _
      // Predicated region
      $region53: #{audio_transformers_forward.1} parent=11 // pred_check
        %p469 = pneg %p309
      $region54: #{audio_transformers_forward.1} parent=11 // pred_check_branch
        %471 = sbr.rel (%p469) target = $region56
      $region55: #{audio_transformers_forward.1} parent=11 // pred_region
        _
      $region56: #{audio_transformers_forward.1} parent=11 // pred_fallthru
        _
      // Predicated region
      $region57: #{audio_transformers_forward.1} parent=11 // pred_check
        %p472 = pneg %p330
      $region58: #{audio_transformers_forward.1} parent=11 // pred_check_branch
        %474 = sbr.rel (%p472) target = $region60
      $region59: #{audio_transformers_forward.1} parent=11 // pred_region
        _
      $region60: #{audio_transformers_forward.1} parent=11 // pred_fallthru
        _
      // Predicated region
      $region61: #{audio_transformers_forward.1} parent=11 // pred_check
        %p475 = pneg %p351
      $region62: #{audio_transformers_forward.1} parent=11 // pred_check_branch
        %477 = sbr.rel (%p475) target = $region64
      $region63: #{audio_transformers_forward.1} parent=11 // pred_region
        _
      $region64: #{audio_transformers_forward.1} parent=11 // pred_fallthru
        _
      // Predicated region
      $region65: #{audio_transformers_forward.1} parent=11 // pred_check
        %p478 = pneg %p372
      $region66: #{audio_transformers_forward.1} parent=11 // pred_check_branch
        %480 = sbr.rel (%p478) target = $region68
      $region67: #{audio_transformers_forward.1} parent=11 // pred_region
        _
      $region68: #{audio_transformers_forward.1} parent=11 // pred_fallthru
        _
    $region12: #{audio_transformers_forward.1} parent=5 // pred_fallthru
      _
    %p481 = scmp.lt.s32.totalorder %s26, 2
    // Predicated region
    $region69: #{audio_transformers_forward.1} parent=5 // pred_check
      %p482 = pneg %p481
    $region70: #{audio_transformers_forward.1} parent=5 // pred_check_branch
      %484 = sbr.rel (%p482) target = $region72
    $region71: #{audio_transformers_forward.1} parent=5 // pred_region
      // Predicated region
      $region73: #{audio_transformers_forward.1} parent=71 // pred_check
        %p485 = pneg %p46
      $region74: #{audio_transformers_forward.1} parent=71 // pred_check_branch
        %487 = sbr.rel (%p485) target = $region76
      $region75: #{audio_transformers_forward.1} parent=71 // pred_region
        %p488 = scmp.lt.s32.totalorder %s26, 1
        %s489 = scalar_select %p488, %s26, 1
        %s490 = smul.addr %s489, 4
        %s491 = smul.addr %s490, 8
        %s492 = scalar_lea.vmem %s0, %s491
      $region76: #{audio_transformers_forward.1} parent=71 // pred_fallthru
        _
      // Predicated region
      $region77: #{audio_transformers_forward.1} parent=71 // pred_check
        %p493 = pneg %p72
      $region78: #{audio_transformers_forward.1} parent=71 // pred_check_branch
        %495 = sbr.rel (%p493) target = $region80
      $region79: #{audio_transformers_forward.1} parent=71 // pred_region
        %p496 = scmp.lt.s32.totalorder %s26, 1
        %s497 = scalar_select %p496, %s26, 1
        %s498 = scalar_lea.vmem %s1, %s497
      $region80: #{audio_transformers_forward.1} parent=71 // pred_fallthru
        _
    $region72: #{audio_transformers_forward.1} parent=5 // pred_fallthru
      _
    %p499 = scmp.le.s32.totalorder 1, %s26
    %p500 = scmp.lt.s32.totalorder %s26, 3
    %p501 = pnand %p499, %p500
    %p502 = pneg %p501
    // Predicated region
    $region81: #{audio_transformers_forward.1} parent=5 // pred_check
      _
    $region82: #{audio_transformers_forward.1} parent=5 // pred_check_branch
      %504 = sbr.rel (%p501) target = $region84
    $region83: #{audio_transformers_forward.1} parent=5 // pred_region
      %s505 = ssub.s32 %s26, 1
      %p506 = scmp.lt.s32.totalorder %s31, 1
      %s507 = scalar_select %p506, %s31, 1
      %s508 = smul.addr %s507, 4
      %s509 = smul.addr %s508, 8
      %s510 = scalar_lea.vmem %s0, %s509
      %p511 = pneg %p52
      %p512 = pneg %p49
      %p513 = scmp.lt.s32.totalorder %s31, 1
      %s514 = scalar_select %p513, %s31, 1
      %s515 = scalar_lea.vmem %s1, %s514
      %p516 = pneg %p78
      %p517 = pneg %p75
      %p518 = pneg %p99
      %p519 = pneg %p96
      %p520 = pneg %p120
      %p521 = pneg %p117
      %p522 = pneg %p141
      %p523 = pneg %p138
      %p524 = pneg %p162
      %p525 = pneg %p159
      %p526 = pneg %p183
      %p527 = pneg %p180
      %p528 = pneg %p204
      %p529 = pneg %p201
      %p530 = pneg %p225
      %p531 = pneg %p222
      %p532 = pneg %p246
      %p533 = pneg %p243
      %p534 = pneg %p267
      %p535 = pneg %p264
      %p536 = pneg %p288
      %p537 = pneg %p285
      %p538 = pneg %p309
      %p539 = pneg %p306
      %p540 = pneg %p330
      %p541 = pneg %p327
      %p542 = pneg %p351
      %p543 = pneg %p348
      %p544 = pneg %p372
      %p545 = pneg %p369
      %p546 = pneg %p398
      %p547 = pneg %p395
      %p548 = scmp.lt.s32.totalorder %s31, 1
      %s549 = scalar_select %p548, %s31, 1
      %s550 = smul.addr %s549, 4
      %s551 = smul.addr %s550, 8
      %s552 = scalar_lea.vmem %s16, %s551
      %p553 = pneg %p424
      %p554 = pneg %p421
      %p555 = scmp.lt.s32.totalorder %s31, 1
      %s556 = scalar_select %p555, %s31, 1
      %s557 = scalar_lea.vmem %s17, %s556
      %p558 = scmp.lt.s32.totalorder %s31, 1
      %s559 = scalar_select %p558, %s31, 1
      %s560 = smul.addr %s559, 4
      %s561 = smul.addr %s560, 8
      %s562 = scalar_lea.vmem %s0, %s561
      %p563 = scmp.lt.s32.totalorder %s31, 1
      %s564 = scalar_select %p563, %s31, 1
      %s565 = scalar_lea.vmem %s1, %s564
      %p566 = scmp.lt.s32.totalorder %s31, 1
      %s567 = scalar_select %p566, %s31, 1
      %s568 = smul.addr %s567, 4
      %s569 = smul.addr %s568, 8
      %s570 = scalar_lea.vmem %s16, %s569
      %p571 = scmp.lt.s32.totalorder %s31, 1
      %s572 = scalar_select %p571, %s31, 1
      %s573 = scalar_lea.vmem %s17, %s572
      %v574 = vld [vmem:[%s562] sm:$0xff]
      %v575 = vld [vmem:[%s562 + $0x8] sm:$0xff]
      %v576 = vld [vmem:[%s562 + $0x10] sm:$0x1]
      %v577 = vld [vmem:[%s562 + $0x18] sm:$0x1]
      %v578 = vld [vmem:[%s565] sm:$0x1]
      %v580 = vlaneseq
      %v581 = vshrl.u32 %v580, 7
      %v582 = vsub.s32 0, %v581
      %v583 = vrot.slane %v578, %v582
      %v585 = vld [vmem:[%s2] sm:$0xff]
      %v586 = vld [vmem:[%s2 + $0x8] sm:$0xff]
      %v587 = vld [vmem:[%s2 + $0x10] sm:$0xff]
      %v588 = vld [vmem:[%s2 + $0x18] sm:$0xff]
      %v589 = vld [vmem:[%s2 + $0x20] sm:$0xff]
      %v590 = vld [vmem:[%s2 + $0x28] sm:$0xff]
      %v591 = vld [vmem:[%s2 + $0x30] sm:$0xff]
      %v592 = vld [vmem:[%s2 + $0x38] sm:$0xff]
      %v593 = vld [vmem:[%s2 + $0x40] sm:$0xff]
      %v594 = vld [vmem:[%s2 + $0x48] sm:$0xff]
      %v595 = vld [vmem:[%s2 + $0x50] sm:$0xff]
      %v596 = vld [vmem:[%s2 + $0x58] sm:$0xff]
      %v597 = vld [vmem:[%s2 + $0x60] sm:$0xff]
      %v598 = vld [vmem:[%s2 + $0x68] sm:$0xff]
      %v599 = vld [vmem:[%s2 + $0x70] sm:$0xff]
      %v600 = vld [vmem:[%s2 + $0x78] sm:$0xff]
      %v601 = vld [vmem:[%s2 + $0x80] sm:$0xff]
      %v602 = vld [vmem:[%s2 + $0x88] sm:$0xff]
      %v603 = vld [vmem:[%s2 + $0x90] sm:$0xff]
      %v604 = vld [vmem:[%s2 + $0x98] sm:$0xff]
      %v605 = vld [vmem:[%s2 + $0xa0] sm:$0xff]
      %v606 = vld [vmem:[%s2 + $0xa8] sm:$0xff]
      %v607 = vld [vmem:[%s2 + $0xb0] sm:$0xff]
      %v608 = vld [vmem:[%s2 + $0xb8] sm:$0xff]
      %v609 = vld [vmem:[%s2 + $0xc0] sm:$0xff]
      %v610 = vld [vmem:[%s2 + $0xc8] sm:$0xff]
      %v611 = vld [vmem:[%s2 + $0xd0] sm:$0xff]
      %v612 = vld [vmem:[%s2 + $0xd8] sm:$0xff]
      %v613 = vld [vmem:[%s2 + $0xe0] sm:$0xff]
      %v614 = vld [vmem:[%s2 + $0xe8] sm:$0xff]
      %v615 = vld [vmem:[%s2 + $0xf0] sm:$0xff]
      %v616 = vld [vmem:[%s2 + $0xf8] sm:$0xff]
      %v617 = vld [vmem:[%s2 + $0x100] sm:$0xff]
      %v618 = vld [vmem:[%s2 + $0x108] sm:$0xff]
      %v619 = vld [vmem:[%s2 + $0x110] sm:$0xff]
      %v620 = vld [vmem:[%s2 + $0x118] sm:$0xff]
      %v621 = vld [vmem:[%s2 + $0x120] sm:$0xff]
      %v622 = vld [vmem:[%s2 + $0x128] sm:$0xff]
      %v623 = vld [vmem:[%s2 + $0x130] sm:$0xff]
      %v624 = vld [vmem:[%s2 + $0x138] sm:$0xff]
      %v625 = vld [vmem:[%s2 + $0x140] sm:$0xff]
      %v626 = vld [vmem:[%s2 + $0x148] sm:$0xff]
      %v627 = vld [vmem:[%s2 + $0x150] sm:$0xff]
      %v628 = vld [vmem:[%s2 + $0x158] sm:$0xff]
      %v629 = vld [vmem:[%s2 + $0x160] sm:$0xff]
      %v630 = vld [vmem:[%s2 + $0x168] sm:$0xff]
      %v631 = vld [vmem:[%s2 + $0x170] sm:$0xff]
      %v632 = vld [vmem:[%s2 + $0x178] sm:$0xff]
      %v633 = vld [vmem:[%s2 + $0x180] sm:$0xff]
      %v634 = vld [vmem:[%s2 + $0x188] sm:$0xff]
      %v635 = vld [vmem:[%s2 + $0x190] sm:$0xff]
      %v636 = vld [vmem:[%s2 + $0x198] sm:$0xff]
      %v637 = vld [vmem:[%s2 + $0x1a0] sm:$0xff]
      %v638 = vld [vmem:[%s2 + $0x1a8] sm:$0xff]
      %v639 = vld [vmem:[%s2 + $0x1b0] sm:$0xff]
      %v640 = vld [vmem:[%s2 + $0x1b8] sm:$0xff]
      %v641 = vld [vmem:[%s2 + $0x1c0] sm:$0xff]
      %v642 = vld [vmem:[%s2 + $0x1c8] sm:$0xff]
      %v643 = vld [vmem:[%s2 + $0x1d0] sm:$0xff]
      %v644 = vld [vmem:[%s2 + $0x1d8] sm:$0xff]
      %v645 = vld [vmem:[%s2 + $0x1e0] sm:$0xff]
      %v646 = vld [vmem:[%s2 + $0x1e8] sm:$0xff]
      %v647 = vld [vmem:[%s2 + $0x1f0] sm:$0xff]
      %v648 = vld [vmem:[%s2 + $0x1f8] sm:$0xff]
      %v649 = vld [vmem:[%s2 + $0x200] sm:$0xff]
      %v650 = vld [vmem:[%s2 + $0x208] sm:$0xff]
      %v651 = vld [vmem:[%s2 + $0x210] sm:$0xff]
      %v652 = vld [vmem:[%s2 + $0x218] sm:$0xff]
      %v653 = vld [vmem:[%s2 + $0x220] sm:$0xff]
      %v654 = vld [vmem:[%s2 + $0x228] sm:$0xff]
      %v655 = vld [vmem:[%s2 + $0x230] sm:$0xff]
      %v656 = vld [vmem:[%s2 + $0x238] sm:$0xff]
      %v657 = vld [vmem:[%s2 + $0x240] sm:$0xff]
      %v658 = vld [vmem:[%s2 + $0x248] sm:$0xff]
      %v659 = vld [vmem:[%s2 + $0x250] sm:$0xff]
      %v660 = vld [vmem:[%s2 + $0x258] sm:$0xff]
      %v661 = vld [vmem:[%s2 + $0x260] sm:$0xff]
      %v662 = vld [vmem:[%s2 + $0x268] sm:$0xff]
      %v663 = vld [vmem:[%s2 + $0x270] sm:$0xff]
      %v664 = vld [vmem:[%s2 + $0x278] sm:$0xff]
      %v665 = vld [vmem:[%s2 + $0x280] sm:$0xff]
      %v666 = vld [vmem:[%s2 + $0x288] sm:$0xff]
      %v667 = vld [vmem:[%s2 + $0x290] sm:$0xff]
      %v668 = vld [vmem:[%s2 + $0x298] sm:$0xff]
      %v669 = vld [vmem:[%s2 + $0x2a0] sm:$0xff]
      %v670 = vld [vmem:[%s2 + $0x2a8] sm:$0xff]
      %v671 = vld [vmem:[%s2 + $0x2b0] sm:$0xff]
      %v672 = vld [vmem:[%s2 + $0x2b8] sm:$0xff]
      %v673 = vld [vmem:[%s2 + $0x2c0] sm:$0xff]
      %v674 = vld [vmem:[%s2 + $0x2c8] sm:$0xff]
      %v675 = vld [vmem:[%s2 + $0x2d0] sm:$0xff]
      %v676 = vld [vmem:[%s2 + $0x2d8] sm:$0xff]
      %v677 = vld [vmem:[%s2 + $0x2e0] sm:$0xff]
      %v678 = vld [vmem:[%s2 + $0x2e8] sm:$0xff]
      %v679 = vld [vmem:[%s2 + $0x2f0] sm:$0xff]
      %v680 = vld [vmem:[%s2 + $0x2f8] sm:$0xff]
      %v681 = vld [vmem:[%s2 + $0x300] sm:$0x3]
      %v682 = vld [vmem:[%s2 + $0x308] sm:$0x3]
      %v683 = vld [vmem:[%s2 + $0x310] sm:$0x3]
      %v684 = vld [vmem:[%s2 + $0x318] sm:$0x3]
      %v685 = vld [vmem:[%s2 + $0x320] sm:$0x3]
      %v686 = vld [vmem:[%s2 + $0x328] sm:$0x3]
      %v687 = vld [vmem:[%s3] sm:$0x3f]
      %v689 = vlaneseq
      %v690 = vshrl.u32 %v689, 7
      %v691 = vsub.s32 0, %v690
      %v692 = vrot.slane %v687, %v691
      %v693 = vlaneseq
      %v694 = vshrl.u32 %v693, 7
      %v695 = vsub.s32 1, %v694
      %v696 = vrot.slane %v687, %v695
      %v697 = vlaneseq
      %v698 = vshrl.u32 %v697, 7
      %v699 = vsub.s32 2, %v698
      %v700 = vrot.slane %v687, %v699
      %v701 = vlaneseq
      %v702 = vshrl.u32 %v701, 7
      %v703 = vsub.s32 3, %v702
      %v704 = vrot.slane %v687, %v703
      %v705 = vlaneseq
      %v706 = vshrl.u32 %v705, 7
      %v707 = vsub.s32 4, %v706
      %v708 = vrot.slane %v687, %v707
      %v709 = vlaneseq
      %v710 = vshrl.u32 %v709, 7
      %v711 = vsub.s32 5, %v710
      %v712 = vrot.slane %v687, %v711
      %vm719 = vcmask 15360
      %v721 = vsel %vm719, %v575, 0
      %v724 = vsel %vm719, %v577, 0
      %vm726 = vcmask 1041408
      %v728 = vsel %vm726, %v681, 0
      %v731 = vsel %vm726, %v682, 0
      %v734 = vsel %vm726, %v683, 0
      %v737 = vsel %vm726, %v684, 0
      %v740 = vsel %vm726, %v685, 0
      %v743 = vsel %vm726, %v686, 0
      %745 = vmatprep.subr.mxu0 %v676
      %746 = vmatpush1.msra.mxu0 %v675
      %747 = vmatprep.subr.mxu0 %v670
      %748 = vmatpush1.msra.mxu0 %v669
      %749 = vmatprep.subr.mxu0 %v664
      %750 = vmatpush1.msra.mxu0 %v663
      %751 = vmatprep.subr.mxu0 %v658
      %752 = vmatpush1.msra.mxu0 %v657
      %753 = vmatprep.subr.mxu0 %v652
      %754 = vmatpush1.msra.mxu0 %v651
      %755 = vmatprep.subr.mxu0 %v646
      %756 = vmatpush1.msra.mxu0 %v645
      %757 = vmatprep.subr.mxu0 %v640
      %758 = vmatpush1.msra.mxu0 %v639
      %759 = vmatprep.subr.mxu0 %v634
      %760 = vmatpush1.msra.mxu0 %v633
      %761 = vmatprep.subr.mxu0 %v628
      %762 = vmatpush1.msra.mxu0 %v627
      %763 = vmatprep.subr.mxu0 %v622
      %764 = vmatpush1.msra.mxu0 %v621
      %765 = vmatprep.subr.mxu0 %v616
      %766 = vmatpush1.msra.mxu0 %v615
      %767 = vmatprep.subr.mxu0 %v610
      %768 = vmatpush1.msra.mxu0 %v609
      %769 = vmatprep.subr.mxu0 %v604
      %770 = vmatpush1.msra.mxu0 %v603
      %771 = vmatprep.subr.mxu0 %v598
      %772 = vmatpush1.msra.mxu0 %v597
      %773 = vmatprep.subr.mxu0 %v592
      %774 = vmatpush1.msra.mxu0 %v591
      %775 = vmatprep.subr.mxu0 %v586
      %776 = vmatpush1.msra.mxu0 %v585
      %777 = vmatprep.subr.mxu0 0.0
      %778 = vmatpush2.msra.mxu0 0.0
      %779 = vmatprep.subr.mxu0 0.0
      %780 = vmatpush2.msra.mxu0 0.0
      %781 = vmatprep.subr.mxu0 0.0
      %782 = vmatpush2.msra.mxu0 0.0
      %783 = vmatprep.subr.mxu0 0.0
      %784 = vmatpush2.msra.mxu0 0.0
      %785 = vmatprep.subr.mxu0 0.0
      %786 = vmatpush2.msra.mxu0 0.0
      %787 = vmatprep.subr.mxu0 0.0
      %788 = vmatpush2.msra.mxu0 0.0
      %789 = vmatprep.subr.mxu0 0.0
      %790 = vmatpush2.msra.mxu0 0.0
      %791 = vmatprep.subr.mxu0 0.0
      %792 = vmatpush2.msra.mxu0 0.0
      %793 = vmatprep.subr.mxu0 0.0
      %794 = vmatpush2.msra.mxu0 0.0
      %795 = vmatprep.subr.mxu0 0.0
      %796 = vmatpush2.msra.mxu0 0.0
      %797 = vmatprep.subr.mxu0 0.0
      %798 = vmatpush2.msra.mxu0 0.0
      %799 = vmatprep.subr.mxu0 0.0
      %800 = vmatpush2.msra.mxu0 0.0
      %801 = vmatprep.subr.mxu0 0.0
      %802 = vmatpush2.msra.mxu0 0.0
      %803 = vmatprep.subr.mxu0 0.0
      %804 = vmatpush2.msra.mxu0 0.0
      %805 = vmatprep.subr.mxu0 0.0
      %806 = vmatpush2.msra.mxu0 0.0
      %807 = vmatprep.subr.mxu0 %v731
      %808 = vmatpush2.msra.mxu0 %v728
      %809 = vmatprep.mubr.f32.mxu0 %v721
      %810 = vmatmul.mubr.f32.gmra.mxu0 %v574
      %v811 = vpop.f32.mrf.mxu0
      %v812 = vadd.f32 %v692, %v811
      %v813 = vpop.f32.mrf.mxu0
      %v814 = vadd.f32 %v696, %v813
      %815 = vmatprep.mubr.f32.mxu0 %v724
      %816 = vmatmul.mubr.f32.gmra.mxu0 %v576
      %v817 = vpop.f32.mrf.mxu0
      %v818 = vadd.f32 %v692, %v817
      %v819 = vpop.f32.mrf.mxu0
      %v820 = vadd.f32 %v696, %v819
      %821 = vdwg.mxu0
      %822 = vmatprep.subr.mxu0 %v678
      %823 = vmatpush1.msra.mxu0 %v677
      %824 = vmatprep.subr.mxu0 %v672
      %825 = vmatpush1.msra.mxu0 %v671
      %826 = vmatprep.subr.mxu0 %v666
      %827 = vmatpush1.msra.mxu0 %v665
      %828 = vmatprep.subr.mxu0 %v660
      %829 = vmatpush1.msra.mxu0 %v659
      %830 = vmatprep.subr.mxu0 %v654
      %831 = vmatpush1.msra.mxu0 %v653
      %832 = vmatprep.subr.mxu0 %v648
      %833 = vmatpush1.msra.mxu0 %v647
      %834 = vmatprep.subr.mxu0 %v642
      %835 = vmatpush1.msra.mxu0 %v641
      %836 = vmatprep.subr.mxu0 %v636
      %837 = vmatpush1.msra.mxu0 %v635
      %838 = vmatprep.subr.mxu0 %v630
      %839 = vmatpush1.msra.mxu0 %v629
      %840 = vmatprep.subr.mxu0 %v624
      %841 = vmatpush1.msra.mxu0 %v623
      %842 = vmatprep.subr.mxu0 %v618
      %843 = vmatpush1.msra.mxu0 %v617
      %844 = vmatprep.subr.mxu0 %v612
      %845 = vmatpush1.msra.mxu0 %v611
      %846 = vmatprep.subr.mxu0 %v606
      %847 = vmatpush1.msra.mxu0 %v605
      %848 = vmatprep.subr.mxu0 %v600
      %849 = vmatpush1.msra.mxu0 %v599
      %850 = vmatprep.subr.mxu0 %v594
      %851 = vmatpush1.msra.mxu0 %v593
      %852 = vmatprep.subr.mxu0 %v588
      %853 = vmatpush1.msra.mxu0 %v587
      %854 = vmatprep.subr.mxu0 0.0
      %855 = vmatpush2.msra.mxu0 0.0
      %856 = vmatprep.subr.mxu0 0.0
      %857 = vmatpush2.msra.mxu0 0.0
      %858 = vmatprep.subr.mxu0 0.0
      %859 = vmatpush2.msra.mxu0 0.0
      %860 = vmatprep.subr.mxu0 0.0
      %861 = vmatpush2.msra.mxu0 0.0
      %862 = vmatprep.subr.mxu0 0.0
      %863 = vmatpush2.msra.mxu0 0.0
      %864 = vmatprep.subr.mxu0 0.0
      %865 = vmatpush2.msra.mxu0 0.0
      %866 = vmatprep.subr.mxu0 0.0
      %867 = vmatpush2.msra.mxu0 0.0
      %868 = vmatprep.subr.mxu0 0.0
      %869 = vmatpush2.msra.mxu0 0.0
      %870 = vmatprep.subr.mxu0 0.0
      %871 = vmatpush2.msra.mxu0 0.0
      %872 = vmatprep.subr.mxu0 0.0
      %873 = vmatpush2.msra.mxu0 0.0
      %874 = vmatprep.subr.mxu0 0.0
      %875 = vmatpush2.msra.mxu0 0.0
      %876 = vmatprep.subr.mxu0 0.0
      %877 = vmatpush2.msra.mxu0 0.0
      %878 = vmatprep.subr.mxu0 0.0
      %879 = vmatpush2.msra.mxu0 0.0
      %880 = vmatprep.subr.mxu0 0.0
      %881 = vmatpush2.msra.mxu0 0.0
      %882 = vmatprep.subr.mxu0 0.0
      %883 = vmatpush2.msra.mxu0 0.0
      %884 = vmatprep.subr.mxu0 %v737
      %885 = vmatpush2.msra.mxu0 %v734
      %886 = vmatprep.mubr.f32.mxu0 %v721
      %887 = vmatmul.mubr.f32.gmra.mxu0 %v574
      %v888 = vpop.f32.mrf.mxu0
      %v889 = vadd.f32 %v700, %v888
      %v890 = vpop.f32.mrf.mxu0
      %v891 = vadd.f32 %v704, %v890
      %892 = vmatprep.mubr.f32.mxu0 %v724
      %893 = vmatmul.mubr.f32.gmra.mxu0 %v576
      %v894 = vpop.f32.mrf.mxu0
      %v895 = vadd.f32 %v700, %v894
      %v896 = vpop.f32.mrf.mxu0
      %v897 = vadd.f32 %v704, %v896
      %898 = vdwg.mxu0
      %899 = vmatprep.subr.mxu0 %v680
      %900 = vmatpush1.msra.mxu0 %v679
      %901 = vmatprep.subr.mxu0 %v674
      %902 = vmatpush1.msra.mxu0 %v673
      %903 = vmatprep.subr.mxu0 %v668
      %904 = vmatpush1.msra.mxu0 %v667
      %905 = vmatprep.subr.mxu0 %v662
      %906 = vmatpush1.msra.mxu0 %v661
      %907 = vmatprep.subr.mxu0 %v656
      %908 = vmatpush1.msra.mxu0 %v655
      %909 = vmatprep.subr.mxu0 %v650
      %910 = vmatpush1.msra.mxu0 %v649
      %911 = vmatprep.subr.mxu0 %v644
      %912 = vmatpush1.msra.mxu0 %v643
      %913 = vmatprep.subr.mxu0 %v638
      %914 = vmatpush1.msra.mxu0 %v637
      %915 = vmatprep.subr.mxu0 %v632
      %916 = vmatpush1.msra.mxu0 %v631
      %917 = vmatprep.subr.mxu0 %v626
      %918 = vmatpush1.msra.mxu0 %v625
      %919 = vmatprep.subr.mxu0 %v620
      %920 = vmatpush1.msra.mxu0 %v619
      %921 = vmatprep.subr.mxu0 %v614
      %922 = vmatpush1.msra.mxu0 %v613
      %923 = vmatprep.subr.mxu0 %v608
      %924 = vmatpush1.msra.mxu0 %v607
      %925 = vmatprep.subr.mxu0 %v602
      %926 = vmatpush1.msra.mxu0 %v601
      %927 = vmatprep.subr.mxu0 %v596
      %928 = vmatpush1.msra.mxu0 %v595
      %929 = vmatprep.subr.mxu0 %v590
      %930 = vmatpush1.msra.mxu0 %v589
      %931 = vmatprep.subr.mxu0 0.0
      %932 = vmatpush2.msra.mxu0 0.0
      %933 = vmatprep.subr.mxu0 0.0
      %934 = vmatpush2.msra.mxu0 0.0
      %935 = vmatprep.subr.mxu0 0.0
      %936 = vmatpush2.msra.mxu0 0.0
      %937 = vmatprep.subr.mxu0 0.0
      %938 = vmatpush2.msra.mxu0 0.0
      %939 = vmatprep.subr.mxu0 0.0
      %940 = vmatpush2.msra.mxu0 0.0
      %941 = vmatprep.subr.mxu0 0.0
      %942 = vmatpush2.msra.mxu0 0.0
      %943 = vmatprep.subr.mxu0 0.0
      %944 = vmatpush2.msra.mxu0 0.0
      %945 = vmatprep.subr.mxu0 0.0
      %946 = vmatpush2.msra.mxu0 0.0
      %947 = vmatprep.subr.mxu0 0.0
      %948 = vmatpush2.msra.mxu0 0.0
      %949 = vmatprep.subr.mxu0 0.0
      %950 = vmatpush2.msra.mxu0 0.0
      %951 = vmatprep.subr.mxu0 0.0
      %952 = vmatpush2.msra.mxu0 0.0
      %953 = vmatprep.subr.mxu0 0.0
      %954 = vmatpush2.msra.mxu0 0.0
      %955 = vmatprep.subr.mxu0 0.0
      %956 = vmatpush2.msra.mxu0 0.0
      %957 = vmatprep.subr.mxu0 0.0
      %958 = vmatpush2.msra.mxu0 0.0
      %959 = vmatprep.subr.mxu0 0.0
      %960 = vmatpush2.msra.mxu0 0.0
      %961 = vmatprep.subr.mxu0 %v743
      %962 = vmatpush2.msra.mxu0 %v740
      %963 = vmatprep.mubr.f32.mxu0 %v721
      %964 = vmatmul.mubr.f32.gmra.mxu0 %v574
      %v965 = vpop.f32.mrf.mxu0
      %v966 = vadd.f32 %v708, %v965
      %v967 = vpop.f32.mrf.mxu0
      %v968 = vadd.f32 %v712, %v967
      %969 = vmatprep.mubr.f32.mxu0 %v724
      %970 = vmatmul.mubr.f32.gmra.mxu0 %v576
      %v971 = vpop.f32.mrf.mxu0
      %v972 = vadd.f32 %v708, %v971
      %v973 = vpop.f32.mrf.mxu0
      %v974 = vadd.f32 %v712, %v973
      %975 = vdwg.mxu0
      %976 = vmatprep.subr.mxu0 0.0
      %977 = vmatpush1.xpose.msra.mxu0 0.0
      %978 = vmatprep.subr.mxu0 0.0
      %979 = vmatpush1.xpose.msra.mxu0 0.0
      %980 = vmatprep.subr.mxu0 0.0
      %981 = vmatpush1.xpose.msra.mxu0 0.0
      %982 = vmatprep.subr.mxu0 0.0
      %983 = vmatpush1.xpose.msra.mxu0 0.0
      %984 = vmatprep.subr.mxu0 0.0
      %985 = vmatpush1.xpose.msra.mxu0 0.0
      %986 = vmatprep.subr.mxu0 0.0
      %987 = vmatpush1.xpose.msra.mxu0 0.0
      %988 = vmatprep.subr.mxu0 0.0
      %989 = vmatpush1.xpose.msra.mxu0 0.0
      %990 = vmatprep.subr.mxu0 0.0
      %991 = vmatpush1.xpose.msra.mxu0 0.0
      %992 = vmatprep.subr.mxu0 0.0
      %993 = vmatpush1.xpose.msra.mxu0 0.0
      %994 = vmatprep.subr.mxu0 0.0
      %995 = vmatpush1.xpose.msra.mxu0 0.0
      %996 = vmatprep.subr.mxu0 0.0
      %997 = vmatpush1.xpose.msra.mxu0 0.0
      %998 = vmatprep.subr.mxu0 0.0
      %999 = vmatpush1.xpose.msra.mxu0 0.0
      %1000 = vmatprep.subr.mxu0 0.0
      %1001 = vmatpush1.xpose.msra.mxu0 0.0
      %1002 = vmatprep.subr.mxu0 0.0
      %1003 = vmatpush1.xpose.msra.mxu0 0.0
      %1004 = vmatprep.subr.mxu0 0.0
      %1005 = vmatpush1.xpose.msra.mxu0 %v895
      %1006 = vmatprep.subr.mxu0 0.0
      %1007 = vmatpush1.xpose.msra.mxu0 %v889
      %1008 = vmatprep.subr.mxu0 0.0
      %1009 = vmatpush2.xpose.msra.mxu0 0.0
      %1010 = vmatprep.subr.mxu0 0.0
      %1011 = vmatpush2.xpose.msra.mxu0 0.0
      %1012 = vmatprep.subr.mxu0 0.0
      %1013 = vmatpush2.xpose.msra.mxu0 0.0
      %1014 = vmatprep.subr.mxu0 0.0
      %1015 = vmatpush2.xpose.msra.mxu0 0.0
      %1016 = vmatprep.subr.mxu0 0.0
      %1017 = vmatpush2.xpose.msra.mxu0 0.0
      %1018 = vmatprep.subr.mxu0 0.0
      %1019 = vmatpush2.xpose.msra.mxu0 0.0
      %1020 = vmatprep.subr.mxu0 0.0
      %1021 = vmatpush2.xpose.msra.mxu0 0.0
      %1022 = vmatprep.subr.mxu0 0.0
      %1023 = vmatpush2.xpose.msra.mxu0 0.0
      %1024 = vmatprep.subr.mxu0 0.0
      %1025 = vmatpush2.xpose.msra.mxu0 0.0
      %1026 = vmatprep.subr.mxu0 0.0
      %1027 = vmatpush2.xpose.msra.mxu0 0.0
      %1028 = vmatprep.subr.mxu0 0.0
      %1029 = vmatpush2.xpose.msra.mxu0 0.0
      %1030 = vmatprep.subr.mxu0 0.0
      %1031 = vmatpush2.xpose.msra.mxu0 0.0
      %1032 = vmatprep.subr.mxu0 0.0
      %1033 = vmatpush2.xpose.msra.mxu0 0.0
      %1034 = vmatprep.subr.mxu0 0.0
      %1035 = vmatpush2.xpose.msra.mxu0 0.0
      %1036 = vmatprep.subr.mxu0 0.0
      %1037 = vmatpush2.xpose.msra.mxu0 0.0
      %1038 = vmatprep.subr.mxu0 0.0
      %1039 = vmatpush2.xpose.msra.mxu0 0.0
      %1040 = vmatprep.mubr.f32.mxu0 0.0
      %1041 = vmatmul.mubr.f32.gmra.mxu0 %v812
      %v1042 = vpop.f32.mrf.mxu0
      %v1043 = vadd.f32 %v583, %v1042
      %v1044 = vpop.f32.mrf.mxu0
      %1045 = vmatprep.mubr.f32.mxu0 0.0
      %1046 = vmatmul.mubr.f32.gmra.mxu0 %v818
      %v1047 = vpop.f32.mrf.mxu0
      %v1048 = vadd.f32 %v583, %v1047
      %v1049 = vpop.f32.mrf.mxu0
      %1050 = vdwg.mxu0
      %vm1051 = vcmask 72704
      %v1052 = vsel %vm1051, %v1043, -inf
      %1053 = vmax.xlane.f32.xlu0 %v1052
      %v1054 = vpop.xlane.xlu0 %1053
      %vm1055 = vcmask 65536
      %v1056 = vsel %vm1055, %v1048, -inf
      %1057 = vmax.xlane.f32.xlu0 %v1056
      %v1058 = vpop.xlane.xlu0 %1057
      %v1059 = vsub.f32 %v1043, %v1054
      %v1060 = vsub.f32 %v1048, %v1058
      %v1061 = vmul.f32 %v1059, 1.442695
      %v1062 = vpow.pop %v1061
      %v1063 = vmul.f32 %v1060, 1.442695
      %v1064 = vpow.pop %v1063
      %v1065 = vsel %vm1051, %v1062, 0.0
      %1066 = vadd.xlane.f32.xlu0 %v1065
      %v1067 = vpop.xlane.xlu0 %1066
      %v1068 = vsel %vm1055, %v1064, 0.0
      %1069 = vadd.xlane.f32.xlu0 %v1068
      %v1070 = vpop.xlane.xlu0 %1069
      %v1071 = vrcp.pop %v1067
      %v1072 = vrcp.pop %v1070
      %v1073 = vmul.f32 %v1062, %v1071
      %v1074 = vmul.f32 %v1064, %v1072
      %v1076 = vsel %vm1051, %v1073, 0
      %v1079 = vsel %vm1051, %v1074, 0
      %vm1081 = vcmask 1040384
      %v1083 = vsel %vm1081, %v972, 0
      %1085 = vmatprep.subr.mxu0 0.0
      %1086 = vmatpush1.msra.mxu0 0.0
      %1087 = vmatprep.subr.mxu0 0.0
      %1088 = vmatpush1.msra.mxu0 0.0
      %1089 = vmatprep.subr.mxu0 0.0
      %1090 = vmatpush1.msra.mxu0 0.0
      %1091 = vmatprep.subr.mxu0 0.0
      %1092 = vmatpush1.msra.mxu0 0.0
      %1093 = vmatprep.subr.mxu0 0.0
      %1094 = vmatpush1.msra.mxu0 0.0
      %1095 = vmatprep.subr.mxu0 0.0
      %1096 = vmatpush1.msra.mxu0 0.0
      %1097 = vmatprep.subr.mxu0 0.0
      %1098 = vmatpush1.msra.mxu0 0.0
      %1099 = vmatprep.subr.mxu0 0.0
      %1100 = vmatpush1.msra.mxu0 0.0
      %1101 = vmatprep.subr.mxu0 0.0
      %1102 = vmatpush1.msra.mxu0 0.0
      %1103 = vmatprep.subr.mxu0 0.0
      %1104 = vmatpush1.msra.mxu0 0.0
      %1105 = vmatprep.subr.mxu0 0.0
      %1106 = vmatpush1.msra.mxu0 0.0
      %1107 = vmatprep.subr.mxu0 0.0
      %1108 = vmatpush1.msra.mxu0 0.0
      %1109 = vmatprep.subr.mxu0 0.0
      %1110 = vmatpush1.msra.mxu0 0.0
      %1111 = vmatprep.subr.mxu0 0.0
      %1112 = vmatpush1.msra.mxu0 0.0
      %1113 = vmatprep.subr.mxu0 0.0
      %1114 = vmatpush1.msra.mxu0 %v1083
      %1115 = vmatprep.subr.mxu0 0.0
      %1116 = vmatpush1.msra.mxu0 %v966
      %1117 = vmatprep.subr.mxu0 0.0
      %1118 = vmatpush2.msra.mxu0 0.0
      %1119 = vmatprep.subr.mxu0 0.0
      %1120 = vmatpush2.msra.mxu0 0.0
      %1121 = vmatprep.subr.mxu0 0.0
      %1122 = vmatpush2.msra.mxu0 0.0
      %1123 = vmatprep.subr.mxu0 0.0
      %1124 = vmatpush2.msra.mxu0 0.0
      %1125 = vmatprep.subr.mxu0 0.0
      %1126 = vmatpush2.msra.mxu0 0.0
      %1127 = vmatprep.subr.mxu0 0.0
      %1128 = vmatpush2.msra.mxu0 0.0
      %1129 = vmatprep.subr.mxu0 0.0
      %1130 = vmatpush2.msra.mxu0 0.0
      %1131 = vmatprep.subr.mxu0 0.0
      %1132 = vmatpush2.msra.mxu0 0.0
      %1133 = vmatprep.subr.mxu0 0.0
      %1134 = vmatpush2.msra.mxu0 0.0
      %1135 = vmatprep.subr.mxu0 0.0
      %1136 = vmatpush2.msra.mxu0 0.0
      %1137 = vmatprep.subr.mxu0 0.0
      %1138 = vmatpush2.msra.mxu0 0.0
      %1139 = vmatprep.subr.mxu0 0.0
      %1140 = vmatpush2.msra.mxu0 0.0
      %1141 = vmatprep.subr.mxu0 0.0
      %1142 = vmatpush2.msra.mxu0 0.0
      %1143 = vmatprep.subr.mxu0 0.0
      %1144 = vmatpush2.msra.mxu0 0.0
      %1145 = vmatprep.subr.mxu0 0.0
      %1146 = vmatpush2.msra.mxu0 0.0
      %1147 = vmatprep.subr.mxu0 0.0
      %1148 = vmatpush2.msra.mxu0 0.0
      %1149 = vmatprep.mubr.f32.mxu0 0.0
      %1150 = vmatmul.mubr.f32.gmra.mxu0 %v1076
      %v1151 = vpop.f32.mrf.mxu0
      %v1152 = vadd.f32 0.0, %v1151
      %v1153 = vpop.f32.mrf.mxu0
      %1154 = vmatprep.mubr.f32.mxu0 0.0
      %1155 = vmatmul.mubr.f32.gmra.mxu0 %v1079
      %v1156 = vpop.f32.mrf.mxu0
      %v1157 = vadd.f32 0.0, %v1156
      %v1158 = vpop.f32.mrf.mxu0
      %1159 = vdwg.mxu0
      %1160 = vmatprep.subr.mxu0 0.0
      %1161 = vmatpush1.xpose.msra.mxu0 0.0
      %1162 = vmatprep.subr.mxu0 0.0
      %1163 = vmatpush1.xpose.msra.mxu0 0.0
      %1164 = vmatprep.subr.mxu0 0.0
      %1165 = vmatpush1.xpose.msra.mxu0 0.0
      %1166 = vmatprep.subr.mxu0 0.0
      %1167 = vmatpush1.xpose.msra.mxu0 0.0
      %1168 = vmatprep.subr.mxu0 0.0
      %1169 = vmatpush1.xpose.msra.mxu0 0.0
      %1170 = vmatprep.subr.mxu0 0.0
      %1171 = vmatpush1.xpose.msra.mxu0 0.0
      %1172 = vmatprep.subr.mxu0 0.0
      %1173 = vmatpush1.xpose.msra.mxu0 0.0
      %1174 = vmatprep.subr.mxu0 0.0
      %1175 = vmatpush1.xpose.msra.mxu0 0.0
      %1176 = vmatprep.subr.mxu0 0.0
      %1177 = vmatpush1.xpose.msra.mxu0 0.0
      %1178 = vmatprep.subr.mxu0 0.0
      %1179 = vmatpush1.xpose.msra.mxu0 0.0
      %1180 = vmatprep.subr.mxu0 0.0
      %1181 = vmatpush1.xpose.msra.mxu0 0.0
      %1182 = vmatprep.subr.mxu0 0.0
      %1183 = vmatpush1.xpose.msra.mxu0 0.0
      %1184 = vmatprep.subr.mxu0 0.0
      %1185 = vmatpush1.xpose.msra.mxu0 0.0
      %1186 = vmatprep.subr.mxu0 0.0
      %1187 = vmatpush1.xpose.msra.mxu0 0.0
      %1188 = vmatprep.subr.mxu0 0.0
      %1189 = vmatpush1.xpose.msra.mxu0 %v897
      %1190 = vmatprep.subr.mxu0 0.0
      %1191 = vmatpush1.xpose.msra.mxu0 %v891
      %1192 = vmatprep.subr.mxu0 0.0
      %1193 = vmatpush2.xpose.msra.mxu0 0.0
      %1194 = vmatprep.subr.mxu0 0.0
      %1195 = vmatpush2.xpose.msra.mxu0 0.0
      %1196 = vmatprep.subr.mxu0 0.0
      %1197 = vmatpush2.xpose.msra.mxu0 0.0
      %1198 = vmatprep.subr.mxu0 0.0
      %1199 = vmatpush2.xpose.msra.mxu0 0.0
      %1200 = vmatprep.subr.mxu0 0.0
      %1201 = vmatpush2.xpose.msra.mxu0 0.0
      %1202 = vmatprep.subr.mxu0 0.0
      %1203 = vmatpush2.xpose.msra.mxu0 0.0
      %1204 = vmatprep.subr.mxu0 0.0
      %1205 = vmatpush2.xpose.msra.mxu0 0.0
      %1206 = vmatprep.subr.mxu0 0.0
      %1207 = vmatpush2.xpose.msra.mxu0 0.0
      %1208 = vmatprep.subr.mxu0 0.0
      %1209 = vmatpush2.xpose.msra.mxu0 0.0
      %1210 = vmatprep.subr.mxu0 0.0
      %1211 = vmatpush2.xpose.msra.mxu0 0.0
      %1212 = vmatprep.subr.mxu0 0.0
      %1213 = vmatpush2.xpose.msra.mxu0 0.0
      %1214 = vmatprep.subr.mxu0 0.0
      %1215 = vmatpush2.xpose.msra.mxu0 0.0
      %1216 = vmatprep.subr.mxu0 0.0
      %1217 = vmatpush2.xpose.msra.mxu0 0.0
      %1218 = vmatprep.subr.mxu0 0.0
      %1219 = vmatpush2.xpose.msra.mxu0 0.0
      %1220 = vmatprep.subr.mxu0 0.0
      %1221 = vmatpush2.xpose.msra.mxu0 0.0
      %1222 = vmatprep.subr.mxu0 0.0
      %1223 = vmatpush2.xpose.msra.mxu0 0.0
      %1224 = vmatprep.mubr.f32.mxu0 0.0
      %1225 = vmatmul.mubr.f32.gmra.mxu0 %v814
      %v1226 = vpop.f32.mrf.mxu0
      %v1227 = vadd.f32 %v583, %v1226
      %v1228 = vpop.f32.mrf.mxu0
      %1229 = vmatprep.mubr.f32.mxu0 0.0
      %1230 = vmatmul.mubr.f32.gmra.mxu0 %v820
      %v1231 = vpop.f32.mrf.mxu0
      %v1232 = vadd.f32 %v583, %v1231
      %v1233 = vpop.f32.mrf.mxu0
      %1234 = vdwg.mxu0
      %v1235 = vsel %vm1051, %v1227, -inf
      %1236 = vmax.xlane.f32.xlu0 %v1235
      %v1237 = vpop.xlane.xlu0 %1236
      %v1238 = vsel %vm1055, %v1232, -inf
      %1239 = vmax.xlane.f32.xlu0 %v1238
      %v1240 = vpop.xlane.xlu0 %1239
      %v1241 = vsub.f32 %v1227, %v1237
      %v1242 = vsub.f32 %v1232, %v1240
      %v1243 = vmul.f32 %v1241, 1.442695
      %v1244 = vpow.pop %v1243
      %v1245 = vmul.f32 %v1242, 1.442695
      %v1246 = vpow.pop %v1245
      %v1247 = vsel %vm1051, %v1244, 0.0
      %1248 = vadd.xlane.f32.xlu0 %v1247
      %v1249 = vpop.xlane.xlu0 %1248
      %v1250 = vsel %vm1055, %v1246, 0.0
      %1251 = vadd.xlane.f32.xlu0 %v1250
      %v1252 = vpop.xlane.xlu0 %1251
      %v1253 = vrcp.pop %v1249
      %v1254 = vrcp.pop %v1252
      %v1255 = vmul.f32 %v1244, %v1253
      %v1256 = vmul.f32 %v1246, %v1254
      %v1258 = vsel %vm1051, %v1255, 0
      %v1261 = vsel %vm1051, %v1256, 0
      %v1264 = vsel %vm1081, %v974, 0
      %1266 = vmatprep.subr.mxu0 0.0
      %1267 = vmatpush1.msra.mxu0 0.0
      %1268 = vmatprep.subr.mxu0 0.0
      %1269 = vmatpush1.msra.mxu0 0.0
      %1270 = vmatprep.subr.mxu0 0.0
      %1271 = vmatpush1.msra.mxu0 0.0
      %1272 = vmatprep.subr.mxu0 0.0
      %1273 = vmatpush1.msra.mxu0 0.0
      %1274 = vmatprep.subr.mxu0 0.0
      %1275 = vmatpush1.msra.mxu0 0.0
      %1276 = vmatprep.subr.mxu0 0.0
      %1277 = vmatpush1.msra.mxu0 0.0
      %1278 = vmatprep.subr.mxu0 0.0
      %1279 = vmatpush1.msra.mxu0 0.0
      %1280 = vmatprep.subr.mxu0 0.0
      %1281 = vmatpush1.msra.mxu0 0.0
      %1282 = vmatprep.subr.mxu0 0.0
      %1283 = vmatpush1.msra.mxu0 0.0
      %1284 = vmatprep.subr.mxu0 0.0
      %1285 = vmatpush1.msra.mxu0 0.0
      %1286 = vmatprep.subr.mxu0 0.0
      %1287 = vmatpush1.msra.mxu0 0.0
      %1288 = vmatprep.subr.mxu0 0.0
      %1289 = vmatpush1.msra.mxu0 0.0
      %1290 = vmatprep.subr.mxu0 0.0
      %1291 = vmatpush1.msra.mxu0 0.0
      %1292 = vmatprep.subr.mxu0 0.0
      %1293 = vmatpush1.msra.mxu0 0.0
      %1294 = vmatprep.subr.mxu0 0.0
      %1295 = vmatpush1.msra.mxu0 %v1264
      %1296 = vmatprep.subr.mxu0 0.0
      %1297 = vmatpush1.msra.mxu0 %v968
      %1298 = vmatprep.subr.mxu0 0.0
      %1299 = vmatpush2.msra.mxu0 0.0
      %1300 = vmatprep.subr.mxu0 0.0
      %1301 = vmatpush2.msra.mxu0 0.0
      %1302 = vmatprep.subr.mxu0 0.0
      %1303 = vmatpush2.msra.mxu0 0.0
      %1304 = vmatprep.subr.mxu0 0.0
      %1305 = vmatpush2.msra.mxu0 0.0
      %1306 = vmatprep.subr.mxu0 0.0
      %1307 = vmatpush2.msra.mxu0 0.0
      %1308 = vmatprep.subr.mxu0 0.0
      %1309 = vmatpush2.msra.mxu0 0.0
      %1310 = vmatprep.subr.mxu0 0.0
      %1311 = vmatpush2.msra.mxu0 0.0
      %1312 = vmatprep.subr.mxu0 0.0
      %1313 = vmatpush2.msra.mxu0 0.0
      %1314 = vmatprep.subr.mxu0 0.0
      %1315 = vmatpush2.msra.mxu0 0.0
      %1316 = vmatprep.subr.mxu0 0.0
      %1317 = vmatpush2.msra.mxu0 0.0
      %1318 = vmatprep.subr.mxu0 0.0
      %1319 = vmatpush2.msra.mxu0 0.0
      %1320 = vmatprep.subr.mxu0 0.0
      %1321 = vmatpush2.msra.mxu0 0.0
      %1322 = vmatprep.subr.mxu0 0.0
      %1323 = vmatpush2.msra.mxu0 0.0
      %1324 = vmatprep.subr.mxu0 0.0
      %1325 = vmatpush2.msra.mxu0 0.0
      %1326 = vmatprep.subr.mxu0 0.0
      %1327 = vmatpush2.msra.mxu0 0.0
      %1328 = vmatprep.subr.mxu0 0.0
      %1329 = vmatpush2.msra.mxu0 0.0
      %1330 = vmatprep.mubr.f32.mxu0 0.0
      %1331 = vmatmul.mubr.f32.gmra.mxu0 %v1258
      %v1332 = vpop.f32.mrf.mxu0
      %v1333 = vadd.f32 0.0, %v1332
      %v1334 = vpop.f32.mrf.mxu0
      %1335 = vmatprep.mubr.f32.mxu0 0.0
      %1336 = vmatmul.mubr.f32.gmra.mxu0 %v1261
      %v1337 = vpop.f32.mrf.mxu0
      %v1338 = vadd.f32 0.0, %v1337
      %v1339 = vpop.f32.mrf.mxu0
      %1340 = vdwg.mxu0
      %v1341 = vld [vmem:[%s4] sm:$0xff]
      %v1342 = vld [vmem:[%s4 + $0x8] sm:$0xff]
      %v1343 = vld [vmem:[%s4 + $0x10] sm:$0xff]
      %v1344 = vld [vmem:[%s4 + $0x18] sm:$0xff]
      %v1345 = vld [vmem:[%s4 + $0x20] sm:$0xff]
      %v1346 = vld [vmem:[%s4 + $0x28] sm:$0xff]
      %v1347 = vld [vmem:[%s4 + $0x30] sm:$0xff]
      %v1348 = vld [vmem:[%s4 + $0x38] sm:$0xff]
      %v1349 = vld [vmem:[%s4 + $0x40] sm:$0xff]
      %v1350 = vld [vmem:[%s4 + $0x48] sm:$0xff]
      %v1351 = vld [vmem:[%s4 + $0x50] sm:$0xff]
      %v1352 = vld [vmem:[%s4 + $0x58] sm:$0xff]
      %v1353 = vld [vmem:[%s4 + $0x60] sm:$0xff]
      %v1354 = vld [vmem:[%s4 + $0x68] sm:$0xff]
      %v1355 = vld [vmem:[%s4 + $0x70] sm:$0xff]
      %v1356 = vld [vmem:[%s4 + $0x78] sm:$0xff]
      %v1357 = vld [vmem:[%s4 + $0x80] sm:$0xff]
      %v1358 = vld [vmem:[%s4 + $0x88] sm:$0xff]
      %v1359 = vld [vmem:[%s4 + $0x90] sm:$0xff]
      %v1360 = vld [vmem:[%s4 + $0x98] sm:$0xff]
      %v1361 = vld [vmem:[%s4 + $0xa0] sm:$0xff]
      %v1362 = vld [vmem:[%s4 + $0xa8] sm:$0xff]
      %v1363 = vld [vmem:[%s4 + $0xb0] sm:$0xff]
      %v1364 = vld [vmem:[%s4 + $0xb8] sm:$0xff]
      %v1365 = vld [vmem:[%s4 + $0xc0] sm:$0xff]
      %v1366 = vld [vmem:[%s4 + $0xc8] sm:$0xff]
      %v1367 = vld [vmem:[%s4 + $0xd0] sm:$0xff]
      %v1368 = vld [vmem:[%s4 + $0xd8] sm:$0xff]
      %v1369 = vld [vmem:[%s4 + $0xe0] sm:$0xff]
      %v1370 = vld [vmem:[%s4 + $0xe8] sm:$0xff]
      %v1371 = vld [vmem:[%s4 + $0xf0] sm:$0xff]
      %v1372 = vld [vmem:[%s4 + $0xf8] sm:$0xff]
      %v1373 = vld [vmem:[%s4 + $0x100] sm:$0xff]
      %v1374 = vld [vmem:[%s4 + $0x108] sm:$0xff]
      %v1375 = vld [vmem:[%s4 + $0x110] sm:$0xff]
      %v1376 = vld [vmem:[%s4 + $0x118] sm:$0xff]
      %v1377 = vld [vmem:[%s4 + $0x120] sm:$0xff]
      %v1378 = vld [vmem:[%s4 + $0x128] sm:$0xff]
      %v1379 = vld [vmem:[%s4 + $0x130] sm:$0xff]
      %v1380 = vld [vmem:[%s4 + $0x138] sm:$0xff]
      %v1381 = vld [vmem:[%s4 + $0x140] sm:$0xff]
      %v1382 = vld [vmem:[%s4 + $0x148] sm:$0xff]
      %v1383 = vld [vmem:[%s4 + $0x150] sm:$0xff]
      %v1384 = vld [vmem:[%s4 + $0x158] sm:$0xff]
      %v1385 = vld [vmem:[%s4 + $0x160] sm:$0xff]
      %v1386 = vld [vmem:[%s4 + $0x168] sm:$0xff]
      %v1387 = vld [vmem:[%s4 + $0x170] sm:$0xff]
      %v1388 = vld [vmem:[%s4 + $0x178] sm:$0xff]
      %v1389 = vld [vmem:[%s4 + $0x180] sm:$0xff]
      %v1390 = vld [vmem:[%s4 + $0x188] sm:$0xff]
      %v1391 = vld [vmem:[%s4 + $0x190] sm:$0xff]
      %v1392 = vld [vmem:[%s4 + $0x198] sm:$0xff]
      %v1393 = vld [vmem:[%s4 + $0x1a0] sm:$0xff]
      %v1394 = vld [vmem:[%s4 + $0x1a8] sm:$0xff]
      %v1395 = vld [vmem:[%s4 + $0x1b0] sm:$0xff]
      %v1396 = vld [vmem:[%s4 + $0x1b8] sm:$0xff]
      %v1397 = vld [vmem:[%s4 + $0x1c0] sm:$0xff]
      %v1398 = vld [vmem:[%s4 + $0x1c8] sm:$0xff]
      %v1399 = vld [vmem:[%s4 + $0x1d0] sm:$0xff]
      %v1400 = vld [vmem:[%s4 + $0x1d8] sm:$0xff]
      %v1401 = vld [vmem:[%s4 + $0x1e0] sm:$0xff]
      %v1402 = vld [vmem:[%s4 + $0x1e8] sm:$0xff]
      %v1403 = vld [vmem:[%s4 + $0x1f0] sm:$0xff]
      %v1404 = vld [vmem:[%s4 + $0x1f8] sm:$0xff]
      %v1405 = vld [vmem:[%s5] sm:$0x3]
      %v1407 = vlaneseq
      %v1408 = vshrl.u32 %v1407, 7
      %v1409 = vsub.s32 0, %v1408
      %v1410 = vrot.slane %v1405, %v1409
      %v1411 = vlaneseq
      %v1412 = vshrl.u32 %v1411, 7
      %v1413 = vsub.s32 1, %v1412
      %v1414 = vrot.slane %v1405, %v1413
      %1417 = vmatprep.subr.mxu0 %v1372
      %1418 = vmatpush1.msra.mxu0 %v1371
      %1419 = vmatprep.subr.mxu0 %v1370
      %1420 = vmatpush1.msra.mxu0 %v1369
      %1421 = vmatprep.subr.mxu0 %v1368
      %1422 = vmatpush1.msra.mxu0 %v1367
      %1423 = vmatprep.subr.mxu0 %v1366
      %1424 = vmatpush1.msra.mxu0 %v1365
      %1425 = vmatprep.subr.mxu0 %v1364
      %1426 = vmatpush1.msra.mxu0 %v1363
      %1427 = vmatprep.subr.mxu0 %v1362
      %1428 = vmatpush1.msra.mxu0 %v1361
      %1429 = vmatprep.subr.mxu0 %v1360
      %1430 = vmatpush1.msra.mxu0 %v1359
      %1431 = vmatprep.subr.mxu0 %v1358
      %1432 = vmatpush1.msra.mxu0 %v1357
      %1433 = vmatprep.subr.mxu0 %v1356
      %1434 = vmatpush1.msra.mxu0 %v1355
      %1435 = vmatprep.subr.mxu0 %v1354
      %1436 = vmatpush1.msra.mxu0 %v1353
      %1437 = vmatprep.subr.mxu0 %v1352
      %1438 = vmatpush1.msra.mxu0 %v1351
      %1439 = vmatprep.subr.mxu0 %v1350
      %1440 = vmatpush1.msra.mxu0 %v1349
      %1441 = vmatprep.subr.mxu0 %v1348
      %1442 = vmatpush1.msra.mxu0 %v1347
      %1443 = vmatprep.subr.mxu0 %v1346
      %1444 = vmatpush1.msra.mxu0 %v1345
      %1445 = vmatprep.subr.mxu0 %v1344
      %1446 = vmatpush1.msra.mxu0 %v1343
      %1447 = vmatprep.subr.mxu0 %v1342
      %1448 = vmatpush1.msra.mxu0 %v1341
      %1449 = vmatprep.subr.mxu0 %v1404
      %1450 = vmatpush2.msra.mxu0 %v1403
      %1451 = vmatprep.subr.mxu0 %v1402
      %1452 = vmatpush2.msra.mxu0 %v1401
      %1453 = vmatprep.subr.mxu0 %v1400
      %1454 = vmatpush2.msra.mxu0 %v1399
      %1455 = vmatprep.subr.mxu0 %v1398
      %1456 = vmatpush2.msra.mxu0 %v1397
      %1457 = vmatprep.subr.mxu0 %v1396
      %1458 = vmatpush2.msra.mxu0 %v1395
      %1459 = vmatprep.subr.mxu0 %v1394
      %1460 = vmatpush2.msra.mxu0 %v1393
      %1461 = vmatprep.subr.mxu0 %v1392
      %1462 = vmatpush2.msra.mxu0 %v1391
      %1463 = vmatprep.subr.mxu0 %v1390
      %1464 = vmatpush2.msra.mxu0 %v1389
      %1465 = vmatprep.subr.mxu0 %v1388
      %1466 = vmatpush2.msra.mxu0 %v1387
      %1467 = vmatprep.subr.mxu0 %v1386
      %1468 = vmatpush2.msra.mxu0 %v1385
      %1469 = vmatprep.subr.mxu0 %v1384
      %1470 = vmatpush2.msra.mxu0 %v1383
      %1471 = vmatprep.subr.mxu0 %v1382
      %1472 = vmatpush2.msra.mxu0 %v1381
      %1473 = vmatprep.subr.mxu0 %v1380
      %1474 = vmatpush2.msra.mxu0 %v1379
      %1475 = vmatprep.subr.mxu0 %v1378
      %1476 = vmatpush2.msra.mxu0 %v1377
      %1477 = vmatprep.subr.mxu0 %v1376
      %1478 = vmatpush2.msra.mxu0 %v1375
      %1479 = vmatprep.subr.mxu0 %v1374
      %1480 = vmatpush2.msra.mxu0 %v1373
      %1481 = vmatprep.mubr.f32.mxu0 %v1333
      %1482 = vmatmul.mubr.f32.gmra.mxu0 %v1152
      %v1483 = vpop.f32.mrf.mxu0
      %v1484 = vadd.f32 %v1410, %v1483
      %v1485 = vpop.f32.mrf.mxu0
      %v1486 = vadd.f32 %v1414, %v1485
      %1487 = vmatprep.mubr.f32.mxu0 %v1338
      %1488 = vmatmul.mubr.f32.gmra.mxu0 %v1157
      %v1489 = vpop.f32.mrf.mxu0
      %v1490 = vadd.f32 %v1410, %v1489
      %v1491 = vpop.f32.mrf.mxu0
      %v1492 = vadd.f32 %v1414, %v1491
      %1493 = vdwg.mxu0
      %v1494 = vadd.f32 %v574, %v1484
      %v1495 = vadd.f32 %v575, %v1486
      %v1496 = vadd.f32 %v576, %v1490
      %v1497 = vadd.f32 %v577, %v1492
      %v1498 = vld [vmem:[%s6] sm:$0x3]
      %v1499 = vld [vmem:[%s7] sm:$0x3]
      %v1500 = vsel %vm719, %v1495, 0.0
      %v1501 = vadd.f32 %v1494, %v1500
      %1502 = vadd.xlane.f32.xlu0 %v1501
      %v1503 = vpop.xlane.xlu0 %1502
      %v1504 = vsel %vm1081, %v1496, 0.0
      %vm1505 = vcmask 8192
      %v1506 = vsel %vm1505, %v1497, 0.0
      %v1507 = vadd.f32 %v1504, %v1506
      %1508 = vadd.xlane.f32.xlu0 %v1507
      %v1509 = vpop.xlane.xlu0 %1508
      %v1510 = vrcp.pop 130.0
      %v1511 = vmul.f32 %v1503, %v1510
      %v1512 = vmul.f32 %v1509, %v1510
      %v1513 = vsub.f32 %v1494, %v1511
      %v1514 = vsub.f32 %v1495, %v1511
      %v1515 = vsub.f32 %v1496, %v1512
      %v1516 = vsub.f32 %v1497, %v1512
      %v1517 = vmul.f32 %v1513, %v1513
      %v1518 = vmul.f32 %v1514, %v1514
      %v1519 = vmul.f32 %v1515, %v1515
      %v1520 = vmul.f32 %v1516, %v1516
      %v1521 = vsel %vm719, %v1518, 0.0
      %v1522 = vadd.f32 %v1517, %v1521
      %1523 = vadd.xlane.f32.xlu0 %v1522
      %v1524 = vpop.xlane.xlu0 %1523
      %v1525 = vsel %vm1081, %v1519, 0.0
      %v1526 = vsel %vm1505, %v1520, 0.0
      %v1527 = vadd.f32 %v1525, %v1526
      %1528 = vadd.xlane.f32.xlu0 %v1527
      %v1529 = vpop.xlane.xlu0 %1528
      %v1530 = vmul.f32 %v1524, %v1510
      %v1531 = vmul.f32 %v1529, %v1510
      %v1532 = vadd.f32 %v1530, 1e-05
      %v1533 = vadd.f32 %v1531, 1e-05
      %v1534 = vrsqrt.pop %v1532
      %v1535 = vrsqrt.pop %v1533
      %v1536 = vmul.f32 %v1513, %v1534
      %v1537 = vmul.f32 %v1514, %v1534
      %v1538 = vmul.f32 %v1515, %v1535
      %v1539 = vmul.f32 %v1516, %v1535
      %v1541 = vlaneseq
      %v1542 = vshrl.u32 %v1541, 7
      %v1543 = vsub.s32 0, %v1542
      %v1544 = vrot.slane %v1498, %v1543
      %v1545 = vlaneseq
      %v1546 = vshrl.u32 %v1545, 7
      %v1547 = vsub.s32 1, %v1546
      %v1548 = vrot.slane %v1498, %v1547
      %v1551 = vmul.f32 %v1536, %v1544
      %v1552 = vmul.f32 %v1537, %v1548
      %v1553 = vmul.f32 %v1538, %v1544
      %v1554 = vmul.f32 %v1539, %v1548
      %v1556 = vlaneseq
      %v1557 = vshrl.u32 %v1556, 7
      %v1558 = vsub.s32 0, %v1557
      %v1559 = vrot.slane %v1499, %v1558
      %v1560 = vlaneseq
      %v1561 = vshrl.u32 %v1560, 7
      %v1562 = vsub.s32 1, %v1561
      %v1563 = vrot.slane %v1499, %v1562
      %v1566 = vadd.f32 %v1551, %v1559
      %v1567 = vadd.f32 %v1552, %v1563
      %v1568 = vadd.f32 %v1553, %v1559
      %v1569 = vadd.f32 %v1554, %v1563
      %v1570 = vld [vmem:[%s8] sm:$0xff]
      %v1571 = vld [vmem:[%s8 + $0x8] sm:$0xff]
      %v1572 = vld [vmem:[%s8 + $0x10] sm:$0xff]
      %v1573 = vld [vmem:[%s8 + $0x18] sm:$0xff]
      %v1574 = vld [vmem:[%s8 + $0x20] sm:$0xff]
      %v1575 = vld [vmem:[%s8 + $0x28] sm:$0xff]
      %v1576 = vld [vmem:[%s8 + $0x30] sm:$0xff]
      %v1577 = vld [vmem:[%s8 + $0x38] sm:$0xff]
      %v1578 = vld [vmem:[%s8 + $0x40] sm:$0xff]
      %v1579 = vld [vmem:[%s8 + $0x48] sm:$0xff]
      %v1580 = vld [vmem:[%s8 + $0x50] sm:$0xff]
      %v1581 = vld [vmem:[%s8 + $0x58] sm:$0xff]
      %v1582 = vld [vmem:[%s8 + $0x60] sm:$0xff]
      %v1583 = vld [vmem:[%s8 + $0x68] sm:$0xff]
      %v1584 = vld [vmem:[%s8 + $0x70] sm:$0xff]
      %v1585 = vld [vmem:[%s8 + $0x78] sm:$0xff]
      %v1586 = vld [vmem:[%s8 + $0x80] sm:$0xff]
      %v1587 = vld [vmem:[%s8 + $0x88] sm:$0xff]
      %v1588 = vld [vmem:[%s8 + $0x90] sm:$0xff]
      %v1589 = vld [vmem:[%s8 + $0x98] sm:$0xff]
      %v1590 = vld [vmem:[%s8 + $0xa0] sm:$0xff]
      %v1591 = vld [vmem:[%s8 + $0xa8] sm:$0xff]
      %v1592 = vld [vmem:[%s8 + $0xb0] sm:$0xff]
      %v1593 = vld [vmem:[%s8 + $0xb8] sm:$0xff]
      %v1594 = vld [vmem:[%s8 + $0xc0] sm:$0xff]
      %v1595 = vld [vmem:[%s8 + $0xc8] sm:$0xff]
      %v1596 = vld [vmem:[%s8 + $0xd0] sm:$0xff]
      %v1597 = vld [vmem:[%s8 + $0xd8] sm:$0xff]
      %v1598 = vld [vmem:[%s8 + $0xe0] sm:$0xff]
      %v1599 = vld [vmem:[%s8 + $0xe8] sm:$0xff]
      %v1600 = vld [vmem:[%s8 + $0xf0] sm:$0xff]
      %v1601 = vld [vmem:[%s8 + $0xf8] sm:$0xff]
      %v1602 = vld [vmem:[%s8 + $0x100] sm:$0xff]
      %v1603 = vld [vmem:[%s8 + $0x108] sm:$0xff]
      %v1604 = vld [vmem:[%s8 + $0x110] sm:$0xff]
      %v1605 = vld [vmem:[%s8 + $0x118] sm:$0xff]
      %v1606 = vld [vmem:[%s8 + $0x120] sm:$0xff]
      %v1607 = vld [vmem:[%s8 + $0x128] sm:$0xff]
      %v1608 = vld [vmem:[%s8 + $0x130] sm:$0xff]
      %v1609 = vld [vmem:[%s8 + $0x138] sm:$0xff]
      %v1610 = vld [vmem:[%s8 + $0x140] sm:$0xff]
      %v1611 = vld [vmem:[%s8 + $0x148] sm:$0xff]
      %v1612 = vld [vmem:[%s8 + $0x150] sm:$0xff]
      %v1613 = vld [vmem:[%s8 + $0x158] sm:$0xff]
      %v1614 = vld [vmem:[%s8 + $0x160] sm:$0xff]
      %v1615 = vld [vmem:[%s8 + $0x168] sm:$0xff]
      %v1616 = vld [vmem:[%s8 + $0x170] sm:$0xff]
      %v1617 = vld [vmem:[%s8 + $0x178] sm:$0xff]
      %v1618 = vld [vmem:[%s8 + $0x180] sm:$0xff]
      %v1619 = vld [vmem:[%s8 + $0x188] sm:$0xff]
      %v1620 = vld [vmem:[%s8 + $0x190] sm:$0xff]
      %v1621 = vld [vmem:[%s8 + $0x198] sm:$0xff]
      %v1622 = vld [vmem:[%s8 + $0x1a0] sm:$0xff]
      %v1623 = vld [vmem:[%s8 + $0x1a8] sm:$0xff]
      %v1624 = vld [vmem:[%s8 + $0x1b0] sm:$0xff]
      %v1625 = vld [vmem:[%s8 + $0x1b8] sm:$0xff]
      %v1626 = vld [vmem:[%s8 + $0x1c0] sm:$0xff]
      %v1627 = vld [vmem:[%s8 + $0x1c8] sm:$0xff]
      %v1628 = vld [vmem:[%s8 + $0x1d0] sm:$0xff]
      %v1629 = vld [vmem:[%s8 + $0x1d8] sm:$0xff]
      %v1630 = vld [vmem:[%s8 + $0x1e0] sm:$0xff]
      %v1631 = vld [vmem:[%s8 + $0x1e8] sm:$0xff]
      %v1632 = vld [vmem:[%s8 + $0x1f0] sm:$0xff]
      %v1633 = vld [vmem:[%s8 + $0x1f8] sm:$0xff]
      %v1634 = vld [vmem:[%s8 + $0x200] sm:$0x3]
      %v1635 = vld [vmem:[%s8 + $0x208] sm:$0x3]
      %v1636 = vld [vmem:[%s8 + $0x210] sm:$0x3]
      %v1637 = vld [vmem:[%s8 + $0x218] sm:$0x3]
      %v1638 = vld [vmem:[%s9] sm:$0xf]
      %v1640 = vlaneseq
      %v1641 = vshrl.u32 %v1640, 7
      %v1642 = vsub.s32 0, %v1641
      %v1643 = vrot.slane %v1638, %v1642
      %v1644 = vlaneseq
      %v1645 = vshrl.u32 %v1644, 7
      %v1646 = vsub.s32 1, %v1645
      %v1647 = vrot.slane %v1638, %v1646
      %v1648 = vlaneseq
      %v1649 = vshrl.u32 %v1648, 7
      %v1650 = vsub.s32 2, %v1649
      %v1651 = vrot.slane %v1638, %v1650
      %v1652 = vlaneseq
      %v1653 = vshrl.u32 %v1652, 7
      %v1654 = vsub.s32 3, %v1653
      %v1655 = vrot.slane %v1638, %v1654
      %v1661 = vsel %vm719, %v1567, 0
      %v1664 = vsel %vm719, %v1569, 0
      %v1667 = vsel %vm726, %v1634, 0
      %v1670 = vsel %vm726, %v1635, 0
      %v1673 = vsel %vm726, %v1636, 0
      %v1676 = vsel %vm726, %v1637, 0
      %1678 = vmatprep.subr.mxu0 %v1631
      %1679 = vmatpush1.msra.mxu0 %v1630
      %1680 = vmatprep.subr.mxu0 %v1627
      %1681 = vmatpush1.msra.mxu0 %v1626
      %1682 = vmatprep.subr.mxu0 %v1623
      %1683 = vmatpush1.msra.mxu0 %v1622
      %1684 = vmatprep.subr.mxu0 %v1619
      %1685 = vmatpush1.msra.mxu0 %v1618
      %1686 = vmatprep.subr.mxu0 %v1615
      %1687 = vmatpush1.msra.mxu0 %v1614
      %1688 = vmatprep.subr.mxu0 %v1611
      %1689 = vmatpush1.msra.mxu0 %v1610
      %1690 = vmatprep.subr.mxu0 %v1607
      %1691 = vmatpush1.msra.mxu0 %v1606
      %1692 = vmatprep.subr.mxu0 %v1603
      %1693 = vmatpush1.msra.mxu0 %v1602
      %1694 = vmatprep.subr.mxu0 %v1599
      %1695 = vmatpush1.msra.mxu0 %v1598
      %1696 = vmatprep.subr.mxu0 %v1595
      %1697 = vmatpush1.msra.mxu0 %v1594
      %1698 = vmatprep.subr.mxu0 %v1591
      %1699 = vmatpush1.msra.mxu0 %v1590
      %1700 = vmatprep.subr.mxu0 %v1587
      %1701 = vmatpush1.msra.mxu0 %v1586
      %1702 = vmatprep.subr.mxu0 %v1583
      %1703 = vmatpush1.msra.mxu0 %v1582
      %1704 = vmatprep.subr.mxu0 %v1579
      %1705 = vmatpush1.msra.mxu0 %v1578
      %1706 = vmatprep.subr.mxu0 %v1575
      %1707 = vmatpush1.msra.mxu0 %v1574
      %1708 = vmatprep.subr.mxu0 %v1571
      %1709 = vmatpush1.msra.mxu0 %v1570
      %1710 = vmatprep.subr.mxu0 0.0
      %1711 = vmatpush2.msra.mxu0 0.0
      %1712 = vmatprep.subr.mxu0 0.0
      %1713 = vmatpush2.msra.mxu0 0.0
      %1714 = vmatprep.subr.mxu0 0.0
      %1715 = vmatpush2.msra.mxu0 0.0
      %1716 = vmatprep.subr.mxu0 0.0
      %1717 = vmatpush2.msra.mxu0 0.0
      %1718 = vmatprep.subr.mxu0 0.0
      %1719 = vmatpush2.msra.mxu0 0.0
      %1720 = vmatprep.subr.mxu0 0.0
      %1721 = vmatpush2.msra.mxu0 0.0
      %1722 = vmatprep.subr.mxu0 0.0
      %1723 = vmatpush2.msra.mxu0 0.0
      %1724 = vmatprep.subr.mxu0 0.0
      %1725 = vmatpush2.msra.mxu0 0.0
      %1726 = vmatprep.subr.mxu0 0.0
      %1727 = vmatpush2.msra.mxu0 0.0
      %1728 = vmatprep.subr.mxu0 0.0
      %1729 = vmatpush2.msra.mxu0 0.0
      %1730 = vmatprep.subr.mxu0 0.0
      %1731 = vmatpush2.msra.mxu0 0.0
      %1732 = vmatprep.subr.mxu0 0.0
      %1733 = vmatpush2.msra.mxu0 0.0
      %1734 = vmatprep.subr.mxu0 0.0
      %1735 = vmatpush2.msra.mxu0 0.0
      %1736 = vmatprep.subr.mxu0 0.0
      %1737 = vmatpush2.msra.mxu0 0.0
      %1738 = vmatprep.subr.mxu0 0.0
      %1739 = vmatpush2.msra.mxu0 0.0
      %1740 = vmatprep.subr.mxu0 %v1670
      %1741 = vmatpush2.msra.mxu0 %v1667
      %1742 = vmatprep.mubr.f32.mxu0 %v1661
      %1743 = vmatmul.mubr.f32.gmra.mxu0 %v1566
      %v1744 = vpop.f32.mrf.mxu0
      %v1745 = vadd.f32 %v1643, %v1744
      %v1746 = vpop.f32.mrf.mxu0
      %v1747 = vadd.f32 %v1647, %v1746
      %1748 = vmatprep.mubr.f32.mxu0 %v1664
      %1749 = vmatmul.mubr.f32.gmra.mxu0 %v1568
      %v1750 = vpop.f32.mrf.mxu0
      %v1751 = vadd.f32 %v1643, %v1750
      %v1752 = vpop.f32.mrf.mxu0
      %v1753 = vadd.f32 %v1647, %v1752
      %1754 = vdwg.mxu0
      %1755 = vmatprep.subr.mxu0 %v1633
      %1756 = vmatpush1.msra.mxu0 %v1632
      %1757 = vmatprep.subr.mxu0 %v1629
      %1758 = vmatpush1.msra.mxu0 %v1628
      %1759 = vmatprep.subr.mxu0 %v1625
      %1760 = vmatpush1.msra.mxu0 %v1624
      %1761 = vmatprep.subr.mxu0 %v1621
      %1762 = vmatpush1.msra.mxu0 %v1620
      %1763 = vmatprep.subr.mxu0 %v1617
      %1764 = vmatpush1.msra.mxu0 %v1616
      %1765 = vmatprep.subr.mxu0 %v1613
      %1766 = vmatpush1.msra.mxu0 %v1612
      %1767 = vmatprep.subr.mxu0 %v1609
      %1768 = vmatpush1.msra.mxu0 %v1608
      %1769 = vmatprep.subr.mxu0 %v1605
      %1770 = vmatpush1.msra.mxu0 %v1604
      %1771 = vmatprep.subr.mxu0 %v1601
      %1772 = vmatpush1.msra.mxu0 %v1600
      %1773 = vmatprep.subr.mxu0 %v1597
      %1774 = vmatpush1.msra.mxu0 %v1596
      %1775 = vmatprep.subr.mxu0 %v1593
      %1776 = vmatpush1.msra.mxu0 %v1592
      %1777 = vmatprep.subr.mxu0 %v1589
      %1778 = vmatpush1.msra.mxu0 %v1588
      %1779 = vmatprep.subr.mxu0 %v1585
      %1780 = vmatpush1.msra.mxu0 %v1584
      %1781 = vmatprep.subr.mxu0 %v1581
      %1782 = vmatpush1.msra.mxu0 %v1580
      %1783 = vmatprep.subr.mxu0 %v1577
      %1784 = vmatpush1.msra.mxu0 %v1576
      %1785 = vmatprep.subr.mxu0 %v1573
      %1786 = vmatpush1.msra.mxu0 %v1572
      %1787 = vmatprep.subr.mxu0 0.0
      %1788 = vmatpush2.msra.mxu0 0.0
      %1789 = vmatprep.subr.mxu0 0.0
      %1790 = vmatpush2.msra.mxu0 0.0
      %1791 = vmatprep.subr.mxu0 0.0
      %1792 = vmatpush2.msra.mxu0 0.0
      %1793 = vmatprep.subr.mxu0 0.0
      %1794 = vmatpush2.msra.mxu0 0.0
      %1795 = vmatprep.subr.mxu0 0.0
      %1796 = vmatpush2.msra.mxu0 0.0
      %1797 = vmatprep.subr.mxu0 0.0
      %1798 = vmatpush2.msra.mxu0 0.0
      %1799 = vmatprep.subr.mxu0 0.0
      %1800 = vmatpush2.msra.mxu0 0.0
      %1801 = vmatprep.subr.mxu0 0.0
      %1802 = vmatpush2.msra.mxu0 0.0
      %1803 = vmatprep.subr.mxu0 0.0
      %1804 = vmatpush2.msra.mxu0 0.0
      %1805 = vmatprep.subr.mxu0 0.0
      %1806 = vmatpush2.msra.mxu0 0.0
      %1807 = vmatprep.subr.mxu0 0.0
      %1808 = vmatpush2.msra.mxu0 0.0
      %1809 = vmatprep.subr.mxu0 0.0
      %1810 = vmatpush2.msra.mxu0 0.0
      %1811 = vmatprep.subr.mxu0 0.0
      %1812 = vmatpush2.msra.mxu0 0.0
      %1813 = vmatprep.subr.mxu0 0.0
      %1814 = vmatpush2.msra.mxu0 0.0
      %1815 = vmatprep.subr.mxu0 0.0
      %1816 = vmatpush2.msra.mxu0 0.0
      %1817 = vmatprep.subr.mxu0 %v1676
      %1818 = vmatpush2.msra.mxu0 %v1673
      %1819 = vmatprep.mubr.f32.mxu0 %v1661
      %1820 = vmatmul.mubr.f32.gmra.mxu0 %v1566
      %v1821 = vpop.f32.mrf.mxu0
      %v1822 = vadd.f32 %v1651, %v1821
      %v1823 = vpop.f32.mrf.mxu0
      %v1824 = vadd.f32 %v1655, %v1823
      %1825 = vmatprep.mubr.f32.mxu0 %v1664
      %1826 = vmatmul.mubr.f32.gmra.mxu0 %v1568
      %v1827 = vpop.f32.mrf.mxu0
      %v1828 = vadd.f32 %v1651, %v1827
      %v1829 = vpop.f32.mrf.mxu0
      %v1830 = vadd.f32 %v1655, %v1829
      %1831 = vdwg.mxu0
      %v1832 = vmax.f32 %v1745, 0.0
      %v1833 = vmax.f32 %v1747, 0.0
      %v1834 = vmax.f32 %v1822, 0.0
      %v1835 = vmax.f32 %v1824, 0.0
      %v1836 = vmax.f32 %v1751, 0.0
      %v1837 = vmax.f32 %v1753, 0.0
      %v1838 = vmax.f32 %v1828, 0.0
      %v1839 = vmax.f32 %v1830, 0.0
      %v1840 = vld [vmem:[%s10] sm:$0xff]
      %v1841 = vld [vmem:[%s10 + $0x8] sm:$0xff]
      %v1842 = vld [vmem:[%s10 + $0x10] sm:$0xff]
      %v1843 = vld [vmem:[%s10 + $0x18] sm:$0xff]
      %v1844 = vld [vmem:[%s10 + $0x20] sm:$0xff]
      %v1845 = vld [vmem:[%s10 + $0x28] sm:$0xff]
      %v1846 = vld [vmem:[%s10 + $0x30] sm:$0xff]
      %v1847 = vld [vmem:[%s10 + $0x38] sm:$0xff]
      %v1848 = vld [vmem:[%s10 + $0x40] sm:$0xff]
      %v1849 = vld [vmem:[%s10 + $0x48] sm:$0xff]
      %v1850 = vld [vmem:[%s10 + $0x50] sm:$0xff]
      %v1851 = vld [vmem:[%s10 + $0x58] sm:$0xff]
      %v1852 = vld [vmem:[%s10 + $0x60] sm:$0xff]
      %v1853 = vld [vmem:[%s10 + $0x68] sm:$0xff]
      %v1854 = vld [vmem:[%s10 + $0x70] sm:$0xff]
      %v1855 = vld [vmem:[%s10 + $0x78] sm:$0xff]
      %v1856 = vld [vmem:[%s10 + $0x80] sm:$0xff]
      %v1857 = vld [vmem:[%s10 + $0x88] sm:$0xff]
      %v1858 = vld [vmem:[%s10 + $0x90] sm:$0xff]
      %v1859 = vld [vmem:[%s10 + $0x98] sm:$0xff]
      %v1860 = vld [vmem:[%s10 + $0xa0] sm:$0xff]
      %v1861 = vld [vmem:[%s10 + $0xa8] sm:$0xff]
      %v1862 = vld [vmem:[%s10 + $0xb0] sm:$0xff]
      %v1863 = vld [vmem:[%s10 + $0xb8] sm:$0xff]
      %v1864 = vld [vmem:[%s10 + $0xc0] sm:$0xff]
      %v1865 = vld [vmem:[%s10 + $0xc8] sm:$0xff]
      %v1866 = vld [vmem:[%s10 + $0xd0] sm:$0xff]
      %v1867 = vld [vmem:[%s10 + $0xd8] sm:$0xff]
      %v1868 = vld [vmem:[%s10 + $0xe0] sm:$0xff]
      %v1869 = vld [vmem:[%s10 + $0xe8] sm:$0xff]
      %v1870 = vld [vmem:[%s10 + $0xf0] sm:$0xff]
      %v1871 = vld [vmem:[%s10 + $0xf8] sm:$0xff]
      %v1872 = vld [vmem:[%s10 + $0x100] sm:$0xff]
      %v1873 = vld [vmem:[%s10 + $0x108] sm:$0xff]
      %v1874 = vld [vmem:[%s10 + $0x110] sm:$0xff]
      %v1875 = vld [vmem:[%s10 + $0x118] sm:$0xff]
      %v1876 = vld [vmem:[%s10 + $0x120] sm:$0xff]
      %v1877 = vld [vmem:[%s10 + $0x128] sm:$0xff]
      %v1878 = vld [vmem:[%s10 + $0x130] sm:$0xff]
      %v1879 = vld [vmem:[%s10 + $0x138] sm:$0xff]
      %v1880 = vld [vmem:[%s10 + $0x140] sm:$0xff]
      %v1881 = vld [vmem:[%s10 + $0x148] sm:$0xff]
      %v1882 = vld [vmem:[%s10 + $0x150] sm:$0xff]
      %v1883 = vld [vmem:[%s10 + $0x158] sm:$0xff]
      %v1884 = vld [vmem:[%s10 + $0x160] sm:$0xff]
      %v1885 = vld [vmem:[%s10 + $0x168] sm:$0xff]
      %v1886 = vld [vmem:[%s10 + $0x170] sm:$0xff]
      %v1887 = vld [vmem:[%s10 + $0x178] sm:$0xff]
      %v1888 = vld [vmem:[%s10 + $0x180] sm:$0xff]
      %v1889 = vld [vmem:[%s10 + $0x188] sm:$0xff]
      %v1890 = vld [vmem:[%s10 + $0x190] sm:$0xff]
      %v1891 = vld [vmem:[%s10 + $0x198] sm:$0xff]
      %v1892 = vld [vmem:[%s10 + $0x1a0] sm:$0xff]
      %v1893 = vld [vmem:[%s10 + $0x1a8] sm:$0xff]
      %v1894 = vld [vmem:[%s10 + $0x1b0] sm:$0xff]
      %v1895 = vld [vmem:[%s10 + $0x1b8] sm:$0xff]
      %v1896 = vld [vmem:[%s10 + $0x1c0] sm:$0xff]
      %v1897 = vld [vmem:[%s10 + $0x1c8] sm:$0xff]
      %v1898 = vld [vmem:[%s10 + $0x1d0] sm:$0xff]
      %v1899 = vld [vmem:[%s10 + $0x1d8] sm:$0xff]
      %v1900 = vld [vmem:[%s10 + $0x1e0] sm:$0xff]
      %v1901 = vld [vmem:[%s10 + $0x1e8] sm:$0xff]
      %v1902 = vld [vmem:[%s10 + $0x1f0] sm:$0xff]
      %v1903 = vld [vmem:[%s10 + $0x1f8] sm:$0xff]
      %v1904 = vld [vmem:[%s10 + $0x200] sm:$0xff]
      %v1905 = vld [vmem:[%s10 + $0x208] sm:$0xff]
      %v1906 = vld [vmem:[%s10 + $0x210] sm:$0xff]
      %v1907 = vld [vmem:[%s10 + $0x218] sm:$0xff]
      %v1908 = vld [vmem:[%s10 + $0x220] sm:$0xff]
      %v1909 = vld [vmem:[%s10 + $0x228] sm:$0xff]
      %v1910 = vld [vmem:[%s10 + $0x230] sm:$0xff]
      %v1911 = vld [vmem:[%s10 + $0x238] sm:$0xff]
      %v1912 = vld [vmem:[%s10 + $0x240] sm:$0xff]
      %v1913 = vld [vmem:[%s10 + $0x248] sm:$0xff]
      %v1914 = vld [vmem:[%s10 + $0x250] sm:$0xff]
      %v1915 = vld [vmem:[%s10 + $0x258] sm:$0xff]
      %v1916 = vld [vmem:[%s10 + $0x260] sm:$0xff]
      %v1917 = vld [vmem:[%s10 + $0x268] sm:$0xff]
      %v1918 = vld [vmem:[%s10 + $0x270] sm:$0xff]
      %v1919 = vld [vmem:[%s10 + $0x278] sm:$0xff]
      %v1920 = vld [vmem:[%s10 + $0x280] sm:$0xff]
      %v1921 = vld [vmem:[%s10 + $0x288] sm:$0xff]
      %v1922 = vld [vmem:[%s10 + $0x290] sm:$0xff]
      %v1923 = vld [vmem:[%s10 + $0x298] sm:$0xff]
      %v1924 = vld [vmem:[%s10 + $0x2a0] sm:$0xff]
      %v1925 = vld [vmem:[%s10 + $0x2a8] sm:$0xff]
      %v1926 = vld [vmem:[%s10 + $0x2b0] sm:$0xff]
      %v1927 = vld [vmem:[%s10 + $0x2b8] sm:$0xff]
      %v1928 = vld [vmem:[%s10 + $0x2c0] sm:$0xff]
      %v1929 = vld [vmem:[%s10 + $0x2c8] sm:$0xff]
      %v1930 = vld [vmem:[%s10 + $0x2d0] sm:$0xff]
      %v1931 = vld [vmem:[%s10 + $0x2d8] sm:$0xff]
      %v1932 = vld [vmem:[%s10 + $0x2e0] sm:$0xff]
      %v1933 = vld [vmem:[%s10 + $0x2e8] sm:$0xff]
      %v1934 = vld [vmem:[%s10 + $0x2f0] sm:$0xff]
      %v1935 = vld [vmem:[%s10 + $0x2f8] sm:$0xff]
      %v1936 = vld [vmem:[%s10 + $0x300] sm:$0xff]
      %v1937 = vld [vmem:[%s10 + $0x308] sm:$0xff]
      %v1938 = vld [vmem:[%s10 + $0x310] sm:$0xff]
      %v1939 = vld [vmem:[%s10 + $0x318] sm:$0xff]
      %v1940 = vld [vmem:[%s10 + $0x320] sm:$0xff]
      %v1941 = vld [vmem:[%s10 + $0x328] sm:$0xff]
      %v1942 = vld [vmem:[%s10 + $0x330] sm:$0xff]
      %v1943 = vld [vmem:[%s10 + $0x338] sm:$0xff]
      %v1944 = vld [vmem:[%s10 + $0x340] sm:$0xff]
      %v1945 = vld [vmem:[%s10 + $0x348] sm:$0xff]
      %v1946 = vld [vmem:[%s10 + $0x350] sm:$0xff]
      %v1947 = vld [vmem:[%s10 + $0x358] sm:$0xff]
      %v1948 = vld [vmem:[%s10 + $0x360] sm:$0xff]
      %v1949 = vld [vmem:[%s10 + $0x368] sm:$0xff]
      %v1950 = vld [vmem:[%s10 + $0x370] sm:$0xff]
      %v1951 = vld [vmem:[%s10 + $0x378] sm:$0xff]
      %v1952 = vld [vmem:[%s10 + $0x380] sm:$0xff]
      %v1953 = vld [vmem:[%s10 + $0x388] sm:$0xff]
      %v1954 = vld [vmem:[%s10 + $0x390] sm:$0xff]
      %v1955 = vld [vmem:[%s10 + $0x398] sm:$0xff]
      %v1956 = vld [vmem:[%s10 + $0x3a0] sm:$0xff]
      %v1957 = vld [vmem:[%s10 + $0x3a8] sm:$0xff]
      %v1958 = vld [vmem:[%s10 + $0x3b0] sm:$0xff]
      %v1959 = vld [vmem:[%s10 + $0x3b8] sm:$0xff]
      %v1960 = vld [vmem:[%s10 + $0x3c0] sm:$0xff]
      %v1961 = vld [vmem:[%s10 + $0x3c8] sm:$0xff]
      %v1962 = vld [vmem:[%s10 + $0x3d0] sm:$0xff]
      %v1963 = vld [vmem:[%s10 + $0x3d8] sm:$0xff]
      %v1964 = vld [vmem:[%s10 + $0x3e0] sm:$0xff]
      %v1965 = vld [vmem:[%s10 + $0x3e8] sm:$0xff]
      %v1966 = vld [vmem:[%s10 + $0x3f0] sm:$0xff]
      %v1967 = vld [vmem:[%s10 + $0x3f8] sm:$0xff]
      %v1968 = vld [vmem:[%s11] sm:$0x3]
      %v1970 = vlaneseq
      %v1971 = vshrl.u32 %v1970, 7
      %v1972 = vsub.s32 0, %v1971
      %v1973 = vrot.slane %v1968, %v1972
      %v1974 = vlaneseq
      %v1975 = vshrl.u32 %v1974, 7
      %v1976 = vsub.s32 1, %v1975
      %v1977 = vrot.slane %v1968, %v1976
      %1980 = vmatprep.subr.mxu0 %v1871
      %1981 = vmatpush1.msra.mxu0 %v1870
      %1982 = vmatprep.subr.mxu0 %v1869
      %1983 = vmatpush1.msra.mxu0 %v1868
      %1984 = vmatprep.subr.mxu0 %v1867
      %1985 = vmatpush1.msra.mxu0 %v1866
      %1986 = vmatprep.subr.mxu0 %v1865
      %1987 = vmatpush1.msra.mxu0 %v1864
      %1988 = vmatprep.subr.mxu0 %v1863
      %1989 = vmatpush1.msra.mxu0 %v1862
      %1990 = vmatprep.subr.mxu0 %v1861
      %1991 = vmatpush1.msra.mxu0 %v1860
      %1992 = vmatprep.subr.mxu0 %v1859
      %1993 = vmatpush1.msra.mxu0 %v1858
      %1994 = vmatprep.subr.mxu0 %v1857
      %1995 = vmatpush1.msra.mxu0 %v1856
      %1996 = vmatprep.subr.mxu0 %v1855
      %1997 = vmatpush1.msra.mxu0 %v1854
      %1998 = vmatprep.subr.mxu0 %v1853
      %1999 = vmatpush1.msra.mxu0 %v1852
      %2000 = vmatprep.subr.mxu0 %v1851
      %2001 = vmatpush1.msra.mxu0 %v1850
      %2002 = vmatprep.subr.mxu0 %v1849
      %2003 = vmatpush1.msra.mxu0 %v1848
      %2004 = vmatprep.subr.mxu0 %v1847
      %2005 = vmatpush1.msra.mxu0 %v1846
      %2006 = vmatprep.subr.mxu0 %v1845
      %2007 = vmatpush1.msra.mxu0 %v1844
      %2008 = vmatprep.subr.mxu0 %v1843
      %2009 = vmatpush1.msra.mxu0 %v1842
      %2010 = vmatprep.subr.mxu0 %v1841
      %2011 = vmatpush1.msra.mxu0 %v1840
      %2012 = vmatprep.subr.mxu0 %v1903
      %2013 = vmatpush2.msra.mxu0 %v1902
      %2014 = vmatprep.subr.mxu0 %v1901
      %2015 = vmatpush2.msra.mxu0 %v1900
      %2016 = vmatprep.subr.mxu0 %v1899
      %2017 = vmatpush2.msra.mxu0 %v1898
      %2018 = vmatprep.subr.mxu0 %v1897
      %2019 = vmatpush2.msra.mxu0 %v1896
      %2020 = vmatprep.subr.mxu0 %v1895
      %2021 = vmatpush2.msra.mxu0 %v1894
      %2022 = vmatprep.subr.mxu0 %v1893
      %2023 = vmatpush2.msra.mxu0 %v1892
      %2024 = vmatprep.subr.mxu0 %v1891
      %2025 = vmatpush2.msra.mxu0 %v1890
      %2026 = vmatprep.subr.mxu0 %v1889
      %2027 = vmatpush2.msra.mxu0 %v1888
      %2028 = vmatprep.subr.mxu0 %v1887
      %2029 = vmatpush2.msra.mxu0 %v1886
      %2030 = vmatprep.subr.mxu0 %v1885
      %2031 = vmatpush2.msra.mxu0 %v1884
      %2032 = vmatprep.subr.mxu0 %v1883
      %2033 = vmatpush2.msra.mxu0 %v1882
      %2034 = vmatprep.subr.mxu0 %v1881
      %2035 = vmatpush2.msra.mxu0 %v1880
      %2036 = vmatprep.subr.mxu0 %v1879
      %2037 = vmatpush2.msra.mxu0 %v1878
      %2038 = vmatprep.subr.mxu0 %v1877
      %2039 = vmatpush2.msra.mxu0 %v1876
      %2040 = vmatprep.subr.mxu0 %v1875
      %2041 = vmatpush2.msra.mxu0 %v1874
      %2042 = vmatprep.subr.mxu0 %v1873
      %2043 = vmatpush2.msra.mxu0 %v1872
      %2044 = vmatprep.mubr.f32.mxu0 %v1833
      %2045 = vmatmul.mubr.f32.gmra.mxu0 %v1832
      %v2046 = vpop.f32.mrf.mxu0
      %v2047 = vadd.f32 %v1973, %v2046
      %v2048 = vpop.f32.mrf.mxu0
      %v2049 = vadd.f32 %v1977, %v2048
      %2050 = vmatprep.mubr.f32.mxu0 %v1837
      %2051 = vmatmul.mubr.f32.gmra.mxu0 %v1836
      %v2052 = vpop.f32.mrf.mxu0
      %v2053 = vadd.f32 %v1973, %v2052
      %v2054 = vpop.f32.mrf.mxu0
      %v2055 = vadd.f32 %v1977, %v2054
      %2056 = vdwg.mxu0
      %2057 = vmatprep.subr.mxu0 %v1935
      %2058 = vmatpush1.msra.mxu0 %v1934
      %2059 = vmatprep.subr.mxu0 %v1933
      %2060 = vmatpush1.msra.mxu0 %v1932
      %2061 = vmatprep.subr.mxu0 %v1931
      %2062 = vmatpush1.msra.mxu0 %v1930
      %2063 = vmatprep.subr.mxu0 %v1929
      %2064 = vmatpush1.msra.mxu0 %v1928
      %2065 = vmatprep.subr.mxu0 %v1927
      %2066 = vmatpush1.msra.mxu0 %v1926
      %2067 = vmatprep.subr.mxu0 %v1925
      %2068 = vmatpush1.msra.mxu0 %v1924
      %2069 = vmatprep.subr.mxu0 %v1923
      %2070 = vmatpush1.msra.mxu0 %v1922
      %2071 = vmatprep.subr.mxu0 %v1921
      %2072 = vmatpush1.msra.mxu0 %v1920
      %2073 = vmatprep.subr.mxu0 %v1919
      %2074 = vmatpush1.msra.mxu0 %v1918
      %2075 = vmatprep.subr.mxu0 %v1917
      %2076 = vmatpush1.msra.mxu0 %v1916
      %2077 = vmatprep.subr.mxu0 %v1915
      %2078 = vmatpush1.msra.mxu0 %v1914
      %2079 = vmatprep.subr.mxu0 %v1913
      %2080 = vmatpush1.msra.mxu0 %v1912
      %2081 = vmatprep.subr.mxu0 %v1911
      %2082 = vmatpush1.msra.mxu0 %v1910
      %2083 = vmatprep.subr.mxu0 %v1909
      %2084 = vmatpush1.msra.mxu0 %v1908
      %2085 = vmatprep.subr.mxu0 %v1907
      %2086 = vmatpush1.msra.mxu0 %v1906
      %2087 = vmatprep.subr.mxu0 %v1905
      %2088 = vmatpush1.msra.mxu0 %v1904
      %2089 = vmatprep.subr.mxu0 %v1967
      %2090 = vmatpush2.msra.mxu0 %v1966
      %2091 = vmatprep.subr.mxu0 %v1965
      %2092 = vmatpush2.msra.mxu0 %v1964
      %2093 = vmatprep.subr.mxu0 %v1963
      %2094 = vmatpush2.msra.mxu0 %v1962
      %2095 = vmatprep.subr.mxu0 %v1961
      %2096 = vmatpush2.msra.mxu0 %v1960
      %2097 = vmatprep.subr.mxu0 %v1959
      %2098 = vmatpush2.msra.mxu0 %v1958
      %2099 = vmatprep.subr.mxu0 %v1957
      %2100 = vmatpush2.msra.mxu0 %v1956
      %2101 = vmatprep.subr.mxu0 %v1955
      %2102 = vmatpush2.msra.mxu0 %v1954
      %2103 = vmatprep.subr.mxu0 %v1953
      %2104 = vmatpush2.msra.mxu0 %v1952
      %2105 = vmatprep.subr.mxu0 %v1951
      %2106 = vmatpush2.msra.mxu0 %v1950
      %2107 = vmatprep.subr.mxu0 %v1949
      %2108 = vmatpush2.msra.mxu0 %v1948
      %2109 = vmatprep.subr.mxu0 %v1947
      %2110 = vmatpush2.msra.mxu0 %v1946
      %2111 = vmatprep.subr.mxu0 %v1945
      %2112 = vmatpush2.msra.mxu0 %v1944
      %2113 = vmatprep.subr.mxu0 %v1943
      %2114 = vmatpush2.msra.mxu0 %v1942
      %2115 = vmatprep.subr.mxu0 %v1941
      %2116 = vmatpush2.msra.mxu0 %v1940
      %2117 = vmatprep.subr.mxu0 %v1939
      %2118 = vmatpush2.msra.mxu0 %v1938
      %2119 = vmatprep.subr.mxu0 %v1937
      %2120 = vmatpush2.msra.mxu0 %v1936
      %2121 = vmatprep.mubr.f32.mxu0 %v1835
      %2122 = vmatmul.mubr.f32.gmra.mxu0 %v1834
      %v2123 = vpop.f32.mrf.mxu0
      %v2124 = vadd.f32 %v2047, %v2123
      %v2125 = vpop.f32.mrf.mxu0
      %v2126 = vadd.f32 %v2049, %v2125
      %2127 = vmatprep.mubr.f32.mxu0 %v1839
      %2128 = vmatmul.mubr.f32.gmra.mxu0 %v1838
      %v2129 = vpop.f32.mrf.mxu0
      %v2130 = vadd.f32 %v2053, %v2129
      %v2131 = vpop.f32.mrf.mxu0
      %v2132 = vadd.f32 %v2055, %v2131
      %2133 = vdwg.mxu0
      %v2134 = vadd.f32 %v1566, %v2124
      %v2135 = vadd.f32 %v1567, %v2126
      %v2136 = vadd.f32 %v1568, %v2130
      %v2137 = vadd.f32 %v1569, %v2132
      %v2138 = vld [vmem:[%s12] sm:$0x3]
      %v2139 = vld [vmem:[%s13] sm:$0x3]
      %v2140 = vsel %vm719, %v2135, 0.0
      %v2141 = vadd.f32 %v2134, %v2140
      %2142 = vadd.xlane.f32.xlu0 %v2141
      %v2143 = vpop.xlane.xlu0 %2142
      %v2144 = vsel %vm1081, %v2136, 0.0
      %v2145 = vsel %vm1505, %v2137, 0.0
      %v2146 = vadd.f32 %v2144, %v2145
      %2147 = vadd.xlane.f32.xlu0 %v2146
      %v2148 = vpop.xlane.xlu0 %2147
      %v2149 = vmul.f32 %v2143, %v1510
      %v2150 = vmul.f32 %v2148, %v1510
      %v2151 = vsub.f32 %v2134, %v2149
      %v2152 = vsub.f32 %v2135, %v2149
      %v2153 = vsub.f32 %v2136, %v2150
      %v2154 = vsub.f32 %v2137, %v2150
      %v2155 = vmul.f32 %v2151, %v2151
      %v2156 = vmul.f32 %v2152, %v2152
      %v2157 = vmul.f32 %v2153, %v2153
      %v2158 = vmul.f32 %v2154, %v2154
      %v2159 = vsel %vm719, %v2156, 0.0
      %v2160 = vadd.f32 %v2155, %v2159
      %2161 = vadd.xlane.f32.xlu0 %v2160
      %v2162 = vpop.xlane.xlu0 %2161
      %v2163 = vsel %vm1081, %v2157, 0.0
      %v2164 = vsel %vm1505, %v2158, 0.0
      %v2165 = vadd.f32 %v2163, %v2164
      %2166 = vadd.xlane.f32.xlu0 %v2165
      %v2167 = vpop.xlane.xlu0 %2166
      %v2168 = vmul.f32 %v2162, %v1510
      %v2169 = vmul.f32 %v2167, %v1510
      %v2170 = vadd.f32 %v2168, 1e-05
      %v2171 = vadd.f32 %v2169, 1e-05
      %v2172 = vrsqrt.pop %v2170
      %v2173 = vrsqrt.pop %v2171
      %v2174 = vmul.f32 %v2151, %v2172
      %v2175 = vmul.f32 %v2152, %v2172
      %v2176 = vmul.f32 %v2153, %v2173
      %v2177 = vmul.f32 %v2154, %v2173
      %v2179 = vlaneseq
      %v2180 = vshrl.u32 %v2179, 7
      %v2181 = vsub.s32 0, %v2180
      %v2182 = vrot.slane %v2138, %v2181
      %v2183 = vlaneseq
      %v2184 = vshrl.u32 %v2183, 7
      %v2185 = vsub.s32 1, %v2184
      %v2186 = vrot.slane %v2138, %v2185
      %v2189 = vmul.f32 %v2174, %v2182
      %v2190 = vmul.f32 %v2175, %v2186
      %v2191 = vmul.f32 %v2176, %v2182
      %v2192 = vmul.f32 %v2177, %v2186
      %v2194 = vlaneseq
      %v2195 = vshrl.u32 %v2194, 7
      %v2196 = vsub.s32 0, %v2195
      %v2197 = vrot.slane %v2139, %v2196
      %v2198 = vlaneseq
      %v2199 = vshrl.u32 %v2198, 7
      %v2200 = vsub.s32 1, %v2199
      %v2201 = vrot.slane %v2139, %v2200
      %v2204 = vadd.f32 %v2189, %v2197
      %v2205 = vadd.f32 %v2190, %v2201
      %v2206 = vadd.f32 %v2191, %v2197
      %v2207 = vadd.f32 %v2192, %v2201
      %s2208 = scalar_lea.vmem %s2, 816
      %v2209 = vld [vmem:[%s2208] sm:$0xff]
      %v2210 = vld [vmem:[%s2208 + $0x8] sm:$0xff]
      %v2211 = vld [vmem:[%s2208 + $0x10] sm:$0xff]
      %v2212 = vld [vmem:[%s2208 + $0x18] sm:$0xff]
      %v2213 = vld [vmem:[%s2208 + $0x20] sm:$0xff]
      %v2214 = vld [vmem:[%s2208 + $0x28] sm:$0xff]
      %v2215 = vld [vmem:[%s2208 + $0x30] sm:$0xff]
      %v2216 = vld [vmem:[%s2208 + $0x38] sm:$0xff]
      %v2217 = vld [vmem:[%s2208 + $0x40] sm:$0xff]
      %v2218 = vld [vmem:[%s2208 + $0x48] sm:$0xff]
      %v2219 = vld [vmem:[%s2208 + $0x50] sm:$0xff]
      %v2220 = vld [vmem:[%s2208 + $0x58] sm:$0xff]
      %v2221 = vld [vmem:[%s2208 + $0x60] sm:$0xff]
      %v2222 = vld [vmem:[%s2208 + $0x68] sm:$0xff]
      %v2223 = vld [vmem:[%s2208 + $0x70] sm:$0xff]
      %v2224 = vld [vmem:[%s2208 + $0x78] sm:$0xff]
      %v2225 = vld [vmem:[%s2208 + $0x80] sm:$0xff]
      %v2226 = vld [vmem:[%s2208 + $0x88] sm:$0xff]
      %v2227 = vld [vmem:[%s2208 + $0x90] sm:$0xff]
      %v2228 = vld [vmem:[%s2208 + $0x98] sm:$0xff]
      %v2229 = vld [vmem:[%s2208 + $0xa0] sm:$0xff]
      %v2230 = vld [vmem:[%s2208 + $0xa8] sm:$0xff]
      %v2231 = vld [vmem:[%s2208 + $0xb0] sm:$0xff]
      %v2232 = vld [vmem:[%s2208 + $0xb8] sm:$0xff]
      %v2233 = vld [vmem:[%s2208 + $0xc0] sm:$0xff]
      %v2234 = vld [vmem:[%s2208 + $0xc8] sm:$0xff]
      %v2235 = vld [vmem:[%s2208 + $0xd0] sm:$0xff]
      %v2236 = vld [vmem:[%s2208 + $0xd8] sm:$0xff]
      %v2237 = vld [vmem:[%s2208 + $0xe0] sm:$0xff]
      %v2238 = vld [vmem:[%s2208 + $0xe8] sm:$0xff]
      %v2239 = vld [vmem:[%s2208 + $0xf0] sm:$0xff]
      %v2240 = vld [vmem:[%s2208 + $0xf8] sm:$0xff]
      %v2241 = vld [vmem:[%s2208 + $0x100] sm:$0xff]
      %v2242 = vld [vmem:[%s2208 + $0x108] sm:$0xff]
      %v2243 = vld [vmem:[%s2208 + $0x110] sm:$0xff]
      %v2244 = vld [vmem:[%s2208 + $0x118] sm:$0xff]
      %v2245 = vld [vmem:[%s2208 + $0x120] sm:$0xff]
      %v2246 = vld [vmem:[%s2208 + $0x128] sm:$0xff]
      %v2247 = vld [vmem:[%s2208 + $0x130] sm:$0xff]
      %v2248 = vld [vmem:[%s2208 + $0x138] sm:$0xff]
      %v2249 = vld [vmem:[%s2208 + $0x140] sm:$0xff]
      %v2250 = vld [vmem:[%s2208 + $0x148] sm:$0xff]
      %v2251 = vld [vmem:[%s2208 + $0x150] sm:$0xff]
      %v2252 = vld [vmem:[%s2208 + $0x158] sm:$0xff]
      %v2253 = vld [vmem:[%s2208 + $0x160] sm:$0xff]
      %v2254 = vld [vmem:[%s2208 + $0x168] sm:$0xff]
      %v2255 = vld [vmem:[%s2208 + $0x170] sm:$0xff]
      %v2256 = vld [vmem:[%s2208 + $0x178] sm:$0xff]
      %v2257 = vld [vmem:[%s2208 + $0x180] sm:$0xff]
      %v2258 = vld [vmem:[%s2208 + $0x188] sm:$0xff]
      %v2259 = vld [vmem:[%s2208 + $0x190] sm:$0xff]
      %v2260 = vld [vmem:[%s2208 + $0x198] sm:$0xff]
      %v2261 = vld [vmem:[%s2208 + $0x1a0] sm:$0xff]
      %v2262 = vld [vmem:[%s2208 + $0x1a8] sm:$0xff]
      %v2263 = vld [vmem:[%s2208 + $0x1b0] sm:$0xff]
      %v2264 = vld [vmem:[%s2208 + $0x1b8] sm:$0xff]
      %v2265 = vld [vmem:[%s2208 + $0x1c0] sm:$0xff]
      %v2266 = vld [vmem:[%s2208 + $0x1c8] sm:$0xff]
      %v2267 = vld [vmem:[%s2208 + $0x1d0] sm:$0xff]
      %v2268 = vld [vmem:[%s2208 + $0x1d8] sm:$0xff]
      %v2269 = vld [vmem:[%s2208 + $0x1e0] sm:$0xff]
      %v2270 = vld [vmem:[%s2208 + $0x1e8] sm:$0xff]
      %v2271 = vld [vmem:[%s2208 + $0x1f0] sm:$0xff]
      %v2272 = vld [vmem:[%s2208 + $0x1f8] sm:$0xff]
      %v2273 = vld [vmem:[%s2208 + $0x200] sm:$0xff]
      %v2274 = vld [vmem:[%s2208 + $0x208] sm:$0xff]
      %v2275 = vld [vmem:[%s2208 + $0x210] sm:$0xff]
      %v2276 = vld [vmem:[%s2208 + $0x218] sm:$0xff]
      %v2277 = vld [vmem:[%s2208 + $0x220] sm:$0xff]
      %v2278 = vld [vmem:[%s2208 + $0x228] sm:$0xff]
      %v2279 = vld [vmem:[%s2208 + $0x230] sm:$0xff]
      %v2280 = vld [vmem:[%s2208 + $0x238] sm:$0xff]
      %v2281 = vld [vmem:[%s2208 + $0x240] sm:$0xff]
      %v2282 = vld [vmem:[%s2208 + $0x248] sm:$0xff]
      %v2283 = vld [vmem:[%s2208 + $0x250] sm:$0xff]
      %v2284 = vld [vmem:[%s2208 + $0x258] sm:$0xff]
      %v2285 = vld [vmem:[%s2208 + $0x260] sm:$0xff]
      %v2286 = vld [vmem:[%s2208 + $0x268] sm:$0xff]
      %v2287 = vld [vmem:[%s2208 + $0x270] sm:$0xff]
      %v2288 = vld [vmem:[%s2208 + $0x278] sm:$0xff]
      %v2289 = vld [vmem:[%s2208 + $0x280] sm:$0xff]
      %v2290 = vld [vmem:[%s2208 + $0x288] sm:$0xff]
      %v2291 = vld [vmem:[%s2208 + $0x290] sm:$0xff]
      %v2292 = vld [vmem:[%s2208 + $0x298] sm:$0xff]
      %v2293 = vld [vmem:[%s2208 + $0x2a0] sm:$0xff]
      %v2294 = vld [vmem:[%s2208 + $0x2a8] sm:$0xff]
      %v2295 = vld [vmem:[%s2208 + $0x2b0] sm:$0xff]
      %v2296 = vld [vmem:[%s2208 + $0x2b8] sm:$0xff]
      %v2297 = vld [vmem:[%s2208 + $0x2c0] sm:$0xff]
      %v2298 = vld [vmem:[%s2208 + $0x2c8] sm:$0xff]
      %v2299 = vld [vmem:[%s2208 + $0x2d0] sm:$0xff]
      %v2300 = vld [vmem:[%s2208 + $0x2d8] sm:$0xff]
      %v2301 = vld [vmem:[%s2208 + $0x2e0] sm:$0xff]
      %v2302 = vld [vmem:[%s2208 + $0x2e8] sm:$0xff]
      %v2303 = vld [vmem:[%s2208 + $0x2f0] sm:$0xff]
      %v2304 = vld [vmem:[%s2208 + $0x2f8] sm:$0xff]
      %v2305 = vld [vmem:[%s2208 + $0x300] sm:$0x3]
      %v2306 = vld [vmem:[%s2208 + $0x308] sm:$0x3]
      %v2307 = vld [vmem:[%s2208 + $0x310] sm:$0x3]
      %v2308 = vld [vmem:[%s2208 + $0x318] sm:$0x3]
      %v2309 = vld [vmem:[%s2208 + $0x320] sm:$0x3]
      %v2310 = vld [vmem:[%s2208 + $0x328] sm:$0x3]
      %s2311 = scalar_lea.vmem %s3, 6
      %v2312 = vld [vmem:[%s2311] sm:$0x3f]
      %v2314 = vlaneseq
      %v2315 = vshrl.u32 %v2314, 7
      %v2316 = vsub.s32 0, %v2315
      %v2317 = vrot.slane %v2312, %v2316
      %v2318 = vlaneseq
      %v2319 = vshrl.u32 %v2318, 7
      %v2320 = vsub.s32 1, %v2319
      %v2321 = vrot.slane %v2312, %v2320
      %v2322 = vlaneseq
      %v2323 = vshrl.u32 %v2322, 7
      %v2324 = vsub.s32 2, %v2323
      %v2325 = vrot.slane %v2312, %v2324
      %v2326 = vlaneseq
      %v2327 = vshrl.u32 %v2326, 7
      %v2328 = vsub.s32 3, %v2327
      %v2329 = vrot.slane %v2312, %v2328
      %v2330 = vlaneseq
      %v2331 = vshrl.u32 %v2330, 7
      %v2332 = vsub.s32 4, %v2331
      %v2333 = vrot.slane %v2312, %v2332
      %v2334 = vlaneseq
      %v2335 = vshrl.u32 %v2334, 7
      %v2336 = vsub.s32 5, %v2335
      %v2337 = vrot.slane %v2312, %v2336
      %v2345 = vsel %vm719, %v2205, 0
      %v2348 = vsel %vm719, %v2207, 0
      %v2351 = vsel %vm726, %v2305, 0
      %v2354 = vsel %vm726, %v2306, 0
      %v2357 = vsel %vm726, %v2307, 0
      %v2360 = vsel %vm726, %v2308, 0
      %v2363 = vsel %vm726, %v2309, 0
      %v2366 = vsel %vm726, %v2310, 0
      %2368 = vmatprep.subr.mxu0 %v2300
      %2369 = vmatpush1.msra.mxu0 %v2299
      %2370 = vmatprep.subr.mxu0 %v2294
      %2371 = vmatpush1.msra.mxu0 %v2293
      %2372 = vmatprep.subr.mxu0 %v2288
      %2373 = vmatpush1.msra.mxu0 %v2287
      %2374 = vmatprep.subr.mxu0 %v2282
      %2375 = vmatpush1.msra.mxu0 %v2281
      %2376 = vmatprep.subr.mxu0 %v2276
      %2377 = vmatpush1.msra.mxu0 %v2275
      %2378 = vmatprep.subr.mxu0 %v2270
      %2379 = vmatpush1.msra.mxu0 %v2269
      %2380 = vmatprep.subr.mxu0 %v2264
      %2381 = vmatpush1.msra.mxu0 %v2263
      %2382 = vmatprep.subr.mxu0 %v2258
      %2383 = vmatpush1.msra.mxu0 %v2257
      %2384 = vmatprep.subr.mxu0 %v2252
      %2385 = vmatpush1.msra.mxu0 %v2251
      %2386 = vmatprep.subr.mxu0 %v2246
      %2387 = vmatpush1.msra.mxu0 %v2245
      %2388 = vmatprep.subr.mxu0 %v2240
      %2389 = vmatpush1.msra.mxu0 %v2239
      %2390 = vmatprep.subr.mxu0 %v2234
      %2391 = vmatpush1.msra.mxu0 %v2233
      %2392 = vmatprep.subr.mxu0 %v2228
      %2393 = vmatpush1.msra.mxu0 %v2227
      %2394 = vmatprep.subr.mxu0 %v2222
      %2395 = vmatpush1.msra.mxu0 %v2221
      %2396 = vmatprep.subr.mxu0 %v2216
      %2397 = vmatpush1.msra.mxu0 %v2215
      %2398 = vmatprep.subr.mxu0 %v2210
      %2399 = vmatpush1.msra.mxu0 %v2209
      %2400 = vmatprep.subr.mxu0 0.0
      %2401 = vmatpush2.msra.mxu0 0.0
      %2402 = vmatprep.subr.mxu0 0.0
      %2403 = vmatpush2.msra.mxu0 0.0
      %2404 = vmatprep.subr.mxu0 0.0
      %2405 = vmatpush2.msra.mxu0 0.0
      %2406 = vmatprep.subr.mxu0 0.0
      %2407 = vmatpush2.msra.mxu0 0.0
      %2408 = vmatprep.subr.mxu0 0.0
      %2409 = vmatpush2.msra.mxu0 0.0
      %2410 = vmatprep.subr.mxu0 0.0
      %2411 = vmatpush2.msra.mxu0 0.0
      %2412 = vmatprep.subr.mxu0 0.0
      %2413 = vmatpush2.msra.mxu0 0.0
      %2414 = vmatprep.subr.mxu0 0.0
      %2415 = vmatpush2.msra.mxu0 0.0
      %2416 = vmatprep.subr.mxu0 0.0
      %2417 = vmatpush2.msra.mxu0 0.0
      %2418 = vmatprep.subr.mxu0 0.0
      %2419 = vmatpush2.msra.mxu0 0.0
      %2420 = vmatprep.subr.mxu0 0.0
      %2421 = vmatpush2.msra.mxu0 0.0
      %2422 = vmatprep.subr.mxu0 0.0
      %2423 = vmatpush2.msra.mxu0 0.0
      %2424 = vmatprep.subr.mxu0 0.0
      %2425 = vmatpush2.msra.mxu0 0.0
      %2426 = vmatprep.subr.mxu0 0.0
      %2427 = vmatpush2.msra.mxu0 0.0
      %2428 = vmatprep.subr.mxu0 0.0
      %2429 = vmatpush2.msra.mxu0 0.0
      %2430 = vmatprep.subr.mxu0 %v2354
      %2431 = vmatpush2.msra.mxu0 %v2351
      %2432 = vmatprep.mubr.f32.mxu0 %v2345
      %2433 = vmatmul.mubr.f32.gmra.mxu0 %v2204
      %v2434 = vpop.f32.mrf.mxu0
      %v2435 = vadd.f32 %v2317, %v2434
      %v2436 = vpop.f32.mrf.mxu0
      %v2437 = vadd.f32 %v2321, %v2436
      %2438 = vmatprep.mubr.f32.mxu0 %v2348
      %2439 = vmatmul.mubr.f32.gmra.mxu0 %v2206
      %v2440 = vpop.f32.mrf.mxu0
      %v2441 = vadd.f32 %v2317, %v2440
      %v2442 = vpop.f32.mrf.mxu0
      %v2443 = vadd.f32 %v2321, %v2442
      %2444 = vdwg.mxu0
      %2445 = vmatprep.subr.mxu0 %v2302
      %2446 = vmatpush1.msra.mxu0 %v2301
      %2447 = vmatprep.subr.mxu0 %v2296
      %2448 = vmatpush1.msra.mxu0 %v2295
      %2449 = vmatprep.subr.mxu0 %v2290
      %2450 = vmatpush1.msra.mxu0 %v2289
      %2451 = vmatprep.subr.mxu0 %v2284
      %2452 = vmatpush1.msra.mxu0 %v2283
      %2453 = vmatprep.subr.mxu0 %v2278
      %2454 = vmatpush1.msra.mxu0 %v2277
      %2455 = vmatprep.subr.mxu0 %v2272
      %2456 = vmatpush1.msra.mxu0 %v2271
      %2457 = vmatprep.subr.mxu0 %v2266
      %2458 = vmatpush1.msra.mxu0 %v2265
      %2459 = vmatprep.subr.mxu0 %v2260
      %2460 = vmatpush1.msra.mxu0 %v2259
      %2461 = vmatprep.subr.mxu0 %v2254
      %2462 = vmatpush1.msra.mxu0 %v2253
      %2463 = vmatprep.subr.mxu0 %v2248
      %2464 = vmatpush1.msra.mxu0 %v2247
      %2465 = vmatprep.subr.mxu0 %v2242
      %2466 = vmatpush1.msra.mxu0 %v2241
      %2467 = vmatprep.subr.mxu0 %v2236
      %2468 = vmatpush1.msra.mxu0 %v2235
      %2469 = vmatprep.subr.mxu0 %v2230
      %2470 = vmatpush1.msra.mxu0 %v2229
      %2471 = vmatprep.subr.mxu0 %v2224
      %2472 = vmatpush1.msra.mxu0 %v2223
      %2473 = vmatprep.subr.mxu0 %v2218
      %2474 = vmatpush1.msra.mxu0 %v2217
      %2475 = vmatprep.subr.mxu0 %v2212
      %2476 = vmatpush1.msra.mxu0 %v2211
      %2477 = vmatprep.subr.mxu0 0.0
      %2478 = vmatpush2.msra.mxu0 0.0
      %2479 = vmatprep.subr.mxu0 0.0
      %2480 = vmatpush2.msra.mxu0 0.0
      %2481 = vmatprep.subr.mxu0 0.0
      %2482 = vmatpush2.msra.mxu0 0.0
      %2483 = vmatprep.subr.mxu0 0.0
      %2484 = vmatpush2.msra.mxu0 0.0
      %2485 = vmatprep.subr.mxu0 0.0
      %2486 = vmatpush2.msra.mxu0 0.0
      %2487 = vmatprep.subr.mxu0 0.0
      %2488 = vmatpush2.msra.mxu0 0.0
      %2489 = vmatprep.subr.mxu0 0.0
      %2490 = vmatpush2.msra.mxu0 0.0
      %2491 = vmatprep.subr.mxu0 0.0
      %2492 = vmatpush2.msra.mxu0 0.0
      %2493 = vmatprep.subr.mxu0 0.0
      %2494 = vmatpush2.msra.mxu0 0.0
      %2495 = vmatprep.subr.mxu0 0.0
      %2496 = vmatpush2.msra.mxu0 0.0
      %2497 = vmatprep.subr.mxu0 0.0
      %2498 = vmatpush2.msra.mxu0 0.0
      %2499 = vmatprep.subr.mxu0 0.0
      %2500 = vmatpush2.msra.mxu0 0.0
      %2501 = vmatprep.subr.mxu0 0.0
      %2502 = vmatpush2.msra.mxu0 0.0
      %2503 = vmatprep.subr.mxu0 0.0
      %2504 = vmatpush2.msra.mxu0 0.0
      %2505 = vmatprep.subr.mxu0 0.0
      %2506 = vmatpush2.msra.mxu0 0.0
      %2507 = vmatprep.subr.mxu0 %v2360
      %2508 = vmatpush2.msra.mxu0 %v2357
      %2509 = vmatprep.mubr.f32.mxu0 %v2345
      %2510 = vmatmul.mubr.f32.gmra.mxu0 %v2204
      %v2511 = vpop.f32.mrf.mxu0
      %v2512 = vadd.f32 %v2325, %v2511
      %v2513 = vpop.f32.mrf.mxu0
      %v2514 = vadd.f32 %v2329, %v2513
      %2515 = vmatprep.mubr.f32.mxu0 %v2348
      %2516 = vmatmul.mubr.f32.gmra.mxu0 %v2206
      %v2517 = vpop.f32.mrf.mxu0
      %v2518 = vadd.f32 %v2325, %v2517
      %v2519 = vpop.f32.mrf.mxu0
      %v2520 = vadd.f32 %v2329, %v2519
      %2521 = vdwg.mxu0
      %2522 = vmatprep.subr.mxu0 %v2304
      %2523 = vmatpush1.msra.mxu0 %v2303
      %2524 = vmatprep.subr.mxu0 %v2298
      %2525 = vmatpush1.msra.mxu0 %v2297
      %2526 = vmatprep.subr.mxu0 %v2292
      %2527 = vmatpush1.msra.mxu0 %v2291
      %2528 = vmatprep.subr.mxu0 %v2286
      %2529 = vmatpush1.msra.mxu0 %v2285
      %2530 = vmatprep.subr.mxu0 %v2280
      %2531 = vmatpush1.msra.mxu0 %v2279
      %2532 = vmatprep.subr.mxu0 %v2274
      %2533 = vmatpush1.msra.mxu0 %v2273
      %2534 = vmatprep.subr.mxu0 %v2268
      %2535 = vmatpush1.msra.mxu0 %v2267
      %2536 = vmatprep.subr.mxu0 %v2262
      %2537 = vmatpush1.msra.mxu0 %v2261
      %2538 = vmatprep.subr.mxu0 %v2256
      %2539 = vmatpush1.msra.mxu0 %v2255
      %2540 = vmatprep.subr.mxu0 %v2250
      %2541 = vmatpush1.msra.mxu0 %v2249
      %2542 = vmatprep.subr.mxu0 %v2244
      %2543 = vmatpush1.msra.mxu0 %v2243
      %2544 = vmatprep.subr.mxu0 %v2238
      %2545 = vmatpush1.msra.mxu0 %v2237
      %2546 = vmatprep.subr.mxu0 %v2232
      %2547 = vmatpush1.msra.mxu0 %v2231
      %2548 = vmatprep.subr.mxu0 %v2226
      %2549 = vmatpush1.msra.mxu0 %v2225
      %2550 = vmatprep.subr.mxu0 %v2220
      %2551 = vmatpush1.msra.mxu0 %v2219
      %2552 = vmatprep.subr.mxu0 %v2214
      %2553 = vmatpush1.msra.mxu0 %v2213
      %2554 = vmatprep.subr.mxu0 0.0
      %2555 = vmatpush2.msra.mxu0 0.0
      %2556 = vmatprep.subr.mxu0 0.0
      %2557 = vmatpush2.msra.mxu0 0.0
      %2558 = vmatprep.subr.mxu0 0.0
      %2559 = vmatpush2.msra.mxu0 0.0
      %2560 = vmatprep.subr.mxu0 0.0
      %2561 = vmatpush2.msra.mxu0 0.0
      %2562 = vmatprep.subr.mxu0 0.0
      %2563 = vmatpush2.msra.mxu0 0.0
      %2564 = vmatprep.subr.mxu0 0.0
      %2565 = vmatpush2.msra.mxu0 0.0
      %2566 = vmatprep.subr.mxu0 0.0
      %2567 = vmatpush2.msra.mxu0 0.0
      %2568 = vmatprep.subr.mxu0 0.0
      %2569 = vmatpush2.msra.mxu0 0.0
      %2570 = vmatprep.subr.mxu0 0.0
      %2571 = vmatpush2.msra.mxu0 0.0
      %2572 = vmatprep.subr.mxu0 0.0
      %2573 = vmatpush2.msra.mxu0 0.0
      %2574 = vmatprep.subr.mxu0 0.0
      %2575 = vmatpush2.msra.mxu0 0.0
      %2576 = vmatprep.subr.mxu0 0.0
      %2577 = vmatpush2.msra.mxu0 0.0
      %2578 = vmatprep.subr.mxu0 0.0
      %2579 = vmatpush2.msra.mxu0 0.0
      %2580 = vmatprep.subr.mxu0 0.0
      %2581 = vmatpush2.msra.mxu0 0.0
      %2582 = vmatprep.subr.mxu0 0.0
      %2583 = vmatpush2.msra.mxu0 0.0
      %2584 = vmatprep.subr.mxu0 %v2366
      %2585 = vmatpush2.msra.mxu0 %v2363
      %2586 = vmatprep.mubr.f32.mxu0 %v2345
      %2587 = vmatmul.mubr.f32.gmra.mxu0 %v2204
      %v2588 = vpop.f32.mrf.mxu0
      %v2589 = vadd.f32 %v2333, %v2588
      %v2590 = vpop.f32.mrf.mxu0
      %v2591 = vadd.f32 %v2337, %v2590
      %2592 = vmatprep.mubr.f32.mxu0 %v2348
      %2593 = vmatmul.mubr.f32.gmra.mxu0 %v2206
      %v2594 = vpop.f32.mrf.mxu0
      %v2595 = vadd.f32 %v2333, %v2594
      %v2596 = vpop.f32.mrf.mxu0
      %v2597 = vadd.f32 %v2337, %v2596
      %2598 = vdwg.mxu0
      %2599 = vmatprep.subr.mxu0 0.0
      %2600 = vmatpush1.xpose.msra.mxu0 0.0
      %2601 = vmatprep.subr.mxu0 0.0
      %2602 = vmatpush1.xpose.msra.mxu0 0.0
      %2603 = vmatprep.subr.mxu0 0.0
      %2604 = vmatpush1.xpose.msra.mxu0 0.0
      %2605 = vmatprep.subr.mxu0 0.0
      %2606 = vmatpush1.xpose.msra.mxu0 0.0
      %2607 = vmatprep.subr.mxu0 0.0
      %2608 = vmatpush1.xpose.msra.mxu0 0.0
      %2609 = vmatprep.subr.mxu0 0.0
      %2610 = vmatpush1.xpose.msra.mxu0 0.0
      %2611 = vmatprep.subr.mxu0 0.0
      %2612 = vmatpush1.xpose.msra.mxu0 0.0
      %2613 = vmatprep.subr.mxu0 0.0
      %2614 = vmatpush1.xpose.msra.mxu0 0.0
      %2615 = vmatprep.subr.mxu0 0.0
      %2616 = vmatpush1.xpose.msra.mxu0 0.0
      %2617 = vmatprep.subr.mxu0 0.0
      %2618 = vmatpush1.xpose.msra.mxu0 0.0
      %2619 = vmatprep.subr.mxu0 0.0
      %2620 = vmatpush1.xpose.msra.mxu0 0.0
      %2621 = vmatprep.subr.mxu0 0.0
      %2622 = vmatpush1.xpose.msra.mxu0 0.0
      %2623 = vmatprep.subr.mxu0 0.0
      %2624 = vmatpush1.xpose.msra.mxu0 0.0
      %2625 = vmatprep.subr.mxu0 0.0
      %2626 = vmatpush1.xpose.msra.mxu0 0.0
      %2627 = vmatprep.subr.mxu0 0.0
      %2628 = vmatpush1.xpose.msra.mxu0 %v2518
      %2629 = vmatprep.subr.mxu0 0.0
      %2630 = vmatpush1.xpose.msra.mxu0 %v2512
      %2631 = vmatprep.subr.mxu0 0.0
      %2632 = vmatpush2.xpose.msra.mxu0 0.0
      %2633 = vmatprep.subr.mxu0 0.0
      %2634 = vmatpush2.xpose.msra.mxu0 0.0
      %2635 = vmatprep.subr.mxu0 0.0
      %2636 = vmatpush2.xpose.msra.mxu0 0.0
      %2637 = vmatprep.subr.mxu0 0.0
      %2638 = vmatpush2.xpose.msra.mxu0 0.0
      %2639 = vmatprep.subr.mxu0 0.0
      %2640 = vmatpush2.xpose.msra.mxu0 0.0
      %2641 = vmatprep.subr.mxu0 0.0
      %2642 = vmatpush2.xpose.msra.mxu0 0.0
      %2643 = vmatprep.subr.mxu0 0.0
      %2644 = vmatpush2.xpose.msra.mxu0 0.0
      %2645 = vmatprep.subr.mxu0 0.0
      %2646 = vmatpush2.xpose.msra.mxu0 0.0
      %2647 = vmatprep.subr.mxu0 0.0
      %2648 = vmatpush2.xpose.msra.mxu0 0.0
      %2649 = vmatprep.subr.mxu0 0.0
      %2650 = vmatpush2.xpose.msra.mxu0 0.0
      %2651 = vmatprep.subr.mxu0 0.0
      %2652 = vmatpush2.xpose.msra.mxu0 0.0
      %2653 = vmatprep.subr.mxu0 0.0
      %2654 = vmatpush2.xpose.msra.mxu0 0.0
      %2655 = vmatprep.subr.mxu0 0.0
      %2656 = vmatpush2.xpose.msra.mxu0 0.0
      %2657 = vmatprep.subr.mxu0 0.0
      %2658 = vmatpush2.xpose.msra.mxu0 0.0
      %2659 = vmatprep.subr.mxu0 0.0
      %2660 = vmatpush2.xpose.msra.mxu0 0.0
      %2661 = vmatprep.subr.mxu0 0.0
      %2662 = vmatpush2.xpose.msra.mxu0 0.0
      %2663 = vmatprep.mubr.f32.mxu0 0.0
      %2664 = vmatmul.mubr.f32.gmra.mxu0 %v2435
      %v2665 = vpop.f32.mrf.mxu0
      %v2666 = vadd.f32 %v583, %v2665
      %v2667 = vpop.f32.mrf.mxu0
      %2668 = vmatprep.mubr.f32.mxu0 0.0
      %2669 = vmatmul.mubr.f32.gmra.mxu0 %v2441
      %v2670 = vpop.f32.mrf.mxu0
      %v2671 = vadd.f32 %v583, %v2670
      %v2672 = vpop.f32.mrf.mxu0
      %2673 = vdwg.mxu0
      %v2674 = vsel %vm1051, %v2666, -inf
      %2675 = vmax.xlane.f32.xlu0 %v2674
      %v2676 = vpop.xlane.xlu0 %2675
      %v2677 = vsel %vm1055, %v2671, -inf
      %2678 = vmax.xlane.f32.xlu0 %v2677
      %v2679 = vpop.xlane.xlu0 %2678
      %v2680 = vsub.f32 %v2666, %v2676
      %v2681 = vsub.f32 %v2671, %v2679
      %v2682 = vmul.f32 %v2680, 1.442695
      %v2683 = vpow.pop %v2682
      %v2684 = vmul.f32 %v2681, 1.442695
      %v2685 = vpow.pop %v2684
      %v2686 = vsel %vm1051, %v2683, 0.0
      %2687 = vadd.xlane.f32.xlu0 %v2686
      %v2688 = vpop.xlane.xlu0 %2687
      %v2689 = vsel %vm1055, %v2685, 0.0
      %2690 = vadd.xlane.f32.xlu0 %v2689
      %v2691 = vpop.xlane.xlu0 %2690
      %v2692 = vrcp.pop %v2688
      %v2693 = vrcp.pop %v2691
      %v2694 = vmul.f32 %v2683, %v2692
      %v2695 = vmul.f32 %v2685, %v2693
      %v2697 = vsel %vm1051, %v2694, 0
      %v2700 = vsel %vm1051, %v2695, 0
      %v2703 = vsel %vm1081, %v2595, 0
      %2705 = vmatprep.subr.mxu0 0.0
      %2706 = vmatpush1.msra.mxu0 0.0
      %2707 = vmatprep.subr.mxu0 0.0
      %2708 = vmatpush1.msra.mxu0 0.0
      %2709 = vmatprep.subr.mxu0 0.0
      %2710 = vmatpush1.msra.mxu0 0.0
      %2711 = vmatprep.subr.mxu0 0.0
      %2712 = vmatpush1.msra.mxu0 0.0
      %2713 = vmatprep.subr.mxu0 0.0
      %2714 = vmatpush1.msra.mxu0 0.0
      %2715 = vmatprep.subr.mxu0 0.0
      %2716 = vmatpush1.msra.mxu0 0.0
      %2717 = vmatprep.subr.mxu0 0.0
      %2718 = vmatpush1.msra.mxu0 0.0
      %2719 = vmatprep.subr.mxu0 0.0
      %2720 = vmatpush1.msra.mxu0 0.0
      %2721 = vmatprep.subr.mxu0 0.0
      %2722 = vmatpush1.msra.mxu0 0.0
      %2723 = vmatprep.subr.mxu0 0.0
      %2724 = vmatpush1.msra.mxu0 0.0
      %2725 = vmatprep.subr.mxu0 0.0
      %2726 = vmatpush1.msra.mxu0 0.0
      %2727 = vmatprep.subr.mxu0 0.0
      %2728 = vmatpush1.msra.mxu0 0.0
      %2729 = vmatprep.subr.mxu0 0.0
      %2730 = vmatpush1.msra.mxu0 0.0
      %2731 = vmatprep.subr.mxu0 0.0
      %2732 = vmatpush1.msra.mxu0 0.0
      %2733 = vmatprep.subr.mxu0 0.0
      %2734 = vmatpush1.msra.mxu0 %v2703
      %2735 = vmatprep.subr.mxu0 0.0
      %2736 = vmatpush1.msra.mxu0 %v2589
      %2737 = vmatprep.subr.mxu0 0.0
      %2738 = vmatpush2.msra.mxu0 0.0
      %2739 = vmatprep.subr.mxu0 0.0
      %2740 = vmatpush2.msra.mxu0 0.0
      %2741 = vmatprep.subr.mxu0 0.0
      %2742 = vmatpush2.msra.mxu0 0.0
      %2743 = vmatprep.subr.mxu0 0.0
      %2744 = vmatpush2.msra.mxu0 0.0
      %2745 = vmatprep.subr.mxu0 0.0
      %2746 = vmatpush2.msra.mxu0 0.0
      %2747 = vmatprep.subr.mxu0 0.0
      %2748 = vmatpush2.msra.mxu0 0.0
      %2749 = vmatprep.subr.mxu0 0.0
      %2750 = vmatpush2.msra.mxu0 0.0
      %2751 = vmatprep.subr.mxu0 0.0
      %2752 = vmatpush2.msra.mxu0 0.0
      %2753 = vmatprep.subr.mxu0 0.0
      %2754 = vmatpush2.msra.mxu0 0.0
      %2755 = vmatprep.subr.mxu0 0.0
      %2756 = vmatpush2.msra.mxu0 0.0
      %2757 = vmatprep.subr.mxu0 0.0
      %2758 = vmatpush2.msra.mxu0 0.0
      %2759 = vmatprep.subr.mxu0 0.0
      %2760 = vmatpush2.msra.mxu0 0.0
      %2761 = vmatprep.subr.mxu0 0.0
      %2762 = vmatpush2.msra.mxu0 0.0
      %2763 = vmatprep.subr.mxu0 0.0
      %2764 = vmatpush2.msra.mxu0 0.0
      %2765 = vmatprep.subr.mxu0 0.0
      %2766 = vmatpush2.msra.mxu0 0.0
      %2767 = vmatprep.subr.mxu0 0.0
      %2768 = vmatpush2.msra.mxu0 0.0
      %2769 = vmatprep.mubr.f32.mxu0 0.0
      %2770 = vmatmul.mubr.f32.gmra.mxu0 %v2697
      %v2771 = vpop.f32.mrf.mxu0
      %v2772 = vadd.f32 0.0, %v2771
      %v2773 = vpop.f32.mrf.mxu0
      %2774 = vmatprep.mubr.f32.mxu0 0.0
      %2775 = vmatmul.mubr.f32.gmra.mxu0 %v2700
      %v2776 = vpop.f32.mrf.mxu0
      %v2777 = vadd.f32 0.0, %v2776
      %v2778 = vpop.f32.mrf.mxu0
      %2779 = vdwg.mxu0
      %2780 = vmatprep.subr.mxu0 0.0
      %2781 = vmatpush1.xpose.msra.mxu0 0.0
      %2782 = vmatprep.subr.mxu0 0.0
      %2783 = vmatpush1.xpose.msra.mxu0 0.0
      %2784 = vmatprep.subr.mxu0 0.0
      %2785 = vmatpush1.xpose.msra.mxu0 0.0
      %2786 = vmatprep.subr.mxu0 0.0
      %2787 = vmatpush1.xpose.msra.mxu0 0.0
      %2788 = vmatprep.subr.mxu0 0.0
      %2789 = vmatpush1.xpose.msra.mxu0 0.0
      %2790 = vmatprep.subr.mxu0 0.0
      %2791 = vmatpush1.xpose.msra.mxu0 0.0
      %2792 = vmatprep.subr.mxu0 0.0
      %2793 = vmatpush1.xpose.msra.mxu0 0.0
      %2794 = vmatprep.subr.mxu0 0.0
      %2795 = vmatpush1.xpose.msra.mxu0 0.0
      %2796 = vmatprep.subr.mxu0 0.0
      %2797 = vmatpush1.xpose.msra.mxu0 0.0
      %2798 = vmatprep.subr.mxu0 0.0
      %2799 = vmatpush1.xpose.msra.mxu0 0.0
      %2800 = vmatprep.subr.mxu0 0.0
      %2801 = vmatpush1.xpose.msra.mxu0 0.0
      %2802 = vmatprep.subr.mxu0 0.0
      %2803 = vmatpush1.xpose.msra.mxu0 0.0
      %2804 = vmatprep.subr.mxu0 0.0
      %2805 = vmatpush1.xpose.msra.mxu0 0.0
      %2806 = vmatprep.subr.mxu0 0.0
      %2807 = vmatpush1.xpose.msra.mxu0 0.0
      %2808 = vmatprep.subr.mxu0 0.0
      %2809 = vmatpush1.xpose.msra.mxu0 %v2520
      %2810 = vmatprep.subr.mxu0 0.0
      %2811 = vmatpush1.xpose.msra.mxu0 %v2514
      %2812 = vmatprep.subr.mxu0 0.0
      %2813 = vmatpush2.xpose.msra.mxu0 0.0
      %2814 = vmatprep.subr.mxu0 0.0
      %2815 = vmatpush2.xpose.msra.mxu0 0.0
      %2816 = vmatprep.subr.mxu0 0.0
      %2817 = vmatpush2.xpose.msra.mxu0 0.0
      %2818 = vmatprep.subr.mxu0 0.0
      %2819 = vmatpush2.xpose.msra.mxu0 0.0
      %2820 = vmatprep.subr.mxu0 0.0
      %2821 = vmatpush2.xpose.msra.mxu0 0.0
      %2822 = vmatprep.subr.mxu0 0.0
      %2823 = vmatpush2.xpose.msra.mxu0 0.0
      %2824 = vmatprep.subr.mxu0 0.0
      %2825 = vmatpush2.xpose.msra.mxu0 0.0
      %2826 = vmatprep.subr.mxu0 0.0
      %2827 = vmatpush2.xpose.msra.mxu0 0.0
      %2828 = vmatprep.subr.mxu0 0.0
      %2829 = vmatpush2.xpose.msra.mxu0 0.0
      %2830 = vmatprep.subr.mxu0 0.0
      %2831 = vmatpush2.xpose.msra.mxu0 0.0
      %2832 = vmatprep.subr.mxu0 0.0
      %2833 = vmatpush2.xpose.msra.mxu0 0.0
      %2834 = vmatprep.subr.mxu0 0.0
      %2835 = vmatpush2.xpose.msra.mxu0 0.0
      %2836 = vmatprep.subr.mxu0 0.0
      %2837 = vmatpush2.xpose.msra.mxu0 0.0
      %2838 = vmatprep.subr.mxu0 0.0
      %2839 = vmatpush2.xpose.msra.mxu0 0.0
      %2840 = vmatprep.subr.mxu0 0.0
      %2841 = vmatpush2.xpose.msra.mxu0 0.0
      %2842 = vmatprep.subr.mxu0 0.0
      %2843 = vmatpush2.xpose.msra.mxu0 0.0
      %2844 = vmatprep.mubr.f32.mxu0 0.0
      %2845 = vmatmul.mubr.f32.gmra.mxu0 %v2437
      %v2846 = vpop.f32.mrf.mxu0
      %v2847 = vadd.f32 %v583, %v2846
      %v2848 = vpop.f32.mrf.mxu0
      %2849 = vmatprep.mubr.f32.mxu0 0.0
      %2850 = vmatmul.mubr.f32.gmra.mxu0 %v2443
      %v2851 = vpop.f32.mrf.mxu0
      %v2852 = vadd.f32 %v583, %v2851
      %v2853 = vpop.f32.mrf.mxu0
      %2854 = vdwg.mxu0
      %v2855 = vsel %vm1051, %v2847, -inf
      %2856 = vmax.xlane.f32.xlu0 %v2855
      %v2857 = vpop.xlane.xlu0 %2856
      %v2858 = vsel %vm1055, %v2852, -inf
      %2859 = vmax.xlane.f32.xlu0 %v2858
      %v2860 = vpop.xlane.xlu0 %2859
      %v2861 = vsub.f32 %v2847, %v2857
      %v2862 = vsub.f32 %v2852, %v2860
      %v2863 = vmul.f32 %v2861, 1.442695
      %v2864 = vpow.pop %v2863
      %v2865 = vmul.f32 %v2862, 1.442695
      %v2866 = vpow.pop %v2865
      %v2867 = vsel %vm1051, %v2864, 0.0
      %2868 = vadd.xlane.f32.xlu0 %v2867
      %v2869 = vpop.xlane.xlu0 %2868
      %v2870 = vsel %vm1055, %v2866, 0.0
      %2871 = vadd.xlane.f32.xlu0 %v2870
      %v2872 = vpop.xlane.xlu0 %2871
      %v2873 = vrcp.pop %v2869
      %v2874 = vrcp.pop %v2872
      %v2875 = vmul.f32 %v2864, %v2873
      %v2876 = vmul.f32 %v2866, %v2874
      %v2878 = vsel %vm1051, %v2875, 0
      %v2881 = vsel %vm1051, %v2876, 0
      %v2884 = vsel %vm1081, %v2597, 0
      %2886 = vmatprep.subr.mxu0 0.0
      %2887 = vmatpush1.msra.mxu0 0.0
      %2888 = vmatprep.subr.mxu0 0.0
      %2889 = vmatpush1.msra.mxu0 0.0
      %2890 = vmatprep.subr.mxu0 0.0
      %2891 = vmatpush1.msra.mxu0 0.0
      %2892 = vmatprep.subr.mxu0 0.0
      %2893 = vmatpush1.msra.mxu0 0.0
      %2894 = vmatprep.subr.mxu0 0.0
      %2895 = vmatpush1.msra.mxu0 0.0
      %2896 = vmatprep.subr.mxu0 0.0
      %2897 = vmatpush1.msra.mxu0 0.0
      %2898 = vmatprep.subr.mxu0 0.0
      %2899 = vmatpush1.msra.mxu0 0.0
      %2900 = vmatprep.subr.mxu0 0.0
      %2901 = vmatpush1.msra.mxu0 0.0
      %2902 = vmatprep.subr.mxu0 0.0
      %2903 = vmatpush1.msra.mxu0 0.0
      %2904 = vmatprep.subr.mxu0 0.0
      %2905 = vmatpush1.msra.mxu0 0.0
      %2906 = vmatprep.subr.mxu0 0.0
      %2907 = vmatpush1.msra.mxu0 0.0
      %2908 = vmatprep.subr.mxu0 0.0
      %2909 = vmatpush1.msra.mxu0 0.0
      %2910 = vmatprep.subr.mxu0 0.0
      %2911 = vmatpush1.msra.mxu0 0.0
      %2912 = vmatprep.subr.mxu0 0.0
      %2913 = vmatpush1.msra.mxu0 0.0
      %2914 = vmatprep.subr.mxu0 0.0
      %2915 = vmatpush1.msra.mxu0 %v2884
      %2916 = vmatprep.subr.mxu0 0.0
      %2917 = vmatpush1.msra.mxu0 %v2591
      %2918 = vmatprep.subr.mxu0 0.0
      %2919 = vmatpush2.msra.mxu0 0.0
      %2920 = vmatprep.subr.mxu0 0.0
      %2921 = vmatpush2.msra.mxu0 0.0
      %2922 = vmatprep.subr.mxu0 0.0
      %2923 = vmatpush2.msra.mxu0 0.0
      %2924 = vmatprep.subr.mxu0 0.0
      %2925 = vmatpush2.msra.mxu0 0.0
      %2926 = vmatprep.subr.mxu0 0.0
      %2927 = vmatpush2.msra.mxu0 0.0
      %2928 = vmatprep.subr.mxu0 0.0
      %2929 = vmatpush2.msra.mxu0 0.0
      %2930 = vmatprep.subr.mxu0 0.0
      %2931 = vmatpush2.msra.mxu0 0.0
      %2932 = vmatprep.subr.mxu0 0.0
      %2933 = vmatpush2.msra.mxu0 0.0
      %2934 = vmatprep.subr.mxu0 0.0
      %2935 = vmatpush2.msra.mxu0 0.0
      %2936 = vmatprep.subr.mxu0 0.0
      %2937 = vmatpush2.msra.mxu0 0.0
      %2938 = vmatprep.subr.mxu0 0.0
      %2939 = vmatpush2.msra.mxu0 0.0
      %2940 = vmatprep.subr.mxu0 0.0
      %2941 = vmatpush2.msra.mxu0 0.0
      %2942 = vmatprep.subr.mxu0 0.0
      %2943 = vmatpush2.msra.mxu0 0.0
      %2944 = vmatprep.subr.mxu0 0.0
      %2945 = vmatpush2.msra.mxu0 0.0
      %2946 = vmatprep.subr.mxu0 0.0
      %2947 = vmatpush2.msra.mxu0 0.0
      %2948 = vmatprep.subr.mxu0 0.0
      %2949 = vmatpush2.msra.mxu0 0.0
      %2950 = vmatprep.mubr.f32.mxu0 0.0
      %2951 = vmatmul.mubr.f32.gmra.mxu0 %v2878
      %v2952 = vpop.f32.mrf.mxu0
      %v2953 = vadd.f32 0.0, %v2952
      %v2954 = vpop.f32.mrf.mxu0
      %2955 = vmatprep.mubr.f32.mxu0 0.0
      %2956 = vmatmul.mubr.f32.gmra.mxu0 %v2881
      %v2957 = vpop.f32.mrf.mxu0
      %v2958 = vadd.f32 0.0, %v2957
      %v2959 = vpop.f32.mrf.mxu0
      %2960 = vdwg.mxu0
      %s2961 = scalar_lea.vmem %s4, 512
      %v2962 = vld [vmem:[%s2961] sm:$0xff]
      %v2963 = vld [vmem:[%s2961 + $0x8] sm:$0xff]
      %v2964 = vld [vmem:[%s2961 + $0x10] sm:$0xff]
      %v2965 = vld [vmem:[%s2961 + $0x18] sm:$0xff]
      %v2966 = vld [vmem:[%s2961 + $0x20] sm:$0xff]
      %v2967 = vld [vmem:[%s2961 + $0x28] sm:$0xff]
      %v2968 = vld [vmem:[%s2961 + $0x30] sm:$0xff]
      %v2969 = vld [vmem:[%s2961 + $0x38] sm:$0xff]
      %v2970 = vld [vmem:[%s2961 + $0x40] sm:$0xff]
      %v2971 = vld [vmem:[%s2961 + $0x48] sm:$0xff]
      %v2972 = vld [vmem:[%s2961 + $0x50] sm:$0xff]
      %v2973 = vld [vmem:[%s2961 + $0x58] sm:$0xff]
      %v2974 = vld [vmem:[%s2961 + $0x60] sm:$0xff]
      %v2975 = vld [vmem:[%s2961 + $0x68] sm:$0xff]
      %v2976 = vld [vmem:[%s2961 + $0x70] sm:$0xff]
      %v2977 = vld [vmem:[%s2961 + $0x78] sm:$0xff]
      %v2978 = vld [vmem:[%s2961 + $0x80] sm:$0xff]
      %v2979 = vld [vmem:[%s2961 + $0x88] sm:$0xff]
      %v2980 = vld [vmem:[%s2961 + $0x90] sm:$0xff]
      %v2981 = vld [vmem:[%s2961 + $0x98] sm:$0xff]
      %v2982 = vld [vmem:[%s2961 + $0xa0] sm:$0xff]
      %v2983 = vld [vmem:[%s2961 + $0xa8] sm:$0xff]
      %v2984 = vld [vmem:[%s2961 + $0xb0] sm:$0xff]
      %v2985 = vld [vmem:[%s2961 + $0xb8] sm:$0xff]
      %v2986 = vld [vmem:[%s2961 + $0xc0] sm:$0xff]
      %v2987 = vld [vmem:[%s2961 + $0xc8] sm:$0xff]
      %v2988 = vld [vmem:[%s2961 + $0xd0] sm:$0xff]
      %v2989 = vld [vmem:[%s2961 + $0xd8] sm:$0xff]
      %v2990 = vld [vmem:[%s2961 + $0xe0] sm:$0xff]
      %v2991 = vld [vmem:[%s2961 + $0xe8] sm:$0xff]
      %v2992 = vld [vmem:[%s2961 + $0xf0] sm:$0xff]
      %v2993 = vld [vmem:[%s2961 + $0xf8] sm:$0xff]
      %v2994 = vld [vmem:[%s2961 + $0x100] sm:$0xff]
      %v2995 = vld [vmem:[%s2961 + $0x108] sm:$0xff]
      %v2996 = vld [vmem:[%s2961 + $0x110] sm:$0xff]
      %v2997 = vld [vmem:[%s2961 + $0x118] sm:$0xff]
      %v2998 = vld [vmem:[%s2961 + $0x120] sm:$0xff]
      %v2999 = vld [vmem:[%s2961 + $0x128] sm:$0xff]
      %v3000 = vld [vmem:[%s2961 + $0x130] sm:$0xff]
      %v3001 = vld [vmem:[%s2961 + $0x138] sm:$0xff]
      %v3002 = vld [vmem:[%s2961 + $0x140] sm:$0xff]
      %v3003 = vld [vmem:[%s2961 + $0x148] sm:$0xff]
      %v3004 = vld [vmem:[%s2961 + $0x150] sm:$0xff]
      %v3005 = vld [vmem:[%s2961 + $0x158] sm:$0xff]
      %v3006 = vld [vmem:[%s2961 + $0x160] sm:$0xff]
      %v3007 = vld [vmem:[%s2961 + $0x168] sm:$0xff]
      %v3008 = vld [vmem:[%s2961 + $0x170] sm:$0xff]
      %v3009 = vld [vmem:[%s2961 + $0x178] sm:$0xff]
      %v3010 = vld [vmem:[%s2961 + $0x180] sm:$0xff]
      %v3011 = vld [vmem:[%s2961 + $0x188] sm:$0xff]
      %v3012 = vld [vmem:[%s2961 + $0x190] sm:$0xff]
      %v3013 = vld [vmem:[%s2961 + $0x198] sm:$0xff]
      %v3014 = vld [vmem:[%s2961 + $0x1a0] sm:$0xff]
      %v3015 = vld [vmem:[%s2961 + $0x1a8] sm:$0xff]
      %v3016 = vld [vmem:[%s2961 + $0x1b0] sm:$0xff]
      %v3017 = vld [vmem:[%s2961 + $0x1b8] sm:$0xff]
      %v3018 = vld [vmem:[%s2961 + $0x1c0] sm:$0xff]
      %v3019 = vld [vmem:[%s2961 + $0x1c8] sm:$0xff]
      %v3020 = vld [vmem:[%s2961 + $0x1d0] sm:$0xff]
      %v3021 = vld [vmem:[%s2961 + $0x1d8] sm:$0xff]
      %v3022 = vld [vmem:[%s2961 + $0x1e0] sm:$0xff]
      %v3023 = vld [vmem:[%s2961 + $0x1e8] sm:$0xff]
      %v3024 = vld [vmem:[%s2961 + $0x1f0] sm:$0xff]
      %v3025 = vld [vmem:[%s2961 + $0x1f8] sm:$0xff]
      %s3026 = scalar_lea.vmem %s5, 2
      %v3027 = vld [vmem:[%s3026] sm:$0x3]
      %v3029 = vlaneseq
      %v3030 = vshrl.u32 %v3029, 7
      %v3031 = vsub.s32 0, %v3030
      %v3032 = vrot.slane %v3027, %v3031
      %v3033 = vlaneseq
      %v3034 = vshrl.u32 %v3033, 7
      %v3035 = vsub.s32 1, %v3034
      %v3036 = vrot.slane %v3027, %v3035
      %3039 = vmatprep.subr.mxu0 %v2993
      %3040 = vmatpush1.msra.mxu0 %v2992
      %3041 = vmatprep.subr.mxu0 %v2991
      %3042 = vmatpush1.msra.mxu0 %v2990
      %3043 = vmatprep.subr.mxu0 %v2989
      %3044 = vmatpush1.msra.mxu0 %v2988
      %3045 = vmatprep.subr.mxu0 %v2987
      %3046 = vmatpush1.msra.mxu0 %v2986
      %3047 = vmatprep.subr.mxu0 %v2985
      %3048 = vmatpush1.msra.mxu0 %v2984
      %3049 = vmatprep.subr.mxu0 %v2983
      %3050 = vmatpush1.msra.mxu0 %v2982
      %3051 = vmatprep.subr.mxu0 %v2981
      %3052 = vmatpush1.msra.mxu0 %v2980
      %3053 = vmatprep.subr.mxu0 %v2979
      %3054 = vmatpush1.msra.mxu0 %v2978
      %3055 = vmatprep.subr.mxu0 %v2977
      %3056 = vmatpush1.msra.mxu0 %v2976
      %3057 = vmatprep.subr.mxu0 %v2975
      %3058 = vmatpush1.msra.mxu0 %v2974
      %3059 = vmatprep.subr.mxu0 %v2973
      %3060 = vmatpush1.msra.mxu0 %v2972
      %3061 = vmatprep.subr.mxu0 %v2971
      %3062 = vmatpush1.msra.mxu0 %v2970
      %3063 = vmatprep.subr.mxu0 %v2969
      %3064 = vmatpush1.msra.mxu0 %v2968
      %3065 = vmatprep.subr.mxu0 %v2967
      %3066 = vmatpush1.msra.mxu0 %v2966
      %3067 = vmatprep.subr.mxu0 %v2965
      %3068 = vmatpush1.msra.mxu0 %v2964
      %3069 = vmatprep.subr.mxu0 %v2963
      %3070 = vmatpush1.msra.mxu0 %v2962
      %3071 = vmatprep.subr.mxu0 %v3025
      %3072 = vmatpush2.msra.mxu0 %v3024
      %3073 = vmatprep.subr.mxu0 %v3023
      %3074 = vmatpush2.msra.mxu0 %v3022
      %3075 = vmatprep.subr.mxu0 %v3021
      %3076 = vmatpush2.msra.mxu0 %v3020
      %3077 = vmatprep.subr.mxu0 %v3019
      %3078 = vmatpush2.msra.mxu0 %v3018
      %3079 = vmatprep.subr.mxu0 %v3017
      %3080 = vmatpush2.msra.mxu0 %v3016
      %3081 = vmatprep.subr.mxu0 %v3015
      %3082 = vmatpush2.msra.mxu0 %v3014
      %3083 = vmatprep.subr.mxu0 %v3013
      %3084 = vmatpush2.msra.mxu0 %v3012
      %3085 = vmatprep.subr.mxu0 %v3011
      %3086 = vmatpush2.msra.mxu0 %v3010
      %3087 = vmatprep.subr.mxu0 %v3009
      %3088 = vmatpush2.msra.mxu0 %v3008
      %3089 = vmatprep.subr.mxu0 %v3007
      %3090 = vmatpush2.msra.mxu0 %v3006
      %3091 = vmatprep.subr.mxu0 %v3005
      %3092 = vmatpush2.msra.mxu0 %v3004
      %3093 = vmatprep.subr.mxu0 %v3003
      %3094 = vmatpush2.msra.mxu0 %v3002
      %3095 = vmatprep.subr.mxu0 %v3001
      %3096 = vmatpush2.msra.mxu0 %v3000
      %3097 = vmatprep.subr.mxu0 %v2999
      %3098 = vmatpush2.msra.mxu0 %v2998
      %3099 = vmatprep.subr.mxu0 %v2997
      %3100 = vmatpush2.msra.mxu0 %v2996
      %3101 = vmatprep.subr.mxu0 %v2995
      %3102 = vmatpush2.msra.mxu0 %v2994
      %3103 = vmatprep.mubr.f32.mxu0 %v2953
      %3104 = vmatmul.mubr.f32.gmra.mxu0 %v2772
      %v3105 = vpop.f32.mrf.mxu0
      %v3106 = vadd.f32 %v3032, %v3105
      %v3107 = vpop.f32.mrf.mxu0
      %v3108 = vadd.f32 %v3036, %v3107
      %3109 = vmatprep.mubr.f32.mxu0 %v2958
      %3110 = vmatmul.mubr.f32.gmra.mxu0 %v2777
      %v3111 = vpop.f32.mrf.mxu0
      %v3112 = vadd.f32 %v3032, %v3111
      %v3113 = vpop.f32.mrf.mxu0
      %v3114 = vadd.f32 %v3036, %v3113
      %3115 = vdwg.mxu0
      %v3116 = vadd.f32 %v2204, %v3106
      %v3117 = vadd.f32 %v2205, %v3108
      %v3118 = vadd.f32 %v2206, %v3112
      %v3119 = vadd.f32 %v2207, %v3114
      %s3120 = scalar_lea.vmem %s6, 2
      %v3121 = vld [vmem:[%s3120] sm:$0x3]
      %s3122 = scalar_lea.vmem %s7, 2
      %v3123 = vld [vmem:[%s3122] sm:$0x3]
      %v3124 = vsel %vm719, %v3117, 0.0
      %v3125 = vadd.f32 %v3116, %v3124
      %3126 = vadd.xlane.f32.xlu0 %v3125
      %v3127 = vpop.xlane.xlu0 %3126
      %v3128 = vsel %vm1081, %v3118, 0.0
      %v3129 = vsel %vm1505, %v3119, 0.0
      %v3130 = vadd.f32 %v3128, %v3129
      %3131 = vadd.xlane.f32.xlu0 %v3130
      %v3132 = vpop.xlane.xlu0 %3131
      %v3133 = vmul.f32 %v3127, %v1510
      %v3134 = vmul.f32 %v3132, %v1510
      %v3135 = vsub.f32 %v3116, %v3133
      %v3136 = vsub.f32 %v3117, %v3133
      %v3137 = vsub.f32 %v3118, %v3134
      %v3138 = vsub.f32 %v3119, %v3134
      %v3139 = vmul.f32 %v3135, %v3135
      %v3140 = vmul.f32 %v3136, %v3136
      %v3141 = vmul.f32 %v3137, %v3137
      %v3142 = vmul.f32 %v3138, %v3138
      %v3143 = vsel %vm719, %v3140, 0.0
      %v3144 = vadd.f32 %v3139, %v3143
      %3145 = vadd.xlane.f32.xlu0 %v3144
      %v3146 = vpop.xlane.xlu0 %3145
      %v3147 = vsel %vm1081, %v3141, 0.0
      %v3148 = vsel %vm1505, %v3142, 0.0
      %v3149 = vadd.f32 %v3147, %v3148
      %3150 = vadd.xlane.f32.xlu0 %v3149
      %v3151 = vpop.xlane.xlu0 %3150
      %v3152 = vmul.f32 %v3146, %v1510
      %v3153 = vmul.f32 %v3151, %v1510
      %v3154 = vadd.f32 %v3152, 1e-05
      %v3155 = vadd.f32 %v3153, 1e-05
      %v3156 = vrsqrt.pop %v3154
      %v3157 = vrsqrt.pop %v3155
      %v3158 = vmul.f32 %v3135, %v3156
      %v3159 = vmul.f32 %v3136, %v3156
      %v3160 = vmul.f32 %v3137, %v3157
      %v3161 = vmul.f32 %v3138, %v3157
      %v3163 = vlaneseq
      %v3164 = vshrl.u32 %v3163, 7
      %v3165 = vsub.s32 0, %v3164
      %v3166 = vrot.slane %v3121, %v3165
      %v3167 = vlaneseq
      %v3168 = vshrl.u32 %v3167, 7
      %v3169 = vsub.s32 1, %v3168
      %v3170 = vrot.slane %v3121, %v3169
      %v3173 = vmul.f32 %v3158, %v3166
      %v3174 = vmul.f32 %v3159, %v3170
      %v3175 = vmul.f32 %v3160, %v3166
      %v3176 = vmul.f32 %v3161, %v3170
      %v3178 = vlaneseq
      %v3179 = vshrl.u32 %v3178, 7
      %v3180 = vsub.s32 0, %v3179
      %v3181 = vrot.slane %v3123, %v3180
      %v3182 = vlaneseq
      %v3183 = vshrl.u32 %v3182, 7
      %v3184 = vsub.s32 1, %v3183
      %v3185 = vrot.slane %v3123, %v3184
      %v3188 = vadd.f32 %v3173, %v3181
      %v3189 = vadd.f32 %v3174, %v3185
      %v3190 = vadd.f32 %v3175, %v3181
      %v3191 = vadd.f32 %v3176, %v3185
      %s3192 = scalar_lea.vmem %s8, 544
      %v3193 = vld [vmem:[%s3192] sm:$0xff]
      %v3194 = vld [vmem:[%s3192 + $0x8] sm:$0xff]
      %v3195 = vld [vmem:[%s3192 + $0x10] sm:$0xff]
      %v3196 = vld [vmem:[%s3192 + $0x18] sm:$0xff]
      %v3197 = vld [vmem:[%s3192 + $0x20] sm:$0xff]
      %v3198 = vld [vmem:[%s3192 + $0x28] sm:$0xff]
      %v3199 = vld [vmem:[%s3192 + $0x30] sm:$0xff]
      %v3200 = vld [vmem:[%s3192 + $0x38] sm:$0xff]
      %v3201 = vld [vmem:[%s3192 + $0x40] sm:$0xff]
      %v3202 = vld [vmem:[%s3192 + $0x48] sm:$0xff]
      %v3203 = vld [vmem:[%s3192 + $0x50] sm:$0xff]
      %v3204 = vld [vmem:[%s3192 + $0x58] sm:$0xff]
      %v3205 = vld [vmem:[%s3192 + $0x60] sm:$0xff]
      %v3206 = vld [vmem:[%s3192 + $0x68] sm:$0xff]
      %v3207 = vld [vmem:[%s3192 + $0x70] sm:$0xff]
      %v3208 = vld [vmem:[%s3192 + $0x78] sm:$0xff]
      %v3209 = vld [vmem:[%s3192 + $0x80] sm:$0xff]
      %v3210 = vld [vmem:[%s3192 + $0x88] sm:$0xff]
      %v3211 = vld [vmem:[%s3192 + $0x90] sm:$0xff]
      %v3212 = vld [vmem:[%s3192 + $0x98] sm:$0xff]
      %v3213 = vld [vmem:[%s3192 + $0xa0] sm:$0xff]
      %v3214 = vld [vmem:[%s3192 + $0xa8] sm:$0xff]
      %v3215 = vld [vmem:[%s3192 + $0xb0] sm:$0xff]
      %v3216 = vld [vmem:[%s3192 + $0xb8] sm:$0xff]
      %v3217 = vld [vmem:[%s3192 + $0xc0] sm:$0xff]
      %v3218 = vld [vmem:[%s3192 + $0xc8] sm:$0xff]
      %v3219 = vld [vmem:[%s3192 + $0xd0] sm:$0xff]
      %v3220 = vld [vmem:[%s3192 + $0xd8] sm:$0xff]
      %v3221 = vld [vmem:[%s3192 + $0xe0] sm:$0xff]
      %v3222 = vld [vmem:[%s3192 + $0xe8] sm:$0xff]
      %v3223 = vld [vmem:[%s3192 + $0xf0] sm:$0xff]
      %v3224 = vld [vmem:[%s3192 + $0xf8] sm:$0xff]
      %v3225 = vld [vmem:[%s3192 + $0x100] sm:$0xff]
      %v3226 = vld [vmem:[%s3192 + $0x108] sm:$0xff]
      %v3227 = vld [vmem:[%s3192 + $0x110] sm:$0xff]
      %v3228 = vld [vmem:[%s3192 + $0x118] sm:$0xff]
      %v3229 = vld [vmem:[%s3192 + $0x120] sm:$0xff]
      %v3230 = vld [vmem:[%s3192 + $0x128] sm:$0xff]
      %v3231 = vld [vmem:[%s3192 + $0x130] sm:$0xff]
      %v3232 = vld [vmem:[%s3192 + $0x138] sm:$0xff]
      %v3233 = vld [vmem:[%s3192 + $0x140] sm:$0xff]
      %v3234 = vld [vmem:[%s3192 + $0x148] sm:$0xff]
      %v3235 = vld [vmem:[%s3192 + $0x150] sm:$0xff]
      %v3236 = vld [vmem:[%s3192 + $0x158] sm:$0xff]
      %v3237 = vld [vmem:[%s3192 + $0x160] sm:$0xff]
      %v3238 = vld [vmem:[%s3192 + $0x168] sm:$0xff]
      %v3239 = vld [vmem:[%s3192 + $0x170] sm:$0xff]
      %v3240 = vld [vmem:[%s3192 + $0x178] sm:$0xff]
      %v3241 = vld [vmem:[%s3192 + $0x180] sm:$0xff]
      %v3242 = vld [vmem:[%s3192 + $0x188] sm:$0xff]
      %v3243 = vld [vmem:[%s3192 + $0x190] sm:$0xff]
      %v3244 = vld [vmem:[%s3192 + $0x198] sm:$0xff]
      %v3245 = vld [vmem:[%s3192 + $0x1a0] sm:$0xff]
      %v3246 = vld [vmem:[%s3192 + $0x1a8] sm:$0xff]
      %v3247 = vld [vmem:[%s3192 + $0x1b0] sm:$0xff]
      %v3248 = vld [vmem:[%s3192 + $0x1b8] sm:$0xff]
      %v3249 = vld [vmem:[%s3192 + $0x1c0] sm:$0xff]
      %v3250 = vld [vmem:[%s3192 + $0x1c8] sm:$0xff]
      %v3251 = vld [vmem:[%s3192 + $0x1d0] sm:$0xff]
      %v3252 = vld [vmem:[%s3192 + $0x1d8] sm:$0xff]
      %v3253 = vld [vmem:[%s3192 + $0x1e0] sm:$0xff]
      %v3254 = vld [vmem:[%s3192 + $0x1e8] sm:$0xff]
      %v3255 = vld [vmem:[%s3192 + $0x1f0] sm:$0xff]
      %v3256 = vld [vmem:[%s3192 + $0x1f8] sm:$0xff]
      %v3257 = vld [vmem:[%s3192 + $0x200] sm:$0x3]
      %v3258 = vld [vmem:[%s3192 + $0x208] sm:$0x3]
      %v3259 = vld [vmem:[%s3192 + $0x210] sm:$0x3]
      %v3260 = vld [vmem:[%s3192 + $0x218] sm:$0x3]
      %s3261 = scalar_lea.vmem %s9, 4
      %v3262 = vld [vmem:[%s3261] sm:$0xf]
      %v3264 = vlaneseq
      %v3265 = vshrl.u32 %v3264, 7
      %v3266 = vsub.s32 0, %v3265
      %v3267 = vrot.slane %v3262, %v3266
      %v3268 = vlaneseq
      %v3269 = vshrl.u32 %v3268, 7
      %v3270 = vsub.s32 1, %v3269
      %v3271 = vrot.slane %v3262, %v3270
      %v3272 = vlaneseq
      %v3273 = vshrl.u32 %v3272, 7
      %v3274 = vsub.s32 2, %v3273
      %v3275 = vrot.slane %v3262, %v3274
      %v3276 = vlaneseq
      %v3277 = vshrl.u32 %v3276, 7
      %v3278 = vsub.s32 3, %v3277
      %v3279 = vrot.slane %v3262, %v3278
      %v3285 = vsel %vm719, %v3189, 0
      %v3288 = vsel %vm719, %v3191, 0
      %v3291 = vsel %vm726, %v3257, 0
      %v3294 = vsel %vm726, %v3258, 0
      %v3297 = vsel %vm726, %v3259, 0
      %v3300 = vsel %vm726, %v3260, 0
      %3302 = vmatprep.subr.mxu0 %v3254
      %3303 = vmatpush1.msra.mxu0 %v3253
      %3304 = vmatprep.subr.mxu0 %v3250
      %3305 = vmatpush1.msra.mxu0 %v3249
      %3306 = vmatprep.subr.mxu0 %v3246
      %3307 = vmatpush1.msra.mxu0 %v3245
      %3308 = vmatprep.subr.mxu0 %v3242
      %3309 = vmatpush1.msra.mxu0 %v3241
      %3310 = vmatprep.subr.mxu0 %v3238
      %3311 = vmatpush1.msra.mxu0 %v3237
      %3312 = vmatprep.subr.mxu0 %v3234
      %3313 = vmatpush1.msra.mxu0 %v3233
      %3314 = vmatprep.subr.mxu0 %v3230
      %3315 = vmatpush1.msra.mxu0 %v3229
      %3316 = vmatprep.subr.mxu0 %v3226
      %3317 = vmatpush1.msra.mxu0 %v3225
      %3318 = vmatprep.subr.mxu0 %v3222
      %3319 = vmatpush1.msra.mxu0 %v3221
      %3320 = vmatprep.subr.mxu0 %v3218
      %3321 = vmatpush1.msra.mxu0 %v3217
      %3322 = vmatprep.subr.mxu0 %v3214
      %3323 = vmatpush1.msra.mxu0 %v3213
      %3324 = vmatprep.subr.mxu0 %v3210
      %3325 = vmatpush1.msra.mxu0 %v3209
      %3326 = vmatprep.subr.mxu0 %v3206
      %3327 = vmatpush1.msra.mxu0 %v3205
      %3328 = vmatprep.subr.mxu0 %v3202
      %3329 = vmatpush1.msra.mxu0 %v3201
      %3330 = vmatprep.subr.mxu0 %v3198
      %3331 = vmatpush1.msra.mxu0 %v3197
      %3332 = vmatprep.subr.mxu0 %v3194
      %3333 = vmatpush1.msra.mxu0 %v3193
      %3334 = vmatprep.subr.mxu0 0.0
      %3335 = vmatpush2.msra.mxu0 0.0
      %3336 = vmatprep.subr.mxu0 0.0
      %3337 = vmatpush2.msra.mxu0 0.0
      %3338 = vmatprep.subr.mxu0 0.0
      %3339 = vmatpush2.msra.mxu0 0.0
      %3340 = vmatprep.subr.mxu0 0.0
      %3341 = vmatpush2.msra.mxu0 0.0
      %3342 = vmatprep.subr.mxu0 0.0
      %3343 = vmatpush2.msra.mxu0 0.0
      %3344 = vmatprep.subr.mxu0 0.0
      %3345 = vmatpush2.msra.mxu0 0.0
      %3346 = vmatprep.subr.mxu0 0.0
      %3347 = vmatpush2.msra.mxu0 0.0
      %3348 = vmatprep.subr.mxu0 0.0
      %3349 = vmatpush2.msra.mxu0 0.0
      %3350 = vmatprep.subr.mxu0 0.0
      %3351 = vmatpush2.msra.mxu0 0.0
      %3352 = vmatprep.subr.mxu0 0.0
      %3353 = vmatpush2.msra.mxu0 0.0
      %3354 = vmatprep.subr.mxu0 0.0
      %3355 = vmatpush2.msra.mxu0 0.0
      %3356 = vmatprep.subr.mxu0 0.0
      %3357 = vmatpush2.msra.mxu0 0.0
      %3358 = vmatprep.subr.mxu0 0.0
      %3359 = vmatpush2.msra.mxu0 0.0
      %3360 = vmatprep.subr.mxu0 0.0
      %3361 = vmatpush2.msra.mxu0 0.0
      %3362 = vmatprep.subr.mxu0 0.0
      %3363 = vmatpush2.msra.mxu0 0.0
      %3364 = vmatprep.subr.mxu0 %v3294
      %3365 = vmatpush2.msra.mxu0 %v3291
      %3366 = vmatprep.mubr.f32.mxu0 %v3285
      %3367 = vmatmul.mubr.f32.gmra.mxu0 %v3188
      %v3368 = vpop.f32.mrf.mxu0
      %v3369 = vadd.f32 %v3267, %v3368
      %v3370 = vpop.f32.mrf.mxu0
      %v3371 = vadd.f32 %v3271, %v3370
      %3372 = vmatprep.mubr.f32.mxu0 %v3288
      %3373 = vmatmul.mubr.f32.gmra.mxu0 %v3190
      %v3374 = vpop.f32.mrf.mxu0
      %v3375 = vadd.f32 %v3267, %v3374
      %v3376 = vpop.f32.mrf.mxu0
      %v3377 = vadd.f32 %v3271, %v3376
      %3378 = vdwg.mxu0
      %3379 = vmatprep.subr.mxu0 %v3256
      %3380 = vmatpush1.msra.mxu0 %v3255
      %3381 = vmatprep.subr.mxu0 %v3252
      %3382 = vmatpush1.msra.mxu0 %v3251
      %3383 = vmatprep.subr.mxu0 %v3248
      %3384 = vmatpush1.msra.mxu0 %v3247
      %3385 = vmatprep.subr.mxu0 %v3244
      %3386 = vmatpush1.msra.mxu0 %v3243
      %3387 = vmatprep.subr.mxu0 %v3240
      %3388 = vmatpush1.msra.mxu0 %v3239
      %3389 = vmatprep.subr.mxu0 %v3236
      %3390 = vmatpush1.msra.mxu0 %v3235
      %3391 = vmatprep.subr.mxu0 %v3232
      %3392 = vmatpush1.msra.mxu0 %v3231
      %3393 = vmatprep.subr.mxu0 %v3228
      %3394 = vmatpush1.msra.mxu0 %v3227
      %3395 = vmatprep.subr.mxu0 %v3224
      %3396 = vmatpush1.msra.mxu0 %v3223
      %3397 = vmatprep.subr.mxu0 %v3220
      %3398 = vmatpush1.msra.mxu0 %v3219
      %3399 = vmatprep.subr.mxu0 %v3216
      %3400 = vmatpush1.msra.mxu0 %v3215
      %3401 = vmatprep.subr.mxu0 %v3212
      %3402 = vmatpush1.msra.mxu0 %v3211
      %3403 = vmatprep.subr.mxu0 %v3208
      %3404 = vmatpush1.msra.mxu0 %v3207
      %3405 = vmatprep.subr.mxu0 %v3204
      %3406 = vmatpush1.msra.mxu0 %v3203
      %3407 = vmatprep.subr.mxu0 %v3200
      %3408 = vmatpush1.msra.mxu0 %v3199
      %3409 = vmatprep.subr.mxu0 %v3196
      %3410 = vmatpush1.msra.mxu0 %v3195
      %3411 = vmatprep.subr.mxu0 0.0
      %3412 = vmatpush2.msra.mxu0 0.0
      %3413 = vmatprep.subr.mxu0 0.0
      %3414 = vmatpush2.msra.mxu0 0.0
      %3415 = vmatprep.subr.mxu0 0.0
      %3416 = vmatpush2.msra.mxu0 0.0
      %3417 = vmatprep.subr.mxu0 0.0
      %3418 = vmatpush2.msra.mxu0 0.0
      %3419 = vmatprep.subr.mxu0 0.0
      %3420 = vmatpush2.msra.mxu0 0.0
      %3421 = vmatprep.subr.mxu0 0.0
      %3422 = vmatpush2.msra.mxu0 0.0
      %3423 = vmatprep.subr.mxu0 0.0
      %3424 = vmatpush2.msra.mxu0 0.0
      %3425 = vmatprep.subr.mxu0 0.0
      %3426 = vmatpush2.msra.mxu0 0.0
      %3427 = vmatprep.subr.mxu0 0.0
      %3428 = vmatpush2.msra.mxu0 0.0
      %3429 = vmatprep.subr.mxu0 0.0
      %3430 = vmatpush2.msra.mxu0 0.0
      %3431 = vmatprep.subr.mxu0 0.0
      %3432 = vmatpush2.msra.mxu0 0.0
      %3433 = vmatprep.subr.mxu0 0.0
      %3434 = vmatpush2.msra.mxu0 0.0
      %3435 = vmatprep.subr.mxu0 0.0
      %3436 = vmatpush2.msra.mxu0 0.0
      %3437 = vmatprep.subr.mxu0 0.0
      %3438 = vmatpush2.msra.mxu0 0.0
      %3439 = vmatprep.subr.mxu0 0.0
      %3440 = vmatpush2.msra.mxu0 0.0
      %3441 = vmatprep.subr.mxu0 %v3300
      %3442 = vmatpush2.msra.mxu0 %v3297
      %3443 = vmatprep.mubr.f32.mxu0 %v3285
      %3444 = vmatmul.mubr.f32.gmra.mxu0 %v3188
      %v3445 = vpop.f32.mrf.mxu0
      %v3446 = vadd.f32 %v3275, %v3445
      %v3447 = vpop.f32.mrf.mxu0
      %v3448 = vadd.f32 %v3279, %v3447
      %3449 = vmatprep.mubr.f32.mxu0 %v3288
      %3450 = vmatmul.mubr.f32.gmra.mxu0 %v3190
      %v3451 = vpop.f32.mrf.mxu0
      %v3452 = vadd.f32 %v3275, %v3451
      %v3453 = vpop.f32.mrf.mxu0
      %v3454 = vadd.f32 %v3279, %v3453
      %3455 = vdwg.mxu0
      %v3456 = vmax.f32 %v3369, 0.0
      %v3457 = vmax.f32 %v3371, 0.0
      %v3458 = vmax.f32 %v3446, 0.0
      %v3459 = vmax.f32 %v3448, 0.0
      %v3460 = vmax.f32 %v3375, 0.0
      %v3461 = vmax.f32 %v3377, 0.0
      %v3462 = vmax.f32 %v3452, 0.0
      %v3463 = vmax.f32 %v3454, 0.0
      %s3464 = scalar_lea.vmem %s10, 1024
      %v3465 = vld [vmem:[%s3464] sm:$0xff]
      %v3466 = vld [vmem:[%s3464 + $0x8] sm:$0xff]
      %v3467 = vld [vmem:[%s3464 + $0x10] sm:$0xff]
      %v3468 = vld [vmem:[%s3464 + $0x18] sm:$0xff]
      %v3469 = vld [vmem:[%s3464 + $0x20] sm:$0xff]
      %v3470 = vld [vmem:[%s3464 + $0x28] sm:$0xff]
      %v3471 = vld [vmem:[%s3464 + $0x30] sm:$0xff]
      %v3472 = vld [vmem:[%s3464 + $0x38] sm:$0xff]
      %v3473 = vld [vmem:[%s3464 + $0x40] sm:$0xff]
      %v3474 = vld [vmem:[%s3464 + $0x48] sm:$0xff]
      %v3475 = vld [vmem:[%s3464 + $0x50] sm:$0xff]
      %v3476 = vld [vmem:[%s3464 + $0x58] sm:$0xff]
      %v3477 = vld [vmem:[%s3464 + $0x60] sm:$0xff]
      %v3478 = vld [vmem:[%s3464 + $0x68] sm:$0xff]
      %v3479 = vld [vmem:[%s3464 + $0x70] sm:$0xff]
      %v3480 = vld [vmem:[%s3464 + $0x78] sm:$0xff]
      %v3481 = vld [vmem:[%s3464 + $0x80] sm:$0xff]
      %v3482 = vld [vmem:[%s3464 + $0x88] sm:$0xff]
      %v3483 = vld [vmem:[%s3464 + $0x90] sm:$0xff]
      %v3484 = vld [vmem:[%s3464 + $0x98] sm:$0xff]
      %v3485 = vld [vmem:[%s3464 + $0xa0] sm:$0xff]
      %v3486 = vld [vmem:[%s3464 + $0xa8] sm:$0xff]
      %v3487 = vld [vmem:[%s3464 + $0xb0] sm:$0xff]
      %v3488 = vld [vmem:[%s3464 + $0xb8] sm:$0xff]
      %v3489 = vld [vmem:[%s3464 + $0xc0] sm:$0xff]
      %v3490 = vld [vmem:[%s3464 + $0xc8] sm:$0xff]
      %v3491 = vld [vmem:[%s3464 + $0xd0] sm:$0xff]
      %v3492 = vld [vmem:[%s3464 + $0xd8] sm:$0xff]
      %v3493 = vld [vmem:[%s3464 + $0xe0] sm:$0xff]
      %v3494 = vld [vmem:[%s3464 + $0xe8] sm:$0xff]
      %v3495 = vld [vmem:[%s3464 + $0xf0] sm:$0xff]
      %v3496 = vld [vmem:[%s3464 + $0xf8] sm:$0xff]
      %v3497 = vld [vmem:[%s3464 + $0x100] sm:$0xff]
      %v3498 = vld [vmem:[%s3464 + $0x108] sm:$0xff]
      %v3499 = vld [vmem:[%s3464 + $0x110] sm:$0xff]
      %v3500 = vld [vmem:[%s3464 + $0x118] sm:$0xff]
      %v3501 = vld [vmem:[%s3464 + $0x120] sm:$0xff]
      %v3502 = vld [vmem:[%s3464 + $0x128] sm:$0xff]
      %v3503 = vld [vmem:[%s3464 + $0x130] sm:$0xff]
      %v3504 = vld [vmem:[%s3464 + $0x138] sm:$0xff]
      %v3505 = vld [vmem:[%s3464 + $0x140] sm:$0xff]
      %v3506 = vld [vmem:[%s3464 + $0x148] sm:$0xff]
      %v3507 = vld [vmem:[%s3464 + $0x150] sm:$0xff]
      %v3508 = vld [vmem:[%s3464 + $0x158] sm:$0xff]
      %v3509 = vld [vmem:[%s3464 + $0x160] sm:$0xff]
      %v3510 = vld [vmem:[%s3464 + $0x168] sm:$0xff]
      %v3511 = vld [vmem:[%s3464 + $0x170] sm:$0xff]
      %v3512 = vld [vmem:[%s3464 + $0x178] sm:$0xff]
      %v3513 = vld [vmem:[%s3464 + $0x180] sm:$0xff]
      %v3514 = vld [vmem:[%s3464 + $0x188] sm:$0xff]
      %v3515 = vld [vmem:[%s3464 + $0x190] sm:$0xff]
      %v3516 = vld [vmem:[%s3464 + $0x198] sm:$0xff]
      %v3517 = vld [vmem:[%s3464 + $0x1a0] sm:$0xff]
      %v3518 = vld [vmem:[%s3464 + $0x1a8] sm:$0xff]
      %v3519 = vld [vmem:[%s3464 + $0x1b0] sm:$0xff]
      %v3520 = vld [vmem:[%s3464 + $0x1b8] sm:$0xff]
      %v3521 = vld [vmem:[%s3464 + $0x1c0] sm:$0xff]
      %v3522 = vld [vmem:[%s3464 + $0x1c8] sm:$0xff]
      %v3523 = vld [vmem:[%s3464 + $0x1d0] sm:$0xff]
      %v3524 = vld [vmem:[%s3464 + $0x1d8] sm:$0xff]
      %v3525 = vld [vmem:[%s3464 + $0x1e0] sm:$0xff]
      %v3526 = vld [vmem:[%s3464 + $0x1e8] sm:$0xff]
      %v3527 = vld [vmem:[%s3464 + $0x1f0] sm:$0xff]
      %v3528 = vld [vmem:[%s3464 + $0x1f8] sm:$0xff]
      %v3529 = vld [vmem:[%s3464 + $0x200] sm:$0xff]
      %v3530 = vld [vmem:[%s3464 + $0x208] sm:$0xff]
      %v3531 = vld [vmem:[%s3464 + $0x210] sm:$0xff]
      %v3532 = vld [vmem:[%s3464 + $0x218] sm:$0xff]
      %v3533 = vld [vmem:[%s3464 + $0x220] sm:$0xff]
      %v3534 = vld [vmem:[%s3464 + $0x228] sm:$0xff]
      %v3535 = vld [vmem:[%s3464 + $0x230] sm:$0xff]
      %v3536 = vld [vmem:[%s3464 + $0x238] sm:$0xff]
      %v3537 = vld [vmem:[%s3464 + $0x240] sm:$0xff]
      %v3538 = vld [vmem:[%s3464 + $0x248] sm:$0xff]
      %v3539 = vld [vmem:[%s3464 + $0x250] sm:$0xff]
      %v3540 = vld [vmem:[%s3464 + $0x258] sm:$0xff]
      %v3541 = vld [vmem:[%s3464 + $0x260] sm:$0xff]
      %v3542 = vld [vmem:[%s3464 + $0x268] sm:$0xff]
      %v3543 = vld [vmem:[%s3464 + $0x270] sm:$0xff]
      %v3544 = vld [vmem:[%s3464 + $0x278] sm:$0xff]
      %v3545 = vld [vmem:[%s3464 + $0x280] sm:$0xff]
      %v3546 = vld [vmem:[%s3464 + $0x288] sm:$0xff]
      %v3547 = vld [vmem:[%s3464 + $0x290] sm:$0xff]
      %v3548 = vld [vmem:[%s3464 + $0x298] sm:$0xff]
      %v3549 = vld [vmem:[%s3464 + $0x2a0] sm:$0xff]
      %v3550 = vld [vmem:[%s3464 + $0x2a8] sm:$0xff]
      %v3551 = vld [vmem:[%s3464 + $0x2b0] sm:$0xff]
      %v3552 = vld [vmem:[%s3464 + $0x2b8] sm:$0xff]
      %v3553 = vld [vmem:[%s3464 + $0x2c0] sm:$0xff]
      %v3554 = vld [vmem:[%s3464 + $0x2c8] sm:$0xff]
      %v3555 = vld [vmem:[%s3464 + $0x2d0] sm:$0xff]
      %v3556 = vld [vmem:[%s3464 + $0x2d8] sm:$0xff]
      %v3557 = vld [vmem:[%s3464 + $0x2e0] sm:$0xff]
      %v3558 = vld [vmem:[%s3464 + $0x2e8] sm:$0xff]
      %v3559 = vld [vmem:[%s3464 + $0x2f0] sm:$0xff]
      %v3560 = vld [vmem:[%s3464 + $0x2f8] sm:$0xff]
      %v3561 = vld [vmem:[%s3464 + $0x300] sm:$0xff]
      %v3562 = vld [vmem:[%s3464 + $0x308] sm:$0xff]
      %v3563 = vld [vmem:[%s3464 + $0x310] sm:$0xff]
      %v3564 = vld [vmem:[%s3464 + $0x318] sm:$0xff]
      %v3565 = vld [vmem:[%s3464 + $0x320] sm:$0xff]
      %v3566 = vld [vmem:[%s3464 + $0x328] sm:$0xff]
      %v3567 = vld [vmem:[%s3464 + $0x330] sm:$0xff]
      %v3568 = vld [vmem:[%s3464 + $0x338] sm:$0xff]
      %v3569 = vld [vmem:[%s3464 + $0x340] sm:$0xff]
      %v3570 = vld [vmem:[%s3464 + $0x348] sm:$0xff]
      %v3571 = vld [vmem:[%s3464 + $0x350] sm:$0xff]
      %v3572 = vld [vmem:[%s3464 + $0x358] sm:$0xff]
      %v3573 = vld [vmem:[%s3464 + $0x360] sm:$0xff]
      %v3574 = vld [vmem:[%s3464 + $0x368] sm:$0xff]
      %v3575 = vld [vmem:[%s3464 + $0x370] sm:$0xff]
      %v3576 = vld [vmem:[%s3464 + $0x378] sm:$0xff]
      %v3577 = vld [vmem:[%s3464 + $0x380] sm:$0xff]
      %v3578 = vld [vmem:[%s3464 + $0x388] sm:$0xff]
      %v3579 = vld [vmem:[%s3464 + $0x390] sm:$0xff]
      %v3580 = vld [vmem:[%s3464 + $0x398] sm:$0xff]
      %v3581 = vld [vmem:[%s3464 + $0x3a0] sm:$0xff]
      %v3582 = vld [vmem:[%s3464 + $0x3a8] sm:$0xff]
      %v3583 = vld [vmem:[%s3464 + $0x3b0] sm:$0xff]
      %v3584 = vld [vmem:[%s3464 + $0x3b8] sm:$0xff]
      %v3585 = vld [vmem:[%s3464 + $0x3c0] sm:$0xff]
      %v3586 = vld [vmem:[%s3464 + $0x3c8] sm:$0xff]
      %v3587 = vld [vmem:[%s3464 + $0x3d0] sm:$0xff]
      %v3588 = vld [vmem:[%s3464 + $0x3d8] sm:$0xff]
      %v3589 = vld [vmem:[%s3464 + $0x3e0] sm:$0xff]
      %v3590 = vld [vmem:[%s3464 + $0x3e8] sm:$0xff]
      %v3591 = vld [vmem:[%s3464 + $0x3f0] sm:$0xff]
      %v3592 = vld [vmem:[%s3464 + $0x3f8] sm:$0xff]
      %s3593 = scalar_lea.vmem %s11, 2
      %v3594 = vld [vmem:[%s3593] sm:$0x3]
      %v3596 = vlaneseq
      %v3597 = vshrl.u32 %v3596, 7
      %v3598 = vsub.s32 0, %v3597
      %v3599 = vrot.slane %v3594, %v3598
      %v3600 = vlaneseq
      %v3601 = vshrl.u32 %v3600, 7
      %v3602 = vsub.s32 1, %v3601
      %v3603 = vrot.slane %v3594, %v3602
      %3606 = vmatprep.subr.mxu0 %v3496
      %3607 = vmatpush1.msra.mxu0 %v3495
      %3608 = vmatprep.subr.mxu0 %v3494
      %3609 = vmatpush1.msra.mxu0 %v3493
      %3610 = vmatprep.subr.mxu0 %v3492
      %3611 = vmatpush1.msra.mxu0 %v3491
      %3612 = vmatprep.subr.mxu0 %v3490
      %3613 = vmatpush1.msra.mxu0 %v3489
      %3614 = vmatprep.subr.mxu0 %v3488
      %3615 = vmatpush1.msra.mxu0 %v3487
      %3616 = vmatprep.subr.mxu0 %v3486
      %3617 = vmatpush1.msra.mxu0 %v3485
      %3618 = vmatprep.subr.mxu0 %v3484
      %3619 = vmatpush1.msra.mxu0 %v3483
      %3620 = vmatprep.subr.mxu0 %v3482
      %3621 = vmatpush1.msra.mxu0 %v3481
      %3622 = vmatprep.subr.mxu0 %v3480
      %3623 = vmatpush1.msra.mxu0 %v3479
      %3624 = vmatprep.subr.mxu0 %v3478
      %3625 = vmatpush1.msra.mxu0 %v3477
      %3626 = vmatprep.subr.mxu0 %v3476
      %3627 = vmatpush1.msra.mxu0 %v3475
      %3628 = vmatprep.subr.mxu0 %v3474
      %3629 = vmatpush1.msra.mxu0 %v3473
      %3630 = vmatprep.subr.mxu0 %v3472
      %3631 = vmatpush1.msra.mxu0 %v3471
      %3632 = vmatprep.subr.mxu0 %v3470
      %3633 = vmatpush1.msra.mxu0 %v3469
      %3634 = vmatprep.subr.mxu0 %v3468
      %3635 = vmatpush1.msra.mxu0 %v3467
      %3636 = vmatprep.subr.mxu0 %v3466
      %3637 = vmatpush1.msra.mxu0 %v3465
      %3638 = vmatprep.subr.mxu0 %v3528
      %3639 = vmatpush2.msra.mxu0 %v3527
      %3640 = vmatprep.subr.mxu0 %v3526
      %3641 = vmatpush2.msra.mxu0 %v3525
      %3642 = vmatprep.subr.mxu0 %v3524
      %3643 = vmatpush2.msra.mxu0 %v3523
      %3644 = vmatprep.subr.mxu0 %v3522
      %3645 = vmatpush2.msra.mxu0 %v3521
      %3646 = vmatprep.subr.mxu0 %v3520
      %3647 = vmatpush2.msra.mxu0 %v3519
      %3648 = vmatprep.subr.mxu0 %v3518
      %3649 = vmatpush2.msra.mxu0 %v3517
      %3650 = vmatprep.subr.mxu0 %v3516
      %3651 = vmatpush2.msra.mxu0 %v3515
      %3652 = vmatprep.subr.mxu0 %v3514
      %3653 = vmatpush2.msra.mxu0 %v3513
      %3654 = vmatprep.subr.mxu0 %v3512
      %3655 = vmatpush2.msra.mxu0 %v3511
      %3656 = vmatprep.subr.mxu0 %v3510
      %3657 = vmatpush2.msra.mxu0 %v3509
      %3658 = vmatprep.subr.mxu0 %v3508
      %3659 = vmatpush2.msra.mxu0 %v3507
      %3660 = vmatprep.subr.mxu0 %v3506
      %3661 = vmatpush2.msra.mxu0 %v3505
      %3662 = vmatprep.subr.mxu0 %v3504
      %3663 = vmatpush2.msra.mxu0 %v3503
      %3664 = vmatprep.subr.mxu0 %v3502
      %3665 = vmatpush2.msra.mxu0 %v3501
      %3666 = vmatprep.subr.mxu0 %v3500
      %3667 = vmatpush2.msra.mxu0 %v3499
      %3668 = vmatprep.subr.mxu0 %v3498
      %3669 = vmatpush2.msra.mxu0 %v3497
      %3670 = vmatprep.mubr.f32.mxu0 %v3457
      %3671 = vmatmul.mubr.f32.gmra.mxu0 %v3456
      %v3672 = vpop.f32.mrf.mxu0
      %v3673 = vadd.f32 %v3599, %v3672
      %v3674 = vpop.f32.mrf.mxu0
      %v3675 = vadd.f32 %v3603, %v3674
      %3676 = vmatprep.mubr.f32.mxu0 %v3461
      %3677 = vmatmul.mubr.f32.gmra.mxu0 %v3460
      %v3678 = vpop.f32.mrf.mxu0
      %v3679 = vadd.f32 %v3599, %v3678
      %v3680 = vpop.f32.mrf.mxu0
      %v3681 = vadd.f32 %v3603, %v3680
      %3682 = vdwg.mxu0
      %3683 = vmatprep.subr.mxu0 %v3560
      %3684 = vmatpush1.msra.mxu0 %v3559
      %3685 = vmatprep.subr.mxu0 %v3558
      %3686 = vmatpush1.msra.mxu0 %v3557
      %3687 = vmatprep.subr.mxu0 %v3556
      %3688 = vmatpush1.msra.mxu0 %v3555
      %3689 = vmatprep.subr.mxu0 %v3554
      %3690 = vmatpush1.msra.mxu0 %v3553
      %3691 = vmatprep.subr.mxu0 %v3552
      %3692 = vmatpush1.msra.mxu0 %v3551
      %3693 = vmatprep.subr.mxu0 %v3550
      %3694 = vmatpush1.msra.mxu0 %v3549
      %3695 = vmatprep.subr.mxu0 %v3548
      %3696 = vmatpush1.msra.mxu0 %v3547
      %3697 = vmatprep.subr.mxu0 %v3546
      %3698 = vmatpush1.msra.mxu0 %v3545
      %3699 = vmatprep.subr.mxu0 %v3544
      %3700 = vmatpush1.msra.mxu0 %v3543
      %3701 = vmatprep.subr.mxu0 %v3542
      %3702 = vmatpush1.msra.mxu0 %v3541
      %3703 = vmatprep.subr.mxu0 %v3540
      %3704 = vmatpush1.msra.mxu0 %v3539
      %3705 = vmatprep.subr.mxu0 %v3538
      %3706 = vmatpush1.msra.mxu0 %v3537
      %3707 = vmatprep.subr.mxu0 %v3536
      %3708 = vmatpush1.msra.mxu0 %v3535
      %3709 = vmatprep.subr.mxu0 %v3534
      %3710 = vmatpush1.msra.mxu0 %v3533
      %3711 = vmatprep.subr.mxu0 %v3532
      %3712 = vmatpush1.msra.mxu0 %v3531
      %3713 = vmatprep.subr.mxu0 %v3530
      %3714 = vmatpush1.msra.mxu0 %v3529
      %3715 = vmatprep.subr.mxu0 %v3592
      %3716 = vmatpush2.msra.mxu0 %v3591
      %3717 = vmatprep.subr.mxu0 %v3590
      %3718 = vmatpush2.msra.mxu0 %v3589
      %3719 = vmatprep.subr.mxu0 %v3588
      %3720 = vmatpush2.msra.mxu0 %v3587
      %3721 = vmatprep.subr.mxu0 %v3586
      %3722 = vmatpush2.msra.mxu0 %v3585
      %3723 = vmatprep.subr.mxu0 %v3584
      %3724 = vmatpush2.msra.mxu0 %v3583
      %3725 = vmatprep.subr.mxu0 %v3582
      %3726 = vmatpush2.msra.mxu0 %v3581
      %3727 = vmatprep.subr.mxu0 %v3580
      %3728 = vmatpush2.msra.mxu0 %v3579
      %3729 = vmatprep.subr.mxu0 %v3578
      %3730 = vmatpush2.msra.mxu0 %v3577
      %3731 = vmatprep.subr.mxu0 %v3576
      %3732 = vmatpush2.msra.mxu0 %v3575
      %3733 = vmatprep.subr.mxu0 %v3574
      %3734 = vmatpush2.msra.mxu0 %v3573
      %3735 = vmatprep.subr.mxu0 %v3572
      %3736 = vmatpush2.msra.mxu0 %v3571
      %3737 = vmatprep.subr.mxu0 %v3570
      %3738 = vmatpush2.msra.mxu0 %v3569
      %3739 = vmatprep.subr.mxu0 %v3568
      %3740 = vmatpush2.msra.mxu0 %v3567
      %3741 = vmatprep.subr.mxu0 %v3566
      %3742 = vmatpush2.msra.mxu0 %v3565
      %3743 = vmatprep.subr.mxu0 %v3564
      %3744 = vmatpush2.msra.mxu0 %v3563
      %3745 = vmatprep.subr.mxu0 %v3562
      %3746 = vmatpush2.msra.mxu0 %v3561
      %3747 = vmatprep.mubr.f32.mxu0 %v3459
      %3748 = vmatmul.mubr.f32.gmra.mxu0 %v3458
      %v3749 = vpop.f32.mrf.mxu0
      %v3750 = vadd.f32 %v3673, %v3749
      %v3751 = vpop.f32.mrf.mxu0
      %v3752 = vadd.f32 %v3675, %v3751
      %3753 = vmatprep.mubr.f32.mxu0 %v3463
      %3754 = vmatmul.mubr.f32.gmra.mxu0 %v3462
      %v3755 = vpop.f32.mrf.mxu0
      %v3756 = vadd.f32 %v3679, %v3755
      %v3757 = vpop.f32.mrf.mxu0
      %v3758 = vadd.f32 %v3681, %v3757
      %3759 = vdwg.mxu0
      %v3760 = vadd.f32 %v3188, %v3750
      %v3761 = vadd.f32 %v3189, %v3752
      %v3762 = vadd.f32 %v3190, %v3756
      %v3763 = vadd.f32 %v3191, %v3758
      %s3764 = scalar_lea.vmem %s12, 2
      %v3765 = vld [vmem:[%s3764] sm:$0x3]
      %s3766 = scalar_lea.vmem %s13, 2
      %v3767 = vld [vmem:[%s3766] sm:$0x3]
      %v3768 = vsel %vm719, %v3761, 0.0
      %v3769 = vadd.f32 %v3760, %v3768
      %3770 = vadd.xlane.f32.xlu0 %v3769
      %v3771 = vpop.xlane.xlu0 %3770
      %v3772 = vsel %vm1081, %v3762, 0.0
      %v3773 = vsel %vm1505, %v3763, 0.0
      %v3774 = vadd.f32 %v3772, %v3773
      %3775 = vadd.xlane.f32.xlu0 %v3774
      %v3776 = vpop.xlane.xlu0 %3775
      %v3777 = vmul.f32 %v3771, %v1510
      %v3778 = vmul.f32 %v3776, %v1510
      %v3779 = vsub.f32 %v3760, %v3777
      %v3780 = vsub.f32 %v3761, %v3777
      %v3781 = vsub.f32 %v3762, %v3778
      %v3782 = vsub.f32 %v3763, %v3778
      %v3783 = vmul.f32 %v3779, %v3779
      %v3784 = vmul.f32 %v3780, %v3780
      %v3785 = vmul.f32 %v3781, %v3781
      %v3786 = vmul.f32 %v3782, %v3782
      %v3787 = vsel %vm719, %v3784, 0.0
      %v3788 = vadd.f32 %v3783, %v3787
      %3789 = vadd.xlane.f32.xlu0 %v3788
      %v3790 = vpop.xlane.xlu0 %3789
      %v3791 = vsel %vm1081, %v3785, 0.0
      %v3792 = vsel %vm1505, %v3786, 0.0
      %v3793 = vadd.f32 %v3791, %v3792
      %3794 = vadd.xlane.f32.xlu0 %v3793
      %v3795 = vpop.xlane.xlu0 %3794
      %v3796 = vmul.f32 %v3790, %v1510
      %v3797 = vmul.f32 %v3795, %v1510
      %v3798 = vadd.f32 %v3796, 1e-05
      %v3799 = vadd.f32 %v3797, 1e-05
      %v3800 = vrsqrt.pop %v3798
      %v3801 = vrsqrt.pop %v3799
      %v3802 = vmul.f32 %v3779, %v3800
      %v3803 = vmul.f32 %v3780, %v3800
      %v3804 = vmul.f32 %v3781, %v3801
      %v3805 = vmul.f32 %v3782, %v3801
      %v3807 = vlaneseq
      %v3808 = vshrl.u32 %v3807, 7
      %v3809 = vsub.s32 0, %v3808
      %v3810 = vrot.slane %v3765, %v3809
      %v3811 = vlaneseq
      %v3812 = vshrl.u32 %v3811, 7
      %v3813 = vsub.s32 1, %v3812
      %v3814 = vrot.slane %v3765, %v3813
      %v3817 = vmul.f32 %v3802, %v3810
      %v3818 = vmul.f32 %v3803, %v3814
      %v3819 = vmul.f32 %v3804, %v3810
      %v3820 = vmul.f32 %v3805, %v3814
      %v3822 = vlaneseq
      %v3823 = vshrl.u32 %v3822, 7
      %v3824 = vsub.s32 0, %v3823
      %v3825 = vrot.slane %v3767, %v3824
      %v3826 = vlaneseq
      %v3827 = vshrl.u32 %v3826, 7
      %v3828 = vsub.s32 1, %v3827
      %v3829 = vrot.slane %v3767, %v3828
      %v3832 = vadd.f32 %v3817, %v3825
      %v3833 = vadd.f32 %v3818, %v3829
      %v3834 = vadd.f32 %v3819, %v3825
      %v3835 = vadd.f32 %v3820, %v3829
      %s3836 = scalar_lea.vmem %s2, 1632
      %v3837 = vld [vmem:[%s3836] sm:$0xff]
      %v3838 = vld [vmem:[%s3836 + $0x8] sm:$0xff]
      %v3839 = vld [vmem:[%s3836 + $0x10] sm:$0xff]
      %v3840 = vld [vmem:[%s3836 + $0x18] sm:$0xff]
      %v3841 = vld [vmem:[%s3836 + $0x20] sm:$0xff]
      %v3842 = vld [vmem:[%s3836 + $0x28] sm:$0xff]
      %v3843 = vld [vmem:[%s3836 + $0x30] sm:$0xff]
      %v3844 = vld [vmem:[%s3836 + $0x38] sm:$0xff]
      %v3845 = vld [vmem:[%s3836 + $0x40] sm:$0xff]
      %v3846 = vld [vmem:[%s3836 + $0x48] sm:$0xff]
      %v3847 = vld [vmem:[%s3836 + $0x50] sm:$0xff]
      %v3848 = vld [vmem:[%s3836 + $0x58] sm:$0xff]
      %v3849 = vld [vmem:[%s3836 + $0x60] sm:$0xff]
      %v3850 = vld [vmem:[%s3836 + $0x68] sm:$0xff]
      %v3851 = vld [vmem:[%s3836 + $0x70] sm:$0xff]
      %v3852 = vld [vmem:[%s3836 + $0x78] sm:$0xff]
      %v3853 = vld [vmem:[%s3836 + $0x80] sm:$0xff]
      %v3854 = vld [vmem:[%s3836 + $0x88] sm:$0xff]
      %v3855 = vld [vmem:[%s3836 + $0x90] sm:$0xff]
      %v3856 = vld [vmem:[%s3836 + $0x98] sm:$0xff]
      %v3857 = vld [vmem:[%s3836 + $0xa0] sm:$0xff]
      %v3858 = vld [vmem:[%s3836 + $0xa8] sm:$0xff]
      %v3859 = vld [vmem:[%s3836 + $0xb0] sm:$0xff]
      %v3860 = vld [vmem:[%s3836 + $0xb8] sm:$0xff]
      %v3861 = vld [vmem:[%s3836 + $0xc0] sm:$0xff]
      %v3862 = vld [vmem:[%s3836 + $0xc8] sm:$0xff]
      %v3863 = vld [vmem:[%s3836 + $0xd0] sm:$0xff]
      %v3864 = vld [vmem:[%s3836 + $0xd8] sm:$0xff]
      %v3865 = vld [vmem:[%s3836 + $0xe0] sm:$0xff]
      %v3866 = vld [vmem:[%s3836 + $0xe8] sm:$0xff]
      %v3867 = vld [vmem:[%s3836 + $0xf0] sm:$0xff]
      %v3868 = vld [vmem:[%s3836 + $0xf8] sm:$0xff]
      %v3869 = vld [vmem:[%s3836 + $0x100] sm:$0xff]
      %v3870 = vld [vmem:[%s3836 + $0x108] sm:$0xff]
      %v3871 = vld [vmem:[%s3836 + $0x110] sm:$0xff]
      %v3872 = vld [vmem:[%s3836 + $0x118] sm:$0xff]
      %v3873 = vld [vmem:[%s3836 + $0x120] sm:$0xff]
      %v3874 = vld [vmem:[%s3836 + $0x128] sm:$0xff]
      %v3875 = vld [vmem:[%s3836 + $0x130] sm:$0xff]
      %v3876 = vld [vmem:[%s3836 + $0x138] sm:$0xff]
      %v3877 = vld [vmem:[%s3836 + $0x140] sm:$0xff]
      %v3878 = vld [vmem:[%s3836 + $0x148] sm:$0xff]
      %v3879 = vld [vmem:[%s3836 + $0x150] sm:$0xff]
      %v3880 = vld [vmem:[%s3836 + $0x158] sm:$0xff]
      %v3881 = vld [vmem:[%s3836 + $0x160] sm:$0xff]
      %v3882 = vld [vmem:[%s3836 + $0x168] sm:$0xff]
      %v3883 = vld [vmem:[%s3836 + $0x170] sm:$0xff]
      %v3884 = vld [vmem:[%s3836 + $0x178] sm:$0xff]
      %v3885 = vld [vmem:[%s3836 + $0x180] sm:$0xff]
      %v3886 = vld [vmem:[%s3836 + $0x188] sm:$0xff]
      %v3887 = vld [vmem:[%s3836 + $0x190] sm:$0xff]
      %v3888 = vld [vmem:[%s3836 + $0x198] sm:$0xff]
      %v3889 = vld [vmem:[%s3836 + $0x1a0] sm:$0xff]
      %v3890 = vld [vmem:[%s3836 + $0x1a8] sm:$0xff]
      %v3891 = vld [vmem:[%s3836 + $0x1b0] sm:$0xff]
      %v3892 = vld [vmem:[%s3836 + $0x1b8] sm:$0xff]
      %v3893 = vld [vmem:[%s3836 + $0x1c0] sm:$0xff]
      %v3894 = vld [vmem:[%s3836 + $0x1c8] sm:$0xff]
      %v3895 = vld [vmem:[%s3836 + $0x1d0] sm:$0xff]
      %v3896 = vld [vmem:[%s3836 + $0x1d8] sm:$0xff]
      %v3897 = vld [vmem:[%s3836 + $0x1e0] sm:$0xff]
      %v3898 = vld [vmem:[%s3836 + $0x1e8] sm:$0xff]
      %v3899 = vld [vmem:[%s3836 + $0x1f0] sm:$0xff]
      %v3900 = vld [vmem:[%s3836 + $0x1f8] sm:$0xff]
      %v3901 = vld [vmem:[%s3836 + $0x200] sm:$0xff]
      %v3902 = vld [vmem:[%s3836 + $0x208] sm:$0xff]
      %v3903 = vld [vmem:[%s3836 + $0x210] sm:$0xff]
      %v3904 = vld [vmem:[%s3836 + $0x218] sm:$0xff]
      %v3905 = vld [vmem:[%s3836 + $0x220] sm:$0xff]
      %v3906 = vld [vmem:[%s3836 + $0x228] sm:$0xff]
      %v3907 = vld [vmem:[%s3836 + $0x230] sm:$0xff]
      %v3908 = vld [vmem:[%s3836 + $0x238] sm:$0xff]
      %v3909 = vld [vmem:[%s3836 + $0x240] sm:$0xff]
      %v3910 = vld [vmem:[%s3836 + $0x248] sm:$0xff]
      %v3911 = vld [vmem:[%s3836 + $0x250] sm:$0xff]
      %v3912 = vld [vmem:[%s3836 + $0x258] sm:$0xff]
      %v3913 = vld [vmem:[%s3836 + $0x260] sm:$0xff]
      %v3914 = vld [vmem:[%s3836 + $0x268] sm:$0xff]
      %v3915 = vld [vmem:[%s3836 + $0x270] sm:$0xff]
      %v3916 = vld [vmem:[%s3836 + $0x278] sm:$0xff]
      %v3917 = vld [vmem:[%s3836 + $0x280] sm:$0xff]
      %v3918 = vld [vmem:[%s3836 + $0x288] sm:$0xff]
      %v3919 = vld [vmem:[%s3836 + $0x290] sm:$0xff]
      %v3920 = vld [vmem:[%s3836 + $0x298] sm:$0xff]
      %v3921 = vld [vmem:[%s3836 + $0x2a0] sm:$0xff]
      %v3922 = vld [vmem:[%s3836 + $0x2a8] sm:$0xff]
      %v3923 = vld [vmem:[%s3836 + $0x2b0] sm:$0xff]
      %v3924 = vld [vmem:[%s3836 + $0x2b8] sm:$0xff]
      %v3925 = vld [vmem:[%s3836 + $0x2c0] sm:$0xff]
      %v3926 = vld [vmem:[%s3836 + $0x2c8] sm:$0xff]
      %v3927 = vld [vmem:[%s3836 + $0x2d0] sm:$0xff]
      %v3928 = vld [vmem:[%s3836 + $0x2d8] sm:$0xff]
      %v3929 = vld [vmem:[%s3836 + $0x2e0] sm:$0xff]
      %v3930 = vld [vmem:[%s3836 + $0x2e8] sm:$0xff]
      %v3931 = vld [vmem:[%s3836 + $0x2f0] sm:$0xff]
      %v3932 = vld [vmem:[%s3836 + $0x2f8] sm:$0xff]
      %v3933 = vld [vmem:[%s3836 + $0x300] sm:$0x3]
      %v3934 = vld [vmem:[%s3836 + $0x308] sm:$0x3]
      %v3935 = vld [vmem:[%s3836 + $0x310] sm:$0x3]
      %v3936 = vld [vmem:[%s3836 + $0x318] sm:$0x3]
      %v3937 = vld [vmem:[%s3836 + $0x320] sm:$0x3]
      %v3938 = vld [vmem:[%s3836 + $0x328] sm:$0x3]
      %s3939 = scalar_lea.vmem %s3, 12
      %v3940 = vld [vmem:[%s3939] sm:$0x3f]
      %v3942 = vlaneseq
      %v3943 = vshrl.u32 %v3942, 7
      %v3944 = vsub.s32 0, %v3943
      %v3945 = vrot.slane %v3940, %v3944
      %v3946 = vlaneseq
      %v3947 = vshrl.u32 %v3946, 7
      %v3948 = vsub.s32 1, %v3947
      %v3949 = vrot.slane %v3940, %v3948
      %v3950 = vlaneseq
      %v3951 = vshrl.u32 %v3950, 7
      %v3952 = vsub.s32 2, %v3951
      %v3953 = vrot.slane %v3940, %v3952
      %v3954 = vlaneseq
      %v3955 = vshrl.u32 %v3954, 7
      %v3956 = vsub.s32 3, %v3955
      %v3957 = vrot.slane %v3940, %v3956
      %v3958 = vlaneseq
      %v3959 = vshrl.u32 %v3958, 7
      %v3960 = vsub.s32 4, %v3959
      %v3961 = vrot.slane %v3940, %v3960
      %v3962 = vlaneseq
      %v3963 = vshrl.u32 %v3962, 7
      %v3964 = vsub.s32 5, %v3963
      %v3965 = vrot.slane %v3940, %v3964
      %v3973 = vsel %vm719, %v3833, 0
      %v3976 = vsel %vm719, %v3835, 0
      %v3979 = vsel %vm726, %v3933, 0
      %v3982 = vsel %vm726, %v3934, 0
      %v3985 = vsel %vm726, %v3935, 0
      %v3988 = vsel %vm726, %v3936, 0
      %v3991 = vsel %vm726, %v3937, 0
      %v3994 = vsel %vm726, %v3938, 0
      %3996 = vmatprep.subr.mxu0 %v3928
      %3997 = vmatpush1.msra.mxu0 %v3927
      %3998 = vmatprep.subr.mxu0 %v3922
      %3999 = vmatpush1.msra.mxu0 %v3921
      %4000 = vmatprep.subr.mxu0 %v3916
      %4001 = vmatpush1.msra.mxu0 %v3915
      %4002 = vmatprep.subr.mxu0 %v3910
      %4003 = vmatpush1.msra.mxu0 %v3909
      %4004 = vmatprep.subr.mxu0 %v3904
      %4005 = vmatpush1.msra.mxu0 %v3903
      %4006 = vmatprep.subr.mxu0 %v3898
      %4007 = vmatpush1.msra.mxu0 %v3897
      %4008 = vmatprep.subr.mxu0 %v3892
      %4009 = vmatpush1.msra.mxu0 %v3891
      %4010 = vmatprep.subr.mxu0 %v3886
      %4011 = vmatpush1.msra.mxu0 %v3885
      %4012 = vmatprep.subr.mxu0 %v3880
      %4013 = vmatpush1.msra.mxu0 %v3879
      %4014 = vmatprep.subr.mxu0 %v3874
      %4015 = vmatpush1.msra.mxu0 %v3873
      %4016 = vmatprep.subr.mxu0 %v3868
      %4017 = vmatpush1.msra.mxu0 %v3867
      %4018 = vmatprep.subr.mxu0 %v3862
      %4019 = vmatpush1.msra.mxu0 %v3861
      %4020 = vmatprep.subr.mxu0 %v3856
      %4021 = vmatpush1.msra.mxu0 %v3855
      %4022 = vmatprep.subr.mxu0 %v3850
      %4023 = vmatpush1.msra.mxu0 %v3849
      %4024 = vmatprep.subr.mxu0 %v3844
      %4025 = vmatpush1.msra.mxu0 %v3843
      %4026 = vmatprep.subr.mxu0 %v3838
      %4027 = vmatpush1.msra.mxu0 %v3837
      %4028 = vmatprep.subr.mxu0 0.0
      %4029 = vmatpush2.msra.mxu0 0.0
      %4030 = vmatprep.subr.mxu0 0.0
      %4031 = vmatpush2.msra.mxu0 0.0
      %4032 = vmatprep.subr.mxu0 0.0
      %4033 = vmatpush2.msra.mxu0 0.0
      %4034 = vmatprep.subr.mxu0 0.0
      %4035 = vmatpush2.msra.mxu0 0.0
      %4036 = vmatprep.subr.mxu0 0.0
      %4037 = vmatpush2.msra.mxu0 0.0
      %4038 = vmatprep.subr.mxu0 0.0
      %4039 = vmatpush2.msra.mxu0 0.0
      %4040 = vmatprep.subr.mxu0 0.0
      %4041 = vmatpush2.msra.mxu0 0.0
      %4042 = vmatprep.subr.mxu0 0.0
      %4043 = vmatpush2.msra.mxu0 0.0
      %4044 = vmatprep.subr.mxu0 0.0
      %4045 = vmatpush2.msra.mxu0 0.0
      %4046 = vmatprep.subr.mxu0 0.0
      %4047 = vmatpush2.msra.mxu0 0.0
      %4048 = vmatprep.subr.mxu0 0.0
      %4049 = vmatpush2.msra.mxu0 0.0
      %4050 = vmatprep.subr.mxu0 0.0
      %4051 = vmatpush2.msra.mxu0 0.0
      %4052 = vmatprep.subr.mxu0 0.0
      %4053 = vmatpush2.msra.mxu0 0.0
      %4054 = vmatprep.subr.mxu0 0.0
      %4055 = vmatpush2.msra.mxu0 0.0
      %4056 = vmatprep.subr.mxu0 0.0
      %4057 = vmatpush2.msra.mxu0 0.0
      %4058 = vmatprep.subr.mxu0 %v3982
      %4059 = vmatpush2.msra.mxu0 %v3979
      %4060 = vmatprep.mubr.f32.mxu0 %v3973
      %4061 = vmatmul.mubr.f32.gmra.mxu0 %v3832
      %v4062 = vpop.f32.mrf.mxu0
      %v4063 = vadd.f32 %v3945, %v4062
      %v4064 = vpop.f32.mrf.mxu0
      %v4065 = vadd.f32 %v3949, %v4064
      %4066 = vmatprep.mubr.f32.mxu0 %v3976
      %4067 = vmatmul.mubr.f32.gmra.mxu0 %v3834
      %v4068 = vpop.f32.mrf.mxu0
      %v4069 = vadd.f32 %v3945, %v4068
      %v4070 = vpop.f32.mrf.mxu0
      %v4071 = vadd.f32 %v3949, %v4070
      %4072 = vdwg.mxu0
      %4073 = vmatprep.subr.mxu0 %v3930
      %4074 = vmatpush1.msra.mxu0 %v3929
      %4075 = vmatprep.subr.mxu0 %v3924
      %4076 = vmatpush1.msra.mxu0 %v3923
      %4077 = vmatprep.subr.mxu0 %v3918
      %4078 = vmatpush1.msra.mxu0 %v3917
      %4079 = vmatprep.subr.mxu0 %v3912
      %4080 = vmatpush1.msra.mxu0 %v3911
      %4081 = vmatprep.subr.mxu0 %v3906
      %4082 = vmatpush1.msra.mxu0 %v3905
      %4083 = vmatprep.subr.mxu0 %v3900
      %4084 = vmatpush1.msra.mxu0 %v3899
      %4085 = vmatprep.subr.mxu0 %v3894
      %4086 = vmatpush1.msra.mxu0 %v3893
      %4087 = vmatprep.subr.mxu0 %v3888
      %4088 = vmatpush1.msra.mxu0 %v3887
      %4089 = vmatprep.subr.mxu0 %v3882
      %4090 = vmatpush1.msra.mxu0 %v3881
      %4091 = vmatprep.subr.mxu0 %v3876
      %4092 = vmatpush1.msra.mxu0 %v3875
      %4093 = vmatprep.subr.mxu0 %v3870
      %4094 = vmatpush1.msra.mxu0 %v3869
      %4095 = vmatprep.subr.mxu0 %v3864
      %4096 = vmatpush1.msra.mxu0 %v3863
      %4097 = vmatprep.subr.mxu0 %v3858
      %4098 = vmatpush1.msra.mxu0 %v3857
      %4099 = vmatprep.subr.mxu0 %v3852
      %4100 = vmatpush1.msra.mxu0 %v3851
      %4101 = vmatprep.subr.mxu0 %v3846
      %4102 = vmatpush1.msra.mxu0 %v3845
      %4103 = vmatprep.subr.mxu0 %v3840
      %4104 = vmatpush1.msra.mxu0 %v3839
      %4105 = vmatprep.subr.mxu0 0.0
      %4106 = vmatpush2.msra.mxu0 0.0
      %4107 = vmatprep.subr.mxu0 0.0
      %4108 = vmatpush2.msra.mxu0 0.0
      %4109 = vmatprep.subr.mxu0 0.0
      %4110 = vmatpush2.msra.mxu0 0.0
      %4111 = vmatprep.subr.mxu0 0.0
      %4112 = vmatpush2.msra.mxu0 0.0
      %4113 = vmatprep.subr.mxu0 0.0
      %4114 = vmatpush2.msra.mxu0 0.0
      %4115 = vmatprep.subr.mxu0 0.0
      %4116 = vmatpush2.msra.mxu0 0.0
      %4117 = vmatprep.subr.mxu0 0.0
      %4118 = vmatpush2.msra.mxu0 0.0
      %4119 = vmatprep.subr.mxu0 0.0
      %4120 = vmatpush2.msra.mxu0 0.0
      %4121 = vmatprep.subr.mxu0 0.0
      %4122 = vmatpush2.msra.mxu0 0.0
      %4123 = vmatprep.subr.mxu0 0.0
      %4124 = vmatpush2.msra.mxu0 0.0
      %4125 = vmatprep.subr.mxu0 0.0
      %4126 = vmatpush2.msra.mxu0 0.0
      %4127 = vmatprep.subr.mxu0 0.0
      %4128 = vmatpush2.msra.mxu0 0.0
      %4129 = vmatprep.subr.mxu0 0.0
      %4130 = vmatpush2.msra.mxu0 0.0
      %4131 = vmatprep.subr.mxu0 0.0
      %4132 = vmatpush2.msra.mxu0 0.0
      %4133 = vmatprep.subr.mxu0 0.0
      %4134 = vmatpush2.msra.mxu0 0.0
      %4135 = vmatprep.subr.mxu0 %v3988
      %4136 = vmatpush2.msra.mxu0 %v3985
      %4137 = vmatprep.mubr.f32.mxu0 %v3973
      %4138 = vmatmul.mubr.f32.gmra.mxu0 %v3832
      %v4139 = vpop.f32.mrf.mxu0
      %v4140 = vadd.f32 %v3953, %v4139
      %v4141 = vpop.f32.mrf.mxu0
      %v4142 = vadd.f32 %v3957, %v4141
      %4143 = vmatprep.mubr.f32.mxu0 %v3976
      %4144 = vmatmul.mubr.f32.gmra.mxu0 %v3834
      %v4145 = vpop.f32.mrf.mxu0
      %v4146 = vadd.f32 %v3953, %v4145
      %v4147 = vpop.f32.mrf.mxu0
      %v4148 = vadd.f32 %v3957, %v4147
      %4149 = vdwg.mxu0
      %4150 = vmatprep.subr.mxu0 %v3932
      %4151 = vmatpush1.msra.mxu0 %v3931
      %4152 = vmatprep.subr.mxu0 %v3926
      %4153 = vmatpush1.msra.mxu0 %v3925
      %4154 = vmatprep.subr.mxu0 %v3920
      %4155 = vmatpush1.msra.mxu0 %v3919
      %4156 = vmatprep.subr.mxu0 %v3914
      %4157 = vmatpush1.msra.mxu0 %v3913
      %4158 = vmatprep.subr.mxu0 %v3908
      %4159 = vmatpush1.msra.mxu0 %v3907
      %4160 = vmatprep.subr.mxu0 %v3902
      %4161 = vmatpush1.msra.mxu0 %v3901
      %4162 = vmatprep.subr.mxu0 %v3896
      %4163 = vmatpush1.msra.mxu0 %v3895
      %4164 = vmatprep.subr.mxu0 %v3890
      %4165 = vmatpush1.msra.mxu0 %v3889
      %4166 = vmatprep.subr.mxu0 %v3884
      %4167 = vmatpush1.msra.mxu0 %v3883
      %4168 = vmatprep.subr.mxu0 %v3878
      %4169 = vmatpush1.msra.mxu0 %v3877
      %4170 = vmatprep.subr.mxu0 %v3872
      %4171 = vmatpush1.msra.mxu0 %v3871
      %4172 = vmatprep.subr.mxu0 %v3866
      %4173 = vmatpush1.msra.mxu0 %v3865
      %4174 = vmatprep.subr.mxu0 %v3860
      %4175 = vmatpush1.msra.mxu0 %v3859
      %4176 = vmatprep.subr.mxu0 %v3854
      %4177 = vmatpush1.msra.mxu0 %v3853
      %4178 = vmatprep.subr.mxu0 %v3848
      %4179 = vmatpush1.msra.mxu0 %v3847
      %4180 = vmatprep.subr.mxu0 %v3842
      %4181 = vmatpush1.msra.mxu0 %v3841
      %4182 = vmatprep.subr.mxu0 0.0
      %4183 = vmatpush2.msra.mxu0 0.0
      %4184 = vmatprep.subr.mxu0 0.0
      %4185 = vmatpush2.msra.mxu0 0.0
      %4186 = vmatprep.subr.mxu0 0.0
      %4187 = vmatpush2.msra.mxu0 0.0
      %4188 = vmatprep.subr.mxu0 0.0
      %4189 = vmatpush2.msra.mxu0 0.0
      %4190 = vmatprep.subr.mxu0 0.0
      %4191 = vmatpush2.msra.mxu0 0.0
      %4192 = vmatprep.subr.mxu0 0.0
      %4193 = vmatpush2.msra.mxu0 0.0
      %4194 = vmatprep.subr.mxu0 0.0
      %4195 = vmatpush2.msra.mxu0 0.0
      %4196 = vmatprep.subr.mxu0 0.0
      %4197 = vmatpush2.msra.mxu0 0.0
      %4198 = vmatprep.subr.mxu0 0.0
      %4199 = vmatpush2.msra.mxu0 0.0
      %4200 = vmatprep.subr.mxu0 0.0
      %4201 = vmatpush2.msra.mxu0 0.0
      %4202 = vmatprep.subr.mxu0 0.0
      %4203 = vmatpush2.msra.mxu0 0.0
      %4204 = vmatprep.subr.mxu0 0.0
      %4205 = vmatpush2.msra.mxu0 0.0
      %4206 = vmatprep.subr.mxu0 0.0
      %4207 = vmatpush2.msra.mxu0 0.0
      %4208 = vmatprep.subr.mxu0 0.0
      %4209 = vmatpush2.msra.mxu0 0.0
      %4210 = vmatprep.subr.mxu0 0.0
      %4211 = vmatpush2.msra.mxu0 0.0
      %4212 = vmatprep.subr.mxu0 %v3994
      %4213 = vmatpush2.msra.mxu0 %v3991
      %4214 = vmatprep.mubr.f32.mxu0 %v3973
      %4215 = vmatmul.mubr.f32.gmra.mxu0 %v3832
      %v4216 = vpop.f32.mrf.mxu0
      %v4217 = vadd.f32 %v3961, %v4216
      %v4218 = vpop.f32.mrf.mxu0
      %v4219 = vadd.f32 %v3965, %v4218
      %4220 = vmatprep.mubr.f32.mxu0 %v3976
      %4221 = vmatmul.mubr.f32.gmra.mxu0 %v3834
      %v4222 = vpop.f32.mrf.mxu0
      %v4223 = vadd.f32 %v3961, %v4222
      %v4224 = vpop.f32.mrf.mxu0
      %v4225 = vadd.f32 %v3965, %v4224
      %4226 = vdwg.mxu0
      %4227 = vmatprep.subr.mxu0 0.0
      %4228 = vmatpush1.xpose.msra.mxu0 0.0
      %4229 = vmatprep.subr.mxu0 0.0
      %4230 = vmatpush1.xpose.msra.mxu0 0.0
      %4231 = vmatprep.subr.mxu0 0.0
      %4232 = vmatpush1.xpose.msra.mxu0 0.0
      %4233 = vmatprep.subr.mxu0 0.0
      %4234 = vmatpush1.xpose.msra.mxu0 0.0
      %4235 = vmatprep.subr.mxu0 0.0
      %4236 = vmatpush1.xpose.msra.mxu0 0.0
      %4237 = vmatprep.subr.mxu0 0.0
      %4238 = vmatpush1.xpose.msra.mxu0 0.0
      %4239 = vmatprep.subr.mxu0 0.0
      %4240 = vmatpush1.xpose.msra.mxu0 0.0
      %4241 = vmatprep.subr.mxu0 0.0
      %4242 = vmatpush1.xpose.msra.mxu0 0.0
      %4243 = vmatprep.subr.mxu0 0.0
      %4244 = vmatpush1.xpose.msra.mxu0 0.0
      %4245 = vmatprep.subr.mxu0 0.0
      %4246 = vmatpush1.xpose.msra.mxu0 0.0
      %4247 = vmatprep.subr.mxu0 0.0
      %4248 = vmatpush1.xpose.msra.mxu0 0.0
      %4249 = vmatprep.subr.mxu0 0.0
      %4250 = vmatpush1.xpose.msra.mxu0 0.0
      %4251 = vmatprep.subr.mxu0 0.0
      %4252 = vmatpush1.xpose.msra.mxu0 0.0
      %4253 = vmatprep.subr.mxu0 0.0
      %4254 = vmatpush1.xpose.msra.mxu0 0.0
      %4255 = vmatprep.subr.mxu0 0.0
      %4256 = vmatpush1.xpose.msra.mxu0 %v4146
      %4257 = vmatprep.subr.mxu0 0.0
      %4258 = vmatpush1.xpose.msra.mxu0 %v4140
      %4259 = vmatprep.subr.mxu0 0.0
      %4260 = vmatpush2.xpose.msra.mxu0 0.0
      %4261 = vmatprep.subr.mxu0 0.0
      %4262 = vmatpush2.xpose.msra.mxu0 0.0
      %4263 = vmatprep.subr.mxu0 0.0
      %4264 = vmatpush2.xpose.msra.mxu0 0.0
      %4265 = vmatprep.subr.mxu0 0.0
      %4266 = vmatpush2.xpose.msra.mxu0 0.0
      %4267 = vmatprep.subr.mxu0 0.0
      %4268 = vmatpush2.xpose.msra.mxu0 0.0
      %4269 = vmatprep.subr.mxu0 0.0
      %4270 = vmatpush2.xpose.msra.mxu0 0.0
      %4271 = vmatprep.subr.mxu0 0.0
      %4272 = vmatpush2.xpose.msra.mxu0 0.0
      %4273 = vmatprep.subr.mxu0 0.0
      %4274 = vmatpush2.xpose.msra.mxu0 0.0
      %4275 = vmatprep.subr.mxu0 0.0
      %4276 = vmatpush2.xpose.msra.mxu0 0.0
      %4277 = vmatprep.subr.mxu0 0.0
      %4278 = vmatpush2.xpose.msra.mxu0 0.0
      %4279 = vmatprep.subr.mxu0 0.0
      %4280 = vmatpush2.xpose.msra.mxu0 0.0
      %4281 = vmatprep.subr.mxu0 0.0
      %4282 = vmatpush2.xpose.msra.mxu0 0.0
      %4283 = vmatprep.subr.mxu0 0.0
      %4284 = vmatpush2.xpose.msra.mxu0 0.0
      %4285 = vmatprep.subr.mxu0 0.0
      %4286 = vmatpush2.xpose.msra.mxu0 0.0
      %4287 = vmatprep.subr.mxu0 0.0
      %4288 = vmatpush2.xpose.msra.mxu0 0.0
      %4289 = vmatprep.subr.mxu0 0.0
      %4290 = vmatpush2.xpose.msra.mxu0 0.0
      %4291 = vmatprep.mubr.f32.mxu0 0.0
      %4292 = vmatmul.mubr.f32.gmra.mxu0 %v4063
      %v4293 = vpop.f32.mrf.mxu0
      %v4294 = vadd.f32 %v583, %v4293
      %v4295 = vpop.f32.mrf.mxu0
      %4296 = vmatprep.mubr.f32.mxu0 0.0
      %4297 = vmatmul.mubr.f32.gmra.mxu0 %v4069
      %v4298 = vpop.f32.mrf.mxu0
      %v4299 = vadd.f32 %v583, %v4298
      %v4300 = vpop.f32.mrf.mxu0
      %4301 = vdwg.mxu0
      %v4302 = vsel %vm1051, %v4294, -inf
      %4303 = vmax.xlane.f32.xlu0 %v4302
      %v4304 = vpop.xlane.xlu0 %4303
      %v4305 = vsel %vm1055, %v4299, -inf
      %4306 = vmax.xlane.f32.xlu0 %v4305
      %v4307 = vpop.xlane.xlu0 %4306
      %v4308 = vsub.f32 %v4294, %v4304
      %v4309 = vsub.f32 %v4299, %v4307
      %v4310 = vmul.f32 %v4308, 1.442695
      %v4311 = vpow.pop %v4310
      %v4312 = vmul.f32 %v4309, 1.442695
      %v4313 = vpow.pop %v4312
      %v4314 = vsel %vm1051, %v4311, 0.0
      %4315 = vadd.xlane.f32.xlu0 %v4314
      %v4316 = vpop.xlane.xlu0 %4315
      %v4317 = vsel %vm1055, %v4313, 0.0
      %4318 = vadd.xlane.f32.xlu0 %v4317
      %v4319 = vpop.xlane.xlu0 %4318
      %v4320 = vrcp.pop %v4316
      %v4321 = vrcp.pop %v4319
      %v4322 = vmul.f32 %v4311, %v4320
      %v4323 = vmul.f32 %v4313, %v4321
      %v4325 = vsel %vm1051, %v4322, 0
      %v4328 = vsel %vm1051, %v4323, 0
      %v4331 = vsel %vm1081, %v4223, 0
      %4333 = vmatprep.subr.mxu0 0.0
      %4334 = vmatpush1.msra.mxu0 0.0
      %4335 = vmatprep.subr.mxu0 0.0
      %4336 = vmatpush1.msra.mxu0 0.0
      %4337 = vmatprep.subr.mxu0 0.0
      %4338 = vmatpush1.msra.mxu0 0.0
      %4339 = vmatprep.subr.mxu0 0.0
      %4340 = vmatpush1.msra.mxu0 0.0
      %4341 = vmatprep.subr.mxu0 0.0
      %4342 = vmatpush1.msra.mxu0 0.0
      %4343 = vmatprep.subr.mxu0 0.0
      %4344 = vmatpush1.msra.mxu0 0.0
      %4345 = vmatprep.subr.mxu0 0.0
      %4346 = vmatpush1.msra.mxu0 0.0
      %4347 = vmatprep.subr.mxu0 0.0
      %4348 = vmatpush1.msra.mxu0 0.0
      %4349 = vmatprep.subr.mxu0 0.0
      %4350 = vmatpush1.msra.mxu0 0.0
      %4351 = vmatprep.subr.mxu0 0.0
      %4352 = vmatpush1.msra.mxu0 0.0
      %4353 = vmatprep.subr.mxu0 0.0
      %4354 = vmatpush1.msra.mxu0 0.0
      %4355 = vmatprep.subr.mxu0 0.0
      %4356 = vmatpush1.msra.mxu0 0.0
      %4357 = vmatprep.subr.mxu0 0.0
      %4358 = vmatpush1.msra.mxu0 0.0
      %4359 = vmatprep.subr.mxu0 0.0
      %4360 = vmatpush1.msra.mxu0 0.0
      %4361 = vmatprep.subr.mxu0 0.0
      %4362 = vmatpush1.msra.mxu0 %v4331
      %4363 = vmatprep.subr.mxu0 0.0
      %4364 = vmatpush1.msra.mxu0 %v4217
      %4365 = vmatprep.subr.mxu0 0.0
      %4366 = vmatpush2.msra.mxu0 0.0
      %4367 = vmatprep.subr.mxu0 0.0
      %4368 = vmatpush2.msra.mxu0 0.0
      %4369 = vmatprep.subr.mxu0 0.0
      %4370 = vmatpush2.msra.mxu0 0.0
      %4371 = vmatprep.subr.mxu0 0.0
      %4372 = vmatpush2.msra.mxu0 0.0
      %4373 = vmatprep.subr.mxu0 0.0
      %4374 = vmatpush2.msra.mxu0 0.0
      %4375 = vmatprep.subr.mxu0 0.0
      %4376 = vmatpush2.msra.mxu0 0.0
      %4377 = vmatprep.subr.mxu0 0.0
      %4378 = vmatpush2.msra.mxu0 0.0
      %4379 = vmatprep.subr.mxu0 0.0
      %4380 = vmatpush2.msra.mxu0 0.0
      %4381 = vmatprep.subr.mxu0 0.0
      %4382 = vmatpush2.msra.mxu0 0.0
      %4383 = vmatprep.subr.mxu0 0.0
      %4384 = vmatpush2.msra.mxu0 0.0
      %4385 = vmatprep.subr.mxu0 0.0
      %4386 = vmatpush2.msra.mxu0 0.0
      %4387 = vmatprep.subr.mxu0 0.0
      %4388 = vmatpush2.msra.mxu0 0.0
      %4389 = vmatprep.subr.mxu0 0.0
      %4390 = vmatpush2.msra.mxu0 0.0
      %4391 = vmatprep.subr.mxu0 0.0
      %4392 = vmatpush2.msra.mxu0 0.0
      %4393 = vmatprep.subr.mxu0 0.0
      %4394 = vmatpush2.msra.mxu0 0.0
      %4395 = vmatprep.subr.mxu0 0.0
      %4396 = vmatpush2.msra.mxu0 0.0
      %4397 = vmatprep.mubr.f32.mxu0 0.0
      %4398 = vmatmul.mubr.f32.gmra.mxu0 %v4325
      %v4399 = vpop.f32.mrf.mxu0
      %v4400 = vadd.f32 0.0, %v4399
      %v4401 = vpop.f32.mrf.mxu0
      %4402 = vmatprep.mubr.f32.mxu0 0.0
      %4403 = vmatmul.mubr.f32.gmra.mxu0 %v4328
      %v4404 = vpop.f32.mrf.mxu0
      %v4405 = vadd.f32 0.0, %v4404
      %v4406 = vpop.f32.mrf.mxu0
      %4407 = vdwg.mxu0
      %4408 = vmatprep.subr.mxu0 0.0
      %4409 = vmatpush1.xpose.msra.mxu0 0.0
      %4410 = vmatprep.subr.mxu0 0.0
      %4411 = vmatpush1.xpose.msra.mxu0 0.0
      %4412 = vmatprep.subr.mxu0 0.0
      %4413 = vmatpush1.xpose.msra.mxu0 0.0
      %4414 = vmatprep.subr.mxu0 0.0
      %4415 = vmatpush1.xpose.msra.mxu0 0.0
      %4416 = vmatprep.subr.mxu0 0.0
      %4417 = vmatpush1.xpose.msra.mxu0 0.0
      %4418 = vmatprep.subr.mxu0 0.0
      %4419 = vmatpush1.xpose.msra.mxu0 0.0
      %4420 = vmatprep.subr.mxu0 0.0
      %4421 = vmatpush1.xpose.msra.mxu0 0.0
      %4422 = vmatprep.subr.mxu0 0.0
      %4423 = vmatpush1.xpose.msra.mxu0 0.0
      %4424 = vmatprep.subr.mxu0 0.0
      %4425 = vmatpush1.xpose.msra.mxu0 0.0
      %4426 = vmatprep.subr.mxu0 0.0
      %4427 = vmatpush1.xpose.msra.mxu0 0.0
      %4428 = vmatprep.subr.mxu0 0.0
      %4429 = vmatpush1.xpose.msra.mxu0 0.0
      %4430 = vmatprep.subr.mxu0 0.0
      %4431 = vmatpush1.xpose.msra.mxu0 0.0
      %4432 = vmatprep.subr.mxu0 0.0
      %4433 = vmatpush1.xpose.msra.mxu0 0.0
      %4434 = vmatprep.subr.mxu0 0.0
      %4435 = vmatpush1.xpose.msra.mxu0 0.0
      %4436 = vmatprep.subr.mxu0 0.0
      %4437 = vmatpush1.xpose.msra.mxu0 %v4148
      %4438 = vmatprep.subr.mxu0 0.0
      %4439 = vmatpush1.xpose.msra.mxu0 %v4142
      %4440 = vmatprep.subr.mxu0 0.0
      %4441 = vmatpush2.xpose.msra.mxu0 0.0
      %4442 = vmatprep.subr.mxu0 0.0
      %4443 = vmatpush2.xpose.msra.mxu0 0.0
      %4444 = vmatprep.subr.mxu0 0.0
      %4445 = vmatpush2.xpose.msra.mxu0 0.0
      %4446 = vmatprep.subr.mxu0 0.0
      %4447 = vmatpush2.xpose.msra.mxu0 0.0
      %4448 = vmatprep.subr.mxu0 0.0
      %4449 = vmatpush2.xpose.msra.mxu0 0.0
      %4450 = vmatprep.subr.mxu0 0.0
      %4451 = vmatpush2.xpose.msra.mxu0 0.0
      %4452 = vmatprep.subr.mxu0 0.0
      %4453 = vmatpush2.xpose.msra.mxu0 0.0
      %4454 = vmatprep.subr.mxu0 0.0
      %4455 = vmatpush2.xpose.msra.mxu0 0.0
      %4456 = vmatprep.subr.mxu0 0.0
      %4457 = vmatpush2.xpose.msra.mxu0 0.0
      %4458 = vmatprep.subr.mxu0 0.0
      %4459 = vmatpush2.xpose.msra.mxu0 0.0
      %4460 = vmatprep.subr.mxu0 0.0
      %4461 = vmatpush2.xpose.msra.mxu0 0.0
      %4462 = vmatprep.subr.mxu0 0.0
      %4463 = vmatpush2.xpose.msra.mxu0 0.0
      %4464 = vmatprep.subr.mxu0 0.0
      %4465 = vmatpush2.xpose.msra.mxu0 0.0
      %4466 = vmatprep.subr.mxu0 0.0
      %4467 = vmatpush2.xpose.msra.mxu0 0.0
      %4468 = vmatprep.subr.mxu0 0.0
      %4469 = vmatpush2.xpose.msra.mxu0 0.0
      %4470 = vmatprep.subr.mxu0 0.0
      %4471 = vmatpush2.xpose.msra.mxu0 0.0
      %4472 = vmatprep.mubr.f32.mxu0 0.0
      %4473 = vmatmul.mubr.f32.gmra.mxu0 %v4065
      %v4474 = vpop.f32.mrf.mxu0
      %v4475 = vadd.f32 %v583, %v4474
      %v4476 = vpop.f32.mrf.mxu0
      %4477 = vmatprep.mubr.f32.mxu0 0.0
      %4478 = vmatmul.mubr.f32.gmra.mxu0 %v4071
      %v4479 = vpop.f32.mrf.mxu0
      %v4480 = vadd.f32 %v583, %v4479
      %v4481 = vpop.f32.mrf.mxu0
      %4482 = vdwg.mxu0
      %v4483 = vsel %vm1051, %v4475, -inf
      %4484 = vmax.xlane.f32.xlu0 %v4483
      %v4485 = vpop.xlane.xlu0 %4484
      %v4486 = vsel %vm1055, %v4480, -inf
      %4487 = vmax.xlane.f32.xlu0 %v4486
      %v4488 = vpop.xlane.xlu0 %4487
      %v4489 = vsub.f32 %v4475, %v4485
      %v4490 = vsub.f32 %v4480, %v4488
      %v4491 = vmul.f32 %v4489, 1.442695
      %v4492 = vpow.pop %v4491
      %v4493 = vmul.f32 %v4490, 1.442695
      %v4494 = vpow.pop %v4493
      %v4495 = vsel %vm1051, %v4492, 0.0
      %4496 = vadd.xlane.f32.xlu0 %v4495
      %v4497 = vpop.xlane.xlu0 %4496
      %v4498 = vsel %vm1055, %v4494, 0.0
      %4499 = vadd.xlane.f32.xlu0 %v4498
      %v4500 = vpop.xlane.xlu0 %4499
      %v4501 = vrcp.pop %v4497
      %v4502 = vrcp.pop %v4500
      %v4503 = vmul.f32 %v4492, %v4501
      %v4504 = vmul.f32 %v4494, %v4502
      %v4506 = vsel %vm1051, %v4503, 0
      %v4509 = vsel %vm1051, %v4504, 0
      %v4512 = vsel %vm1081, %v4225, 0
      %4514 = vmatprep.subr.mxu0 0.0
      %4515 = vmatpush1.msra.mxu0 0.0
      %4516 = vmatprep.subr.mxu0 0.0
      %4517 = vmatpush1.msra.mxu0 0.0
      %4518 = vmatprep.subr.mxu0 0.0
      %4519 = vmatpush1.msra.mxu0 0.0
      %4520 = vmatprep.subr.mxu0 0.0
      %4521 = vmatpush1.msra.mxu0 0.0
      %4522 = vmatprep.subr.mxu0 0.0
      %4523 = vmatpush1.msra.mxu0 0.0
      %4524 = vmatprep.subr.mxu0 0.0
      %4525 = vmatpush1.msra.mxu0 0.0
      %4526 = vmatprep.subr.mxu0 0.0
      %4527 = vmatpush1.msra.mxu0 0.0
      %4528 = vmatprep.subr.mxu0 0.0
      %4529 = vmatpush1.msra.mxu0 0.0
      %4530 = vmatprep.subr.mxu0 0.0
      %4531 = vmatpush1.msra.mxu0 0.0
      %4532 = vmatprep.subr.mxu0 0.0
      %4533 = vmatpush1.msra.mxu0 0.0
      %4534 = vmatprep.subr.mxu0 0.0
      %4535 = vmatpush1.msra.mxu0 0.0
      %4536 = vmatprep.subr.mxu0 0.0
      %4537 = vmatpush1.msra.mxu0 0.0
      %4538 = vmatprep.subr.mxu0 0.0
      %4539 = vmatpush1.msra.mxu0 0.0
      %4540 = vmatprep.subr.mxu0 0.0
      %4541 = vmatpush1.msra.mxu0 0.0
      %4542 = vmatprep.subr.mxu0 0.0
      %4543 = vmatpush1.msra.mxu0 %v4512
      %4544 = vmatprep.subr.mxu0 0.0
      %4545 = vmatpush1.msra.mxu0 %v4219
      %4546 = vmatprep.subr.mxu0 0.0
      %4547 = vmatpush2.msra.mxu0 0.0
      %4548 = vmatprep.subr.mxu0 0.0
      %4549 = vmatpush2.msra.mxu0 0.0
      %4550 = vmatprep.subr.mxu0 0.0
      %4551 = vmatpush2.msra.mxu0 0.0
      %4552 = vmatprep.subr.mxu0 0.0
      %4553 = vmatpush2.msra.mxu0 0.0
      %4554 = vmatprep.subr.mxu0 0.0
      %4555 = vmatpush2.msra.mxu0 0.0
      %4556 = vmatprep.subr.mxu0 0.0
      %4557 = vmatpush2.msra.mxu0 0.0
      %4558 = vmatprep.subr.mxu0 0.0
      %4559 = vmatpush2.msra.mxu0 0.0
      %4560 = vmatprep.subr.mxu0 0.0
      %4561 = vmatpush2.msra.mxu0 0.0
      %4562 = vmatprep.subr.mxu0 0.0
      %4563 = vmatpush2.msra.mxu0 0.0
      %4564 = vmatprep.subr.mxu0 0.0
      %4565 = vmatpush2.msra.mxu0 0.0
      %4566 = vmatprep.subr.mxu0 0.0
      %4567 = vmatpush2.msra.mxu0 0.0
      %4568 = vmatprep.subr.mxu0 0.0
      %4569 = vmatpush2.msra.mxu0 0.0
      %4570 = vmatprep.subr.mxu0 0.0
      %4571 = vmatpush2.msra.mxu0 0.0
      %4572 = vmatprep.subr.mxu0 0.0
      %4573 = vmatpush2.msra.mxu0 0.0
      %4574 = vmatprep.subr.mxu0 0.0
      %4575 = vmatpush2.msra.mxu0 0.0
      %4576 = vmatprep.subr.mxu0 0.0
      %4577 = vmatpush2.msra.mxu0 0.0
      %4578 = vmatprep.mubr.f32.mxu0 0.0
      %4579 = vmatmul.mubr.f32.gmra.mxu0 %v4506
      %v4580 = vpop.f32.mrf.mxu0
      %v4581 = vadd.f32 0.0, %v4580
      %v4582 = vpop.f32.mrf.mxu0
      %4583 = vmatprep.mubr.f32.mxu0 0.0
      %4584 = vmatmul.mubr.f32.gmra.mxu0 %v4509
      %v4585 = vpop.f32.mrf.mxu0
      %v4586 = vadd.f32 0.0, %v4585
      %v4587 = vpop.f32.mrf.mxu0
      %4588 = vdwg.mxu0
      %s4589 = scalar_lea.vmem %s4, 1024
      %v4590 = vld [vmem:[%s4589] sm:$0xff]
      %v4591 = vld [vmem:[%s4589 + $0x8] sm:$0xff]
      %v4592 = vld [vmem:[%s4589 + $0x10] sm:$0xff]
      %v4593 = vld [vmem:[%s4589 + $0x18] sm:$0xff]
      %v4594 = vld [vmem:[%s4589 + $0x20] sm:$0xff]
      %v4595 = vld [vmem:[%s4589 + $0x28] sm:$0xff]
      %v4596 = vld [vmem:[%s4589 + $0x30] sm:$0xff]
      %v4597 = vld [vmem:[%s4589 + $0x38] sm:$0xff]
      %v4598 = vld [vmem:[%s4589 + $0x40] sm:$0xff]
      %v4599 = vld [vmem:[%s4589 + $0x48] sm:$0xff]
      %v4600 = vld [vmem:[%s4589 + $0x50] sm:$0xff]
      %v4601 = vld [vmem:[%s4589 + $0x58] sm:$0xff]
      %v4602 = vld [vmem:[%s4589 + $0x60] sm:$0xff]
      %v4603 = vld [vmem:[%s4589 + $0x68] sm:$0xff]
      %v4604 = vld [vmem:[%s4589 + $0x70] sm:$0xff]
      %v4605 = vld [vmem:[%s4589 + $0x78] sm:$0xff]
      %v4606 = vld [vmem:[%s4589 + $0x80] sm:$0xff]
      %v4607 = vld [vmem:[%s4589 + $0x88] sm:$0xff]
      %v4608 = vld [vmem:[%s4589 + $0x90] sm:$0xff]
      %v4609 = vld [vmem:[%s4589 + $0x98] sm:$0xff]
      %v4610 = vld [vmem:[%s4589 + $0xa0] sm:$0xff]
      %v4611 = vld [vmem:[%s4589 + $0xa8] sm:$0xff]
      %v4612 = vld [vmem:[%s4589 + $0xb0] sm:$0xff]
      %v4613 = vld [vmem:[%s4589 + $0xb8] sm:$0xff]
      %v4614 = vld [vmem:[%s4589 + $0xc0] sm:$0xff]
      %v4615 = vld [vmem:[%s4589 + $0xc8] sm:$0xff]
      %v4616 = vld [vmem:[%s4589 + $0xd0] sm:$0xff]
      %v4617 = vld [vmem:[%s4589 + $0xd8] sm:$0xff]
      %v4618 = vld [vmem:[%s4589 + $0xe0] sm:$0xff]
      %v4619 = vld [vmem:[%s4589 + $0xe8] sm:$0xff]
      %v4620 = vld [vmem:[%s4589 + $0xf0] sm:$0xff]
      %v4621 = vld [vmem:[%s4589 + $0xf8] sm:$0xff]
      %v4622 = vld [vmem:[%s4589 + $0x100] sm:$0xff]
      %v4623 = vld [vmem:[%s4589 + $0x108] sm:$0xff]
      %v4624 = vld [vmem:[%s4589 + $0x110] sm:$0xff]
      %v4625 = vld [vmem:[%s4589 + $0x118] sm:$0xff]
      %v4626 = vld [vmem:[%s4589 + $0x120] sm:$0xff]
      %v4627 = vld [vmem:[%s4589 + $0x128] sm:$0xff]
      %v4628 = vld [vmem:[%s4589 + $0x130] sm:$0xff]
      %v4629 = vld [vmem:[%s4589 + $0x138] sm:$0xff]
      %v4630 = vld [vmem:[%s4589 + $0x140] sm:$0xff]
      %v4631 = vld [vmem:[%s4589 + $0x148] sm:$0xff]
      %v4632 = vld [vmem:[%s4589 + $0x150] sm:$0xff]
      %v4633 = vld [vmem:[%s4589 + $0x158] sm:$0xff]
      %v4634 = vld [vmem:[%s4589 + $0x160] sm:$0xff]
      %v4635 = vld [vmem:[%s4589 + $0x168] sm:$0xff]
      %v4636 = vld [vmem:[%s4589 + $0x170] sm:$0xff]
      %v4637 = vld [vmem:[%s4589 + $0x178] sm:$0xff]
      %v4638 = vld [vmem:[%s4589 + $0x180] sm:$0xff]
      %v4639 = vld [vmem:[%s4589 + $0x188] sm:$0xff]
      %v4640 = vld [vmem:[%s4589 + $0x190] sm:$0xff]
      %v4641 = vld [vmem:[%s4589 + $0x198] sm:$0xff]
      %v4642 = vld [vmem:[%s4589 + $0x1a0] sm:$0xff]
      %v4643 = vld [vmem:[%s4589 + $0x1a8] sm:$0xff]
      %v4644 = vld [vmem:[%s4589 + $0x1b0] sm:$0xff]
      %v4645 = vld [vmem:[%s4589 + $0x1b8] sm:$0xff]
      %v4646 = vld [vmem:[%s4589 + $0x1c0] sm:$0xff]
      %v4647 = vld [vmem:[%s4589 + $0x1c8] sm:$0xff]
      %v4648 = vld [vmem:[%s4589 + $0x1d0] sm:$0xff]
      %v4649 = vld [vmem:[%s4589 + $0x1d8] sm:$0xff]
      %v4650 = vld [vmem:[%s4589 + $0x1e0] sm:$0xff]
      %v4651 = vld [vmem:[%s4589 + $0x1e8] sm:$0xff]
      %v4652 = vld [vmem:[%s4589 + $0x1f0] sm:$0xff]
      %v4653 = vld [vmem:[%s4589 + $0x1f8] sm:$0xff]
      %s4654 = scalar_lea.vmem %s5, 4
      %v4655 = vld [vmem:[%s4654] sm:$0x3]
      %v4657 = vlaneseq
      %v4658 = vshrl.u32 %v4657, 7
      %v4659 = vsub.s32 0, %v4658
      %v4660 = vrot.slane %v4655, %v4659
      %v4661 = vlaneseq
      %v4662 = vshrl.u32 %v4661, 7
      %v4663 = vsub.s32 1, %v4662
      %v4664 = vrot.slane %v4655, %v4663
      %4667 = vmatprep.subr.mxu0 %v4621
      %4668 = vmatpush1.msra.mxu0 %v4620
      %4669 = vmatprep.subr.mxu0 %v4619
      %4670 = vmatpush1.msra.mxu0 %v4618
      %4671 = vmatprep.subr.mxu0 %v4617
      %4672 = vmatpush1.msra.mxu0 %v4616
      %4673 = vmatprep.subr.mxu0 %v4615
      %4674 = vmatpush1.msra.mxu0 %v4614
      %4675 = vmatprep.subr.mxu0 %v4613
      %4676 = vmatpush1.msra.mxu0 %v4612
      %4677 = vmatprep.subr.mxu0 %v4611
      %4678 = vmatpush1.msra.mxu0 %v4610
      %4679 = vmatprep.subr.mxu0 %v4609
      %4680 = vmatpush1.msra.mxu0 %v4608
      %4681 = vmatprep.subr.mxu0 %v4607
      %4682 = vmatpush1.msra.mxu0 %v4606
      %4683 = vmatprep.subr.mxu0 %v4605
      %4684 = vmatpush1.msra.mxu0 %v4604
      %4685 = vmatprep.subr.mxu0 %v4603
      %4686 = vmatpush1.msra.mxu0 %v4602
      %4687 = vmatprep.subr.mxu0 %v4601
      %4688 = vmatpush1.msra.mxu0 %v4600
      %4689 = vmatprep.subr.mxu0 %v4599
      %4690 = vmatpush1.msra.mxu0 %v4598
      %4691 = vmatprep.subr.mxu0 %v4597
      %4692 = vmatpush1.msra.mxu0 %v4596
      %4693 = vmatprep.subr.mxu0 %v4595
      %4694 = vmatpush1.msra.mxu0 %v4594
      %4695 = vmatprep.subr.mxu0 %v4593
      %4696 = vmatpush1.msra.mxu0 %v4592
      %4697 = vmatprep.subr.mxu0 %v4591
      %4698 = vmatpush1.msra.mxu0 %v4590
      %4699 = vmatprep.subr.mxu0 %v4653
      %4700 = vmatpush2.msra.mxu0 %v4652
      %4701 = vmatprep.subr.mxu0 %v4651
      %4702 = vmatpush2.msra.mxu0 %v4650
      %4703 = vmatprep.subr.mxu0 %v4649
      %4704 = vmatpush2.msra.mxu0 %v4648
      %4705 = vmatprep.subr.mxu0 %v4647
      %4706 = vmatpush2.msra.mxu0 %v4646
      %4707 = vmatprep.subr.mxu0 %v4645
      %4708 = vmatpush2.msra.mxu0 %v4644
      %4709 = vmatprep.subr.mxu0 %v4643
      %4710 = vmatpush2.msra.mxu0 %v4642
      %4711 = vmatprep.subr.mxu0 %v4641
      %4712 = vmatpush2.msra.mxu0 %v4640
      %4713 = vmatprep.subr.mxu0 %v4639
      %4714 = vmatpush2.msra.mxu0 %v4638
      %4715 = vmatprep.subr.mxu0 %v4637
      %4716 = vmatpush2.msra.mxu0 %v4636
      %4717 = vmatprep.subr.mxu0 %v4635
      %4718 = vmatpush2.msra.mxu0 %v4634
      %4719 = vmatprep.subr.mxu0 %v4633
      %4720 = vmatpush2.msra.mxu0 %v4632
      %4721 = vmatprep.subr.mxu0 %v4631
      %4722 = vmatpush2.msra.mxu0 %v4630
      %4723 = vmatprep.subr.mxu0 %v4629
      %4724 = vmatpush2.msra.mxu0 %v4628
      %4725 = vmatprep.subr.mxu0 %v4627
      %4726 = vmatpush2.msra.mxu0 %v4626
      %4727 = vmatprep.subr.mxu0 %v4625
      %4728 = vmatpush2.msra.mxu0 %v4624
      %4729 = vmatprep.subr.mxu0 %v4623
      %4730 = vmatpush2.msra.mxu0 %v4622
      %4731 = vmatprep.mubr.f32.mxu0 %v4581
      %4732 = vmatmul.mubr.f32.gmra.mxu0 %v4400
      %v4733 = vpop.f32.mrf.mxu0
      %v4734 = vadd.f32 %v4660, %v4733
      %v4735 = vpop.f32.mrf.mxu0
      %v4736 = vadd.f32 %v4664, %v4735
      %4737 = vmatprep.mubr.f32.mxu0 %v4586
      %4738 = vmatmul.mubr.f32.gmra.mxu0 %v4405
      %v4739 = vpop.f32.mrf.mxu0
      %v4740 = vadd.f32 %v4660, %v4739
      %v4741 = vpop.f32.mrf.mxu0
      %v4742 = vadd.f32 %v4664, %v4741
      %4743 = vdwg.mxu0
      %v4744 = vadd.f32 %v3832, %v4734
      %v4745 = vadd.f32 %v3833, %v4736
      %v4746 = vadd.f32 %v3834, %v4740
      %v4747 = vadd.f32 %v3835, %v4742
      %s4748 = scalar_lea.vmem %s6, 4
      %v4749 = vld [vmem:[%s4748] sm:$0x3]
      %s4750 = scalar_lea.vmem %s7, 4
      %v4751 = vld [vmem:[%s4750] sm:$0x3]
      %v4752 = vsel %vm719, %v4745, 0.0
      %v4753 = vadd.f32 %v4744, %v4752
      %4754 = vadd.xlane.f32.xlu0 %v4753
      %v4755 = vpop.xlane.xlu0 %4754
      %v4756 = vsel %vm1081, %v4746, 0.0
      %v4757 = vsel %vm1505, %v4747, 0.0
      %v4758 = vadd.f32 %v4756, %v4757
      %4759 = vadd.xlane.f32.xlu0 %v4758
      %v4760 = vpop.xlane.xlu0 %4759
      %v4761 = vmul.f32 %v4755, %v1510
      %v4762 = vmul.f32 %v4760, %v1510
      %v4763 = vsub.f32 %v4744, %v4761
      %v4764 = vsub.f32 %v4745, %v4761
      %v4765 = vsub.f32 %v4746, %v4762
      %v4766 = vsub.f32 %v4747, %v4762
      %v4767 = vmul.f32 %v4763, %v4763
      %v4768 = vmul.f32 %v4764, %v4764
      %v4769 = vmul.f32 %v4765, %v4765
      %v4770 = vmul.f32 %v4766, %v4766
      %v4771 = vsel %vm719, %v4768, 0.0
      %v4772 = vadd.f32 %v4767, %v4771
      %4773 = vadd.xlane.f32.xlu0 %v4772
      %v4774 = vpop.xlane.xlu0 %4773
      %v4775 = vsel %vm1081, %v4769, 0.0
      %v4776 = vsel %vm1505, %v4770, 0.0
      %v4777 = vadd.f32 %v4775, %v4776
      %4778 = vadd.xlane.f32.xlu0 %v4777
      %v4779 = vpop.xlane.xlu0 %4778
      %v4780 = vmul.f32 %v4774, %v1510
      %v4781 = vmul.f32 %v4779, %v1510
      %v4782 = vadd.f32 %v4780, 1e-05
      %v4783 = vadd.f32 %v4781, 1e-05
      %v4784 = vrsqrt.pop %v4782
      %v4785 = vrsqrt.pop %v4783
      %v4786 = vmul.f32 %v4763, %v4784
      %v4787 = vmul.f32 %v4764, %v4784
      %v4788 = vmul.f32 %v4765, %v4785
      %v4789 = vmul.f32 %v4766, %v4785
      %v4791 = vlaneseq
      %v4792 = vshrl.u32 %v4791, 7
      %v4793 = vsub.s32 0, %v4792
      %v4794 = vrot.slane %v4749, %v4793
      %v4795 = vlaneseq
      %v4796 = vshrl.u32 %v4795, 7
      %v4797 = vsub.s32 1, %v4796
      %v4798 = vrot.slane %v4749, %v4797
      %v4801 = vmul.f32 %v4786, %v4794
      %v4802 = vmul.f32 %v4787, %v4798
      %v4803 = vmul.f32 %v4788, %v4794
      %v4804 = vmul.f32 %v4789, %v4798
      %v4806 = vlaneseq
      %v4807 = vshrl.u32 %v4806, 7
      %v4808 = vsub.s32 0, %v4807
      %v4809 = vrot.slane %v4751, %v4808
      %v4810 = vlaneseq
      %v4811 = vshrl.u32 %v4810, 7
      %v4812 = vsub.s32 1, %v4811
      %v4813 = vrot.slane %v4751, %v4812
      %v4816 = vadd.f32 %v4801, %v4809
      %v4817 = vadd.f32 %v4802, %v4813
      %v4818 = vadd.f32 %v4803, %v4809
      %v4819 = vadd.f32 %v4804, %v4813
      %s4820 = scalar_lea.vmem %s8, 1088
      %v4821 = vld [vmem:[%s4820] sm:$0xff]
      %v4822 = vld [vmem:[%s4820 + $0x8] sm:$0xff]
      %v4823 = vld [vmem:[%s4820 + $0x10] sm:$0xff]
      %v4824 = vld [vmem:[%s4820 + $0x18] sm:$0xff]
      %v4825 = vld [vmem:[%s4820 + $0x20] sm:$0xff]
      %v4826 = vld [vmem:[%s4820 + $0x28] sm:$0xff]
      %v4827 = vld [vmem:[%s4820 + $0x30] sm:$0xff]
      %v4828 = vld [vmem:[%s4820 + $0x38] sm:$0xff]
      %v4829 = vld [vmem:[%s4820 + $0x40] sm:$0xff]
      %v4830 = vld [vmem:[%s4820 + $0x48] sm:$0xff]
      %v4831 = vld [vmem:[%s4820 + $0x50] sm:$0xff]
      %v4832 = vld [vmem:[%s4820 + $0x58] sm:$0xff]
      %v4833 = vld [vmem:[%s4820 + $0x60] sm:$0xff]
      %v4834 = vld [vmem:[%s4820 + $0x68] sm:$0xff]
      %v4835 = vld [vmem:[%s4820 + $0x70] sm:$0xff]
      %v4836 = vld [vmem:[%s4820 + $0x78] sm:$0xff]
      %v4837 = vld [vmem:[%s4820 + $0x80] sm:$0xff]
      %v4838 = vld [vmem:[%s4820 + $0x88] sm:$0xff]
      %v4839 = vld [vmem:[%s4820 + $0x90] sm:$0xff]
      %v4840 = vld [vmem:[%s4820 + $0x98] sm:$0xff]
      %v4841 = vld [vmem:[%s4820 + $0xa0] sm:$0xff]
      %v4842 = vld [vmem:[%s4820 + $0xa8] sm:$0xff]
      %v4843 = vld [vmem:[%s4820 + $0xb0] sm:$0xff]
      %v4844 = vld [vmem:[%s4820 + $0xb8] sm:$0xff]
      %v4845 = vld [vmem:[%s4820 + $0xc0] sm:$0xff]
      %v4846 = vld [vmem:[%s4820 + $0xc8] sm:$0xff]
      %v4847 = vld [vmem:[%s4820 + $0xd0] sm:$0xff]
      %v4848 = vld [vmem:[%s4820 + $0xd8] sm:$0xff]
      %v4849 = vld [vmem:[%s4820 + $0xe0] sm:$0xff]
      %v4850 = vld [vmem:[%s4820 + $0xe8] sm:$0xff]
      %v4851 = vld [vmem:[%s4820 + $0xf0] sm:$0xff]
      %v4852 = vld [vmem:[%s4820 + $0xf8] sm:$0xff]
      %v4853 = vld [vmem:[%s4820 + $0x100] sm:$0xff]
      %v4854 = vld [vmem:[%s4820 + $0x108] sm:$0xff]
      %v4855 = vld [vmem:[%s4820 + $0x110] sm:$0xff]
      %v4856 = vld [vmem:[%s4820 + $0x118] sm:$0xff]
      %v4857 = vld [vmem:[%s4820 + $0x120] sm:$0xff]
      %v4858 = vld [vmem:[%s4820 + $0x128] sm:$0xff]
      %v4859 = vld [vmem:[%s4820 + $0x130] sm:$0xff]
      %v4860 = vld [vmem:[%s4820 + $0x138] sm:$0xff]
      %v4861 = vld [vmem:[%s4820 + $0x140] sm:$0xff]
      %v4862 = vld [vmem:[%s4820 + $0x148] sm:$0xff]
      %v4863 = vld [vmem:[%s4820 + $0x150] sm:$0xff]
      %v4864 = vld [vmem:[%s4820 + $0x158] sm:$0xff]
      %v4865 = vld [vmem:[%s4820 + $0x160] sm:$0xff]
      %v4866 = vld [vmem:[%s4820 + $0x168] sm:$0xff]
      %v4867 = vld [vmem:[%s4820 + $0x170] sm:$0xff]
      %v4868 = vld [vmem:[%s4820 + $0x178] sm:$0xff]
      %v4869 = vld [vmem:[%s4820 + $0x180] sm:$0xff]
      %v4870 = vld [vmem:[%s4820 + $0x188] sm:$0xff]
      %v4871 = vld [vmem:[%s4820 + $0x190] sm:$0xff]
      %v4872 = vld [vmem:[%s4820 + $0x198] sm:$0xff]
      %v4873 = vld [vmem:[%s4820 + $0x1a0] sm:$0xff]
      %v4874 = vld [vmem:[%s4820 + $0x1a8] sm:$0xff]
      %v4875 = vld [vmem:[%s4820 + $0x1b0] sm:$0xff]
      %v4876 = vld [vmem:[%s4820 + $0x1b8] sm:$0xff]
      %v4877 = vld [vmem:[%s4820 + $0x1c0] sm:$0xff]
      %v4878 = vld [vmem:[%s4820 + $0x1c8] sm:$0xff]
      %v4879 = vld [vmem:[%s4820 + $0x1d0] sm:$0xff]
      %v4880 = vld [vmem:[%s4820 + $0x1d8] sm:$0xff]
      %v4881 = vld [vmem:[%s4820 + $0x1e0] sm:$0xff]
      %v4882 = vld [vmem:[%s4820 + $0x1e8] sm:$0xff]
      %v4883 = vld [vmem:[%s4820 + $0x1f0] sm:$0xff]
      %v4884 = vld [vmem:[%s4820 + $0x1f8] sm:$0xff]
      %v4885 = vld [vmem:[%s4820 + $0x200] sm:$0x3]
      %v4886 = vld [vmem:[%s4820 + $0x208] sm:$0x3]
      %v4887 = vld [vmem:[%s4820 + $0x210] sm:$0x3]
      %v4888 = vld [vmem:[%s4820 + $0x218] sm:$0x3]
      %s4889 = scalar_lea.vmem %s9, 8
      %v4890 = vld [vmem:[%s4889] sm:$0xf]
      %v4892 = vlaneseq
      %v4893 = vshrl.u32 %v4892, 7
      %v4894 = vsub.s32 0, %v4893
      %v4895 = vrot.slane %v4890, %v4894
      %v4896 = vlaneseq
      %v4897 = vshrl.u32 %v4896, 7
      %v4898 = vsub.s32 1, %v4897
      %v4899 = vrot.slane %v4890, %v4898
      %v4900 = vlaneseq
      %v4901 = vshrl.u32 %v4900, 7
      %v4902 = vsub.s32 2, %v4901
      %v4903 = vrot.slane %v4890, %v4902
      %v4904 = vlaneseq
      %v4905 = vshrl.u32 %v4904, 7
      %v4906 = vsub.s32 3, %v4905
      %v4907 = vrot.slane %v4890, %v4906
      %v4913 = vsel %vm719, %v4817, 0
      %v4916 = vsel %vm719, %v4819, 0
      %v4919 = vsel %vm726, %v4885, 0
      %v4922 = vsel %vm726, %v4886, 0
      %v4925 = vsel %vm726, %v4887, 0
      %v4928 = vsel %vm726, %v4888, 0
      %4930 = vmatprep.subr.mxu0 %v4882
      %4931 = vmatpush1.msra.mxu0 %v4881
      %4932 = vmatprep.subr.mxu0 %v4878
      %4933 = vmatpush1.msra.mxu0 %v4877
      %4934 = vmatprep.subr.mxu0 %v4874
      %4935 = vmatpush1.msra.mxu0 %v4873
      %4936 = vmatprep.subr.mxu0 %v4870
      %4937 = vmatpush1.msra.mxu0 %v4869
      %4938 = vmatprep.subr.mxu0 %v4866
      %4939 = vmatpush1.msra.mxu0 %v4865
      %4940 = vmatprep.subr.mxu0 %v4862
      %4941 = vmatpush1.msra.mxu0 %v4861
      %4942 = vmatprep.subr.mxu0 %v4858
      %4943 = vmatpush1.msra.mxu0 %v4857
      %4944 = vmatprep.subr.mxu0 %v4854
      %4945 = vmatpush1.msra.mxu0 %v4853
      %4946 = vmatprep.subr.mxu0 %v4850
      %4947 = vmatpush1.msra.mxu0 %v4849
      %4948 = vmatprep.subr.mxu0 %v4846
      %4949 = vmatpush1.msra.mxu0 %v4845
      %4950 = vmatprep.subr.mxu0 %v4842
      %4951 = vmatpush1.msra.mxu0 %v4841
      %4952 = vmatprep.subr.mxu0 %v4838
      %4953 = vmatpush1.msra.mxu0 %v4837
      %4954 = vmatprep.subr.mxu0 %v4834
      %4955 = vmatpush1.msra.mxu0 %v4833
      %4956 = vmatprep.subr.mxu0 %v4830
      %4957 = vmatpush1.msra.mxu0 %v4829
      %4958 = vmatprep.subr.mxu0 %v4826
      %4959 = vmatpush1.msra.mxu0 %v4825
      %4960 = vmatprep.subr.mxu0 %v4822
      %4961 = vmatpush1.msra.mxu0 %v4821
      %4962 = vmatprep.subr.mxu0 0.0
      %4963 = vmatpush2.msra.mxu0 0.0
      %4964 = vmatprep.subr.mxu0 0.0
      %4965 = vmatpush2.msra.mxu0 0.0
      %4966 = vmatprep.subr.mxu0 0.0
      %4967 = vmatpush2.msra.mxu0 0.0
      %4968 = vmatprep.subr.mxu0 0.0
      %4969 = vmatpush2.msra.mxu0 0.0
      %4970 = vmatprep.subr.mxu0 0.0
      %4971 = vmatpush2.msra.mxu0 0.0
      %4972 = vmatprep.subr.mxu0 0.0
      %4973 = vmatpush2.msra.mxu0 0.0
      %4974 = vmatprep.subr.mxu0 0.0
      %4975 = vmatpush2.msra.mxu0 0.0
      %4976 = vmatprep.subr.mxu0 0.0
      %4977 = vmatpush2.msra.mxu0 0.0
      %4978 = vmatprep.subr.mxu0 0.0
      %4979 = vmatpush2.msra.mxu0 0.0
      %4980 = vmatprep.subr.mxu0 0.0
      %4981 = vmatpush2.msra.mxu0 0.0
      %4982 = vmatprep.subr.mxu0 0.0
      %4983 = vmatpush2.msra.mxu0 0.0
      %4984 = vmatprep.subr.mxu0 0.0
      %4985 = vmatpush2.msra.mxu0 0.0
      %4986 = vmatprep.subr.mxu0 0.0
      %4987 = vmatpush2.msra.mxu0 0.0
      %4988 = vmatprep.subr.mxu0 0.0
      %4989 = vmatpush2.msra.mxu0 0.0
      %4990 = vmatprep.subr.mxu0 0.0
      %4991 = vmatpush2.msra.mxu0 0.0
      %4992 = vmatprep.subr.mxu0 %v4922
      %4993 = vmatpush2.msra.mxu0 %v4919
      %4994 = vmatprep.mubr.f32.mxu0 %v4913
      %4995 = vmatmul.mubr.f32.gmra.mxu0 %v4816
      %v4996 = vpop.f32.mrf.mxu0
      %v4997 = vadd.f32 %v4895, %v4996
      %v4998 = vpop.f32.mrf.mxu0
      %v4999 = vadd.f32 %v4899, %v4998
      %5000 = vmatprep.mubr.f32.mxu0 %v4916
      %5001 = vmatmul.mubr.f32.gmra.mxu0 %v4818
      %v5002 = vpop.f32.mrf.mxu0
      %v5003 = vadd.f32 %v4895, %v5002
      %v5004 = vpop.f32.mrf.mxu0
      %v5005 = vadd.f32 %v4899, %v5004
      %5006 = vdwg.mxu0
      %5007 = vmatprep.subr.mxu0 %v4884
      %5008 = vmatpush1.msra.mxu0 %v4883
      %5009 = vmatprep.subr.mxu0 %v4880
      %5010 = vmatpush1.msra.mxu0 %v4879
      %5011 = vmatprep.subr.mxu0 %v4876
      %5012 = vmatpush1.msra.mxu0 %v4875
      %5013 = vmatprep.subr.mxu0 %v4872
      %5014 = vmatpush1.msra.mxu0 %v4871
      %5015 = vmatprep.subr.mxu0 %v4868
      %5016 = vmatpush1.msra.mxu0 %v4867
      %5017 = vmatprep.subr.mxu0 %v4864
      %5018 = vmatpush1.msra.mxu0 %v4863
      %5019 = vmatprep.subr.mxu0 %v4860
      %5020 = vmatpush1.msra.mxu0 %v4859
      %5021 = vmatprep.subr.mxu0 %v4856
      %5022 = vmatpush1.msra.mxu0 %v4855
      %5023 = vmatprep.subr.mxu0 %v4852
      %5024 = vmatpush1.msra.mxu0 %v4851
      %5025 = vmatprep.subr.mxu0 %v4848
      %5026 = vmatpush1.msra.mxu0 %v4847
      %5027 = vmatprep.subr.mxu0 %v4844
      %5028 = vmatpush1.msra.mxu0 %v4843
      %5029 = vmatprep.subr.mxu0 %v4840
      %5030 = vmatpush1.msra.mxu0 %v4839
      %5031 = vmatprep.subr.mxu0 %v4836
      %5032 = vmatpush1.msra.mxu0 %v4835
      %5033 = vmatprep.subr.mxu0 %v4832
      %5034 = vmatpush1.msra.mxu0 %v4831
      %5035 = vmatprep.subr.mxu0 %v4828
      %5036 = vmatpush1.msra.mxu0 %v4827
      %5037 = vmatprep.subr.mxu0 %v4824
      %5038 = vmatpush1.msra.mxu0 %v4823
      %5039 = vmatprep.subr.mxu0 0.0
      %5040 = vmatpush2.msra.mxu0 0.0
      %5041 = vmatprep.subr.mxu0 0.0
      %5042 = vmatpush2.msra.mxu0 0.0
      %5043 = vmatprep.subr.mxu0 0.0
      %5044 = vmatpush2.msra.mxu0 0.0
      %5045 = vmatprep.subr.mxu0 0.0
      %5046 = vmatpush2.msra.mxu0 0.0
      %5047 = vmatprep.subr.mxu0 0.0
      %5048 = vmatpush2.msra.mxu0 0.0
      %5049 = vmatprep.subr.mxu0 0.0
      %5050 = vmatpush2.msra.mxu0 0.0
      %5051 = vmatprep.subr.mxu0 0.0
      %5052 = vmatpush2.msra.mxu0 0.0
      %5053 = vmatprep.subr.mxu0 0.0
      %5054 = vmatpush2.msra.mxu0 0.0
      %5055 = vmatprep.subr.mxu0 0.0
      %5056 = vmatpush2.msra.mxu0 0.0
      %5057 = vmatprep.subr.mxu0 0.0
      %5058 = vmatpush2.msra.mxu0 0.0
      %5059 = vmatprep.subr.mxu0 0.0
      %5060 = vmatpush2.msra.mxu0 0.0
      %5061 = vmatprep.subr.mxu0 0.0
      %5062 = vmatpush2.msra.mxu0 0.0
      %5063 = vmatprep.subr.mxu0 0.0
      %5064 = vmatpush2.msra.mxu0 0.0
      %5065 = vmatprep.subr.mxu0 0.0
      %5066 = vmatpush2.msra.mxu0 0.0
      %5067 = vmatprep.subr.mxu0 0.0
      %5068 = vmatpush2.msra.mxu0 0.0
      %5069 = vmatprep.subr.mxu0 %v4928
      %5070 = vmatpush2.msra.mxu0 %v4925
      %5071 = vmatprep.mubr.f32.mxu0 %v4913
      %5072 = vmatmul.mubr.f32.gmra.mxu0 %v4816
      %v5073 = vpop.f32.mrf.mxu0
      %v5074 = vadd.f32 %v4903, %v5073
      %v5075 = vpop.f32.mrf.mxu0
      %v5076 = vadd.f32 %v4907, %v5075
      %5077 = vmatprep.mubr.f32.mxu0 %v4916
      %5078 = vmatmul.mubr.f32.gmra.mxu0 %v4818
      %v5079 = vpop.f32.mrf.mxu0
      %v5080 = vadd.f32 %v4903, %v5079
      %v5081 = vpop.f32.mrf.mxu0
      %v5082 = vadd.f32 %v4907, %v5081
      %5083 = vdwg.mxu0
      %v5084 = vmax.f32 %v4997, 0.0
      %v5085 = vmax.f32 %v4999, 0.0
      %v5086 = vmax.f32 %v5074, 0.0
      %v5087 = vmax.f32 %v5076, 0.0
      %v5088 = vmax.f32 %v5003, 0.0
      %v5089 = vmax.f32 %v5005, 0.0
      %v5090 = vmax.f32 %v5080, 0.0
      %v5091 = vmax.f32 %v5082, 0.0
      %s5092 = scalar_lea.vmem %s10, 2048
      %v5093 = vld [vmem:[%s5092] sm:$0xff]
      %v5094 = vld [vmem:[%s5092 + $0x8] sm:$0xff]
      %v5095 = vld [vmem:[%s5092 + $0x10] sm:$0xff]
      %v5096 = vld [vmem:[%s5092 + $0x18] sm:$0xff]
      %v5097 = vld [vmem:[%s5092 + $0x20] sm:$0xff]
      %v5098 = vld [vmem:[%s5092 + $0x28] sm:$0xff]
      %v5099 = vld [vmem:[%s5092 + $0x30] sm:$0xff]
      %v5100 = vld [vmem:[%s5092 + $0x38] sm:$0xff]
      %v5101 = vld [vmem:[%s5092 + $0x40] sm:$0xff]
      %v5102 = vld [vmem:[%s5092 + $0x48] sm:$0xff]
      %v5103 = vld [vmem:[%s5092 + $0x50] sm:$0xff]
      %v5104 = vld [vmem:[%s5092 + $0x58] sm:$0xff]
      %v5105 = vld [vmem:[%s5092 + $0x60] sm:$0xff]
      %v5106 = vld [vmem:[%s5092 + $0x68] sm:$0xff]
      %v5107 = vld [vmem:[%s5092 + $0x70] sm:$0xff]
      %v5108 = vld [vmem:[%s5092 + $0x78] sm:$0xff]
      %v5109 = vld [vmem:[%s5092 + $0x80] sm:$0xff]
      %v5110 = vld [vmem:[%s5092 + $0x88] sm:$0xff]
      %v5111 = vld [vmem:[%s5092 + $0x90] sm:$0xff]
      %v5112 = vld [vmem:[%s5092 + $0x98] sm:$0xff]
      %v5113 = vld [vmem:[%s5092 + $0xa0] sm:$0xff]
      %v5114 = vld [vmem:[%s5092 + $0xa8] sm:$0xff]
      %v5115 = vld [vmem:[%s5092 + $0xb0] sm:$0xff]
      %v5116 = vld [vmem:[%s5092 + $0xb8] sm:$0xff]
      %v5117 = vld [vmem:[%s5092 + $0xc0] sm:$0xff]
      %v5118 = vld [vmem:[%s5092 + $0xc8] sm:$0xff]
      %v5119 = vld [vmem:[%s5092 + $0xd0] sm:$0xff]
      %v5120 = vld [vmem:[%s5092 + $0xd8] sm:$0xff]
      %v5121 = vld [vmem:[%s5092 + $0xe0] sm:$0xff]
      %v5122 = vld [vmem:[%s5092 + $0xe8] sm:$0xff]
      %v5123 = vld [vmem:[%s5092 + $0xf0] sm:$0xff]
      %v5124 = vld [vmem:[%s5092 + $0xf8] sm:$0xff]
      %v5125 = vld [vmem:[%s5092 + $0x100] sm:$0xff]
      %v5126 = vld [vmem:[%s5092 + $0x108] sm:$0xff]
      %v5127 = vld [vmem:[%s5092 + $0x110] sm:$0xff]
      %v5128 = vld [vmem:[%s5092 + $0x118] sm:$0xff]
      %v5129 = vld [vmem:[%s5092 + $0x120] sm:$0xff]
      %v5130 = vld [vmem:[%s5092 + $0x128] sm:$0xff]
      %v5131 = vld [vmem:[%s5092 + $0x130] sm:$0xff]
      %v5132 = vld [vmem:[%s5092 + $0x138] sm:$0xff]
      %v5133 = vld [vmem:[%s5092 + $0x140] sm:$0xff]
      %v5134 = vld [vmem:[%s5092 + $0x148] sm:$0xff]
      %v5135 = vld [vmem:[%s5092 + $0x150] sm:$0xff]
      %v5136 = vld [vmem:[%s5092 + $0x158] sm:$0xff]
      %v5137 = vld [vmem:[%s5092 + $0x160] sm:$0xff]
      %v5138 = vld [vmem:[%s5092 + $0x168] sm:$0xff]
      %v5139 = vld [vmem:[%s5092 + $0x170] sm:$0xff]
      %v5140 = vld [vmem:[%s5092 + $0x178] sm:$0xff]
      %v5141 = vld [vmem:[%s5092 + $0x180] sm:$0xff]
      %v5142 = vld [vmem:[%s5092 + $0x188] sm:$0xff]
      %v5143 = vld [vmem:[%s5092 + $0x190] sm:$0xff]
      %v5144 = vld [vmem:[%s5092 + $0x198] sm:$0xff]
      %v5145 = vld [vmem:[%s5092 + $0x1a0] sm:$0xff]
      %v5146 = vld [vmem:[%s5092 + $0x1a8] sm:$0xff]
      %v5147 = vld [vmem:[%s5092 + $0x1b0] sm:$0xff]
      %v5148 = vld [vmem:[%s5092 + $0x1b8] sm:$0xff]
      %v5149 = vld [vmem:[%s5092 + $0x1c0] sm:$0xff]
      %v5150 = vld [vmem:[%s5092 + $0x1c8] sm:$0xff]
      %v5151 = vld [vmem:[%s5092 + $0x1d0] sm:$0xff]
      %v5152 = vld [vmem:[%s5092 + $0x1d8] sm:$0xff]
      %v5153 = vld [vmem:[%s5092 + $0x1e0] sm:$0xff]
      %v5154 = vld [vmem:[%s5092 + $0x1e8] sm:$0xff]
      %v5155 = vld [vmem:[%s5092 + $0x1f0] sm:$0xff]
      %v5156 = vld [vmem:[%s5092 + $0x1f8] sm:$0xff]
      %v5157 = vld [vmem:[%s5092 + $0x200] sm:$0xff]
      %v5158 = vld [vmem:[%s5092 + $0x208] sm:$0xff]
      %v5159 = vld [vmem:[%s5092 + $0x210] sm:$0xff]
      %v5160 = vld [vmem:[%s5092 + $0x218] sm:$0xff]
      %v5161 = vld [vmem:[%s5092 + $0x220] sm:$0xff]
      %v5162 = vld [vmem:[%s5092 + $0x228] sm:$0xff]
      %v5163 = vld [vmem:[%s5092 + $0x230] sm:$0xff]
      %v5164 = vld [vmem:[%s5092 + $0x238] sm:$0xff]
      %v5165 = vld [vmem:[%s5092 + $0x240] sm:$0xff]
      %v5166 = vld [vmem:[%s5092 + $0x248] sm:$0xff]
      %v5167 = vld [vmem:[%s5092 + $0x250] sm:$0xff]
      %v5168 = vld [vmem:[%s5092 + $0x258] sm:$0xff]
      %v5169 = vld [vmem:[%s5092 + $0x260] sm:$0xff]
      %v5170 = vld [vmem:[%s5092 + $0x268] sm:$0xff]
      %v5171 = vld [vmem:[%s5092 + $0x270] sm:$0xff]
      %v5172 = vld [vmem:[%s5092 + $0x278] sm:$0xff]
      %v5173 = vld [vmem:[%s5092 + $0x280] sm:$0xff]
      %v5174 = vld [vmem:[%s5092 + $0x288] sm:$0xff]
      %v5175 = vld [vmem:[%s5092 + $0x290] sm:$0xff]
      %v5176 = vld [vmem:[%s5092 + $0x298] sm:$0xff]
      %v5177 = vld [vmem:[%s5092 + $0x2a0] sm:$0xff]
      %v5178 = vld [vmem:[%s5092 + $0x2a8] sm:$0xff]
      %v5179 = vld [vmem:[%s5092 + $0x2b0] sm:$0xff]
      %v5180 = vld [vmem:[%s5092 + $0x2b8] sm:$0xff]
      %v5181 = vld [vmem:[%s5092 + $0x2c0] sm:$0xff]
      %v5182 = vld [vmem:[%s5092 + $0x2c8] sm:$0xff]
      %v5183 = vld [vmem:[%s5092 + $0x2d0] sm:$0xff]
      %v5184 = vld [vmem:[%s5092 + $0x2d8] sm:$0xff]
      %v5185 = vld [vmem:[%s5092 + $0x2e0] sm:$0xff]
      %v5186 = vld [vmem:[%s5092 + $0x2e8] sm:$0xff]
      %v5187 = vld [vmem:[%s5092 + $0x2f0] sm:$0xff]
      %v5188 = vld [vmem:[%s5092 + $0x2f8] sm:$0xff]
      %v5189 = vld [vmem:[%s5092 + $0x300] sm:$0xff]
      %v5190 = vld [vmem:[%s5092 + $0x308] sm:$0xff]
      %v5191 = vld [vmem:[%s5092 + $0x310] sm:$0xff]
      %v5192 = vld [vmem:[%s5092 + $0x318] sm:$0xff]
      %v5193 = vld [vmem:[%s5092 + $0x320] sm:$0xff]
      %v5194 = vld [vmem:[%s5092 + $0x328] sm:$0xff]
      %v5195 = vld [vmem:[%s5092 + $0x330] sm:$0xff]
      %v5196 = vld [vmem:[%s5092 + $0x338] sm:$0xff]
      %v5197 = vld [vmem:[%s5092 + $0x340] sm:$0xff]
      %v5198 = vld [vmem:[%s5092 + $0x348] sm:$0xff]
      %v5199 = vld [vmem:[%s5092 + $0x350] sm:$0xff]
      %v5200 = vld [vmem:[%s5092 + $0x358] sm:$0xff]
      %v5201 = vld [vmem:[%s5092 + $0x360] sm:$0xff]
      %v5202 = vld [vmem:[%s5092 + $0x368] sm:$0xff]
      %v5203 = vld [vmem:[%s5092 + $0x370] sm:$0xff]
      %v5204 = vld [vmem:[%s5092 + $0x378] sm:$0xff]
      %v5205 = vld [vmem:[%s5092 + $0x380] sm:$0xff]
      %v5206 = vld [vmem:[%s5092 + $0x388] sm:$0xff]
      %v5207 = vld [vmem:[%s5092 + $0x390] sm:$0xff]
      %v5208 = vld [vmem:[%s5092 + $0x398] sm:$0xff]
      %v5209 = vld [vmem:[%s5092 + $0x3a0] sm:$0xff]
      %v5210 = vld [vmem:[%s5092 + $0x3a8] sm:$0xff]
      %v5211 = vld [vmem:[%s5092 + $0x3b0] sm:$0xff]
      %v5212 = vld [vmem:[%s5092 + $0x3b8] sm:$0xff]
      %v5213 = vld [vmem:[%s5092 + $0x3c0] sm:$0xff]
      %v5214 = vld [vmem:[%s5092 + $0x3c8] sm:$0xff]
      %v5215 = vld [vmem:[%s5092 + $0x3d0] sm:$0xff]
      %v5216 = vld [vmem:[%s5092 + $0x3d8] sm:$0xff]
      %v5217 = vld [vmem:[%s5092 + $0x3e0] sm:$0xff]
      %v5218 = vld [vmem:[%s5092 + $0x3e8] sm:$0xff]
      %v5219 = vld [vmem:[%s5092 + $0x3f0] sm:$0xff]
      %v5220 = vld [vmem:[%s5092 + $0x3f8] sm:$0xff]
      %s5221 = scalar_lea.vmem %s11, 4
      %v5222 = vld [vmem:[%s5221] sm:$0x3]
      %v5224 = vlaneseq
      %v5225 = vshrl.u32 %v5224, 7
      %v5226 = vsub.s32 0, %v5225
      %v5227 = vrot.slane %v5222, %v5226
      %v5228 = vlaneseq
      %v5229 = vshrl.u32 %v5228, 7
      %v5230 = vsub.s32 1, %v5229
      %v5231 = vrot.slane %v5222, %v5230
      %5234 = vmatprep.subr.mxu0 %v5124
      %5235 = vmatpush1.msra.mxu0 %v5123
      %5236 = vmatprep.subr.mxu0 %v5122
      %5237 = vmatpush1.msra.mxu0 %v5121
      %5238 = vmatprep.subr.mxu0 %v5120
      %5239 = vmatpush1.msra.mxu0 %v5119
      %5240 = vmatprep.subr.mxu0 %v5118
      %5241 = vmatpush1.msra.mxu0 %v5117
      %5242 = vmatprep.subr.mxu0 %v5116
      %5243 = vmatpush1.msra.mxu0 %v5115
      %5244 = vmatprep.subr.mxu0 %v5114
      %5245 = vmatpush1.msra.mxu0 %v5113
      %5246 = vmatprep.subr.mxu0 %v5112
      %5247 = vmatpush1.msra.mxu0 %v5111
      %5248 = vmatprep.subr.mxu0 %v5110
      %5249 = vmatpush1.msra.mxu0 %v5109
      %5250 = vmatprep.subr.mxu0 %v5108
      %5251 = vmatpush1.msra.mxu0 %v5107
      %5252 = vmatprep.subr.mxu0 %v5106
      %5253 = vmatpush1.msra.mxu0 %v5105
      %5254 = vmatprep.subr.mxu0 %v5104
      %5255 = vmatpush1.msra.mxu0 %v5103
      %5256 = vmatprep.subr.mxu0 %v5102
      %5257 = vmatpush1.msra.mxu0 %v5101
      %5258 = vmatprep.subr.mxu0 %v5100
      %5259 = vmatpush1.msra.mxu0 %v5099
      %5260 = vmatprep.subr.mxu0 %v5098
      %5261 = vmatpush1.msra.mxu0 %v5097
      %5262 = vmatprep.subr.mxu0 %v5096
      %5263 = vmatpush1.msra.mxu0 %v5095
      %5264 = vmatprep.subr.mxu0 %v5094
      %5265 = vmatpush1.msra.mxu0 %v5093
      %5266 = vmatprep.subr.mxu0 %v5156
      %5267 = vmatpush2.msra.mxu0 %v5155
      %5268 = vmatprep.subr.mxu0 %v5154
      %5269 = vmatpush2.msra.mxu0 %v5153
      %5270 = vmatprep.subr.mxu0 %v5152
      %5271 = vmatpush2.msra.mxu0 %v5151
      %5272 = vmatprep.subr.mxu0 %v5150
      %5273 = vmatpush2.msra.mxu0 %v5149
      %5274 = vmatprep.subr.mxu0 %v5148
      %5275 = vmatpush2.msra.mxu0 %v5147
      %5276 = vmatprep.subr.mxu0 %v5146
      %5277 = vmatpush2.msra.mxu0 %v5145
      %5278 = vmatprep.subr.mxu0 %v5144
      %5279 = vmatpush2.msra.mxu0 %v5143
      %5280 = vmatprep.subr.mxu0 %v5142
      %5281 = vmatpush2.msra.mxu0 %v5141
      %5282 = vmatprep.subr.mxu0 %v5140
      %5283 = vmatpush2.msra.mxu0 %v5139
      %5284 = vmatprep.subr.mxu0 %v5138
      %5285 = vmatpush2.msra.mxu0 %v5137
      %5286 = vmatprep.subr.mxu0 %v5136
      %5287 = vmatpush2.msra.mxu0 %v5135
      %5288 = vmatprep.subr.mxu0 %v5134
      %5289 = vmatpush2.msra.mxu0 %v5133
      %5290 = vmatprep.subr.mxu0 %v5132
      %5291 = vmatpush2.msra.mxu0 %v5131
      %5292 = vmatprep.subr.mxu0 %v5130
      %5293 = vmatpush2.msra.mxu0 %v5129
      %5294 = vmatprep.subr.mxu0 %v5128
      %5295 = vmatpush2.msra.mxu0 %v5127
      %5296 = vmatprep.subr.mxu0 %v5126
      %5297 = vmatpush2.msra.mxu0 %v5125
      %5298 = vmatprep.mubr.f32.mxu0 %v5085
      %5299 = vmatmul.mubr.f32.gmra.mxu0 %v5084
      %v5300 = vpop.f32.mrf.mxu0
      %v5301 = vadd.f32 %v5227, %v5300
      %v5302 = vpop.f32.mrf.mxu0
      %v5303 = vadd.f32 %v5231, %v5302
      %5304 = vmatprep.mubr.f32.mxu0 %v5089
      %5305 = vmatmul.mubr.f32.gmra.mxu0 %v5088
      %v5306 = vpop.f32.mrf.mxu0
      %v5307 = vadd.f32 %v5227, %v5306
      %v5308 = vpop.f32.mrf.mxu0
      %v5309 = vadd.f32 %v5231, %v5308
      %5310 = vdwg.mxu0
      %5311 = vmatprep.subr.mxu0 %v5188
      %5312 = vmatpush1.msra.mxu0 %v5187
      %5313 = vmatprep.subr.mxu0 %v5186
      %5314 = vmatpush1.msra.mxu0 %v5185
      %5315 = vmatprep.subr.mxu0 %v5184
      %5316 = vmatpush1.msra.mxu0 %v5183
      %5317 = vmatprep.subr.mxu0 %v5182
      %5318 = vmatpush1.msra.mxu0 %v5181
      %5319 = vmatprep.subr.mxu0 %v5180
      %5320 = vmatpush1.msra.mxu0 %v5179
      %5321 = vmatprep.subr.mxu0 %v5178
      %5322 = vmatpush1.msra.mxu0 %v5177
      %5323 = vmatprep.subr.mxu0 %v5176
      %5324 = vmatpush1.msra.mxu0 %v5175
      %5325 = vmatprep.subr.mxu0 %v5174
      %5326 = vmatpush1.msra.mxu0 %v5173
      %5327 = vmatprep.subr.mxu0 %v5172
      %5328 = vmatpush1.msra.mxu0 %v5171
      %5329 = vmatprep.subr.mxu0 %v5170
      %5330 = vmatpush1.msra.mxu0 %v5169
      %5331 = vmatprep.subr.mxu0 %v5168
      %5332 = vmatpush1.msra.mxu0 %v5167
      %5333 = vmatprep.subr.mxu0 %v5166
      %5334 = vmatpush1.msra.mxu0 %v5165
      %5335 = vmatprep.subr.mxu0 %v5164
      %5336 = vmatpush1.msra.mxu0 %v5163
      %5337 = vmatprep.subr.mxu0 %v5162
      %5338 = vmatpush1.msra.mxu0 %v5161
      %5339 = vmatprep.subr.mxu0 %v5160
      %5340 = vmatpush1.msra.mxu0 %v5159
      %5341 = vmatprep.subr.mxu0 %v5158
      %5342 = vmatpush1.msra.mxu0 %v5157
      %5343 = vmatprep.subr.mxu0 %v5220
      %5344 = vmatpush2.msra.mxu0 %v5219
      %5345 = vmatprep.subr.mxu0 %v5218
      %5346 = vmatpush2.msra.mxu0 %v5217
      %5347 = vmatprep.subr.mxu0 %v5216
      %5348 = vmatpush2.msra.mxu0 %v5215
      %5349 = vmatprep.subr.mxu0 %v5214
      %5350 = vmatpush2.msra.mxu0 %v5213
      %5351 = vmatprep.subr.mxu0 %v5212
      %5352 = vmatpush2.msra.mxu0 %v5211
      %5353 = vmatprep.subr.mxu0 %v5210
      %5354 = vmatpush2.msra.mxu0 %v5209
      %5355 = vmatprep.subr.mxu0 %v5208
      %5356 = vmatpush2.msra.mxu0 %v5207
      %5357 = vmatprep.subr.mxu0 %v5206
      %5358 = vmatpush2.msra.mxu0 %v5205
      %5359 = vmatprep.subr.mxu0 %v5204
      %5360 = vmatpush2.msra.mxu0 %v5203
      %5361 = vmatprep.subr.mxu0 %v5202
      %5362 = vmatpush2.msra.mxu0 %v5201
      %5363 = vmatprep.subr.mxu0 %v5200
      %5364 = vmatpush2.msra.mxu0 %v5199
      %5365 = vmatprep.subr.mxu0 %v5198
      %5366 = vmatpush2.msra.mxu0 %v5197
      %5367 = vmatprep.subr.mxu0 %v5196
      %5368 = vmatpush2.msra.mxu0 %v5195
      %5369 = vmatprep.subr.mxu0 %v5194
      %5370 = vmatpush2.msra.mxu0 %v5193
      %5371 = vmatprep.subr.mxu0 %v5192
      %5372 = vmatpush2.msra.mxu0 %v5191
      %5373 = vmatprep.subr.mxu0 %v5190
      %5374 = vmatpush2.msra.mxu0 %v5189
      %5375 = vmatprep.mubr.f32.mxu0 %v5087
      %5376 = vmatmul.mubr.f32.gmra.mxu0 %v5086
      %v5377 = vpop.f32.mrf.mxu0
      %v5378 = vadd.f32 %v5301, %v5377
      %v5379 = vpop.f32.mrf.mxu0
      %v5380 = vadd.f32 %v5303, %v5379
      %5381 = vmatprep.mubr.f32.mxu0 %v5091
      %5382 = vmatmul.mubr.f32.gmra.mxu0 %v5090
      %v5383 = vpop.f32.mrf.mxu0
      %v5384 = vadd.f32 %v5307, %v5383
      %v5385 = vpop.f32.mrf.mxu0
      %v5386 = vadd.f32 %v5309, %v5385
      %5387 = vdwg.mxu0
      %v5388 = vadd.f32 %v4816, %v5378
      %v5389 = vadd.f32 %v4817, %v5380
      %v5390 = vadd.f32 %v4818, %v5384
      %v5391 = vadd.f32 %v4819, %v5386
      %s5392 = scalar_lea.vmem %s12, 4
      %v5393 = vld [vmem:[%s5392] sm:$0x3]
      %s5394 = scalar_lea.vmem %s13, 4
      %v5395 = vld [vmem:[%s5394] sm:$0x3]
      %v5396 = vsel %vm719, %v5389, 0.0
      %v5397 = vadd.f32 %v5388, %v5396
      %5398 = vadd.xlane.f32.xlu0 %v5397
      %v5399 = vpop.xlane.xlu0 %5398
      %v5400 = vsel %vm1081, %v5390, 0.0
      %v5401 = vsel %vm1505, %v5391, 0.0
      %v5402 = vadd.f32 %v5400, %v5401
      %5403 = vadd.xlane.f32.xlu0 %v5402
      %v5404 = vpop.xlane.xlu0 %5403
      %v5405 = vmul.f32 %v5399, %v1510
      %v5406 = vmul.f32 %v5404, %v1510
      %v5407 = vsub.f32 %v5388, %v5405
      %v5408 = vsub.f32 %v5389, %v5405
      %v5409 = vsub.f32 %v5390, %v5406
      %v5410 = vsub.f32 %v5391, %v5406
      %v5411 = vmul.f32 %v5407, %v5407
      %v5412 = vmul.f32 %v5408, %v5408
      %v5413 = vmul.f32 %v5409, %v5409
      %v5414 = vmul.f32 %v5410, %v5410
      %v5415 = vsel %vm719, %v5412, 0.0
      %v5416 = vadd.f32 %v5411, %v5415
      %5417 = vadd.xlane.f32.xlu0 %v5416
      %v5418 = vpop.xlane.xlu0 %5417
      %v5419 = vsel %vm1081, %v5413, 0.0
      %v5420 = vsel %vm1505, %v5414, 0.0
      %v5421 = vadd.f32 %v5419, %v5420
      %5422 = vadd.xlane.f32.xlu0 %v5421
      %v5423 = vpop.xlane.xlu0 %5422
      %v5424 = vmul.f32 %v5418, %v1510
      %v5425 = vmul.f32 %v5423, %v1510
      %v5426 = vadd.f32 %v5424, 1e-05
      %v5427 = vadd.f32 %v5425, 1e-05
      %v5428 = vrsqrt.pop %v5426
      %v5429 = vrsqrt.pop %v5427
      %v5430 = vmul.f32 %v5407, %v5428
      %v5431 = vmul.f32 %v5408, %v5428
      %v5432 = vmul.f32 %v5409, %v5429
      %v5433 = vmul.f32 %v5410, %v5429
      %v5435 = vlaneseq
      %v5436 = vshrl.u32 %v5435, 7
      %v5437 = vsub.s32 0, %v5436
      %v5438 = vrot.slane %v5393, %v5437
      %v5439 = vlaneseq
      %v5440 = vshrl.u32 %v5439, 7
      %v5441 = vsub.s32 1, %v5440
      %v5442 = vrot.slane %v5393, %v5441
      %v5445 = vmul.f32 %v5430, %v5438
      %v5446 = vmul.f32 %v5431, %v5442
      %v5447 = vmul.f32 %v5432, %v5438
      %v5448 = vmul.f32 %v5433, %v5442
      %v5450 = vlaneseq
      %v5451 = vshrl.u32 %v5450, 7
      %v5452 = vsub.s32 0, %v5451
      %v5453 = vrot.slane %v5395, %v5452
      %v5454 = vlaneseq
      %v5455 = vshrl.u32 %v5454, 7
      %v5456 = vsub.s32 1, %v5455
      %v5457 = vrot.slane %v5395, %v5456
      %v5460 = vadd.f32 %v5445, %v5453
      %v5461 = vadd.f32 %v5446, %v5457
      %v5462 = vadd.f32 %v5447, %v5453
      %v5463 = vadd.f32 %v5448, %v5457
      %5464 = vst [vmem:[%s570] sm:$0xff] %v5460
      %5465 = vst.msk [vmem:[%s570 + $0x8] sm:$0xff] %vm719, %v5461
      %5466 = vst [vmem:[%s570 + $0x10] sm:$0x1] %v5462
      %5467 = vst.msk [vmem:[%s570 + $0x18] sm:$0x1] %vm1505, %v5463
      %v5468 = vld [vmem:[%s14] sm:$0xff]
      %v5469 = vld [vmem:[%s14 + $0x8] sm:$0xff]
      %v5470 = vld [vmem:[%s14 + $0x10] sm:$0xff]
      %v5471 = vld [vmem:[%s14 + $0x18] sm:$0xff]
      %v5472 = vld [vmem:[%s14 + $0x20] sm:$0xff]
      %v5473 = vld [vmem:[%s14 + $0x28] sm:$0xff]
      %v5474 = vld [vmem:[%s14 + $0x30] sm:$0xff]
      %v5475 = vld [vmem:[%s14 + $0x38] sm:$0xff]
      %v5476 = vld [vmem:[%s14 + $0x40] sm:$0xff]
      %v5477 = vld [vmem:[%s14 + $0x48] sm:$0xff]
      %v5478 = vld [vmem:[%s14 + $0x50] sm:$0xff]
      %v5479 = vld [vmem:[%s14 + $0x58] sm:$0xff]
      %v5480 = vld [vmem:[%s14 + $0x60] sm:$0xff]
      %v5481 = vld [vmem:[%s14 + $0x68] sm:$0xff]
      %v5482 = vld [vmem:[%s14 + $0x70] sm:$0xff]
      %v5483 = vld [vmem:[%s14 + $0x78] sm:$0xff]
      %v5484 = vld [vmem:[%s14 + $0x80] sm:$0x3]
      %v5485 = vld [vmem:[#allocation2] sm:$0x1]
      %v5487 = vsel %vm719, %v5461, 0
      %v5490 = vsel %vm726, %v5484, 0
      %5492 = vmatprep.subr.mxu0 0.0
      %5493 = vmatpush1.msra.mxu0 %v5483
      %5494 = vmatprep.subr.mxu0 0.0
      %5495 = vmatpush1.msra.mxu0 %v5482
      %5496 = vmatprep.subr.mxu0 0.0
      %5497 = vmatpush1.msra.mxu0 %v5481
      %5498 = vmatprep.subr.mxu0 0.0
      %5499 = vmatpush1.msra.mxu0 %v5480
      %5500 = vmatprep.subr.mxu0 0.0
      %5501 = vmatpush1.msra.mxu0 %v5479
      %5502 = vmatprep.subr.mxu0 0.0
      %5503 = vmatpush1.msra.mxu0 %v5478
      %5504 = vmatprep.subr.mxu0 0.0
      %5505 = vmatpush1.msra.mxu0 %v5477
      %5506 = vmatprep.subr.mxu0 0.0
      %5507 = vmatpush1.msra.mxu0 %v5476
      %5508 = vmatprep.subr.mxu0 0.0
      %5509 = vmatpush1.msra.mxu0 %v5475
      %5510 = vmatprep.subr.mxu0 0.0
      %5511 = vmatpush1.msra.mxu0 %v5474
      %5512 = vmatprep.subr.mxu0 0.0
      %5513 = vmatpush1.msra.mxu0 %v5473
      %5514 = vmatprep.subr.mxu0 0.0
      %5515 = vmatpush1.msra.mxu0 %v5472
      %5516 = vmatprep.subr.mxu0 0.0
      %5517 = vmatpush1.msra.mxu0 %v5471
      %5518 = vmatprep.subr.mxu0 0.0
      %5519 = vmatpush1.msra.mxu0 %v5470
      %5520 = vmatprep.subr.mxu0 0.0
      %5521 = vmatpush1.msra.mxu0 %v5469
      %5522 = vmatprep.subr.mxu0 0.0
      %5523 = vmatpush1.msra.mxu0 %v5468
      %5524 = vmatprep.subr.mxu0 0.0
      %5525 = vmatpush2.msra.mxu0 0.0
      %5526 = vmatprep.subr.mxu0 0.0
      %5527 = vmatpush2.msra.mxu0 0.0
      %5528 = vmatprep.subr.mxu0 0.0
      %5529 = vmatpush2.msra.mxu0 0.0
      %5530 = vmatprep.subr.mxu0 0.0
      %5531 = vmatpush2.msra.mxu0 0.0
      %5532 = vmatprep.subr.mxu0 0.0
      %5533 = vmatpush2.msra.mxu0 0.0
      %5534 = vmatprep.subr.mxu0 0.0
      %5535 = vmatpush2.msra.mxu0 0.0
      %5536 = vmatprep.subr.mxu0 0.0
      %5537 = vmatpush2.msra.mxu0 0.0
      %5538 = vmatprep.subr.mxu0 0.0
      %5539 = vmatpush2.msra.mxu0 0.0
      %5540 = vmatprep.subr.mxu0 0.0
      %5541 = vmatpush2.msra.mxu0 0.0
      %5542 = vmatprep.subr.mxu0 0.0
      %5543 = vmatpush2.msra.mxu0 0.0
      %5544 = vmatprep.subr.mxu0 0.0
      %5545 = vmatpush2.msra.mxu0 0.0
      %5546 = vmatprep.subr.mxu0 0.0
      %5547 = vmatpush2.msra.mxu0 0.0
      %5548 = vmatprep.subr.mxu0 0.0
      %5549 = vmatpush2.msra.mxu0 0.0
      %5550 = vmatprep.subr.mxu0 0.0
      %5551 = vmatpush2.msra.mxu0 0.0
      %5552 = vmatprep.subr.mxu0 0.0
      %5553 = vmatpush2.msra.mxu0 0.0
      %5554 = vmatprep.subr.mxu0 0.0
      %5555 = vmatpush2.msra.mxu0 %v5490
      %5556 = vmatprep.mubr.f32.mxu0 %v5487
      %5557 = vmatmul.mubr.f32.gmra.mxu0 %v5460
      %v5558 = vpop.f32.mrf.mxu0
      %v5559 = vadd.f32 %v5485, %v5558
      %v5560 = vpop.f32.mrf.mxu0
      %5561 = vdwg.mxu0
      %vm5562 = vcmask 0
      %5563 = vst.msk [vmem:[%s573] sm:$0x1] %vm5562, %v5559
      %p5564 = scmp.lt.s32.totalorder %s31, 1
      %s5565 = scalar_select %p5564, %s31, 1
      %s5566 = smul.addr %s5565, 4
      %s5567 = smul.addr %s5566, 8
      %s5568 = scalar_lea.vmem %s16, %s5567
      %p5569 = scmp.lt.s32.totalorder %s31, 1
      %s5570 = scalar_select %p5569, %s31, 1
      %s5571 = scalar_lea.vmem %s17, %s5570
      // Predicated region
      $region85: #{audio_transformers_forward.1} parent=83 // pred_check
        %p5572 = pneg %p395
      $region86: #{audio_transformers_forward.1} parent=83 // pred_check_branch
        %5574 = sbr.rel (%p5572) target = $region88
      $region87: #{audio_transformers_forward.1} parent=83 // pred_region
        _
      $region88: #{audio_transformers_forward.1} parent=83 // pred_fallthru
        _
      // Predicated region
      $region89: #{audio_transformers_forward.1} parent=83 // pred_check
        %p5575 = pneg %p421
      $region90: #{audio_transformers_forward.1} parent=83 // pred_check_branch
        %5577 = sbr.rel (%p5575) target = $region92
      $region91: #{audio_transformers_forward.1} parent=83 // pred_region
        _
      $region92: #{audio_transformers_forward.1} parent=83 // pred_fallthru
        _
    $region84: #{audio_transformers_forward.1} parent=5 // pred_fallthru
      _
    %p5578 = scmp.le.s32.totalorder 2, %s26
    // Predicated region
    $region93: #{audio_transformers_forward.1} parent=5 // pred_check
      %p5579 = pneg %p5578
    $region94: #{audio_transformers_forward.1} parent=5 // pred_check_branch
      %5581 = sbr.rel (%p5579) target = $region96
    $region95: #{audio_transformers_forward.1} parent=5 // pred_region
      %s5582 = ssub.s32 %s26, 2
      // Predicated region
      $region97: #{audio_transformers_forward.1} parent=95 // pred_check
        %p5583 = pneg %p401
      $region98: #{audio_transformers_forward.1} parent=95 // pred_check_branch
        %5585 = sbr.rel (%p5583) target = $region100
      $region99: #{audio_transformers_forward.1} parent=95 // pred_region
        %p5586 = scmp.lt.s32.totalorder %s32, 1
        %s5587 = scalar_select %p5586, %s32, 1
        %s5588 = smul.addr %s5587, 4
        %s5589 = smul.addr %s5588, 8
        %s5590 = scalar_lea.vmem %s16, %s5589
      $region100: #{audio_transformers_forward.1} parent=95 // pred_fallthru
        _
      // Predicated region
      $region101: #{audio_transformers_forward.1} parent=95 // pred_check
        %p5591 = pneg %p427
      $region102: #{audio_transformers_forward.1} parent=95 // pred_check_branch
        %5593 = sbr.rel (%p5591) target = $region104
      $region103: #{audio_transformers_forward.1} parent=95 // pred_region
        %p5594 = scmp.lt.s32.totalorder %s32, 1
        %s5595 = scalar_select %p5594, %s32, 1
        %s5596 = scalar_lea.vmem %s17, %s5595
      $region104: #{audio_transformers_forward.1} parent=95 // pred_fallthru
        _
    $region96: #{audio_transformers_forward.1} parent=5 // pred_fallthru
      _
  $region6: #{audio_transformers_forward.1} parent=0 // loop_footer
    %s30 = sadd.s32 1, %s26
  $region7: #{audio_transformers_forward.1} parent=0 // loop_footer_branch
    %25 = sbr.rel target = $region3
  $region8: #{audio_transformers_forward.1} parent=0 // loop_exit
    _

</llo_original>
